<compile_context>
chip_gen: v6e
topology: v6e:2x2x1
jax: 0.10.0
libtpu: 0.0.40
codegen_flags: <defaults>
</compile_context>

<pallas_src>
import numpy as np
import jax
import jax.numpy as jnp
from jax.experimental import pallas as pl
from jax.experimental.pallas import tpu as pltpu


# ------------------------------ small helpers -------------------------------

def _rup(x, m):
    return ((x + m - 1) // m) * m


def _pad_to(a, shape):
    a = np.asarray(a, np.float32)
    out = np.zeros(shape, np.float32)
    out[tuple(slice(0, s) for s in a.shape)] = a
    return out


def _uniform(key, shape, fan_in):
    bound = 1.0 / np.sqrt(float(fan_in))
    return jax.random.uniform(key, shape, jnp.float32, -bound, bound)


# ------------------- ConvTranspose2d -> dense matrix (setup) ----------------

def convT_as_matrix(w, h_in, w_in, stride):
    """PyTorch ConvTranspose2d (no padding) as a dense matrix.

    w: (Cin, Cout, KH, KW).  Returns (M, (Hout, Wout)) with M of shape
    (Cin*Hin*Win, Cout*Hout*Wout) such that y_flat = x_flat @ M reproduces the
    transposed convolution in NCHW-flatten order (matches x.view(-1, C, H, W)).
    """
    w = np.asarray(w, np.float32)
    cin, cout, kh_, kw_ = w.shape
    h_out = (h_in - 1) * stride + kh_
    w_out = (w_in - 1) * stride + kw_
    m = np.zeros((cin, h_in, w_in, cout, h_out, w_out), np.float32)
    for kh in range(kh_):
        for kw in range(kw_):
            for ih in range(h_in):
                for iw in range(w_in):
                    m[:, ih, iw, :, ih * stride + kh, iw * stride + kw] += w[:, :, kh, kw]
    return m.reshape(cin * h_in * w_in, cout * h_out * w_out), (h_out, w_out)


def _quantize_cols(m, rows_pad, cols_pad):
    """Symmetric per-output-column int8 quantization of a zero-padded matrix."""
    mp = _pad_to(m, (rows_pad, cols_pad))
    amax = np.abs(mp).max(axis=0)
    scale = np.where(amax > 0.0, amax / 127.0, 1.0).astype(np.float32)
    q = np.clip(np.rint(mp / scale), -127.0, 127.0).astype(np.int8)
    return jnp.asarray(q), jnp.asarray(scale.reshape(1, -1), jnp.float32)


# ------------------------------- parameters ---------------------------------

def build_params(key, dim_z):
    k = jax.random.split(key, 10)
    # Linear layers: PyTorch default init, fan_in = in_features.
    w1 = _uniform(k[0], (dim_z, 300), dim_z)
    b1 = _uniform(k[1], (300,), dim_z)
    w2 = _uniform(k[2], (300, 4 * 4 * 32), 300)
    b2 = _uniform(k[3], (4 * 4 * 32,), 300)
    # ConvTranspose2d default init: fan_in = out_channels * KH * KW.
    wt1 = _uniform(k[4], (32, 16, 5, 5), 16 * 5 * 5)
    bt1 = _uniform(k[5], (16,), 16 * 5 * 5)
    wt2 = _uniform(k[6], (16, 1, 5, 5), 1 * 5 * 5)
    bt2 = _uniform(k[7], (1,), 1 * 5 * 5)
    wt3 = _uniform(k[8], (1, 1, 4, 4), 1 * 4 * 4)
    bt3 = _uniform(k[9], (1,), 1 * 4 * 4)

    m1, (h1, s1) = convT_as_matrix(wt1, 4, 4, stride=2)    # 4x4   -> 11x11
    m2, (h2, s2) = convT_as_matrix(wt2, h1, s1, stride=2)  # 11x11 -> 25x25
    m3, (h3, s3) = convT_as_matrix(wt3, h2, s2, stride=1)  # 25x25 -> 28x28
    assert (h3, s3) == (28, 28)

    c1 = np.repeat(np.asarray(bt1, np.float32), h1 * s1)   # per-channel bias, NCHW flatten
    c2 = np.repeat(np.asarray(bt2, np.float32), h2 * s2)
    c3 = np.repeat(np.asarray(bt3, np.float32), h3 * s3)

    # Lane-dense column padding (multiples of 128); K of layer 1 stays dim_z.
    N1 = _rup(300, 128)                 # 384
    N2 = 4 * 4 * 32                     # 512 (already lane-dense)
    N3 = _rup(16 * h1 * s1, 128)        # 1936 -> 2048
    N4 = _rup(1 * h2 * s2, 128)         # 625  -> 640
    N5 = _rup(28 * 28, 128)             # 784  -> 896

    def bpad(a, c):
        return jnp.asarray(_pad_to(np.asarray(a).reshape(1, -1), (1, c)), jnp.float32)

    q1, sc1 = _quantize_cols(m1, N2, N3)     # (512, 2048)  int8
    q2, sc2 = _quantize_cols(m2, N3, N4)     # (2048, 640)  int8
    q3, sc3 = _quantize_cols(m3, N4, N5)     # (640, 896)   int8

    params = dict(
        # fc weights: small, stay un-quantized (layer 1 f32, layer 2 bf16).
        w1=jnp.asarray(_pad_to(w1, (dim_z, N1)), jnp.float32), b1=bpad(b1, N1),
        w2=jnp.asarray(_pad_to(w2, (N1, N2)), jnp.bfloat16),   b2=bpad(b2, N2),
        q1=q1, s1=sc1, c1=bpad(c1, N3),
        q2=q2, s2=sc2, c2=bpad(c2, N4),
        q3=q3, s3=sc3, c3=bpad(c3, N5),
        dims=dict(dim_z=dim_z, N5=N5),
    )
    return params


# ------------------------------ fused kernel --------------------------------

def _decoder_kernel(z_ref, w1_ref, b1_ref, w2_ref, b2_ref,
                    q1_hbm, s1_ref, c1_ref,
                    q2_hbm, s2_ref, c2_ref,
                    q3_hbm, s3_ref, c3_ref,
                    o_ref,
                    q1_vmem, q2_vmem, q3_vmem, dma_sem):
    # Kick off the convT weight streams immediately: the DMA engine pulls the
    # int8 matrices from HBM while the MXU runs the fc / earlier conv layers.
    cp1 = pltpu.make_async_copy(q1_hbm, q1_vmem, dma_sem.at[0]); cp1.start()
    cp2 = pltpu.make_async_copy(q2_hbm, q2_vmem, dma_sem.at[1]); cp2.start()
    cp3 = pltpu.make_async_copy(q3_hbm, q3_vmem, dma_sem.at[2]); cp3.start()

    def dense(x, w, bias, scale=None, relu=True):
        # x/w already in their MXU dtype; accumulate / scale / bias / ReLU f32.
        acc = jnp.dot(x, w, preferred_element_type=jnp.float32)
        if scale is not None:
            acc = acc * scale
        acc = acc + bias
        if relu:
            acc = jnp.maximum(acc, 0.0)
        return acc

    # fc: Linear(dim_z, 300) + ReLU ; Linear(300, 512) + ReLU
    h = dense(z_ref[...], w1_ref[...], b1_ref[...])                       # (M, 384)  f32xf32
    h = dense(h.astype(jnp.bfloat16), w2_ref[...], b2_ref[...])           # (M, 512)

    # ConvTranspose2d(32,16,5,s=2) + ReLU  (as int8-quantized matmul)
    cp1.wait()
    h = dense(h.astype(jnp.bfloat16), q1_vmem[...].astype(jnp.bfloat16),
              c1_ref[...], s1_ref[...])                                   # (M, 2048)
    # ConvTranspose2d(16,1,5,s=2) + ReLU
    cp2.wait()
    h = dense(h.astype(jnp.bfloat16), q2_vmem[...].astype(jnp.bfloat16),
              c2_ref[...], s2_ref[...])                                   # (M, 640)
    # ConvTranspose2d(1,1,4)  (no ReLU)
    cp3.wait()
    h = dense(h.astype(jnp.bfloat16), q3_vmem[...].astype(jnp.bfloat16),
              c3_ref[...], s3_ref[...], relu=False)                       # (M, 896)
    o_ref[...] = h


# --------------------------------- forward ----------------------------------

def decoder_forward(z, p):
    """Matches DecoderCNN.forward: (B, dim_z) -> (B, 28*28)."""
    B, dz = z.shape
    mpad = max(16, _rup(B, 16))                  # bf16 packs 2 rows / sublane
    zp = jnp.zeros((mpad, dz), jnp.float32).at[:B, :].set(z.astype(jnp.float32))

    vmem = pltpu.MemorySpace.VMEM
    args = (zp, p["w1"], p["b1"], p["w2"], p["b2"],
            p["q1"], p["s1"], p["c1"],
            p["q2"], p["s2"], p["c2"],
            p["q3"], p["s3"], p["c3"])
    hbm_idx = {5, 8, 11}                         # q1, q2, q3: manual DMA
    in_specs = [pl.BlockSpec(memory_space=pl.ANY) if i in hbm_idx
                else pl.BlockSpec(memory_space=vmem)
                for i in range(len(args))]

    out = pl.pallas_call(
        _decoder_kernel,
        out_shape=jax.ShapeDtypeStruct((mpad, p["dims"]["N5"]), jnp.float32),
        in_specs=in_specs,
        out_specs=pl.BlockSpec(memory_space=vmem),
        scratch_shapes=[
            pltpu.VMEM(p["q1"].shape, jnp.int8),
            pltpu.VMEM(p["q2"].shape, jnp.int8),
            pltpu.VMEM(p["q3"].shape, jnp.int8),
            pltpu.SemaphoreType.DMA((3,)),
        ],
        compiler_params=pltpu.CompilerParams(
            # Explicit cap (keep it): total footprint is ~6 MiB, well inside
            # v5e's 16 MiB default scope and v7x's 64 MiB physical VMEM.
            vmem_limit_bytes=32 << 20),
    )(*args)
    return out[:B, :28 * 28]


# ------------------------------ pure-JAX reference ---------------------------

def decoder_reference(z, p):
    """Same math as the kernel (f32 layer 1; bf16 operands + int8/scale convT
    weights + f32 accumulate for layers 2-5), without Pallas, for checking."""
    h = jnp.maximum(
        jnp.dot(z, p["w1"], preferred_element_type=jnp.float32) + p["b1"], 0.0)

    def qdense(x, w, bias, scale=None, relu=True):
        acc = jnp.dot(x.astype(jnp.bfloat16), w.astype(jnp.bfloat16),
                      preferred_element_type=jnp.float32)
        if scale is not None:
            acc = acc * scale
        acc = acc + bias
        return jnp.maximum(acc, 0.0) if relu else acc

    h = qdense(h, p["w2"], p["b2"])
    h = qdense(h, p["q1"], p["c1"], p["s1"])
    h = qdense(h, p["q2"], p["c2"], p["s2"])
    h = qdense(h, p["q3"], p["c3"], p["s3"], relu=False)
    return h[:, :28 * 28]


if __name__ == "__main__":
    dim_z = 8
    batch = 2
    key = jax.random.PRNGKey(0)
    pkey, zkey = jax.random.split(key)
    params = build_params(pkey, dim_z)
    z = jax.random.normal(zkey, (batch, dim_z), jnp.float32)

    out = jax.block_until_ready(decoder_forward(z, params))

    assert out.shape == (batch, 28 * 28)
    assert bool(jnp.all(jnp.isfinite(out)))

    ref = jax.block_until_ready(decoder_reference(z, params))
    np.testing.assert_allclose(np.asarray(out), np.asarray(ref), rtol=1e-2, atol=1e-2)

    print("KERNEL_OK")
</pallas_src>

<mosaic_0001>
module attributes {stable_mosaic.version = 11 : i64} {
  func.func @_decoder_kernel(%arg0: memref<16x8xf32, #tpu.memory_space<vmem>>, %arg1: memref<8x384xf32, #tpu.memory_space<vmem>>, %arg2: memref<1x384xf32, #tpu.memory_space<vmem>>, %arg3: memref<384x512xbf16, #tpu.memory_space<vmem>>, %arg4: memref<1x512xf32, #tpu.memory_space<vmem>>, %arg5: memref<512x2048xi8, #tpu.memory_space<any>>, %arg6: memref<1x2048xf32, #tpu.memory_space<vmem>>, %arg7: memref<1x2048xf32, #tpu.memory_space<vmem>>, %arg8: memref<2048x640xi8, #tpu.memory_space<any>>, %arg9: memref<1x640xf32, #tpu.memory_space<vmem>>, %arg10: memref<1x640xf32, #tpu.memory_space<vmem>>, %arg11: memref<640x896xi8, #tpu.memory_space<any>>, %arg12: memref<1x896xf32, #tpu.memory_space<vmem>>, %arg13: memref<1x896xf32, #tpu.memory_space<vmem>>, %arg14: memref<16x896xf32, #tpu.memory_space<vmem>>, %arg15: memref<512x2048xi8, #tpu.memory_space<vmem>>, %arg16: memref<2048x640xi8, #tpu.memory_space<vmem>>, %arg17: memref<640x896xi8, #tpu.memory_space<vmem>>, %arg18: memref<3x!tpu.dma_semaphore, #tpu.memory_space<semaphore_mem>>) attributes {dimension_semantics = [], scalar_prefetch = 0 : i64, scratch_operands = 4 : i64, tpu.core_type = #tpu.core_type<tc>} {
    %c0_i32 = arith.constant 0 : i32
    %0 = tpu.memref_slice %arg18[%c0_i32] : memref<3x!tpu.dma_semaphore, #tpu.memory_space<semaphore_mem>> -> memref<1x!tpu.dma_semaphore, #tpu.memory_space<semaphore_mem>>
    %1 = tpu.memref_squeeze %0 : memref<1x!tpu.dma_semaphore, #tpu.memory_space<semaphore_mem>> -> memref<!tpu.dma_semaphore, #tpu.memory_space<semaphore_mem>>
    tpu.enqueue_dma source(%arg5 : memref<512x2048xi8, #tpu.memory_space<any>>) target(%arg15 : memref<512x2048xi8, #tpu.memory_space<vmem>>) target_semaphore(%1 : memref<!tpu.dma_semaphore, #tpu.memory_space<semaphore_mem>>)
    %c1_i32 = arith.constant 1 : i32
    %2 = tpu.memref_slice %arg18[%c1_i32] : memref<3x!tpu.dma_semaphore, #tpu.memory_space<semaphore_mem>> -> memref<1x!tpu.dma_semaphore, #tpu.memory_space<semaphore_mem>>
    %3 = tpu.memref_squeeze %2 : memref<1x!tpu.dma_semaphore, #tpu.memory_space<semaphore_mem>> -> memref<!tpu.dma_semaphore, #tpu.memory_space<semaphore_mem>>
    tpu.enqueue_dma source(%arg8 : memref<2048x640xi8, #tpu.memory_space<any>>) target(%arg16 : memref<2048x640xi8, #tpu.memory_space<vmem>>) target_semaphore(%3 : memref<!tpu.dma_semaphore, #tpu.memory_space<semaphore_mem>>)
    %c2_i32 = arith.constant 2 : i32
    %4 = tpu.memref_slice %arg18[%c2_i32] : memref<3x!tpu.dma_semaphore, #tpu.memory_space<semaphore_mem>> -> memref<1x!tpu.dma_semaphore, #tpu.memory_space<semaphore_mem>>
    %5 = tpu.memref_squeeze %4 : memref<1x!tpu.dma_semaphore, #tpu.memory_space<semaphore_mem>> -> memref<!tpu.dma_semaphore, #tpu.memory_space<semaphore_mem>>
    tpu.enqueue_dma source(%arg11 : memref<640x896xi8, #tpu.memory_space<any>>) target(%arg17 : memref<640x896xi8, #tpu.memory_space<vmem>>) target_semaphore(%5 : memref<!tpu.dma_semaphore, #tpu.memory_space<semaphore_mem>>)
    %c0 = arith.constant 0 : index
    %c0_0 = arith.constant 0 : index
    %6 = vector.load %arg0[%c0, %c0_0] : memref<16x8xf32, #tpu.memory_space<vmem>>, vector<16x8xf32>
    %c0_1 = arith.constant 0 : index
    %c0_2 = arith.constant 0 : index
    %7 = vector.load %arg1[%c0_1, %c0_2] : memref<8x384xf32, #tpu.memory_space<vmem>>, vector<8x384xf32>
    %c0_3 = arith.constant 0 : index
    %c0_4 = arith.constant 0 : index
    %8 = vector.load %arg2[%c0_3, %c0_4] : memref<1x384xf32, #tpu.memory_space<vmem>>, vector<1x384xf32>
    %cst = arith.constant dense<0.000000e+00> : vector<16x384xf32>
    %9 = tpu.matmul %6, %7, %cst {dimension_numbers = #tpu.dot_dimension_numbers<[1], [0], [0], [1], [0, 0, 1, 1], [], []>} : vector<16x8xf32>, vector<8x384xf32>, vector<16x384xf32> -> vector<16x384xf32>
    %10 = vector.broadcast %8 : vector<1x384xf32> to vector<16x384xf32>
    %11 = arith.addf %9, %10 : vector<16x384xf32>
    %cst_5 = arith.constant 0.000000e+00 : f32
    %12 = vector.broadcast %cst_5 : f32 to vector<16x384xf32>
    %13 = arith.maximumf %11, %12 : vector<16x384xf32>
    %14 = arith.truncf %13 : vector<16x384xf32> to vector<16x384xbf16>
    %c0_6 = arith.constant 0 : index
    %c0_7 = arith.constant 0 : index
    %15 = vector.load %arg3[%c0_6, %c0_7] : memref<384x512xbf16, #tpu.memory_space<vmem>>, vector<384x512xbf16>
    %c0_8 = arith.constant 0 : index
    %c0_9 = arith.constant 0 : index
    %16 = vector.load %arg4[%c0_8, %c0_9] : memref<1x512xf32, #tpu.memory_space<vmem>>, vector<1x512xf32>
    %cst_10 = arith.constant dense<0.000000e+00> : vector<16x512xf32>
    %17 = tpu.matmul %14, %15, %cst_10 {dimension_numbers = #tpu.dot_dimension_numbers<[1], [0], [0], [1], [0, 0, 1, 1], [], []>} : vector<16x384xbf16>, vector<384x512xbf16>, vector<16x512xf32> -> vector<16x512xf32>
    %18 = vector.broadcast %16 : vector<1x512xf32> to vector<16x512xf32>
    %19 = arith.addf %17, %18 : vector<16x512xf32>
    %cst_11 = arith.constant 0.000000e+00 : f32
    %20 = vector.broadcast %cst_11 : f32 to vector<16x512xf32>
    %21 = arith.maximumf %19, %20 : vector<16x512xf32>
    %c0_i32_12 = arith.constant 0 : i32
    %22 = tpu.memref_slice %arg18[%c0_i32_12] : memref<3x!tpu.dma_semaphore, #tpu.memory_space<semaphore_mem>> -> memref<1x!tpu.dma_semaphore, #tpu.memory_space<semaphore_mem>>
    %23 = tpu.memref_squeeze %22 : memref<1x!tpu.dma_semaphore, #tpu.memory_space<semaphore_mem>> -> memref<!tpu.dma_semaphore, #tpu.memory_space<semaphore_mem>>
    tpu.wait_dma2 semaphore(%23 : memref<!tpu.dma_semaphore, #tpu.memory_space<semaphore_mem>>) src(%arg5 : memref<512x2048xi8, #tpu.memory_space<any>>) dst(%arg15 : memref<512x2048xi8, #tpu.memory_space<vmem>>)
    %24 = arith.truncf %21 : vector<16x512xf32> to vector<16x512xbf16>
    %c0_13 = arith.constant 0 : index
    %c0_14 = arith.constant 0 : index
    %25 = vector.load %arg15[%c0_13, %c0_14] : memref<512x2048xi8, #tpu.memory_space<vmem>>, vector<512x2048xi8>
    %26 = arith.sitofp %25 : vector<512x2048xi8> to vector<512x2048xbf16>
    %c0_15 = arith.constant 0 : index
    %c0_16 = arith.constant 0 : index
    %27 = vector.load %arg7[%c0_15, %c0_16] : memref<1x2048xf32, #tpu.memory_space<vmem>>, vector<1x2048xf32>
    %c0_17 = arith.constant 0 : index
    %c0_18 = arith.constant 0 : index
    %28 = vector.load %arg6[%c0_17, %c0_18] : memref<1x2048xf32, #tpu.memory_space<vmem>>, vector<1x2048xf32>
    %cst_19 = arith.constant dense<0.000000e+00> : vector<16x2048xf32>
    %29 = tpu.matmul %24, %26, %cst_19 {dimension_numbers = #tpu.dot_dimension_numbers<[1], [0], [0], [1], [0, 0, 1, 1], [], []>} : vector<16x512xbf16>, vector<512x2048xbf16>, vector<16x2048xf32> -> vector<16x2048xf32>
    %30 = vector.broadcast %28 : vector<1x2048xf32> to vector<16x2048xf32>
    %31 = arith.mulf %29, %30 : vector<16x2048xf32>
    %32 = vector.broadcast %27 : vector<1x2048xf32> to vector<16x2048xf32>
    %33 = arith.addf %31, %32 : vector<16x2048xf32>
    %cst_20 = arith.constant 0.000000e+00 : f32
    %34 = vector.broadcast %cst_20 : f32 to vector<16x2048xf32>
    %35 = arith.maximumf %33, %34 : vector<16x2048xf32>
    %c1_i32_21 = arith.constant 1 : i32
    %36 = tpu.memref_slice %arg18[%c1_i32_21] : memref<3x!tpu.dma_semaphore, #tpu.memory_space<semaphore_mem>> -> memref<1x!tpu.dma_semaphore, #tpu.memory_space<semaphore_mem>>
    %37 = tpu.memref_squeeze %36 : memref<1x!tpu.dma_semaphore, #tpu.memory_space<semaphore_mem>> -> memref<!tpu.dma_semaphore, #tpu.memory_space<semaphore_mem>>
    tpu.wait_dma2 semaphore(%37 : memref<!tpu.dma_semaphore, #tpu.memory_space<semaphore_mem>>) src(%arg8 : memref<2048x640xi8, #tpu.memory_space<any>>) dst(%arg16 : memref<2048x640xi8, #tpu.memory_space<vmem>>)
    %38 = arith.truncf %35 : vector<16x2048xf32> to vector<16x2048xbf16>
    %c0_22 = arith.constant 0 : index
    %c0_23 = arith.constant 0 : index
    %39 = vector.load %arg16[%c0_22, %c0_23] : memref<2048x640xi8, #tpu.memory_space<vmem>>, vector<2048x640xi8>
    %40 = arith.sitofp %39 : vector<2048x640xi8> to vector<2048x640xbf16>
    %c0_24 = arith.constant 0 : index
    %c0_25 = arith.constant 0 : index
    %41 = vector.load %arg10[%c0_24, %c0_25] : memref<1x640xf32, #tpu.memory_space<vmem>>, vector<1x640xf32>
    %c0_26 = arith.constant 0 : index
    %c0_27 = arith.constant 0 : index
    %42 = vector.load %arg9[%c0_26, %c0_27] : memref<1x640xf32, #tpu.memory_space<vmem>>, vector<1x640xf32>
    %cst_28 = arith.constant dense<0.000000e+00> : vector<16x640xf32>
    %43 = tpu.matmul %38, %40, %cst_28 {dimension_numbers = #tpu.dot_dimension_numbers<[1], [0], [0], [1], [0, 0, 1, 1], [], []>} : vector<16x2048xbf16>, vector<2048x640xbf16>, vector<16x640xf32> -> vector<16x640xf32>
    %44 = vector.broadcast %42 : vector<1x640xf32> to vector<16x640xf32>
    %45 = arith.mulf %43, %44 : vector<16x640xf32>
    %46 = vector.broadcast %41 : vector<1x640xf32> to vector<16x640xf32>
    %47 = arith.addf %45, %46 : vector<16x640xf32>
    %cst_29 = arith.constant 0.000000e+00 : f32
    %48 = vector.broadcast %cst_29 : f32 to vector<16x640xf32>
    %49 = arith.maximumf %47, %48 : vector<16x640xf32>
    %c2_i32_30 = arith.constant 2 : i32
    %50 = tpu.memref_slice %arg18[%c2_i32_30] : memref<3x!tpu.dma_semaphore, #tpu.memory_space<semaphore_mem>> -> memref<1x!tpu.dma_semaphore, #tpu.memory_space<semaphore_mem>>
    %51 = tpu.memref_squeeze %50 : memref<1x!tpu.dma_semaphore, #tpu.memory_space<semaphore_mem>> -> memref<!tpu.dma_semaphore, #tpu.memory_space<semaphore_mem>>
    tpu.wait_dma2 semaphore(%51 : memref<!tpu.dma_semaphore, #tpu.memory_space<semaphore_mem>>) src(%arg11 : memref<640x896xi8, #tpu.memory_space<any>>) dst(%arg17 : memref<640x896xi8, #tpu.memory_space<vmem>>)
    %52 = arith.truncf %49 : vector<16x640xf32> to vector<16x640xbf16>
    %c0_31 = arith.constant 0 : index
    %c0_32 = arith.constant 0 : index
    %53 = vector.load %arg17[%c0_31, %c0_32] : memref<640x896xi8, #tpu.memory_space<vmem>>, vector<640x896xi8>
    %54 = arith.sitofp %53 : vector<640x896xi8> to vector<640x896xbf16>
    %c0_33 = arith.constant 0 : index
    %c0_34 = arith.constant 0 : index
    %55 = vector.load %arg13[%c0_33, %c0_34] : memref<1x896xf32, #tpu.memory_space<vmem>>, vector<1x896xf32>
    %c0_35 = arith.constant 0 : index
    %c0_36 = arith.constant 0 : index
    %56 = vector.load %arg12[%c0_35, %c0_36] : memref<1x896xf32, #tpu.memory_space<vmem>>, vector<1x896xf32>
    %cst_37 = arith.constant dense<0.000000e+00> : vector<16x896xf32>
    %57 = tpu.matmul %52, %54, %cst_37 {dimension_numbers = #tpu.dot_dimension_numbers<[1], [0], [0], [1], [0, 0, 1, 1], [], []>} : vector<16x640xbf16>, vector<640x896xbf16>, vector<16x896xf32> -> vector<16x896xf32>
    %58 = vector.broadcast %56 : vector<1x896xf32> to vector<16x896xf32>
    %59 = arith.mulf %57, %58 : vector<16x896xf32>
    %60 = vector.broadcast %55 : vector<1x896xf32> to vector<16x896xf32>
    %61 = arith.addf %59, %60 : vector<16x896xf32>
    %c0_38 = arith.constant 0 : index
    %c0_39 = arith.constant 0 : index
    %62 = vector.load %arg14[%c0_38, %c0_39] : memref<16x896xf32, #tpu.memory_space<vmem>>, vector<16x896xf32>
    tpu.vector_store %arg14[%c0_38, %c0_39], %61 {strides = array<i32>} : memref<16x896xf32, #tpu.memory_space<vmem>>, vector<16x896xf32>,
    return
  }
}

</mosaic_0001>

<llo_original>
// kernel: tpu_custom_call.1
$region0: #{tpu_custom_call.1}
  #allocation0 [shape = 'u32[]', space=smem, size = 0x4, offset = 0x4, fixed_abs, tag = 'smem constant byte address 0x4 - core index']
  #allocation1 [shape = 'u32[144,128]{1,0:T(1,128)}', space=vmem, size = 0x12000, scoped, tag = 'internal scratch']
  #allocation2 [shape = 's8[512,2048]{1,0:T(32,128)(4,1)}', space=vmem, size = 0x100000, scoped, tag = 'scratch operand']
  #allocation3 [shape = 's8[2048,640]{1,0:T(32,128)(4,1)}', space=vmem, size = 0x140000, scoped, tag = 'scratch operand']
  #allocation4 [shape = 's8[640,896]{1,0:T(32,128)(4,1)}', space=vmem, size = 0x8c000, scoped, tag = 'scratch operand']
  #allocation5 [shape = 's32[3]{0}', space=sflag, size = 0xc, scoped, tag = 'scratch operand']
  #allocation24 [shape = 's32[]', space=sflag, size = 0x4, offset = 0, fixed_abs, tag = 'sflag constant byte address 0x0 - dummy sync flag']
  #allocation25 [shape = 's32[]', space=sflag, size = 0x4, offset = 0, fixed_abs, tag = 'sflag constant byte address 0x0 - dummy sync flag']
  #allocation26 [shape = 'u32[]', space=smem, size = 0x4, offset = 0x44, fixed_abs, tag = 'smem constant byte address 0x44 - assertion arg 0']
  #allocation27 [shape = 'u32[]', space=smem, size = 0x4, offset = 0x48, fixed_abs, tag = 'smem constant byte address 0x48 - assertion arg 1']
  #allocation28 [shape = 's32[]', space=sflag, size = 0x4, offset = 0, fixed_abs, tag = 'sflag constant byte address 0x0 - dummy sync flag']
  #allocation29 [shape = 's32[]', space=sflag, size = 0x4, offset = 0, fixed_abs, tag = 'sflag constant byte address 0x0 - dummy sync flag']
  #allocation30 [shape = 's32[]', space=sflag, size = 0x4, offset = 0, fixed_abs, tag = 'sflag constant byte address 0x0 - dummy sync flag']
  #allocation31 [shape = 's32[]', space=sflag, size = 0x4, offset = 0, fixed_abs, tag = 'sflag constant byte address 0x0 - dummy sync flag']
  %s0 = inlined_call_operand.vmem [shape: f32[16,8], index: 0, kind: input, shape index: {}]
  %s1 = inlined_call_operand.hbm [shape: f32[8,384], index: 1, kind: input, shape index: {}]
  %s2 = inlined_call_operand.hbm [shape: f32[1,384], index: 2, kind: input, shape index: {}]
  %s3 = inlined_call_operand.hbm [shape: bf16[384,512], index: 3, kind: input, shape index: {}]
  %s4 = inlined_call_operand.hbm [shape: f32[1,512], index: 4, kind: input, shape index: {}]
  %s5 = inlined_call_operand.hbm [shape: s8[512,2048], index: 5, kind: input, shape index: {}]
  %s6 = inlined_call_operand.hbm [shape: f32[1,2048], index: 6, kind: input, shape index: {}]
  %s7 = inlined_call_operand.hbm [shape: f32[1,2048], index: 7, kind: input, shape index: {}]
  %s8 = inlined_call_operand.hbm [shape: s8[2048,640], index: 8, kind: input, shape index: {}]
  %s9 = inlined_call_operand.hbm [shape: f32[1,640], index: 9, kind: input, shape index: {}]
  %s10 = inlined_call_operand.hbm [shape: f32[1,640], index: 10, kind: input, shape index: {}]
  %s11 = inlined_call_operand.hbm [shape: s8[640,896], index: 11, kind: input, shape index: {}]
  %s12 = inlined_call_operand.hbm [shape: f32[1,896], index: 12, kind: input, shape index: {}]
  %s13 = inlined_call_operand.hbm [shape: f32[1,896], index: 13, kind: input, shape index: {}]
  %s14 = inlined_call_operand.hbm [shape: f32[16,896], index: 14, kind: output, shape index: {}]
  %s15 = sld [smem:[#allocation0]]
  $region106: #{tpu_custom_call.1} parent=0
    _
  %s17 = ssub.s32 1, %s15
  %s18 = scalar_select 0, %s17, %s15
  $region1: #{tpu_custom_call.1} parent=0
    #allocation6 [shape = 'u8[12288]{0}', space=vmem, size = 0x3000, scoped, tag = 'input window, operand 1, single buffered']
    #allocation7 [shape = 's32[1]{0}', space=sflag, size = 0x4, scoped, tag = 'scoped memory for tpu_custom_call.1']
    #allocation8 [shape = 's32[1]{0}', space=sflag, size = 0x4, scoped, tag = 'scoped memory for tpu_custom_call.1']
    #allocation9 [shape = 'u8[1536]{0}', space=vmem, size = 0x800, scoped, tag = 'input window, operand 2, single buffered']
    #allocation10 [shape = 's32[1]{0}', space=sflag, size = 0x4, scoped, tag = 'scoped memory for tpu_custom_call.1']
    #allocation11 [shape = 'u8[393216]{0}', space=vmem, size = 0x60000, scoped, tag = 'input window, operand 3, single buffered']
    #allocation12 [shape = 'u8[2048]{0}', space=vmem, size = 0x800, scoped, tag = 'input window, operand 4, single buffered']
    #allocation13 [shape = 's32[1]{0}', space=sflag, size = 0x4, scoped, tag = 'scoped memory for tpu_custom_call.1']
    #allocation14 [shape = 'u8[8192]{0}', space=vmem, size = 0x2000, scoped, tag = 'input window, operand 6, single buffered']
    #allocation15 [shape = 'u8[8192]{0}', space=vmem, size = 0x2000, scoped, tag = 'input window, operand 7, single buffered']
    #allocation16 [shape = 's32[1]{0}', space=sflag, size = 0x4, scoped, tag = 'scoped memory for tpu_custom_call.1']
    #allocation17 [shape = 'u8[2560]{0}', space=vmem, size = 0xc00, scoped, tag = 'input window, operand 9, single buffered']
    #allocation18 [shape = 'u8[2560]{0}', space=vmem, size = 0xc00, scoped, tag = 'input window, operand 10, single buffered']
    #allocation19 [shape = 's32[1]{0}', space=sflag, size = 0x4, scoped, tag = 'scoped memory for tpu_custom_call.1']
    #allocation20 [shape = 'u8[3584]{0}', space=vmem, size = 0x1000, scoped, tag = 'input window, operand 12, single buffered']
    #allocation21 [shape = 'u8[3584]{0}', space=vmem, size = 0x1000, scoped, tag = 'input window, operand 13, single buffered']
    #allocation22 [shape = 's32[1]{0}', space=sflag, size = 0x4, scoped, tag = 'scoped memory for tpu_custom_call.1']
    #allocation23 [shape = 'u8[57344]{0}', space=vmem, size = 0xe000, scoped, tag = 'output window, operand 0, single buffered']
    %19 = vsyncpa [#allocation7], 0
    %20 = vsyncpa [#allocation10], 0
    %21 = vsyncpa [#allocation13], 0
    %22 = vsyncpa [#allocation16], 0
    %23 = vsyncpa [#allocation19], 0
    %24 = vsyncpa [#allocation22], 0
    %25 = vsyncpa [#allocation8], 0
    // Predicated region
    $region2: #{tpu_custom_call.1} parent=1 // pred_check
      _
    $region3: #{tpu_custom_call.1} parent=1 // pred_check_branch
      %27 = sbr.rel (0) target = $region5
    $region4: #{tpu_custom_call.1} parent=1 // pred_region
      _
    $region5: #{tpu_custom_call.1} parent=1 // pred_fallthru
      _
    // Predicated region
    $region6: #{tpu_custom_call.1} parent=1 // pred_check
      _
    $region7: #{tpu_custom_call.1} parent=1 // pred_check_branch
      %29 = sbr.rel (0) target = $region9
    $region8: #{tpu_custom_call.1} parent=1 // pred_region
      %s31 = ssub.s32 384, 384
      %32 = vsyncadd [#allocation7], %s31
      %s34 = sshll.u32 [#allocation6], 4
      %s35 = int_to_ptr.vmem [resolvable:$true] %s34
      %37 = dma.hbm_to_vmem [thread:$0]  %s1, 384, %s35, [#allocation7]
    $region9: #{tpu_custom_call.1} parent=1 // pred_fallthru
      _
    // Predicated region
    $region10: #{tpu_custom_call.1} parent=1 // pred_check
      _
    $region11: #{tpu_custom_call.1} parent=1 // pred_check_branch
      %39 = sbr.rel (0) target = $region13
    $region12: #{tpu_custom_call.1} parent=1 // pred_region
      %s41 = ssub.s32 48, 48
      %42 = vsyncadd [#allocation10], %s41
      %s44 = sshll.u32 [#allocation9], 4
      %s45 = int_to_ptr.vmem [resolvable:$true] %s44
      %47 = dma.hbm_to_vmem [thread:$0]  %s2, 48, %s45, [#allocation10]
    $region13: #{tpu_custom_call.1} parent=1 // pred_fallthru
      _
    // Predicated region
    $region14: #{tpu_custom_call.1} parent=1 // pred_check
      _
    $region15: #{tpu_custom_call.1} parent=1 // pred_check_branch
      %49 = sbr.rel (0) target = $region17
    $region16: #{tpu_custom_call.1} parent=1 // pred_region
      %s51 = ssub.s32 12288, 12288
      %52 = vsyncadd [#allocation10], %s51
      %s53 = sshll.u32 [#allocation11], 4
      %s54 = int_to_ptr.vmem [resolvable:$true] %s53
      %59 = dma.hbm_to_vmem [thread:$0]  %s3, 12288, %s54, [#allocation10], 256, 256, 16
    $region17: #{tpu_custom_call.1} parent=1 // pred_fallthru
      _
    // Predicated region
    $region18: #{tpu_custom_call.1} parent=1 // pred_check
      _
    $region19: #{tpu_custom_call.1} parent=1 // pred_check_branch
      %61 = sbr.rel (0) target = $region21
    $region20: #{tpu_custom_call.1} parent=1 // pred_region
      %s63 = ssub.s32 64, 64
      %64 = vsyncadd [#allocation13], %s63
      %s66 = sshll.u32 [#allocation12], 4
      %s67 = int_to_ptr.vmem [resolvable:$true] %s66
      %69 = dma.hbm_to_vmem [thread:$0]  %s4, 64, %s67, [#allocation13]
    $region21: #{tpu_custom_call.1} parent=1 // pred_fallthru
      _
    // Predicated region
    $region22: #{tpu_custom_call.1} parent=1 // pred_check
      _
    $region23: #{tpu_custom_call.1} parent=1 // pred_check_branch
      %71 = sbr.rel (0) target = $region25
    $region24: #{tpu_custom_call.1} parent=1 // pred_region
      %s73 = ssub.s32 256, 256
      %74 = vsyncadd [#allocation13], %s73
      %s76 = sshll.u32 [#allocation14], 4
      %s77 = int_to_ptr.vmem [resolvable:$true] %s76
      %79 = dma.hbm_to_vmem [thread:$0]  %s6, 256, %s77, [#allocation13]
    $region25: #{tpu_custom_call.1} parent=1 // pred_fallthru
      _
    // Predicated region
    $region26: #{tpu_custom_call.1} parent=1 // pred_check
      _
    $region27: #{tpu_custom_call.1} parent=1 // pred_check_branch
      %81 = sbr.rel (0) target = $region29
    $region28: #{tpu_custom_call.1} parent=1 // pred_region
      %s83 = ssub.s32 256, 256
      %84 = vsyncadd [#allocation16], %s83
      %s86 = sshll.u32 [#allocation15], 4
      %s87 = int_to_ptr.vmem [resolvable:$true] %s86
      %89 = dma.hbm_to_vmem [thread:$0]  %s7, 256, %s87, [#allocation16]
    $region29: #{tpu_custom_call.1} parent=1 // pred_fallthru
      _
    // Predicated region
    $region30: #{tpu_custom_call.1} parent=1 // pred_check
      _
    $region31: #{tpu_custom_call.1} parent=1 // pred_check_branch
      %91 = sbr.rel (0) target = $region33
    $region32: #{tpu_custom_call.1} parent=1 // pred_region
      %s93 = ssub.s32 80, 80
      %94 = vsyncadd [#allocation16], %s93
      %s96 = sshll.u32 [#allocation17], 4
      %s97 = int_to_ptr.vmem [resolvable:$true] %s96
      %99 = dma.hbm_to_vmem [thread:$0]  %s9, 80, %s97, [#allocation16]
    $region33: #{tpu_custom_call.1} parent=1 // pred_fallthru
      _
    // Predicated region
    $region34: #{tpu_custom_call.1} parent=1 // pred_check
      _
    $region35: #{tpu_custom_call.1} parent=1 // pred_check_branch
      %101 = sbr.rel (0) target = $region37
    $region36: #{tpu_custom_call.1} parent=1 // pred_region
      %s103 = ssub.s32 80, 80
      %104 = vsyncadd [#allocation19], %s103
      %s106 = sshll.u32 [#allocation18], 4
      %s107 = int_to_ptr.vmem [resolvable:$true] %s106
      %109 = dma.hbm_to_vmem [thread:$0]  %s10, 80, %s107, [#allocation19]
    $region37: #{tpu_custom_call.1} parent=1 // pred_fallthru
      _
    // Predicated region
    $region38: #{tpu_custom_call.1} parent=1 // pred_check
      _
    $region39: #{tpu_custom_call.1} parent=1 // pred_check_branch
      %111 = sbr.rel (0) target = $region41
    $region40: #{tpu_custom_call.1} parent=1 // pred_region
      %s113 = ssub.s32 112, 112
      %114 = vsyncadd [#allocation19], %s113
      %s116 = sshll.u32 [#allocation20], 4
      %s117 = int_to_ptr.vmem [resolvable:$true] %s116
      %119 = dma.hbm_to_vmem [thread:$0]  %s12, 112, %s117, [#allocation19]
    $region41: #{tpu_custom_call.1} parent=1 // pred_fallthru
      _
    // Predicated region
    $region42: #{tpu_custom_call.1} parent=1 // pred_check
      _
    $region43: #{tpu_custom_call.1} parent=1 // pred_check_branch
      %121 = sbr.rel (0) target = $region45
    $region44: #{tpu_custom_call.1} parent=1 // pred_region
      %s123 = ssub.s32 112, 112
      %124 = vsyncadd [#allocation22], %s123
      %s126 = sshll.u32 [#allocation21], 4
      %s127 = int_to_ptr.vmem [resolvable:$true] %s126
      %129 = dma.hbm_to_vmem [thread:$0]  %s13, 112, %s127, [#allocation22]
    $region45: #{tpu_custom_call.1} parent=1 // pred_fallthru
      _
    // Predicated region
    $region46: #{tpu_custom_call.1} parent=1 // pred_check
      _
    $region47: #{tpu_custom_call.1} parent=1 // pred_check_branch
      %131 = sbr.rel (0) target = $region49
    $region48: #{tpu_custom_call.1} parent=1 // pred_region
      %132 = dma.done [#allocation7], 384
    $region49: #{tpu_custom_call.1} parent=1 // pred_fallthru
      _
    // Predicated region
    $region50: #{tpu_custom_call.1} parent=1 // pred_check
      _
    $region51: #{tpu_custom_call.1} parent=1 // pred_check_branch
      %134 = sbr.rel (0) target = $region53
    $region52: #{tpu_custom_call.1} parent=1 // pred_region
      %135 = dma.done [#allocation10], 48
    $region53: #{tpu_custom_call.1} parent=1 // pred_fallthru
      _
    // Predicated region
    $region54: #{tpu_custom_call.1} parent=1 // pred_check
      _
    $region55: #{tpu_custom_call.1} parent=1 // pred_check_branch
      %137 = sbr.rel (0) target = $region57
    $region56: #{tpu_custom_call.1} parent=1 // pred_region
      %138 = dma.done [#allocation10], 12288
    $region57: #{tpu_custom_call.1} parent=1 // pred_fallthru
      _
    // Predicated region
    $region58: #{tpu_custom_call.1} parent=1 // pred_check
      _
    $region59: #{tpu_custom_call.1} parent=1 // pred_check_branch
      %140 = sbr.rel (0) target = $region61
    $region60: #{tpu_custom_call.1} parent=1 // pred_region
      %141 = dma.done [#allocation13], 64
    $region61: #{tpu_custom_call.1} parent=1 // pred_fallthru
      _
    // Predicated region
    $region62: #{tpu_custom_call.1} parent=1 // pred_check
      _
    $region63: #{tpu_custom_call.1} parent=1 // pred_check_branch
      %143 = sbr.rel (0) target = $region65
    $region64: #{tpu_custom_call.1} parent=1 // pred_region
      %144 = dma.done [#allocation13], 256
    $region65: #{tpu_custom_call.1} parent=1 // pred_fallthru
      _
    // Predicated region
    $region66: #{tpu_custom_call.1} parent=1 // pred_check
      _
    $region67: #{tpu_custom_call.1} parent=1 // pred_check_branch
      %146 = sbr.rel (0) target = $region69
    $region68: #{tpu_custom_call.1} parent=1 // pred_region
      %147 = dma.done [#allocation16], 256
    $region69: #{tpu_custom_call.1} parent=1 // pred_fallthru
      _
    // Predicated region
    $region70: #{tpu_custom_call.1} parent=1 // pred_check
      _
    $region71: #{tpu_custom_call.1} parent=1 // pred_check_branch
      %149 = sbr.rel (0) target = $region73
    $region72: #{tpu_custom_call.1} parent=1 // pred_region
      %150 = dma.done [#allocation16], 80
    $region73: #{tpu_custom_call.1} parent=1 // pred_fallthru
      _
    // Predicated region
    $region74: #{tpu_custom_call.1} parent=1 // pred_check
      _
    $region75: #{tpu_custom_call.1} parent=1 // pred_check_branch
      %152 = sbr.rel (0) target = $region77
    $region76: #{tpu_custom_call.1} parent=1 // pred_region
      %153 = dma.done [#allocation19], 80
    $region77: #{tpu_custom_call.1} parent=1 // pred_fallthru
      _
    // Predicated region
    $region78: #{tpu_custom_call.1} parent=1 // pred_check
      _
    $region79: #{tpu_custom_call.1} parent=1 // pred_check_branch
      %155 = sbr.rel (0) target = $region81
    $region80: #{tpu_custom_call.1} parent=1 // pred_region
      %156 = dma.done [#allocation19], 112
    $region81: #{tpu_custom_call.1} parent=1 // pred_fallthru
      _
    // Predicated region
    $region82: #{tpu_custom_call.1} parent=1 // pred_check
      _
    $region83: #{tpu_custom_call.1} parent=1 // pred_check_branch
      %158 = sbr.rel (0) target = $region85
    $region84: #{tpu_custom_call.1} parent=1 // pred_region
      %159 = dma.done [#allocation22], 112
    $region85: #{tpu_custom_call.1} parent=1 // pred_fallthru
      _
    // Predicated region
    $region86: #{tpu_custom_call.1} parent=1 // pred_check
      _
    $region87: #{tpu_custom_call.1} parent=1 // pred_check_branch
      %162 = sbr.rel target = $region89
    $region88: #{tpu_custom_call.1} parent=1 // pred_region
      %163 = sst [smem:[#allocation26]] [#allocation25]
      %164 = sst [smem:[#allocation27]] [#allocation24]
    $region89: #{tpu_custom_call.1} parent=1 // pred_fallthru
      _
    %166 = shalt.err (0)
    %s168 = sshll.u32 [#allocation2], 4
    %s169 = int_to_ptr.vmem [resolvable:$true] %s168
    %171 = dma.hbm_to_vmem [thread:$0]  %s5, 32768, %s169, [#allocation5]
    %s172 = scalar_lea.sflag [#allocation5], 1
    // Predicated region
    $region90: #{tpu_custom_call.1} parent=1 // pred_check
      _
    $region91: #{tpu_custom_call.1} parent=1 // pred_check_branch
      %174 = sbr.rel target = $region93
    $region92: #{tpu_custom_call.1} parent=1 // pred_region
      %175 = sst [smem:[#allocation26]] [#allocation29]
      %176 = sst [smem:[#allocation27]] [#allocation28]
    $region93: #{tpu_custom_call.1} parent=1 // pred_fallthru
      _
    %178 = shalt.err (0)
    %s180 = sshll.u32 [#allocation3], 4
    %s181 = int_to_ptr.vmem [resolvable:$true] %s180
    %183 = dma.hbm_to_vmem [thread:$0]  %s8, 40960, %s181, %s172
    %s184 = scalar_lea.sflag [#allocation5], 2
    // Predicated region
    $region94: #{tpu_custom_call.1} parent=1 // pred_check
      _
    $region95: #{tpu_custom_call.1} parent=1 // pred_check_branch
      %186 = sbr.rel target = $region97
    $region96: #{tpu_custom_call.1} parent=1 // pred_region
      %187 = sst [smem:[#allocation26]] [#allocation31]
      %188 = sst [smem:[#allocation27]] [#allocation30]
    $region97: #{tpu_custom_call.1} parent=1 // pred_fallthru
      _
    %190 = shalt.err (0)
    %s192 = sshll.u32 [#allocation4], 4
    %s193 = int_to_ptr.vmem [resolvable:$true] %s192
    %195 = dma.hbm_to_vmem [thread:$0]  %s11, 17920, %s193, %s184
    %v196 = vld [vmem:[%s0] sm:$0xff]
    %v197 = vld [vmem:[%s0 + $0x8] sm:$0xff]
    %v198 = vld [vmem:[#allocation6] sm:$0xff]
    %v199 = vld [vmem:[#allocation6 + $0x8] sm:$0xff]
    %v200 = vld [vmem:[#allocation6 + $0x10] sm:$0xff]
    %v201 = vld [vmem:[#allocation9] sm:$0x7]
    %v203 = vlaneseq
    %v204 = vshrl.u32 %v203, 7
    %v205 = vsub.s32 0, %v204
    %v206 = vrot.slane %v201, %v205
    %v207 = vlaneseq
    %v208 = vshrl.u32 %v207, 7
    %v209 = vsub.s32 1, %v208
    %v210 = vrot.slane %v201, %v209
    %v211 = vlaneseq
    %v212 = vshrl.u32 %v211, 7
    %v213 = vsub.s32 2, %v212
    %v214 = vrot.slane %v201, %v213
    %vm218 = vcmask 64512
    %v220 = vsel %vm218, %v196, 0
    %v223 = vsel %vm218, %v197, 0
    %225 = vmatprep.subr.mxu0 0.0
    %226 = vmatpush1.msra.mxu0 0.0
    %227 = vmatprep.subr.mxu0 0.0
    %228 = vmatpush1.msra.mxu0 0.0
    %229 = vmatprep.subr.mxu0 0.0
    %230 = vmatpush1.msra.mxu0 0.0
    %231 = vmatprep.subr.mxu0 0.0
    %232 = vmatpush1.msra.mxu0 0.0
    %233 = vmatprep.subr.mxu0 0.0
    %234 = vmatpush1.msra.mxu0 0.0
    %235 = vmatprep.subr.mxu0 0.0
    %236 = vmatpush1.msra.mxu0 0.0
    %237 = vmatprep.subr.mxu0 0.0
    %238 = vmatpush1.msra.mxu0 0.0
    %239 = vmatprep.subr.mxu0 0.0
    %240 = vmatpush1.msra.mxu0 0.0
    %241 = vmatprep.subr.mxu0 0.0
    %242 = vmatpush1.msra.mxu0 0.0
    %243 = vmatprep.subr.mxu0 0.0
    %244 = vmatpush1.msra.mxu0 0.0
    %245 = vmatprep.subr.mxu0 0.0
    %246 = vmatpush1.msra.mxu0 0.0
    %247 = vmatprep.subr.mxu0 0.0
    %248 = vmatpush1.msra.mxu0 0.0
    %249 = vmatprep.subr.mxu0 0.0
    %250 = vmatpush1.msra.mxu0 0.0
    %251 = vmatprep.subr.mxu0 0.0
    %252 = vmatpush1.msra.mxu0 0.0
    %253 = vmatprep.subr.mxu0 0.0
    %254 = vmatpush1.msra.mxu0 0.0
    %255 = vmatprep.subr.mxu0 %v199
    %256 = vmatpush1.msra.mxu0 %v198
    %257 = vmatprep.subr.mxu0 0.0
    %258 = vmatpush2.msra.mxu0 0.0
    %259 = vmatprep.subr.mxu0 0.0
    %260 = vmatpush2.msra.mxu0 0.0
    %261 = vmatprep.subr.mxu0 0.0
    %262 = vmatpush2.msra.mxu0 0.0
    %263 = vmatprep.subr.mxu0 0.0
    %264 = vmatpush2.msra.mxu0 0.0
    %265 = vmatprep.subr.mxu0 0.0
    %266 = vmatpush2.msra.mxu0 0.0
    %267 = vmatprep.subr.mxu0 0.0
    %268 = vmatpush2.msra.mxu0 0.0
    %269 = vmatprep.subr.mxu0 0.0
    %270 = vmatpush2.msra.mxu0 0.0
    %271 = vmatprep.subr.mxu0 0.0
    %272 = vmatpush2.msra.mxu0 0.0
    %273 = vmatprep.subr.mxu0 0.0
    %274 = vmatpush2.msra.mxu0 0.0
    %275 = vmatprep.subr.mxu0 0.0
    %276 = vmatpush2.msra.mxu0 0.0
    %277 = vmatprep.subr.mxu0 0.0
    %278 = vmatpush2.msra.mxu0 0.0
    %279 = vmatprep.subr.mxu0 0.0
    %280 = vmatpush2.msra.mxu0 0.0
    %281 = vmatprep.subr.mxu0 0.0
    %282 = vmatpush2.msra.mxu0 0.0
    %283 = vmatprep.subr.mxu0 0.0
    %284 = vmatpush2.msra.mxu0 0.0
    %285 = vmatprep.subr.mxu0 0.0
    %286 = vmatpush2.msra.mxu0 0.0
    %287 = vmatprep.subr.mxu0 0.0
    %288 = vmatpush2.msra.mxu0 0.0
    %289 = vmatprep.mubr.f32.mxu0 0.0
    %290 = vmatmul.mubr.f32.gmra.mxu0 %v220
    %v291 = vpop.f32.mrf.mxu0
    %v292 = vadd.f32 %v206, %v291
    %v293 = vpop.f32.mrf.mxu0
    %v294 = vadd.f32 %v210, %v293
    %295 = vmatprep.mubr.f32.mxu0 0.0
    %296 = vmatmul.mubr.f32.gmra.mxu0 %v223
    %v297 = vpop.f32.mrf.mxu0
    %v298 = vadd.f32 %v206, %v297
    %v299 = vpop.f32.mrf.mxu0
    %v300 = vadd.f32 %v210, %v299
    %301 = vdwg.mxu0
    %302 = vmatprep.subr.mxu0 0.0
    %303 = vmatpush1.msra.mxu0 0.0
    %304 = vmatprep.subr.mxu0 0.0
    %305 = vmatpush1.msra.mxu0 0.0
    %306 = vmatprep.subr.mxu0 0.0
    %307 = vmatpush1.msra.mxu0 0.0
    %308 = vmatprep.subr.mxu0 0.0
    %309 = vmatpush1.msra.mxu0 0.0
    %310 = vmatprep.subr.mxu0 0.0
    %311 = vmatpush1.msra.mxu0 0.0
    %312 = vmatprep.subr.mxu0 0.0
    %313 = vmatpush1.msra.mxu0 0.0
    %314 = vmatprep.subr.mxu0 0.0
    %315 = vmatpush1.msra.mxu0 0.0
    %316 = vmatprep.subr.mxu0 0.0
    %317 = vmatpush1.msra.mxu0 0.0
    %318 = vmatprep.subr.mxu0 0.0
    %319 = vmatpush1.msra.mxu0 0.0
    %320 = vmatprep.subr.mxu0 0.0
    %321 = vmatpush1.msra.mxu0 0.0
    %322 = vmatprep.subr.mxu0 0.0
    %323 = vmatpush1.msra.mxu0 0.0
    %324 = vmatprep.subr.mxu0 0.0
    %325 = vmatpush1.msra.mxu0 0.0
    %326 = vmatprep.subr.mxu0 0.0
    %327 = vmatpush1.msra.mxu0 0.0
    %328 = vmatprep.subr.mxu0 0.0
    %329 = vmatpush1.msra.mxu0 0.0
    %330 = vmatprep.subr.mxu0 0.0
    %331 = vmatpush1.msra.mxu0 0.0
    %332 = vmatprep.subr.mxu0 0.0
    %333 = vmatpush1.msra.mxu0 %v200
    %334 = vmatprep.subr.mxu0 0.0
    %335 = vmatpush2.msra.mxu0 0.0
    %336 = vmatprep.subr.mxu0 0.0
    %337 = vmatpush2.msra.mxu0 0.0
    %338 = vmatprep.subr.mxu0 0.0
    %339 = vmatpush2.msra.mxu0 0.0
    %340 = vmatprep.subr.mxu0 0.0
    %341 = vmatpush2.msra.mxu0 0.0
    %342 = vmatprep.subr.mxu0 0.0
    %343 = vmatpush2.msra.mxu0 0.0
    %344 = vmatprep.subr.mxu0 0.0
    %345 = vmatpush2.msra.mxu0 0.0
    %346 = vmatprep.subr.mxu0 0.0
    %347 = vmatpush2.msra.mxu0 0.0
    %348 = vmatprep.subr.mxu0 0.0
    %349 = vmatpush2.msra.mxu0 0.0
    %350 = vmatprep.subr.mxu0 0.0
    %351 = vmatpush2.msra.mxu0 0.0
    %352 = vmatprep.subr.mxu0 0.0
    %353 = vmatpush2.msra.mxu0 0.0
    %354 = vmatprep.subr.mxu0 0.0
    %355 = vmatpush2.msra.mxu0 0.0
    %356 = vmatprep.subr.mxu0 0.0
    %357 = vmatpush2.msra.mxu0 0.0
    %358 = vmatprep.subr.mxu0 0.0
    %359 = vmatpush2.msra.mxu0 0.0
    %360 = vmatprep.subr.mxu0 0.0
    %361 = vmatpush2.msra.mxu0 0.0
    %362 = vmatprep.subr.mxu0 0.0
    %363 = vmatpush2.msra.mxu0 0.0
    %364 = vmatprep.subr.mxu0 0.0
    %365 = vmatpush2.msra.mxu0 0.0
    %366 = vmatprep.mubr.f32.mxu0 0.0
    %367 = vmatmul.mubr.f32.gmra.mxu0 %v220
    %v368 = vpop.f32.mrf.mxu0
    %v369 = vadd.f32 %v214, %v368
    %v370 = vpop.f32.mrf.mxu0
    %371 = vmatprep.mubr.f32.mxu0 0.0
    %372 = vmatmul.mubr.f32.gmra.mxu0 %v223
    %v373 = vpop.f32.mrf.mxu0
    %v374 = vadd.f32 %v214, %v373
    %v375 = vpop.f32.mrf.mxu0
    %376 = vdwg.mxu0
    %v377 = vmax.f32 %v292, 0.0
    %v378 = vmax.f32 %v294, 0.0
    %v379 = vmax.f32 %v369, 0.0
    %v380 = vmax.f32 %v298, 0.0
    %v381 = vmax.f32 %v300, 0.0
    %v382 = vmax.f32 %v374, 0.0
    %v383 = vpack.c.bf16 %v380, %v377
    %v384 = vpack.c.bf16 %v381, %v378
    %v385 = vpack.c.bf16 %v382, %v379
    %v386 = vld [vmem:[#allocation11] sm:$0xff]
    %v387 = vld [vmem:[#allocation11 + $0x8] sm:$0xff]
    %v388 = vld [vmem:[#allocation11 + $0x10] sm:$0xff]
    %v389 = vld [vmem:[#allocation11 + $0x18] sm:$0xff]
    %v390 = vld [vmem:[#allocation11 + $0x20] sm:$0xff]
    %v391 = vld [vmem:[#allocation11 + $0x28] sm:$0xff]
    %v392 = vld [vmem:[#allocation11 + $0x30] sm:$0xff]
    %v393 = vld [vmem:[#allocation11 + $0x38] sm:$0xff]
    %v394 = vld [vmem:[#allocation11 + $0x40] sm:$0xff]
    %v395 = vld [vmem:[#allocation11 + $0x48] sm:$0xff]
    %v396 = vld [vmem:[#allocation11 + $0x50] sm:$0xff]
    %v397 = vld [vmem:[#allocation11 + $0x58] sm:$0xff]
    %v398 = vld [vmem:[#allocation11 + $0x60] sm:$0xff]
    %v399 = vld [vmem:[#allocation11 + $0x68] sm:$0xff]
    %v400 = vld [vmem:[#allocation11 + $0x70] sm:$0xff]
    %v401 = vld [vmem:[#allocation11 + $0x78] sm:$0xff]
    %v402 = vld [vmem:[#allocation11 + $0x80] sm:$0xff]
    %v403 = vld [vmem:[#allocation11 + $0x88] sm:$0xff]
    %v404 = vld [vmem:[#allocation11 + $0x90] sm:$0xff]
    %v405 = vld [vmem:[#allocation11 + $0x98] sm:$0xff]
    %v406 = vld [vmem:[#allocation11 + $0xa0] sm:$0xff]
    %v407 = vld [vmem:[#allocation11 + $0xa8] sm:$0xff]
    %v408 = vld [vmem:[#allocation11 + $0xb0] sm:$0xff]
    %v409 = vld [vmem:[#allocation11 + $0xb8] sm:$0xff]
    %v410 = vld [vmem:[#allocation11 + $0xc0] sm:$0xff]
    %v411 = vld [vmem:[#allocation11 + $0xc8] sm:$0xff]
    %v412 = vld [vmem:[#allocation11 + $0xd0] sm:$0xff]
    %v413 = vld [vmem:[#allocation11 + $0xd8] sm:$0xff]
    %v414 = vld [vmem:[#allocation11 + $0xe0] sm:$0xff]
    %v415 = vld [vmem:[#allocation11 + $0xe8] sm:$0xff]
    %v416 = vld [vmem:[#allocation11 + $0xf0] sm:$0xff]
    %v417 = vld [vmem:[#allocation11 + $0xf8] sm:$0xff]
    %v418 = vld [vmem:[#allocation11 + $0x100] sm:$0xff]
    %v419 = vld [vmem:[#allocation11 + $0x108] sm:$0xff]
    %v420 = vld [vmem:[#allocation11 + $0x110] sm:$0xff]
    %v421 = vld [vmem:[#allocation11 + $0x118] sm:$0xff]
    %v422 = vld [vmem:[#allocation11 + $0x120] sm:$0xff]
    %v423 = vld [vmem:[#allocation11 + $0x128] sm:$0xff]
    %v424 = vld [vmem:[#allocation11 + $0x130] sm:$0xff]
    %v425 = vld [vmem:[#allocation11 + $0x138] sm:$0xff]
    %v426 = vld [vmem:[#allocation11 + $0x140] sm:$0xff]
    %v427 = vld [vmem:[#allocation11 + $0x148] sm:$0xff]
    %v428 = vld [vmem:[#allocation11 + $0x150] sm:$0xff]
    %v429 = vld [vmem:[#allocation11 + $0x158] sm:$0xff]
    %v430 = vld [vmem:[#allocation11 + $0x160] sm:$0xff]
    %v431 = vld [vmem:[#allocation11 + $0x168] sm:$0xff]
    %v432 = vld [vmem:[#allocation11 + $0x170] sm:$0xff]
    %v433 = vld [vmem:[#allocation11 + $0x178] sm:$0xff]
    %v434 = vld [vmem:[#allocation11 + $0x180] sm:$0xff]
    %v435 = vld [vmem:[#allocation11 + $0x188] sm:$0xff]
    %v436 = vld [vmem:[#allocation11 + $0x190] sm:$0xff]
    %v437 = vld [vmem:[#allocation11 + $0x198] sm:$0xff]
    %v438 = vld [vmem:[#allocation11 + $0x1a0] sm:$0xff]
    %v439 = vld [vmem:[#allocation11 + $0x1a8] sm:$0xff]
    %v440 = vld [vmem:[#allocation11 + $0x1b0] sm:$0xff]
    %v441 = vld [vmem:[#allocation11 + $0x1b8] sm:$0xff]
    %v442 = vld [vmem:[#allocation11 + $0x1c0] sm:$0xff]
    %v443 = vld [vmem:[#allocation11 + $0x1c8] sm:$0xff]
    %v444 = vld [vmem:[#allocation11 + $0x1d0] sm:$0xff]
    %v445 = vld [vmem:[#allocation11 + $0x1d8] sm:$0xff]
    %v446 = vld [vmem:[#allocation11 + $0x1e0] sm:$0xff]
    %v447 = vld [vmem:[#allocation11 + $0x1e8] sm:$0xff]
    %v448 = vld [vmem:[#allocation11 + $0x1f0] sm:$0xff]
    %v449 = vld [vmem:[#allocation11 + $0x1f8] sm:$0xff]
    %v450 = vld [vmem:[#allocation11 + $0x200] sm:$0xff]
    %v451 = vld [vmem:[#allocation11 + $0x208] sm:$0xff]
    %v452 = vld [vmem:[#allocation11 + $0x210] sm:$0xff]
    %v453 = vld [vmem:[#allocation11 + $0x218] sm:$0xff]
    %v454 = vld [vmem:[#allocation11 + $0x220] sm:$0xff]
    %v455 = vld [vmem:[#allocation11 + $0x228] sm:$0xff]
    %v456 = vld [vmem:[#allocation11 + $0x230] sm:$0xff]
    %v457 = vld [vmem:[#allocation11 + $0x238] sm:$0xff]
    %v458 = vld [vmem:[#allocation11 + $0x240] sm:$0xff]
    %v459 = vld [vmem:[#allocation11 + $0x248] sm:$0xff]
    %v460 = vld [vmem:[#allocation11 + $0x250] sm:$0xff]
    %v461 = vld [vmem:[#allocation11 + $0x258] sm:$0xff]
    %v462 = vld [vmem:[#allocation11 + $0x260] sm:$0xff]
    %v463 = vld [vmem:[#allocation11 + $0x268] sm:$0xff]
    %v464 = vld [vmem:[#allocation11 + $0x270] sm:$0xff]
    %v465 = vld [vmem:[#allocation11 + $0x278] sm:$0xff]
    %v466 = vld [vmem:[#allocation11 + $0x280] sm:$0xff]
    %v467 = vld [vmem:[#allocation11 + $0x288] sm:$0xff]
    %v468 = vld [vmem:[#allocation11 + $0x290] sm:$0xff]
    %v469 = vld [vmem:[#allocation11 + $0x298] sm:$0xff]
    %v470 = vld [vmem:[#allocation11 + $0x2a0] sm:$0xff]
    %v471 = vld [vmem:[#allocation11 + $0x2a8] sm:$0xff]
    %v472 = vld [vmem:[#allocation11 + $0x2b0] sm:$0xff]
    %v473 = vld [vmem:[#allocation11 + $0x2b8] sm:$0xff]
    %v474 = vld [vmem:[#allocation11 + $0x2c0] sm:$0xff]
    %v475 = vld [vmem:[#allocation11 + $0x2c8] sm:$0xff]
    %v476 = vld [vmem:[#allocation11 + $0x2d0] sm:$0xff]
    %v477 = vld [vmem:[#allocation11 + $0x2d8] sm:$0xff]
    %v478 = vld [vmem:[#allocation11 + $0x2e0] sm:$0xff]
    %v479 = vld [vmem:[#allocation11 + $0x2e8] sm:$0xff]
    %v480 = vld [vmem:[#allocation11 + $0x2f0] sm:$0xff]
    %v481 = vld [vmem:[#allocation11 + $0x2f8] sm:$0xff]
    %v482 = vld [vmem:[#allocation12] sm:$0xf]
    %v484 = vlaneseq
    %v485 = vshrl.u32 %v484, 7
    %v486 = vsub.s32 0, %v485
    %v487 = vrot.slane %v482, %v486
    %v488 = vlaneseq
    %v489 = vshrl.u32 %v488, 7
    %v490 = vsub.s32 1, %v489
    %v491 = vrot.slane %v482, %v490
    %v492 = vlaneseq
    %v493 = vshrl.u32 %v492, 7
    %v494 = vsub.s32 2, %v493
    %v495 = vrot.slane %v482, %v494
    %v496 = vlaneseq
    %v497 = vshrl.u32 %v496, 7
    %v498 = vsub.s32 3, %v497
    %v499 = vrot.slane %v482, %v498
    %v600 = vunpack.c.l.b16 %v386
    %v601 = vunpack.c.h.b16 %v386
    %v602 = vunpack.c.l.b16 %v387
    %v603 = vunpack.c.h.b16 %v387
    %v604 = vunpack.c.l.b16 %v388
    %v605 = vunpack.c.h.b16 %v388
    %v606 = vunpack.c.l.b16 %v389
    %v607 = vunpack.c.h.b16 %v389
    %v608 = vunpack.c.l.b16 %v390
    %v609 = vunpack.c.h.b16 %v390
    %v610 = vunpack.c.l.b16 %v391
    %v611 = vunpack.c.h.b16 %v391
    %v612 = vunpack.c.l.b16 %v392
    %v613 = vunpack.c.h.b16 %v392
    %v614 = vunpack.c.l.b16 %v393
    %v615 = vunpack.c.h.b16 %v393
    %v616 = vunpack.c.l.b16 %v394
    %v617 = vunpack.c.h.b16 %v394
    %v618 = vunpack.c.l.b16 %v395
    %v619 = vunpack.c.h.b16 %v395
    %v620 = vunpack.c.l.b16 %v396
    %v621 = vunpack.c.h.b16 %v396
    %v622 = vunpack.c.l.b16 %v397
    %v623 = vunpack.c.h.b16 %v397
    %v624 = vunpack.c.l.b16 %v398
    %v625 = vunpack.c.h.b16 %v398
    %v626 = vunpack.c.l.b16 %v399
    %v627 = vunpack.c.h.b16 %v399
    %v628 = vunpack.c.l.b16 %v400
    %v629 = vunpack.c.h.b16 %v400
    %v630 = vunpack.c.l.b16 %v401
    %v631 = vunpack.c.h.b16 %v401
    %v632 = vunpack.c.l.b16 %v402
    %v633 = vunpack.c.h.b16 %v402
    %v634 = vunpack.c.l.b16 %v403
    %v635 = vunpack.c.h.b16 %v403
    %v636 = vunpack.c.l.b16 %v404
    %v637 = vunpack.c.h.b16 %v404
    %v638 = vunpack.c.l.b16 %v405
    %v639 = vunpack.c.h.b16 %v405
    %v640 = vunpack.c.l.b16 %v406
    %v641 = vunpack.c.h.b16 %v406
    %v642 = vunpack.c.l.b16 %v407
    %v643 = vunpack.c.h.b16 %v407
    %v644 = vunpack.c.l.b16 %v408
    %v645 = vunpack.c.h.b16 %v408
    %v646 = vunpack.c.l.b16 %v409
    %v647 = vunpack.c.h.b16 %v409
    %v648 = vunpack.c.l.b16 %v410
    %v649 = vunpack.c.h.b16 %v410
    %v650 = vunpack.c.l.b16 %v411
    %v651 = vunpack.c.h.b16 %v411
    %v652 = vunpack.c.l.b16 %v412
    %v653 = vunpack.c.h.b16 %v412
    %v654 = vunpack.c.l.b16 %v413
    %v655 = vunpack.c.h.b16 %v413
    %v656 = vunpack.c.l.b16 %v414
    %v657 = vunpack.c.h.b16 %v414
    %v658 = vunpack.c.l.b16 %v415
    %v659 = vunpack.c.h.b16 %v415
    %v660 = vunpack.c.l.b16 %v416
    %v661 = vunpack.c.h.b16 %v416
    %v662 = vunpack.c.l.b16 %v417
    %v663 = vunpack.c.h.b16 %v417
    %v664 = vunpack.c.l.b16 %v418
    %v665 = vunpack.c.h.b16 %v418
    %v666 = vunpack.c.l.b16 %v419
    %v667 = vunpack.c.h.b16 %v419
    %v668 = vunpack.c.l.b16 %v420
    %v669 = vunpack.c.h.b16 %v420
    %v670 = vunpack.c.l.b16 %v421
    %v671 = vunpack.c.h.b16 %v421
    %v672 = vunpack.c.l.b16 %v422
    %v673 = vunpack.c.h.b16 %v422
    %v674 = vunpack.c.l.b16 %v423
    %v675 = vunpack.c.h.b16 %v423
    %v676 = vunpack.c.l.b16 %v424
    %v677 = vunpack.c.h.b16 %v424
    %v678 = vunpack.c.l.b16 %v425
    %v679 = vunpack.c.h.b16 %v425
    %v680 = vunpack.c.l.b16 %v426
    %v681 = vunpack.c.h.b16 %v426
    %v682 = vunpack.c.l.b16 %v427
    %v683 = vunpack.c.h.b16 %v427
    %v684 = vunpack.c.l.b16 %v428
    %v685 = vunpack.c.h.b16 %v428
    %v686 = vunpack.c.l.b16 %v429
    %v687 = vunpack.c.h.b16 %v429
    %v688 = vunpack.c.l.b16 %v430
    %v689 = vunpack.c.h.b16 %v430
    %v690 = vunpack.c.l.b16 %v431
    %v691 = vunpack.c.h.b16 %v431
    %v692 = vunpack.c.l.b16 %v432
    %v693 = vunpack.c.h.b16 %v432
    %v694 = vunpack.c.l.b16 %v433
    %v695 = vunpack.c.h.b16 %v433
    %v696 = vunpack.c.l.b16 %v434
    %v697 = vunpack.c.h.b16 %v434
    %v698 = vunpack.c.l.b16 %v435
    %v699 = vunpack.c.h.b16 %v435
    %v700 = vunpack.c.l.b16 %v436
    %v701 = vunpack.c.h.b16 %v436
    %v702 = vunpack.c.l.b16 %v437
    %v703 = vunpack.c.h.b16 %v437
    %v704 = vunpack.c.l.b16 %v438
    %v705 = vunpack.c.h.b16 %v438
    %v706 = vunpack.c.l.b16 %v439
    %v707 = vunpack.c.h.b16 %v439
    %v708 = vunpack.c.l.b16 %v440
    %v709 = vunpack.c.h.b16 %v440
    %v710 = vunpack.c.l.b16 %v441
    %v711 = vunpack.c.h.b16 %v441
    %v712 = vunpack.c.l.b16 %v442
    %v713 = vunpack.c.h.b16 %v442
    %v714 = vunpack.c.l.b16 %v443
    %v715 = vunpack.c.h.b16 %v443
    %v716 = vunpack.c.l.b16 %v444
    %v717 = vunpack.c.h.b16 %v444
    %v718 = vunpack.c.l.b16 %v445
    %v719 = vunpack.c.h.b16 %v445
    %v720 = vunpack.c.l.b16 %v446
    %v721 = vunpack.c.h.b16 %v446
    %v722 = vunpack.c.l.b16 %v447
    %v723 = vunpack.c.h.b16 %v447
    %v724 = vunpack.c.l.b16 %v448
    %v725 = vunpack.c.h.b16 %v448
    %v726 = vunpack.c.l.b16 %v449
    %v727 = vunpack.c.h.b16 %v449
    %v728 = vunpack.c.l.b16 %v450
    %v729 = vunpack.c.h.b16 %v450
    %v730 = vunpack.c.l.b16 %v451
    %v731 = vunpack.c.h.b16 %v451
    %v732 = vunpack.c.l.b16 %v452
    %v733 = vunpack.c.h.b16 %v452
    %v734 = vunpack.c.l.b16 %v453
    %v735 = vunpack.c.h.b16 %v453
    %v736 = vunpack.c.l.b16 %v454
    %v737 = vunpack.c.h.b16 %v454
    %v738 = vunpack.c.l.b16 %v455
    %v739 = vunpack.c.h.b16 %v455
    %v740 = vunpack.c.l.b16 %v456
    %v741 = vunpack.c.h.b16 %v456
    %v742 = vunpack.c.l.b16 %v457
    %v743 = vunpack.c.h.b16 %v457
    %v744 = vunpack.c.l.b16 %v458
    %v745 = vunpack.c.h.b16 %v458
    %v746 = vunpack.c.l.b16 %v459
    %v747 = vunpack.c.h.b16 %v459
    %v748 = vunpack.c.l.b16 %v460
    %v749 = vunpack.c.h.b16 %v460
    %v750 = vunpack.c.l.b16 %v461
    %v751 = vunpack.c.h.b16 %v461
    %v752 = vunpack.c.l.b16 %v462
    %v753 = vunpack.c.h.b16 %v462
    %v754 = vunpack.c.l.b16 %v463
    %v755 = vunpack.c.h.b16 %v463
    %v756 = vunpack.c.l.b16 %v464
    %v757 = vunpack.c.h.b16 %v464
    %v758 = vunpack.c.l.b16 %v465
    %v759 = vunpack.c.h.b16 %v465
    %v760 = vunpack.c.l.b16 %v466
    %v761 = vunpack.c.h.b16 %v466
    %v762 = vunpack.c.l.b16 %v467
    %v763 = vunpack.c.h.b16 %v467
    %v764 = vunpack.c.l.b16 %v468
    %v765 = vunpack.c.h.b16 %v468
    %v766 = vunpack.c.l.b16 %v469
    %v767 = vunpack.c.h.b16 %v469
    %v768 = vunpack.c.l.b16 %v470
    %v769 = vunpack.c.h.b16 %v470
    %v770 = vunpack.c.l.b16 %v471
    %v771 = vunpack.c.h.b16 %v471
    %v772 = vunpack.c.l.b16 %v472
    %v773 = vunpack.c.h.b16 %v472
    %v774 = vunpack.c.l.b16 %v473
    %v775 = vunpack.c.h.b16 %v473
    %v776 = vunpack.c.l.b16 %v474
    %v777 = vunpack.c.h.b16 %v474
    %v778 = vunpack.c.l.b16 %v475
    %v779 = vunpack.c.h.b16 %v475
    %v780 = vunpack.c.l.b16 %v476
    %v781 = vunpack.c.h.b16 %v476
    %v782 = vunpack.c.l.b16 %v477
    %v783 = vunpack.c.h.b16 %v477
    %v784 = vunpack.c.l.b16 %v478
    %v785 = vunpack.c.h.b16 %v478
    %v786 = vunpack.c.l.b16 %v479
    %v787 = vunpack.c.h.b16 %v479
    %v788 = vunpack.c.l.b16 %v480
    %v789 = vunpack.c.h.b16 %v480
    %v790 = vunpack.c.l.b16 %v481
    %v791 = vunpack.c.h.b16 %v481
    %v792 = vpack.c.b16 %v604, %v600
    %v793 = vpack.c.b16 %v605, %v601
    %v794 = vpack.c.b16 %v606, %v602
    %v795 = vpack.c.b16 %v607, %v603
    %v796 = vpack.c.b16 %v612, %v608
    %v797 = vpack.c.b16 %v613, %v609
    %v798 = vpack.c.b16 %v614, %v610
    %v799 = vpack.c.b16 %v615, %v611
    %v800 = vpack.c.b16 %v620, %v616
    %v801 = vpack.c.b16 %v621, %v617
    %v802 = vpack.c.b16 %v622, %v618
    %v803 = vpack.c.b16 %v623, %v619
    %v804 = vpack.c.b16 %v628, %v624
    %v805 = vpack.c.b16 %v629, %v625
    %v806 = vpack.c.b16 %v630, %v626
    %v807 = vpack.c.b16 %v631, %v627
    %v808 = vpack.c.b16 %v636, %v632
    %v809 = vpack.c.b16 %v637, %v633
    %v810 = vpack.c.b16 %v638, %v634
    %v811 = vpack.c.b16 %v639, %v635
    %v812 = vpack.c.b16 %v644, %v640
    %v813 = vpack.c.b16 %v645, %v641
    %v814 = vpack.c.b16 %v646, %v642
    %v815 = vpack.c.b16 %v647, %v643
    %v816 = vpack.c.b16 %v652, %v648
    %v817 = vpack.c.b16 %v653, %v649
    %v818 = vpack.c.b16 %v654, %v650
    %v819 = vpack.c.b16 %v655, %v651
    %v820 = vpack.c.b16 %v660, %v656
    %v821 = vpack.c.b16 %v661, %v657
    %v822 = vpack.c.b16 %v662, %v658
    %v823 = vpack.c.b16 %v663, %v659
    %v824 = vpack.c.b16 %v668, %v664
    %v825 = vpack.c.b16 %v669, %v665
    %v826 = vpack.c.b16 %v670, %v666
    %v827 = vpack.c.b16 %v671, %v667
    %v828 = vpack.c.b16 %v676, %v672
    %v829 = vpack.c.b16 %v677, %v673
    %v830 = vpack.c.b16 %v678, %v674
    %v831 = vpack.c.b16 %v679, %v675
    %v832 = vpack.c.b16 %v684, %v680
    %v833 = vpack.c.b16 %v685, %v681
    %v834 = vpack.c.b16 %v686, %v682
    %v835 = vpack.c.b16 %v687, %v683
    %v836 = vpack.c.b16 %v692, %v688
    %v837 = vpack.c.b16 %v693, %v689
    %v838 = vpack.c.b16 %v694, %v690
    %v839 = vpack.c.b16 %v695, %v691
    %v840 = vpack.c.b16 %v700, %v696
    %v841 = vpack.c.b16 %v701, %v697
    %v842 = vpack.c.b16 %v702, %v698
    %v843 = vpack.c.b16 %v703, %v699
    %v844 = vpack.c.b16 %v708, %v704
    %v845 = vpack.c.b16 %v709, %v705
    %v846 = vpack.c.b16 %v710, %v706
    %v847 = vpack.c.b16 %v711, %v707
    %v848 = vpack.c.b16 %v716, %v712
    %v849 = vpack.c.b16 %v717, %v713
    %v850 = vpack.c.b16 %v718, %v714
    %v851 = vpack.c.b16 %v719, %v715
    %v852 = vpack.c.b16 %v724, %v720
    %v853 = vpack.c.b16 %v725, %v721
    %v854 = vpack.c.b16 %v726, %v722
    %v855 = vpack.c.b16 %v727, %v723
    %v856 = vpack.c.b16 %v732, %v728
    %v857 = vpack.c.b16 %v733, %v729
    %v858 = vpack.c.b16 %v734, %v730
    %v859 = vpack.c.b16 %v735, %v731
    %v860 = vpack.c.b16 %v740, %v736
    %v861 = vpack.c.b16 %v741, %v737
    %v862 = vpack.c.b16 %v742, %v738
    %v863 = vpack.c.b16 %v743, %v739
    %v864 = vpack.c.b16 %v748, %v744
    %v865 = vpack.c.b16 %v749, %v745
    %v866 = vpack.c.b16 %v750, %v746
    %v867 = vpack.c.b16 %v751, %v747
    %v868 = vpack.c.b16 %v756, %v752
    %v869 = vpack.c.b16 %v757, %v753
    %v870 = vpack.c.b16 %v758, %v754
    %v871 = vpack.c.b16 %v759, %v755
    %v872 = vpack.c.b16 %v764, %v760
    %v873 = vpack.c.b16 %v765, %v761
    %v874 = vpack.c.b16 %v766, %v762
    %v875 = vpack.c.b16 %v767, %v763
    %v876 = vpack.c.b16 %v772, %v768
    %v877 = vpack.c.b16 %v773, %v769
    %v878 = vpack.c.b16 %v774, %v770
    %v879 = vpack.c.b16 %v775, %v771
    %v880 = vpack.c.b16 %v780, %v776
    %v881 = vpack.c.b16 %v781, %v777
    %v882 = vpack.c.b16 %v782, %v778
    %v883 = vpack.c.b16 %v783, %v779
    %v884 = vpack.c.b16 %v788, %v784
    %v885 = vpack.c.b16 %v789, %v785
    %v886 = vpack.c.b16 %v790, %v786
    %v887 = vpack.c.b16 %v791, %v787
    %984 = vmatprep.subr.bf16.mxu0 %v821
    %985 = vmatpush1.bf16.msra.mxu0 %v820
    %986 = vmatprep.subr.bf16.mxu0 %v817
    %987 = vmatpush1.bf16.msra.mxu0 %v816
    %988 = vmatprep.subr.bf16.mxu0 %v813
    %989 = vmatpush1.bf16.msra.mxu0 %v812
    %990 = vmatprep.subr.bf16.mxu0 %v809
    %991 = vmatpush1.bf16.msra.mxu0 %v808
    %992 = vmatprep.subr.bf16.mxu0 %v805
    %993 = vmatpush1.bf16.msra.mxu0 %v804
    %994 = vmatprep.subr.bf16.mxu0 %v801
    %995 = vmatpush1.bf16.msra.mxu0 %v800
    %996 = vmatprep.subr.bf16.mxu0 %v797
    %997 = vmatpush1.bf16.msra.mxu0 %v796
    %998 = vmatprep.subr.bf16.mxu0 %v793
    %999 = vmatpush1.bf16.msra.mxu0 %v792
    %1000 = vmatprep.subr.bf16.mxu0 %v853
    %1001 = vmatpush2.bf16.msra.mxu0 %v852
    %1002 = vmatprep.subr.bf16.mxu0 %v849
    %1003 = vmatpush2.bf16.msra.mxu0 %v848
    %1004 = vmatprep.subr.bf16.mxu0 %v845
    %1005 = vmatpush2.bf16.msra.mxu0 %v844
    %1006 = vmatprep.subr.bf16.mxu0 %v841
    %1007 = vmatpush2.bf16.msra.mxu0 %v840
    %1008 = vmatprep.subr.bf16.mxu0 %v837
    %1009 = vmatpush2.bf16.msra.mxu0 %v836
    %1010 = vmatprep.subr.bf16.mxu0 %v833
    %1011 = vmatpush2.bf16.msra.mxu0 %v832
    %1012 = vmatprep.subr.bf16.mxu0 %v829
    %1013 = vmatpush2.bf16.msra.mxu0 %v828
    %1014 = vmatprep.subr.bf16.mxu0 %v825
    %1015 = vmatpush2.bf16.msra.mxu0 %v824
    %1016 = vmatprep.mubr.bf16.mxu0 %v384
    %1017 = vmatmul.mubr.bf16.gmra.mxu0 %v383
    %v1018 = vpop.f32.mrf.mxu0
    %v1019 = vadd.f32 %v487, %v1018
    %v1020 = vpop.f32.mrf.mxu0
    %v1021 = vadd.f32 %v491, %v1020
    %v1022 = vpop.f32.mrf.mxu0
    %v1023 = vadd.f32 %v487, %v1022
    %v1024 = vpop.f32.mrf.mxu0
    %v1025 = vadd.f32 %v491, %v1024
    %1026 = vdwg.mxu0
    %1027 = vmatprep.subr.bf16.mxu0 %v885
    %1028 = vmatpush1.bf16.msra.mxu0 %v884
    %1029 = vmatprep.subr.bf16.mxu0 %v881
    %1030 = vmatpush1.bf16.msra.mxu0 %v880
    %1031 = vmatprep.subr.bf16.mxu0 %v877
    %1032 = vmatpush1.bf16.msra.mxu0 %v876
    %1033 = vmatprep.subr.bf16.mxu0 %v873
    %1034 = vmatpush1.bf16.msra.mxu0 %v872
    %1035 = vmatprep.subr.bf16.mxu0 %v869
    %1036 = vmatpush1.bf16.msra.mxu0 %v868
    %1037 = vmatprep.subr.bf16.mxu0 %v865
    %1038 = vmatpush1.bf16.msra.mxu0 %v864
    %1039 = vmatprep.subr.bf16.mxu0 %v861
    %1040 = vmatpush1.bf16.msra.mxu0 %v860
    %1041 = vmatprep.subr.bf16.mxu0 %v857
    %1042 = vmatpush1.bf16.msra.mxu0 %v856
    %1043 = vmatprep.subr.bf16.mxu0 0
    %1044 = vmatpush2.bf16.msra.mxu0 0
    %1045 = vmatprep.subr.bf16.mxu0 0
    %1046 = vmatpush2.bf16.msra.mxu0 0
    %1047 = vmatprep.subr.bf16.mxu0 0
    %1048 = vmatpush2.bf16.msra.mxu0 0
    %1049 = vmatprep.subr.bf16.mxu0 0
    %1050 = vmatpush2.bf16.msra.mxu0 0
    %1051 = vmatprep.subr.bf16.mxu0 0
    %1052 = vmatpush2.bf16.msra.mxu0 0
    %1053 = vmatprep.subr.bf16.mxu0 0
    %1054 = vmatpush2.bf16.msra.mxu0 0
    %1055 = vmatprep.subr.bf16.mxu0 0
    %1056 = vmatpush2.bf16.msra.mxu0 0
    %1057 = vmatprep.subr.bf16.mxu0 0
    %1058 = vmatpush2.bf16.msra.mxu0 0
    %1059 = vmatprep.mubr.bf16.mxu0 0
    %1060 = vmatmul.mubr.bf16.gmra.mxu0 %v385
    %v1061 = vpop.f32.mrf.mxu0
    %v1062 = vadd.f32 %v1019, %v1061
    %v1063 = vpop.f32.mrf.mxu0
    %v1064 = vadd.f32 %v1021, %v1063
    %v1065 = vpop.f32.mrf.mxu0
    %v1066 = vadd.f32 %v1023, %v1065
    %v1067 = vpop.f32.mrf.mxu0
    %v1068 = vadd.f32 %v1025, %v1067
    %1069 = vdwg.mxu0
    %1070 = vmatprep.subr.bf16.mxu0 %v823
    %1071 = vmatpush1.bf16.msra.mxu0 %v822
    %1072 = vmatprep.subr.bf16.mxu0 %v819
    %1073 = vmatpush1.bf16.msra.mxu0 %v818
    %1074 = vmatprep.subr.bf16.mxu0 %v815
    %1075 = vmatpush1.bf16.msra.mxu0 %v814
    %1076 = vmatprep.subr.bf16.mxu0 %v811
    %1077 = vmatpush1.bf16.msra.mxu0 %v810
    %1078 = vmatprep.subr.bf16.mxu0 %v807
    %1079 = vmatpush1.bf16.msra.mxu0 %v806
    %1080 = vmatprep.subr.bf16.mxu0 %v803
    %1081 = vmatpush1.bf16.msra.mxu0 %v802
    %1082 = vmatprep.subr.bf16.mxu0 %v799
    %1083 = vmatpush1.bf16.msra.mxu0 %v798
    %1084 = vmatprep.subr.bf16.mxu0 %v795
    %1085 = vmatpush1.bf16.msra.mxu0 %v794
    %1086 = vmatprep.subr.bf16.mxu0 %v855
    %1087 = vmatpush2.bf16.msra.mxu0 %v854
    %1088 = vmatprep.subr.bf16.mxu0 %v851
    %1089 = vmatpush2.bf16.msra.mxu0 %v850
    %1090 = vmatprep.subr.bf16.mxu0 %v847
    %1091 = vmatpush2.bf16.msra.mxu0 %v846
    %1092 = vmatprep.subr.bf16.mxu0 %v843
    %1093 = vmatpush2.bf16.msra.mxu0 %v842
    %1094 = vmatprep.subr.bf16.mxu0 %v839
    %1095 = vmatpush2.bf16.msra.mxu0 %v838
    %1096 = vmatprep.subr.bf16.mxu0 %v835
    %1097 = vmatpush2.bf16.msra.mxu0 %v834
    %1098 = vmatprep.subr.bf16.mxu0 %v831
    %1099 = vmatpush2.bf16.msra.mxu0 %v830
    %1100 = vmatprep.subr.bf16.mxu0 %v827
    %1101 = vmatpush2.bf16.msra.mxu0 %v826
    %1102 = vmatprep.mubr.bf16.mxu0 %v384
    %1103 = vmatmul.mubr.bf16.gmra.mxu0 %v383
    %v1104 = vpop.f32.mrf.mxu0
    %v1105 = vadd.f32 %v495, %v1104
    %v1106 = vpop.f32.mrf.mxu0
    %v1107 = vadd.f32 %v499, %v1106
    %v1108 = vpop.f32.mrf.mxu0
    %v1109 = vadd.f32 %v495, %v1108
    %v1110 = vpop.f32.mrf.mxu0
    %v1111 = vadd.f32 %v499, %v1110
    %1112 = vdwg.mxu0
    %1113 = vmatprep.subr.bf16.mxu0 %v887
    %1114 = vmatpush1.bf16.msra.mxu0 %v886
    %1115 = vmatprep.subr.bf16.mxu0 %v883
    %1116 = vmatpush1.bf16.msra.mxu0 %v882
    %1117 = vmatprep.subr.bf16.mxu0 %v879
    %1118 = vmatpush1.bf16.msra.mxu0 %v878
    %1119 = vmatprep.subr.bf16.mxu0 %v875
    %1120 = vmatpush1.bf16.msra.mxu0 %v874
    %1121 = vmatprep.subr.bf16.mxu0 %v871
    %1122 = vmatpush1.bf16.msra.mxu0 %v870
    %1123 = vmatprep.subr.bf16.mxu0 %v867
    %1124 = vmatpush1.bf16.msra.mxu0 %v866
    %1125 = vmatprep.subr.bf16.mxu0 %v863
    %1126 = vmatpush1.bf16.msra.mxu0 %v862
    %1127 = vmatprep.subr.bf16.mxu0 %v859
    %1128 = vmatpush1.bf16.msra.mxu0 %v858
    %1129 = vmatprep.subr.bf16.mxu0 0
    %1130 = vmatpush2.bf16.msra.mxu0 0
    %1131 = vmatprep.subr.bf16.mxu0 0
    %1132 = vmatpush2.bf16.msra.mxu0 0
    %1133 = vmatprep.subr.bf16.mxu0 0
    %1134 = vmatpush2.bf16.msra.mxu0 0
    %1135 = vmatprep.subr.bf16.mxu0 0
    %1136 = vmatpush2.bf16.msra.mxu0 0
    %1137 = vmatprep.subr.bf16.mxu0 0
    %1138 = vmatpush2.bf16.msra.mxu0 0
    %1139 = vmatprep.subr.bf16.mxu0 0
    %1140 = vmatpush2.bf16.msra.mxu0 0
    %1141 = vmatprep.subr.bf16.mxu0 0
    %1142 = vmatpush2.bf16.msra.mxu0 0
    %1143 = vmatprep.subr.bf16.mxu0 0
    %1144 = vmatpush2.bf16.msra.mxu0 0
    %1145 = vmatprep.mubr.bf16.mxu0 0
    %1146 = vmatmul.mubr.bf16.gmra.mxu0 %v385
    %v1147 = vpop.f32.mrf.mxu0
    %v1148 = vadd.f32 %v1105, %v1147
    %v1149 = vpop.f32.mrf.mxu0
    %v1150 = vadd.f32 %v1107, %v1149
    %v1151 = vpop.f32.mrf.mxu0
    %v1152 = vadd.f32 %v1109, %v1151
    %v1153 = vpop.f32.mrf.mxu0
    %v1154 = vadd.f32 %v1111, %v1153
    %1155 = vdwg.mxu0
    %v1156 = vmax.f32 %v1062, 0.0
    %v1157 = vmax.f32 %v1064, 0.0
    %v1158 = vmax.f32 %v1148, 0.0
    %v1159 = vmax.f32 %v1150, 0.0
    %v1160 = vmax.f32 %v1066, 0.0
    %v1161 = vmax.f32 %v1068, 0.0
    %v1162 = vmax.f32 %v1152, 0.0
    %v1163 = vmax.f32 %v1154, 0.0
    %s1164 = smul.u32 2, 64
    %s1165 = smul.u32 %s1164, 16
    %s1166 = sshll.u32 %s1165, 4
    %1167 = dma.done [#allocation5], %s1166
    %v1168 = vpack.c.bf16 %v1160, %v1156
    %v1169 = vpack.c.bf16 %v1161, %v1157
    %v1170 = vpack.c.bf16 %v1162, %v1158
    %v1171 = vpack.c.bf16 %v1163, %v1159
    %v1172 = vld [vmem:[#allocation2] sm:$0xff]
    %v1173 = vld [vmem:[#allocation2 + $0x8] sm:$0xff]
    %v1174 = vld [vmem:[#allocation2 + $0x10] sm:$0xff]
    %v1175 = vld [vmem:[#allocation2 + $0x18] sm:$0xff]
    %v1176 = vld [vmem:[#allocation2 + $0x20] sm:$0xff]
    %v1177 = vld [vmem:[#allocation2 + $0x28] sm:$0xff]
    %v1178 = vld [vmem:[#allocation2 + $0x30] sm:$0xff]
    %v1179 = vld [vmem:[#allocation2 + $0x38] sm:$0xff]
    %v1180 = vld [vmem:[#allocation2 + $0x40] sm:$0xff]
    %v1181 = vld [vmem:[#allocation2 + $0x48] sm:$0xff]
    %v1182 = vld [vmem:[#allocation2 + $0x50] sm:$0xff]
    %v1183 = vld [vmem:[#allocation2 + $0x58] sm:$0xff]
    %v1184 = vld [vmem:[#allocation2 + $0x60] sm:$0xff]
    %v1185 = vld [vmem:[#allocation2 + $0x68] sm:$0xff]
    %v1186 = vld [vmem:[#allocation2 + $0x70] sm:$0xff]
    %v1187 = vld [vmem:[#allocation2 + $0x78] sm:$0xff]
    %v1188 = vld [vmem:[#allocation2 + $0x80] sm:$0xff]
    %v1189 = vld [vmem:[#allocation2 + $0x88] sm:$0xff]
    %v1190 = vld [vmem:[#allocation2 + $0x90] sm:$0xff]
    %v1191 = vld [vmem:[#allocation2 + $0x98] sm:$0xff]
    %v1192 = vld [vmem:[#allocation2 + $0xa0] sm:$0xff]
    %v1193 = vld [vmem:[#allocation2 + $0xa8] sm:$0xff]
    %v1194 = vld [vmem:[#allocation2 + $0xb0] sm:$0xff]
    %v1195 = vld [vmem:[#allocation2 + $0xb8] sm:$0xff]
    %v1196 = vld [vmem:[#allocation2 + $0xc0] sm:$0xff]
    %v1197 = vld [vmem:[#allocation2 + $0xc8] sm:$0xff]
    %v1198 = vld [vmem:[#allocation2 + $0xd0] sm:$0xff]
    %v1199 = vld [vmem:[#allocation2 + $0xd8] sm:$0xff]
    %v1200 = vld [vmem:[#allocation2 + $0xe0] sm:$0xff]
    %v1201 = vld [vmem:[#allocation2 + $0xe8] sm:$0xff]
    %v1202 = vld [vmem:[#allocation2 + $0xf0] sm:$0xff]
    %v1203 = vld [vmem:[#allocation2 + $0xf8] sm:$0xff]
    %v1204 = vld [vmem:[#allocation2 + $0x100] sm:$0xff]
    %v1205 = vld [vmem:[#allocation2 + $0x108] sm:$0xff]
    %v1206 = vld [vmem:[#allocation2 + $0x110] sm:$0xff]
    %v1207 = vld [vmem:[#allocation2 + $0x118] sm:$0xff]
    %v1208 = vld [vmem:[#allocation2 + $0x120] sm:$0xff]
    %v1209 = vld [vmem:[#allocation2 + $0x128] sm:$0xff]
    %v1210 = vld [vmem:[#allocation2 + $0x130] sm:$0xff]
    %v1211 = vld [vmem:[#allocation2 + $0x138] sm:$0xff]
    %v1212 = vld [vmem:[#allocation2 + $0x140] sm:$0xff]
    %v1213 = vld [vmem:[#allocation2 + $0x148] sm:$0xff]
    %v1214 = vld [vmem:[#allocation2 + $0x150] sm:$0xff]
    %v1215 = vld [vmem:[#allocation2 + $0x158] sm:$0xff]
    %v1216 = vld [vmem:[#allocation2 + $0x160] sm:$0xff]
    %v1217 = vld [vmem:[#allocation2 + $0x168] sm:$0xff]
    %v1218 = vld [vmem:[#allocation2 + $0x170] sm:$0xff]
    %v1219 = vld [vmem:[#allocation2 + $0x178] sm:$0xff]
    %v1220 = vld [vmem:[#allocation2 + $0x180] sm:$0xff]
    %v1221 = vld [vmem:[#allocation2 + $0x188] sm:$0xff]
    %v1222 = vld [vmem:[#allocation2 + $0x190] sm:$0xff]
    %v1223 = vld [vmem:[#allocation2 + $0x198] sm:$0xff]
    %v1224 = vld [vmem:[#allocation2 + $0x1a0] sm:$0xff]
    %v1225 = vld [vmem:[#allocation2 + $0x1a8] sm:$0xff]
    %v1226 = vld [vmem:[#allocation2 + $0x1b0] sm:$0xff]
    %v1227 = vld [vmem:[#allocation2 + $0x1b8] sm:$0xff]
    %v1228 = vld [vmem:[#allocation2 + $0x1c0] sm:$0xff]
    %v1229 = vld [vmem:[#allocation2 + $0x1c8] sm:$0xff]
    %v1230 = vld [vmem:[#allocation2 + $0x1d0] sm:$0xff]
    %v1231 = vld [vmem:[#allocation2 + $0x1d8] sm:$0xff]
    %v1232 = vld [vmem:[#allocation2 + $0x1e0] sm:$0xff]
    %v1233 = vld [vmem:[#allocation2 + $0x1e8] sm:$0xff]
    %v1234 = vld [vmem:[#allocation2 + $0x1f0] sm:$0xff]
    %v1235 = vld [vmem:[#allocation2 + $0x1f8] sm:$0xff]
    %v1236 = vld [vmem:[#allocation2 + $0x200] sm:$0xff]
    %v1237 = vld [vmem:[#allocation2 + $0x208] sm:$0xff]
    %v1238 = vld [vmem:[#allocation2 + $0x210] sm:$0xff]
    %v1239 = vld [vmem:[#allocation2 + $0x218] sm:$0xff]
    %v1240 = vld [vmem:[#allocation2 + $0x220] sm:$0xff]
    %v1241 = vld [vmem:[#allocation2 + $0x228] sm:$0xff]
    %v1242 = vld [vmem:[#allocation2 + $0x230] sm:$0xff]
    %v1243 = vld [vmem:[#allocation2 + $0x238] sm:$0xff]
    %v1244 = vld [vmem:[#allocation2 + $0x240] sm:$0xff]
    %v1245 = vld [vmem:[#allocation2 + $0x248] sm:$0xff]
    %v1246 = vld [vmem:[#allocation2 + $0x250] sm:$0xff]
    %v1247 = vld [vmem:[#allocation2 + $0x258] sm:$0xff]
    %v1248 = vld [vmem:[#allocation2 + $0x260] sm:$0xff]
    %v1249 = vld [vmem:[#allocation2 + $0x268] sm:$0xff]
    %v1250 = vld [vmem:[#allocation2 + $0x270] sm:$0xff]
    %v1251 = vld [vmem:[#allocation2 + $0x278] sm:$0xff]
    %v1252 = vld [vmem:[#allocation2 + $0x280] sm:$0xff]
    %v1253 = vld [vmem:[#allocation2 + $0x288] sm:$0xff]
    %v1254 = vld [vmem:[#allocation2 + $0x290] sm:$0xff]
    %v1255 = vld [vmem:[#allocation2 + $0x298] sm:$0xff]
    %v1256 = vld [vmem:[#allocation2 + $0x2a0] sm:$0xff]
    %v1257 = vld [vmem:[#allocation2 + $0x2a8] sm:$0xff]
    %v1258 = vld [vmem:[#allocation2 + $0x2b0] sm:$0xff]
    %v1259 = vld [vmem:[#allocation2 + $0x2b8] sm:$0xff]
    %v1260 = vld [vmem:[#allocation2 + $0x2c0] sm:$0xff]
    %v1261 = vld [vmem:[#allocation2 + $0x2c8] sm:$0xff]
    %v1262 = vld [vmem:[#allocation2 + $0x2d0] sm:$0xff]
    %v1263 = vld [vmem:[#allocation2 + $0x2d8] sm:$0xff]
    %v1264 = vld [vmem:[#allocation2 + $0x2e0] sm:$0xff]
    %v1265 = vld [vmem:[#allocation2 + $0x2e8] sm:$0xff]
    %v1266 = vld [vmem:[#allocation2 + $0x2f0] sm:$0xff]
    %v1267 = vld [vmem:[#allocation2 + $0x2f8] sm:$0xff]
    %v1268 = vld [vmem:[#allocation2 + $0x300] sm:$0xff]
    %v1269 = vld [vmem:[#allocation2 + $0x308] sm:$0xff]
    %v1270 = vld [vmem:[#allocation2 + $0x310] sm:$0xff]
    %v1271 = vld [vmem:[#allocation2 + $0x318] sm:$0xff]
    %v1272 = vld [vmem:[#allocation2 + $0x320] sm:$0xff]
    %v1273 = vld [vmem:[#allocation2 + $0x328] sm:$0xff]
    %v1274 = vld [vmem:[#allocation2 + $0x330] sm:$0xff]
    %v1275 = vld [vmem:[#allocation2 + $0x338] sm:$0xff]
    %v1276 = vld [vmem:[#allocation2 + $0x340] sm:$0xff]
    %v1277 = vld [vmem:[#allocation2 + $0x348] sm:$0xff]
    %v1278 = vld [vmem:[#allocation2 + $0x350] sm:$0xff]
    %v1279 = vld [vmem:[#allocation2 + $0x358] sm:$0xff]
    %v1280 = vld [vmem:[#allocation2 + $0x360] sm:$0xff]
    %v1281 = vld [vmem:[#allocation2 + $0x368] sm:$0xff]
    %v1282 = vld [vmem:[#allocation2 + $0x370] sm:$0xff]
    %v1283 = vld [vmem:[#allocation2 + $0x378] sm:$0xff]
    %v1284 = vld [vmem:[#allocation2 + $0x380] sm:$0xff]
    %v1285 = vld [vmem:[#allocation2 + $0x388] sm:$0xff]
    %v1286 = vld [vmem:[#allocation2 + $0x390] sm:$0xff]
    %v1287 = vld [vmem:[#allocation2 + $0x398] sm:$0xff]
    %v1288 = vld [vmem:[#allocation2 + $0x3a0] sm:$0xff]
    %v1289 = vld [vmem:[#allocation2 + $0x3a8] sm:$0xff]
    %v1290 = vld [vmem:[#allocation2 + $0x3b0] sm:$0xff]
    %v1291 = vld [vmem:[#allocation2 + $0x3b8] sm:$0xff]
    %v1292 = vld [vmem:[#allocation2 + $0x3c0] sm:$0xff]
    %v1293 = vld [vmem:[#allocation2 + $0x3c8] sm:$0xff]
    %v1294 = vld [vmem:[#allocation2 + $0x3d0] sm:$0xff]
    %v1295 = vld [vmem:[#allocation2 + $0x3d8] sm:$0xff]
    %v1296 = vld [vmem:[#allocation2 + $0x3e0] sm:$0xff]
    %v1297 = vld [vmem:[#allocation2 + $0x3e8] sm:$0xff]
    %v1298 = vld [vmem:[#allocation2 + $0x3f0] sm:$0xff]
    %v1299 = vld [vmem:[#allocation2 + $0x3f8] sm:$0xff]
    %v1300 = vld [vmem:[#allocation2 + $0x400] sm:$0xff]
    %v1301 = vld [vmem:[#allocation2 + $0x408] sm:$0xff]
    %v1302 = vld [vmem:[#allocation2 + $0x410] sm:$0xff]
    %v1303 = vld [vmem:[#allocation2 + $0x418] sm:$0xff]
    %v1304 = vld [vmem:[#allocation2 + $0x420] sm:$0xff]
    %v1305 = vld [vmem:[#allocation2 + $0x428] sm:$0xff]
    %v1306 = vld [vmem:[#allocation2 + $0x430] sm:$0xff]
    %v1307 = vld [vmem:[#allocation2 + $0x438] sm:$0xff]
    %v1308 = vld [vmem:[#allocation2 + $0x440] sm:$0xff]
    %v1309 = vld [vmem:[#allocation2 + $0x448] sm:$0xff]
    %v1310 = vld [vmem:[#allocation2 + $0x450] sm:$0xff]
    %v1311 = vld [vmem:[#allocation2 + $0x458] sm:$0xff]
    %v1312 = vld [vmem:[#allocation2 + $0x460] sm:$0xff]
    %v1313 = vld [vmem:[#allocation2 + $0x468] sm:$0xff]
    %v1314 = vld [vmem:[#allocation2 + $0x470] sm:$0xff]
    %v1315 = vld [vmem:[#allocation2 + $0x478] sm:$0xff]
    %v1316 = vld [vmem:[#allocation2 + $0x480] sm:$0xff]
    %v1317 = vld [vmem:[#allocation2 + $0x488] sm:$0xff]
    %v1318 = vld [vmem:[#allocation2 + $0x490] sm:$0xff]
    %v1319 = vld [vmem:[#allocation2 + $0x498] sm:$0xff]
    %v1320 = vld [vmem:[#allocation2 + $0x4a0] sm:$0xff]
    %v1321 = vld [vmem:[#allocation2 + $0x4a8] sm:$0xff]
    %v1322 = vld [vmem:[#allocation2 + $0x4b0] sm:$0xff]
    %v1323 = vld [vmem:[#allocation2 + $0x4b8] sm:$0xff]
    %v1324 = vld [vmem:[#allocation2 + $0x4c0] sm:$0xff]
    %v1325 = vld [vmem:[#allocation2 + $0x4c8] sm:$0xff]
    %v1326 = vld [vmem:[#allocation2 + $0x4d0] sm:$0xff]
    %v1327 = vld [vmem:[#allocation2 + $0x4d8] sm:$0xff]
    %v1328 = vld [vmem:[#allocation2 + $0x4e0] sm:$0xff]
    %v1329 = vld [vmem:[#allocation2 + $0x4e8] sm:$0xff]
    %v1330 = vld [vmem:[#allocation2 + $0x4f0] sm:$0xff]
    %v1331 = vld [vmem:[#allocation2 + $0x4f8] sm:$0xff]
    %v1332 = vld [vmem:[#allocation2 + $0x500] sm:$0xff]
    %v1333 = vld [vmem:[#allocation2 + $0x508] sm:$0xff]
    %v1334 = vld [vmem:[#allocation2 + $0x510] sm:$0xff]
    %v1335 = vld [vmem:[#allocation2 + $0x518] sm:$0xff]
    %v1336 = vld [vmem:[#allocation2 + $0x520] sm:$0xff]
    %v1337 = vld [vmem:[#allocation2 + $0x528] sm:$0xff]
    %v1338 = vld [vmem:[#allocation2 + $0x530] sm:$0xff]
    %v1339 = vld [vmem:[#allocation2 + $0x538] sm:$0xff]
    %v1340 = vld [vmem:[#allocation2 + $0x540] sm:$0xff]
    %v1341 = vld [vmem:[#allocation2 + $0x548] sm:$0xff]
    %v1342 = vld [vmem:[#allocation2 + $0x550] sm:$0xff]
    %v1343 = vld [vmem:[#allocation2 + $0x558] sm:$0xff]
    %v1344 = vld [vmem:[#allocation2 + $0x560] sm:$0xff]
    %v1345 = vld [vmem:[#allocation2 + $0x568] sm:$0xff]
    %v1346 = vld [vmem:[#allocation2 + $0x570] sm:$0xff]
    %v1347 = vld [vmem:[#allocation2 + $0x578] sm:$0xff]
    %v1348 = vld [vmem:[#allocation2 + $0x580] sm:$0xff]
    %v1349 = vld [vmem:[#allocation2 + $0x588] sm:$0xff]
    %v1350 = vld [vmem:[#allocation2 + $0x590] sm:$0xff]
    %v1351 = vld [vmem:[#allocation2 + $0x598] sm:$0xff]
    %v1352 = vld [vmem:[#allocation2 + $0x5a0] sm:$0xff]
    %v1353 = vld [vmem:[#allocation2 + $0x5a8] sm:$0xff]
    %v1354 = vld [vmem:[#allocation2 + $0x5b0] sm:$0xff]
    %v1355 = vld [vmem:[#allocation2 + $0x5b8] sm:$0xff]
    %v1356 = vld [vmem:[#allocation2 + $0x5c0] sm:$0xff]
    %v1357 = vld [vmem:[#allocation2 + $0x5c8] sm:$0xff]
    %v1358 = vld [vmem:[#allocation2 + $0x5d0] sm:$0xff]
    %v1359 = vld [vmem:[#allocation2 + $0x5d8] sm:$0xff]
    %v1360 = vld [vmem:[#allocation2 + $0x5e0] sm:$0xff]
    %v1361 = vld [vmem:[#allocation2 + $0x5e8] sm:$0xff]
    %v1362 = vld [vmem:[#allocation2 + $0x5f0] sm:$0xff]
    %v1363 = vld [vmem:[#allocation2 + $0x5f8] sm:$0xff]
    %v1364 = vld [vmem:[#allocation2 + $0x600] sm:$0xff]
    %v1365 = vld [vmem:[#allocation2 + $0x608] sm:$0xff]
    %v1366 = vld [vmem:[#allocation2 + $0x610] sm:$0xff]
    %v1367 = vld [vmem:[#allocation2 + $0x618] sm:$0xff]
    %v1368 = vld [vmem:[#allocation2 + $0x620] sm:$0xff]
    %v1369 = vld [vmem:[#allocation2 + $0x628] sm:$0xff]
    %v1370 = vld [vmem:[#allocation2 + $0x630] sm:$0xff]
    %v1371 = vld [vmem:[#allocation2 + $0x638] sm:$0xff]
    %v1372 = vld [vmem:[#allocation2 + $0x640] sm:$0xff]
    %v1373 = vld [vmem:[#allocation2 + $0x648] sm:$0xff]
    %v1374 = vld [vmem:[#allocation2 + $0x650] sm:$0xff]
    %v1375 = vld [vmem:[#allocation2 + $0x658] sm:$0xff]
    %v1376 = vld [vmem:[#allocation2 + $0x660] sm:$0xff]
    %v1377 = vld [vmem:[#allocation2 + $0x668] sm:$0xff]
    %v1378 = vld [vmem:[#allocation2 + $0x670] sm:$0xff]
    %v1379 = vld [vmem:[#allocation2 + $0x678] sm:$0xff]
    %v1380 = vld [vmem:[#allocation2 + $0x680] sm:$0xff]
    %v1381 = vld [vmem:[#allocation2 + $0x688] sm:$0xff]
    %v1382 = vld [vmem:[#allocation2 + $0x690] sm:$0xff]
    %v1383 = vld [vmem:[#allocation2 + $0x698] sm:$0xff]
    %v1384 = vld [vmem:[#allocation2 + $0x6a0] sm:$0xff]
    %v1385 = vld [vmem:[#allocation2 + $0x6a8] sm:$0xff]
    %v1386 = vld [vmem:[#allocation2 + $0x6b0] sm:$0xff]
    %v1387 = vld [vmem:[#allocation2 + $0x6b8] sm:$0xff]
    %v1388 = vld [vmem:[#allocation2 + $0x6c0] sm:$0xff]
    %v1389 = vld [vmem:[#allocation2 + $0x6c8] sm:$0xff]
    %v1390 = vld [vmem:[#allocation2 + $0x6d0] sm:$0xff]
    %v1391 = vld [vmem:[#allocation2 + $0x6d8] sm:$0xff]
    %v1392 = vld [vmem:[#allocation2 + $0x6e0] sm:$0xff]
    %v1393 = vld [vmem:[#allocation2 + $0x6e8] sm:$0xff]
    %v1394 = vld [vmem:[#allocation2 + $0x6f0] sm:$0xff]
    %v1395 = vld [vmem:[#allocation2 + $0x6f8] sm:$0xff]
    %v1396 = vld [vmem:[#allocation2 + $0x700] sm:$0xff]
    %v1397 = vld [vmem:[#allocation2 + $0x708] sm:$0xff]
    %v1398 = vld [vmem:[#allocation2 + $0x710] sm:$0xff]
    %v1399 = vld [vmem:[#allocation2 + $0x718] sm:$0xff]
    %v1400 = vld [vmem:[#allocation2 + $0x720] sm:$0xff]
    %v1401 = vld [vmem:[#allocation2 + $0x728] sm:$0xff]
    %v1402 = vld [vmem:[#allocation2 + $0x730] sm:$0xff]
    %v1403 = vld [vmem:[#allocation2 + $0x738] sm:$0xff]
    %v1404 = vld [vmem:[#allocation2 + $0x740] sm:$0xff]
    %v1405 = vld [vmem:[#allocation2 + $0x748] sm:$0xff]
    %v1406 = vld [vmem:[#allocation2 + $0x750] sm:$0xff]
    %v1407 = vld [vmem:[#allocation2 + $0x758] sm:$0xff]
    %v1408 = vld [vmem:[#allocation2 + $0x760] sm:$0xff]
    %v1409 = vld [vmem:[#allocation2 + $0x768] sm:$0xff]
    %v1410 = vld [vmem:[#allocation2 + $0x770] sm:$0xff]
    %v1411 = vld [vmem:[#allocation2 + $0x778] sm:$0xff]
    %v1412 = vld [vmem:[#allocation2 + $0x780] sm:$0xff]
    %v1413 = vld [vmem:[#allocation2 + $0x788] sm:$0xff]
    %v1414 = vld [vmem:[#allocation2 + $0x790] sm:$0xff]
    %v1415 = vld [vmem:[#allocation2 + $0x798] sm:$0xff]
    %v1416 = vld [vmem:[#allocation2 + $0x7a0] sm:$0xff]
    %v1417 = vld [vmem:[#allocation2 + $0x7a8] sm:$0xff]
    %v1418 = vld [vmem:[#allocation2 + $0x7b0] sm:$0xff]
    %v1419 = vld [vmem:[#allocation2 + $0x7b8] sm:$0xff]
    %v1420 = vld [vmem:[#allocation2 + $0x7c0] sm:$0xff]
    %v1421 = vld [vmem:[#allocation2 + $0x7c8] sm:$0xff]
    %v1422 = vld [vmem:[#allocation2 + $0x7d0] sm:$0xff]
    %v1423 = vld [vmem:[#allocation2 + $0x7d8] sm:$0xff]
    %v1424 = vld [vmem:[#allocation2 + $0x7e0] sm:$0xff]
    %v1425 = vld [vmem:[#allocation2 + $0x7e8] sm:$0xff]
    %v1426 = vld [vmem:[#allocation2 + $0x7f0] sm:$0xff]
    %v1427 = vld [vmem:[#allocation2 + $0x7f8] sm:$0xff]
    %v1428 = vunpack.c.l.s8.bf16 %v1172
    %v1429 = vunpack.c.l.s8.bf16 %v1173
    %v1430 = vunpack.c.l.s8.bf16 %v1174
    %v1431 = vunpack.c.l.s8.bf16 %v1175
    %v1432 = vunpack.c.l.s8.bf16 %v1176
    %v1433 = vunpack.c.l.s8.bf16 %v1177
    %v1434 = vunpack.c.l.s8.bf16 %v1178
    %v1435 = vunpack.c.l.s8.bf16 %v1179
    %v1436 = vunpack.c.l.s8.bf16 %v1180
    %v1437 = vunpack.c.l.s8.bf16 %v1181
    %v1438 = vunpack.c.l.s8.bf16 %v1182
    %v1439 = vunpack.c.l.s8.bf16 %v1183
    %v1440 = vunpack.c.l.s8.bf16 %v1184
    %v1441 = vunpack.c.l.s8.bf16 %v1185
    %v1442 = vunpack.c.l.s8.bf16 %v1186
    %v1443 = vunpack.c.l.s8.bf16 %v1187
    %v1444 = vunpack.c.h.s8.bf16 %v1172
    %v1445 = vunpack.c.h.s8.bf16 %v1173
    %v1446 = vunpack.c.h.s8.bf16 %v1174
    %v1447 = vunpack.c.h.s8.bf16 %v1175
    %v1448 = vunpack.c.h.s8.bf16 %v1176
    %v1449 = vunpack.c.h.s8.bf16 %v1177
    %v1450 = vunpack.c.h.s8.bf16 %v1178
    %v1451 = vunpack.c.h.s8.bf16 %v1179
    %v1452 = vunpack.c.h.s8.bf16 %v1180
    %v1453 = vunpack.c.h.s8.bf16 %v1181
    %v1454 = vunpack.c.h.s8.bf16 %v1182
    %v1455 = vunpack.c.h.s8.bf16 %v1183
    %v1456 = vunpack.c.h.s8.bf16 %v1184
    %v1457 = vunpack.c.h.s8.bf16 %v1185
    %v1458 = vunpack.c.h.s8.bf16 %v1186
    %v1459 = vunpack.c.h.s8.bf16 %v1187
    %v1460 = vunpack.c.l.s8.bf16 %v1188
    %v1461 = vunpack.c.l.s8.bf16 %v1189
    %v1462 = vunpack.c.l.s8.bf16 %v1190
    %v1463 = vunpack.c.l.s8.bf16 %v1191
    %v1464 = vunpack.c.l.s8.bf16 %v1192
    %v1465 = vunpack.c.l.s8.bf16 %v1193
    %v1466 = vunpack.c.l.s8.bf16 %v1194
    %v1467 = vunpack.c.l.s8.bf16 %v1195
    %v1468 = vunpack.c.l.s8.bf16 %v1196
    %v1469 = vunpack.c.l.s8.bf16 %v1197
    %v1470 = vunpack.c.l.s8.bf16 %v1198
    %v1471 = vunpack.c.l.s8.bf16 %v1199
    %v1472 = vunpack.c.l.s8.bf16 %v1200
    %v1473 = vunpack.c.l.s8.bf16 %v1201
    %v1474 = vunpack.c.l.s8.bf16 %v1202
    %v1475 = vunpack.c.l.s8.bf16 %v1203
    %v1476 = vunpack.c.h.s8.bf16 %v1188
    %v1477 = vunpack.c.h.s8.bf16 %v1189
    %v1478 = vunpack.c.h.s8.bf16 %v1190
    %v1479 = vunpack.c.h.s8.bf16 %v1191
    %v1480 = vunpack.c.h.s8.bf16 %v1192
    %v1481 = vunpack.c.h.s8.bf16 %v1193
    %v1482 = vunpack.c.h.s8.bf16 %v1194
    %v1483 = vunpack.c.h.s8.bf16 %v1195
    %v1484 = vunpack.c.h.s8.bf16 %v1196
    %v1485 = vunpack.c.h.s8.bf16 %v1197
    %v1486 = vunpack.c.h.s8.bf16 %v1198
    %v1487 = vunpack.c.h.s8.bf16 %v1199
    %v1488 = vunpack.c.h.s8.bf16 %v1200
    %v1489 = vunpack.c.h.s8.bf16 %v1201
    %v1490 = vunpack.c.h.s8.bf16 %v1202
    %v1491 = vunpack.c.h.s8.bf16 %v1203
    %v1492 = vunpack.c.l.s8.bf16 %v1204
    %v1493 = vunpack.c.l.s8.bf16 %v1205
    %v1494 = vunpack.c.l.s8.bf16 %v1206
    %v1495 = vunpack.c.l.s8.bf16 %v1207
    %v1496 = vunpack.c.l.s8.bf16 %v1208
    %v1497 = vunpack.c.l.s8.bf16 %v1209
    %v1498 = vunpack.c.l.s8.bf16 %v1210
    %v1499 = vunpack.c.l.s8.bf16 %v1211
    %v1500 = vunpack.c.l.s8.bf16 %v1212
    %v1501 = vunpack.c.l.s8.bf16 %v1213
    %v1502 = vunpack.c.l.s8.bf16 %v1214
    %v1503 = vunpack.c.l.s8.bf16 %v1215
    %v1504 = vunpack.c.l.s8.bf16 %v1216
    %v1505 = vunpack.c.l.s8.bf16 %v1217
    %v1506 = vunpack.c.l.s8.bf16 %v1218
    %v1507 = vunpack.c.l.s8.bf16 %v1219
    %v1508 = vunpack.c.h.s8.bf16 %v1204
    %v1509 = vunpack.c.h.s8.bf16 %v1205
    %v1510 = vunpack.c.h.s8.bf16 %v1206
    %v1511 = vunpack.c.h.s8.bf16 %v1207
    %v1512 = vunpack.c.h.s8.bf16 %v1208
    %v1513 = vunpack.c.h.s8.bf16 %v1209
    %v1514 = vunpack.c.h.s8.bf16 %v1210
    %v1515 = vunpack.c.h.s8.bf16 %v1211
    %v1516 = vunpack.c.h.s8.bf16 %v1212
    %v1517 = vunpack.c.h.s8.bf16 %v1213
    %v1518 = vunpack.c.h.s8.bf16 %v1214
    %v1519 = vunpack.c.h.s8.bf16 %v1215
    %v1520 = vunpack.c.h.s8.bf16 %v1216
    %v1521 = vunpack.c.h.s8.bf16 %v1217
    %v1522 = vunpack.c.h.s8.bf16 %v1218
    %v1523 = vunpack.c.h.s8.bf16 %v1219
    %v1524 = vunpack.c.l.s8.bf16 %v1220
    %v1525 = vunpack.c.l.s8.bf16 %v1221
    %v1526 = vunpack.c.l.s8.bf16 %v1222
    %v1527 = vunpack.c.l.s8.bf16 %v1223
    %v1528 = vunpack.c.l.s8.bf16 %v1224
    %v1529 = vunpack.c.l.s8.bf16 %v1225
    %v1530 = vunpack.c.l.s8.bf16 %v1226
    %v1531 = vunpack.c.l.s8.bf16 %v1227
    %v1532 = vunpack.c.l.s8.bf16 %v1228
    %v1533 = vunpack.c.l.s8.bf16 %v1229
    %v1534 = vunpack.c.l.s8.bf16 %v1230
    %v1535 = vunpack.c.l.s8.bf16 %v1231
    %v1536 = vunpack.c.l.s8.bf16 %v1232
    %v1537 = vunpack.c.l.s8.bf16 %v1233
    %v1538 = vunpack.c.l.s8.bf16 %v1234
    %v1539 = vunpack.c.l.s8.bf16 %v1235
    %v1540 = vunpack.c.h.s8.bf16 %v1220
    %v1541 = vunpack.c.h.s8.bf16 %v1221
    %v1542 = vunpack.c.h.s8.bf16 %v1222
    %v1543 = vunpack.c.h.s8.bf16 %v1223
    %v1544 = vunpack.c.h.s8.bf16 %v1224
    %v1545 = vunpack.c.h.s8.bf16 %v1225
    %v1546 = vunpack.c.h.s8.bf16 %v1226
    %v1547 = vunpack.c.h.s8.bf16 %v1227
    %v1548 = vunpack.c.h.s8.bf16 %v1228
    %v1549 = vunpack.c.h.s8.bf16 %v1229
    %v1550 = vunpack.c.h.s8.bf16 %v1230
    %v1551 = vunpack.c.h.s8.bf16 %v1231
    %v1552 = vunpack.c.h.s8.bf16 %v1232
    %v1553 = vunpack.c.h.s8.bf16 %v1233
    %v1554 = vunpack.c.h.s8.bf16 %v1234
    %v1555 = vunpack.c.h.s8.bf16 %v1235
    %v1556 = vunpack.c.l.s8.bf16 %v1236
    %v1557 = vunpack.c.l.s8.bf16 %v1237
    %v1558 = vunpack.c.l.s8.bf16 %v1238
    %v1559 = vunpack.c.l.s8.bf16 %v1239
    %v1560 = vunpack.c.l.s8.bf16 %v1240
    %v1561 = vunpack.c.l.s8.bf16 %v1241
    %v1562 = vunpack.c.l.s8.bf16 %v1242
    %v1563 = vunpack.c.l.s8.bf16 %v1243
    %v1564 = vunpack.c.l.s8.bf16 %v1244
    %v1565 = vunpack.c.l.s8.bf16 %v1245
    %v1566 = vunpack.c.l.s8.bf16 %v1246
    %v1567 = vunpack.c.l.s8.bf16 %v1247
    %v1568 = vunpack.c.l.s8.bf16 %v1248
    %v1569 = vunpack.c.l.s8.bf16 %v1249
    %v1570 = vunpack.c.l.s8.bf16 %v1250
    %v1571 = vunpack.c.l.s8.bf16 %v1251
    %v1572 = vunpack.c.h.s8.bf16 %v1236
    %v1573 = vunpack.c.h.s8.bf16 %v1237
    %v1574 = vunpack.c.h.s8.bf16 %v1238
    %v1575 = vunpack.c.h.s8.bf16 %v1239
    %v1576 = vunpack.c.h.s8.bf16 %v1240
    %v1577 = vunpack.c.h.s8.bf16 %v1241
    %v1578 = vunpack.c.h.s8.bf16 %v1242
    %v1579 = vunpack.c.h.s8.bf16 %v1243
    %v1580 = vunpack.c.h.s8.bf16 %v1244
    %v1581 = vunpack.c.h.s8.bf16 %v1245
    %v1582 = vunpack.c.h.s8.bf16 %v1246
    %v1583 = vunpack.c.h.s8.bf16 %v1247
    %v1584 = vunpack.c.h.s8.bf16 %v1248
    %v1585 = vunpack.c.h.s8.bf16 %v1249
    %v1586 = vunpack.c.h.s8.bf16 %v1250
    %v1587 = vunpack.c.h.s8.bf16 %v1251
    %v1588 = vunpack.c.l.s8.bf16 %v1252
    %v1589 = vunpack.c.l.s8.bf16 %v1253
    %v1590 = vunpack.c.l.s8.bf16 %v1254
    %v1591 = vunpack.c.l.s8.bf16 %v1255
    %v1592 = vunpack.c.l.s8.bf16 %v1256
    %v1593 = vunpack.c.l.s8.bf16 %v1257
    %v1594 = vunpack.c.l.s8.bf16 %v1258
    %v1595 = vunpack.c.l.s8.bf16 %v1259
    %v1596 = vunpack.c.l.s8.bf16 %v1260
    %v1597 = vunpack.c.l.s8.bf16 %v1261
    %v1598 = vunpack.c.l.s8.bf16 %v1262
    %v1599 = vunpack.c.l.s8.bf16 %v1263
    %v1600 = vunpack.c.l.s8.bf16 %v1264
    %v1601 = vunpack.c.l.s8.bf16 %v1265
    %v1602 = vunpack.c.l.s8.bf16 %v1266
    %v1603 = vunpack.c.l.s8.bf16 %v1267
    %v1604 = vunpack.c.h.s8.bf16 %v1252
    %v1605 = vunpack.c.h.s8.bf16 %v1253
    %v1606 = vunpack.c.h.s8.bf16 %v1254
    %v1607 = vunpack.c.h.s8.bf16 %v1255
    %v1608 = vunpack.c.h.s8.bf16 %v1256
    %v1609 = vunpack.c.h.s8.bf16 %v1257
    %v1610 = vunpack.c.h.s8.bf16 %v1258
    %v1611 = vunpack.c.h.s8.bf16 %v1259
    %v1612 = vunpack.c.h.s8.bf16 %v1260
    %v1613 = vunpack.c.h.s8.bf16 %v1261
    %v1614 = vunpack.c.h.s8.bf16 %v1262
    %v1615 = vunpack.c.h.s8.bf16 %v1263
    %v1616 = vunpack.c.h.s8.bf16 %v1264
    %v1617 = vunpack.c.h.s8.bf16 %v1265
    %v1618 = vunpack.c.h.s8.bf16 %v1266
    %v1619 = vunpack.c.h.s8.bf16 %v1267
    %v1620 = vunpack.c.l.s8.bf16 %v1268
    %v1621 = vunpack.c.l.s8.bf16 %v1269
    %v1622 = vunpack.c.l.s8.bf16 %v1270
    %v1623 = vunpack.c.l.s8.bf16 %v1271
    %v1624 = vunpack.c.l.s8.bf16 %v1272
    %v1625 = vunpack.c.l.s8.bf16 %v1273
    %v1626 = vunpack.c.l.s8.bf16 %v1274
    %v1627 = vunpack.c.l.s8.bf16 %v1275
    %v1628 = vunpack.c.l.s8.bf16 %v1276
    %v1629 = vunpack.c.l.s8.bf16 %v1277
    %v1630 = vunpack.c.l.s8.bf16 %v1278
    %v1631 = vunpack.c.l.s8.bf16 %v1279
    %v1632 = vunpack.c.l.s8.bf16 %v1280
    %v1633 = vunpack.c.l.s8.bf16 %v1281
    %v1634 = vunpack.c.l.s8.bf16 %v1282
    %v1635 = vunpack.c.l.s8.bf16 %v1283
    %v1636 = vunpack.c.h.s8.bf16 %v1268
    %v1637 = vunpack.c.h.s8.bf16 %v1269
    %v1638 = vunpack.c.h.s8.bf16 %v1270
    %v1639 = vunpack.c.h.s8.bf16 %v1271
    %v1640 = vunpack.c.h.s8.bf16 %v1272
    %v1641 = vunpack.c.h.s8.bf16 %v1273
    %v1642 = vunpack.c.h.s8.bf16 %v1274
    %v1643 = vunpack.c.h.s8.bf16 %v1275
    %v1644 = vunpack.c.h.s8.bf16 %v1276
    %v1645 = vunpack.c.h.s8.bf16 %v1277
    %v1646 = vunpack.c.h.s8.bf16 %v1278
    %v1647 = vunpack.c.h.s8.bf16 %v1279
    %v1648 = vunpack.c.h.s8.bf16 %v1280
    %v1649 = vunpack.c.h.s8.bf16 %v1281
    %v1650 = vunpack.c.h.s8.bf16 %v1282
    %v1651 = vunpack.c.h.s8.bf16 %v1283
    %v1652 = vunpack.c.l.s8.bf16 %v1284
    %v1653 = vunpack.c.l.s8.bf16 %v1285
    %v1654 = vunpack.c.l.s8.bf16 %v1286
    %v1655 = vunpack.c.l.s8.bf16 %v1287
    %v1656 = vunpack.c.l.s8.bf16 %v1288
    %v1657 = vunpack.c.l.s8.bf16 %v1289
    %v1658 = vunpack.c.l.s8.bf16 %v1290
    %v1659 = vunpack.c.l.s8.bf16 %v1291
    %v1660 = vunpack.c.l.s8.bf16 %v1292
    %v1661 = vunpack.c.l.s8.bf16 %v1293
    %v1662 = vunpack.c.l.s8.bf16 %v1294
    %v1663 = vunpack.c.l.s8.bf16 %v1295
    %v1664 = vunpack.c.l.s8.bf16 %v1296
    %v1665 = vunpack.c.l.s8.bf16 %v1297
    %v1666 = vunpack.c.l.s8.bf16 %v1298
    %v1667 = vunpack.c.l.s8.bf16 %v1299
    %v1668 = vunpack.c.h.s8.bf16 %v1284
    %v1669 = vunpack.c.h.s8.bf16 %v1285
    %v1670 = vunpack.c.h.s8.bf16 %v1286
    %v1671 = vunpack.c.h.s8.bf16 %v1287
    %v1672 = vunpack.c.h.s8.bf16 %v1288
    %v1673 = vunpack.c.h.s8.bf16 %v1289
    %v1674 = vunpack.c.h.s8.bf16 %v1290
    %v1675 = vunpack.c.h.s8.bf16 %v1291
    %v1676 = vunpack.c.h.s8.bf16 %v1292
    %v1677 = vunpack.c.h.s8.bf16 %v1293
    %v1678 = vunpack.c.h.s8.bf16 %v1294
    %v1679 = vunpack.c.h.s8.bf16 %v1295
    %v1680 = vunpack.c.h.s8.bf16 %v1296
    %v1681 = vunpack.c.h.s8.bf16 %v1297
    %v1682 = vunpack.c.h.s8.bf16 %v1298
    %v1683 = vunpack.c.h.s8.bf16 %v1299
    %v1684 = vunpack.c.l.s8.bf16 %v1300
    %v1685 = vunpack.c.l.s8.bf16 %v1301
    %v1686 = vunpack.c.l.s8.bf16 %v1302
    %v1687 = vunpack.c.l.s8.bf16 %v1303
    %v1688 = vunpack.c.l.s8.bf16 %v1304
    %v1689 = vunpack.c.l.s8.bf16 %v1305
    %v1690 = vunpack.c.l.s8.bf16 %v1306
    %v1691 = vunpack.c.l.s8.bf16 %v1307
    %v1692 = vunpack.c.l.s8.bf16 %v1308
    %v1693 = vunpack.c.l.s8.bf16 %v1309
    %v1694 = vunpack.c.l.s8.bf16 %v1310
    %v1695 = vunpack.c.l.s8.bf16 %v1311
    %v1696 = vunpack.c.l.s8.bf16 %v1312
    %v1697 = vunpack.c.l.s8.bf16 %v1313
    %v1698 = vunpack.c.l.s8.bf16 %v1314
    %v1699 = vunpack.c.l.s8.bf16 %v1315
    %v1700 = vunpack.c.h.s8.bf16 %v1300
    %v1701 = vunpack.c.h.s8.bf16 %v1301
    %v1702 = vunpack.c.h.s8.bf16 %v1302
    %v1703 = vunpack.c.h.s8.bf16 %v1303
    %v1704 = vunpack.c.h.s8.bf16 %v1304
    %v1705 = vunpack.c.h.s8.bf16 %v1305
    %v1706 = vunpack.c.h.s8.bf16 %v1306
    %v1707 = vunpack.c.h.s8.bf16 %v1307
    %v1708 = vunpack.c.h.s8.bf16 %v1308
    %v1709 = vunpack.c.h.s8.bf16 %v1309
    %v1710 = vunpack.c.h.s8.bf16 %v1310
    %v1711 = vunpack.c.h.s8.bf16 %v1311
    %v1712 = vunpack.c.h.s8.bf16 %v1312
    %v1713 = vunpack.c.h.s8.bf16 %v1313
    %v1714 = vunpack.c.h.s8.bf16 %v1314
    %v1715 = vunpack.c.h.s8.bf16 %v1315
    %v1716 = vunpack.c.l.s8.bf16 %v1316
    %v1717 = vunpack.c.l.s8.bf16 %v1317
    %v1718 = vunpack.c.l.s8.bf16 %v1318
    %v1719 = vunpack.c.l.s8.bf16 %v1319
    %v1720 = vunpack.c.l.s8.bf16 %v1320
    %v1721 = vunpack.c.l.s8.bf16 %v1321
    %v1722 = vunpack.c.l.s8.bf16 %v1322
    %v1723 = vunpack.c.l.s8.bf16 %v1323
    %v1724 = vunpack.c.l.s8.bf16 %v1324
    %v1725 = vunpack.c.l.s8.bf16 %v1325
    %v1726 = vunpack.c.l.s8.bf16 %v1326
    %v1727 = vunpack.c.l.s8.bf16 %v1327
    %v1728 = vunpack.c.l.s8.bf16 %v1328
    %v1729 = vunpack.c.l.s8.bf16 %v1329
    %v1730 = vunpack.c.l.s8.bf16 %v1330
    %v1731 = vunpack.c.l.s8.bf16 %v1331
    %v1732 = vunpack.c.h.s8.bf16 %v1316
    %v1733 = vunpack.c.h.s8.bf16 %v1317
    %v1734 = vunpack.c.h.s8.bf16 %v1318
    %v1735 = vunpack.c.h.s8.bf16 %v1319
    %v1736 = vunpack.c.h.s8.bf16 %v1320
    %v1737 = vunpack.c.h.s8.bf16 %v1321
    %v1738 = vunpack.c.h.s8.bf16 %v1322
    %v1739 = vunpack.c.h.s8.bf16 %v1323
    %v1740 = vunpack.c.h.s8.bf16 %v1324
    %v1741 = vunpack.c.h.s8.bf16 %v1325
    %v1742 = vunpack.c.h.s8.bf16 %v1326
    %v1743 = vunpack.c.h.s8.bf16 %v1327
    %v1744 = vunpack.c.h.s8.bf16 %v1328
    %v1745 = vunpack.c.h.s8.bf16 %v1329
    %v1746 = vunpack.c.h.s8.bf16 %v1330
    %v1747 = vunpack.c.h.s8.bf16 %v1331
    %v1748 = vunpack.c.l.s8.bf16 %v1332
    %v1749 = vunpack.c.l.s8.bf16 %v1333
    %v1750 = vunpack.c.l.s8.bf16 %v1334
    %v1751 = vunpack.c.l.s8.bf16 %v1335
    %v1752 = vunpack.c.l.s8.bf16 %v1336
    %v1753 = vunpack.c.l.s8.bf16 %v1337
    %v1754 = vunpack.c.l.s8.bf16 %v1338
    %v1755 = vunpack.c.l.s8.bf16 %v1339
    %v1756 = vunpack.c.l.s8.bf16 %v1340
    %v1757 = vunpack.c.l.s8.bf16 %v1341
    %v1758 = vunpack.c.l.s8.bf16 %v1342
    %v1759 = vunpack.c.l.s8.bf16 %v1343
    %v1760 = vunpack.c.l.s8.bf16 %v1344
    %v1761 = vunpack.c.l.s8.bf16 %v1345
    %v1762 = vunpack.c.l.s8.bf16 %v1346
    %v1763 = vunpack.c.l.s8.bf16 %v1347
    %v1764 = vunpack.c.h.s8.bf16 %v1332
    %v1765 = vunpack.c.h.s8.bf16 %v1333
    %v1766 = vunpack.c.h.s8.bf16 %v1334
    %v1767 = vunpack.c.h.s8.bf16 %v1335
    %v1768 = vunpack.c.h.s8.bf16 %v1336
    %v1769 = vunpack.c.h.s8.bf16 %v1337
    %v1770 = vunpack.c.h.s8.bf16 %v1338
    %v1771 = vunpack.c.h.s8.bf16 %v1339
    %v1772 = vunpack.c.h.s8.bf16 %v1340
    %v1773 = vunpack.c.h.s8.bf16 %v1341
    %v1774 = vunpack.c.h.s8.bf16 %v1342
    %v1775 = vunpack.c.h.s8.bf16 %v1343
    %v1776 = vunpack.c.h.s8.bf16 %v1344
    %v1777 = vunpack.c.h.s8.bf16 %v1345
    %v1778 = vunpack.c.h.s8.bf16 %v1346
    %v1779 = vunpack.c.h.s8.bf16 %v1347
    %v1780 = vunpack.c.l.s8.bf16 %v1348
    %v1781 = vunpack.c.l.s8.bf16 %v1349
    %v1782 = vunpack.c.l.s8.bf16 %v1350
    %v1783 = vunpack.c.l.s8.bf16 %v1351
    %v1784 = vunpack.c.l.s8.bf16 %v1352
    %v1785 = vunpack.c.l.s8.bf16 %v1353
    %v1786 = vunpack.c.l.s8.bf16 %v1354
    %v1787 = vunpack.c.l.s8.bf16 %v1355
    %v1788 = vunpack.c.l.s8.bf16 %v1356
    %v1789 = vunpack.c.l.s8.bf16 %v1357
    %v1790 = vunpack.c.l.s8.bf16 %v1358
    %v1791 = vunpack.c.l.s8.bf16 %v1359
    %v1792 = vunpack.c.l.s8.bf16 %v1360
    %v1793 = vunpack.c.l.s8.bf16 %v1361
    %v1794 = vunpack.c.l.s8.bf16 %v1362
    %v1795 = vunpack.c.l.s8.bf16 %v1363
    %v1796 = vunpack.c.h.s8.bf16 %v1348
    %v1797 = vunpack.c.h.s8.bf16 %v1349
    %v1798 = vunpack.c.h.s8.bf16 %v1350
    %v1799 = vunpack.c.h.s8.bf16 %v1351
    %v1800 = vunpack.c.h.s8.bf16 %v1352
    %v1801 = vunpack.c.h.s8.bf16 %v1353
    %v1802 = vunpack.c.h.s8.bf16 %v1354
    %v1803 = vunpack.c.h.s8.bf16 %v1355
    %v1804 = vunpack.c.h.s8.bf16 %v1356
    %v1805 = vunpack.c.h.s8.bf16 %v1357
    %v1806 = vunpack.c.h.s8.bf16 %v1358
    %v1807 = vunpack.c.h.s8.bf16 %v1359
    %v1808 = vunpack.c.h.s8.bf16 %v1360
    %v1809 = vunpack.c.h.s8.bf16 %v1361
    %v1810 = vunpack.c.h.s8.bf16 %v1362
    %v1811 = vunpack.c.h.s8.bf16 %v1363
    %v1812 = vunpack.c.l.s8.bf16 %v1364
    %v1813 = vunpack.c.l.s8.bf16 %v1365
    %v1814 = vunpack.c.l.s8.bf16 %v1366
    %v1815 = vunpack.c.l.s8.bf16 %v1367
    %v1816 = vunpack.c.l.s8.bf16 %v1368
    %v1817 = vunpack.c.l.s8.bf16 %v1369
    %v1818 = vunpack.c.l.s8.bf16 %v1370
    %v1819 = vunpack.c.l.s8.bf16 %v1371
    %v1820 = vunpack.c.l.s8.bf16 %v1372
    %v1821 = vunpack.c.l.s8.bf16 %v1373
    %v1822 = vunpack.c.l.s8.bf16 %v1374
    %v1823 = vunpack.c.l.s8.bf16 %v1375
    %v1824 = vunpack.c.l.s8.bf16 %v1376
    %v1825 = vunpack.c.l.s8.bf16 %v1377
    %v1826 = vunpack.c.l.s8.bf16 %v1378
    %v1827 = vunpack.c.l.s8.bf16 %v1379
    %v1828 = vunpack.c.h.s8.bf16 %v1364
    %v1829 = vunpack.c.h.s8.bf16 %v1365
    %v1830 = vunpack.c.h.s8.bf16 %v1366
    %v1831 = vunpack.c.h.s8.bf16 %v1367
    %v1832 = vunpack.c.h.s8.bf16 %v1368
    %v1833 = vunpack.c.h.s8.bf16 %v1369
    %v1834 = vunpack.c.h.s8.bf16 %v1370
    %v1835 = vunpack.c.h.s8.bf16 %v1371
    %v1836 = vunpack.c.h.s8.bf16 %v1372
    %v1837 = vunpack.c.h.s8.bf16 %v1373
    %v1838 = vunpack.c.h.s8.bf16 %v1374
    %v1839 = vunpack.c.h.s8.bf16 %v1375
    %v1840 = vunpack.c.h.s8.bf16 %v1376
    %v1841 = vunpack.c.h.s8.bf16 %v1377
    %v1842 = vunpack.c.h.s8.bf16 %v1378
    %v1843 = vunpack.c.h.s8.bf16 %v1379
    %v1844 = vunpack.c.l.s8.bf16 %v1380
    %v1845 = vunpack.c.l.s8.bf16 %v1381
    %v1846 = vunpack.c.l.s8.bf16 %v1382
    %v1847 = vunpack.c.l.s8.bf16 %v1383
    %v1848 = vunpack.c.l.s8.bf16 %v1384
    %v1849 = vunpack.c.l.s8.bf16 %v1385
    %v1850 = vunpack.c.l.s8.bf16 %v1386
    %v1851 = vunpack.c.l.s8.bf16 %v1387
    %v1852 = vunpack.c.l.s8.bf16 %v1388
    %v1853 = vunpack.c.l.s8.bf16 %v1389
    %v1854 = vunpack.c.l.s8.bf16 %v1390
    %v1855 = vunpack.c.l.s8.bf16 %v1391
    %v1856 = vunpack.c.l.s8.bf16 %v1392
    %v1857 = vunpack.c.l.s8.bf16 %v1393
    %v1858 = vunpack.c.l.s8.bf16 %v1394
    %v1859 = vunpack.c.l.s8.bf16 %v1395
    %v1860 = vunpack.c.h.s8.bf16 %v1380
    %v1861 = vunpack.c.h.s8.bf16 %v1381
    %v1862 = vunpack.c.h.s8.bf16 %v1382
    %v1863 = vunpack.c.h.s8.bf16 %v1383
    %v1864 = vunpack.c.h.s8.bf16 %v1384
    %v1865 = vunpack.c.h.s8.bf16 %v1385
    %v1866 = vunpack.c.h.s8.bf16 %v1386
    %v1867 = vunpack.c.h.s8.bf16 %v1387
    %v1868 = vunpack.c.h.s8.bf16 %v1388
    %v1869 = vunpack.c.h.s8.bf16 %v1389
    %v1870 = vunpack.c.h.s8.bf16 %v1390
    %v1871 = vunpack.c.h.s8.bf16 %v1391
    %v1872 = vunpack.c.h.s8.bf16 %v1392
    %v1873 = vunpack.c.h.s8.bf16 %v1393
    %v1874 = vunpack.c.h.s8.bf16 %v1394
    %v1875 = vunpack.c.h.s8.bf16 %v1395
    %v1876 = vunpack.c.l.s8.bf16 %v1396
    %v1877 = vunpack.c.l.s8.bf16 %v1397
    %v1878 = vunpack.c.l.s8.bf16 %v1398
    %v1879 = vunpack.c.l.s8.bf16 %v1399
    %v1880 = vunpack.c.l.s8.bf16 %v1400
    %v1881 = vunpack.c.l.s8.bf16 %v1401
    %v1882 = vunpack.c.l.s8.bf16 %v1402
    %v1883 = vunpack.c.l.s8.bf16 %v1403
    %v1884 = vunpack.c.l.s8.bf16 %v1404
    %v1885 = vunpack.c.l.s8.bf16 %v1405
    %v1886 = vunpack.c.l.s8.bf16 %v1406
    %v1887 = vunpack.c.l.s8.bf16 %v1407
    %v1888 = vunpack.c.l.s8.bf16 %v1408
    %v1889 = vunpack.c.l.s8.bf16 %v1409
    %v1890 = vunpack.c.l.s8.bf16 %v1410
    %v1891 = vunpack.c.l.s8.bf16 %v1411
    %v1892 = vunpack.c.h.s8.bf16 %v1396
    %v1893 = vunpack.c.h.s8.bf16 %v1397
    %v1894 = vunpack.c.h.s8.bf16 %v1398
    %v1895 = vunpack.c.h.s8.bf16 %v1399
    %v1896 = vunpack.c.h.s8.bf16 %v1400
    %v1897 = vunpack.c.h.s8.bf16 %v1401
    %v1898 = vunpack.c.h.s8.bf16 %v1402
    %v1899 = vunpack.c.h.s8.bf16 %v1403
    %v1900 = vunpack.c.h.s8.bf16 %v1404
    %v1901 = vunpack.c.h.s8.bf16 %v1405
    %v1902 = vunpack.c.h.s8.bf16 %v1406
    %v1903 = vunpack.c.h.s8.bf16 %v1407
    %v1904 = vunpack.c.h.s8.bf16 %v1408
    %v1905 = vunpack.c.h.s8.bf16 %v1409
    %v1906 = vunpack.c.h.s8.bf16 %v1410
    %v1907 = vunpack.c.h.s8.bf16 %v1411
    %v1908 = vunpack.c.l.s8.bf16 %v1412
    %v1909 = vunpack.c.l.s8.bf16 %v1413
    %v1910 = vunpack.c.l.s8.bf16 %v1414
    %v1911 = vunpack.c.l.s8.bf16 %v1415
    %v1912 = vunpack.c.l.s8.bf16 %v1416
    %v1913 = vunpack.c.l.s8.bf16 %v1417
    %v1914 = vunpack.c.l.s8.bf16 %v1418
    %v1915 = vunpack.c.l.s8.bf16 %v1419
    %v1916 = vunpack.c.l.s8.bf16 %v1420
    %v1917 = vunpack.c.l.s8.bf16 %v1421
    %v1918 = vunpack.c.l.s8.bf16 %v1422
    %v1919 = vunpack.c.l.s8.bf16 %v1423
    %v1920 = vunpack.c.l.s8.bf16 %v1424
    %v1921 = vunpack.c.l.s8.bf16 %v1425
    %v1922 = vunpack.c.l.s8.bf16 %v1426
    %v1923 = vunpack.c.l.s8.bf16 %v1427
    %v1924 = vunpack.c.h.s8.bf16 %v1412
    %v1925 = vunpack.c.h.s8.bf16 %v1413
    %v1926 = vunpack.c.h.s8.bf16 %v1414
    %v1927 = vunpack.c.h.s8.bf16 %v1415
    %v1928 = vunpack.c.h.s8.bf16 %v1416
    %v1929 = vunpack.c.h.s8.bf16 %v1417
    %v1930 = vunpack.c.h.s8.bf16 %v1418
    %v1931 = vunpack.c.h.s8.bf16 %v1419
    %v1932 = vunpack.c.h.s8.bf16 %v1420
    %v1933 = vunpack.c.h.s8.bf16 %v1421
    %v1934 = vunpack.c.h.s8.bf16 %v1422
    %v1935 = vunpack.c.h.s8.bf16 %v1423
    %v1936 = vunpack.c.h.s8.bf16 %v1424
    %v1937 = vunpack.c.h.s8.bf16 %v1425
    %v1938 = vunpack.c.h.s8.bf16 %v1426
    %v1939 = vunpack.c.h.s8.bf16 %v1427
    %v1940 = vld [vmem:[#allocation15] sm:$0xff]
    %v1941 = vld [vmem:[#allocation15 + $0x8] sm:$0xff]
    %v1942 = vld [vmem:[#allocation14] sm:$0xff]
    %v1943 = vld [vmem:[#allocation14 + $0x8] sm:$0xff]
    %1944 = vmatprep.subr.bf16.mxu0 %v1541
    %1945 = vmatpush1.bf16.msra.mxu0 %v1540
    %1946 = vmatprep.subr.bf16.mxu0 %v1525
    %1947 = vmatpush1.bf16.msra.mxu0 %v1524
    %1948 = vmatprep.subr.bf16.mxu0 %v1509
    %1949 = vmatpush1.bf16.msra.mxu0 %v1508
    %1950 = vmatprep.subr.bf16.mxu0 %v1493
    %1951 = vmatpush1.bf16.msra.mxu0 %v1492
    %1952 = vmatprep.subr.bf16.mxu0 %v1477
    %1953 = vmatpush1.bf16.msra.mxu0 %v1476
    %1954 = vmatprep.subr.bf16.mxu0 %v1461
    %1955 = vmatpush1.bf16.msra.mxu0 %v1460
    %1956 = vmatprep.subr.bf16.mxu0 %v1445
    %1957 = vmatpush1.bf16.msra.mxu0 %v1444
    %1958 = vmatprep.subr.bf16.mxu0 %v1429
    %1959 = vmatpush1.bf16.msra.mxu0 %v1428
    %1960 = vmatprep.subr.bf16.mxu0 %v1669
    %1961 = vmatpush2.bf16.msra.mxu0 %v1668
    %1962 = vmatprep.subr.bf16.mxu0 %v1653
    %1963 = vmatpush2.bf16.msra.mxu0 %v1652
    %1964 = vmatprep.subr.bf16.mxu0 %v1637
    %1965 = vmatpush2.bf16.msra.mxu0 %v1636
    %1966 = vmatprep.subr.bf16.mxu0 %v1621
    %1967 = vmatpush2.bf16.msra.mxu0 %v1620
    %1968 = vmatprep.subr.bf16.mxu0 %v1605
    %1969 = vmatpush2.bf16.msra.mxu0 %v1604
    %1970 = vmatprep.subr.bf16.mxu0 %v1589
    %1971 = vmatpush2.bf16.msra.mxu0 %v1588
    %1972 = vmatprep.subr.bf16.mxu0 %v1573
    %1973 = vmatpush2.bf16.msra.mxu0 %v1572
    %1974 = vmatprep.subr.bf16.mxu0 %v1557
    %1975 = vmatpush2.bf16.msra.mxu0 %v1556
    %1976 = vmatprep.mubr.bf16.mxu0 %v1169
    %1977 = vmatmul.mubr.bf16.gmra.mxu0 %v1168
    %v1978 = vpop.f32.mrf.mxu0
    %v1979 = vadd.f32 0.0, %v1978
    %v1980 = vpop.f32.mrf.mxu0
    %v1981 = vadd.f32 0.0, %v1980
    %v1982 = vpop.f32.mrf.mxu0
    %v1983 = vadd.f32 0.0, %v1982
    %v1984 = vpop.f32.mrf.mxu0
    %v1985 = vadd.f32 0.0, %v1984
    %1986 = vdwg.mxu0
    %1987 = vmatprep.subr.bf16.mxu0 %v1797
    %1988 = vmatpush1.bf16.msra.mxu0 %v1796
    %1989 = vmatprep.subr.bf16.mxu0 %v1781
    %1990 = vmatpush1.bf16.msra.mxu0 %v1780
    %1991 = vmatprep.subr.bf16.mxu0 %v1765
    %1992 = vmatpush1.bf16.msra.mxu0 %v1764
    %1993 = vmatprep.subr.bf16.mxu0 %v1749
    %1994 = vmatpush1.bf16.msra.mxu0 %v1748
    %1995 = vmatprep.subr.bf16.mxu0 %v1733
    %1996 = vmatpush1.bf16.msra.mxu0 %v1732
    %1997 = vmatprep.subr.bf16.mxu0 %v1717
    %1998 = vmatpush1.bf16.msra.mxu0 %v1716
    %1999 = vmatprep.subr.bf16.mxu0 %v1701
    %2000 = vmatpush1.bf16.msra.mxu0 %v1700
    %2001 = vmatprep.subr.bf16.mxu0 %v1685
    %2002 = vmatpush1.bf16.msra.mxu0 %v1684
    %2003 = vmatprep.subr.bf16.mxu0 %v1925
    %2004 = vmatpush2.bf16.msra.mxu0 %v1924
    %2005 = vmatprep.subr.bf16.mxu0 %v1909
    %2006 = vmatpush2.bf16.msra.mxu0 %v1908
    %2007 = vmatprep.subr.bf16.mxu0 %v1893
    %2008 = vmatpush2.bf16.msra.mxu0 %v1892
    %2009 = vmatprep.subr.bf16.mxu0 %v1877
    %2010 = vmatpush2.bf16.msra.mxu0 %v1876
    %2011 = vmatprep.subr.bf16.mxu0 %v1861
    %2012 = vmatpush2.bf16.msra.mxu0 %v1860
    %2013 = vmatprep.subr.bf16.mxu0 %v1845
    %2014 = vmatpush2.bf16.msra.mxu0 %v1844
    %2015 = vmatprep.subr.bf16.mxu0 %v1829
    %2016 = vmatpush2.bf16.msra.mxu0 %v1828
    %2017 = vmatprep.subr.bf16.mxu0 %v1813
    %2018 = vmatpush2.bf16.msra.mxu0 %v1812
    %2019 = vmatprep.mubr.bf16.mxu0 %v1171
    %2020 = vmatmul.mubr.bf16.gmra.mxu0 %v1170
    %v2021 = vpop.f32.mrf.mxu0
    %v2022 = vadd.f32 %v1979, %v2021
    %v2023 = vpop.f32.mrf.mxu0
    %v2024 = vadd.f32 %v1981, %v2023
    %v2025 = vpop.f32.mrf.mxu0
    %v2026 = vadd.f32 %v1983, %v2025
    %v2027 = vpop.f32.mrf.mxu0
    %v2028 = vadd.f32 %v1985, %v2027
    %2029 = vdwg.mxu0
    %2030 = vmatprep.subr.bf16.mxu0 %v1543
    %2031 = vmatpush1.bf16.msra.mxu0 %v1542
    %2032 = vmatprep.subr.bf16.mxu0 %v1527
    %2033 = vmatpush1.bf16.msra.mxu0 %v1526
    %2034 = vmatprep.subr.bf16.mxu0 %v1511
    %2035 = vmatpush1.bf16.msra.mxu0 %v1510
    %2036 = vmatprep.subr.bf16.mxu0 %v1495
    %2037 = vmatpush1.bf16.msra.mxu0 %v1494
    %2038 = vmatprep.subr.bf16.mxu0 %v1479
    %2039 = vmatpush1.bf16.msra.mxu0 %v1478
    %2040 = vmatprep.subr.bf16.mxu0 %v1463
    %2041 = vmatpush1.bf16.msra.mxu0 %v1462
    %2042 = vmatprep.subr.bf16.mxu0 %v1447
    %2043 = vmatpush1.bf16.msra.mxu0 %v1446
    %2044 = vmatprep.subr.bf16.mxu0 %v1431
    %2045 = vmatpush1.bf16.msra.mxu0 %v1430
    %2046 = vmatprep.subr.bf16.mxu0 %v1671
    %2047 = vmatpush2.bf16.msra.mxu0 %v1670
    %2048 = vmatprep.subr.bf16.mxu0 %v1655
    %2049 = vmatpush2.bf16.msra.mxu0 %v1654
    %2050 = vmatprep.subr.bf16.mxu0 %v1639
    %2051 = vmatpush2.bf16.msra.mxu0 %v1638
    %2052 = vmatprep.subr.bf16.mxu0 %v1623
    %2053 = vmatpush2.bf16.msra.mxu0 %v1622
    %2054 = vmatprep.subr.bf16.mxu0 %v1607
    %2055 = vmatpush2.bf16.msra.mxu0 %v1606
    %2056 = vmatprep.subr.bf16.mxu0 %v1591
    %2057 = vmatpush2.bf16.msra.mxu0 %v1590
    %2058 = vmatprep.subr.bf16.mxu0 %v1575
    %2059 = vmatpush2.bf16.msra.mxu0 %v1574
    %2060 = vmatprep.subr.bf16.mxu0 %v1559
    %2061 = vmatpush2.bf16.msra.mxu0 %v1558
    %2062 = vmatprep.mubr.bf16.mxu0 %v1169
    %2063 = vmatmul.mubr.bf16.gmra.mxu0 %v1168
    %v2064 = vpop.f32.mrf.mxu0
    %v2065 = vadd.f32 0.0, %v2064
    %v2066 = vpop.f32.mrf.mxu0
    %v2067 = vadd.f32 0.0, %v2066
    %v2068 = vpop.f32.mrf.mxu0
    %v2069 = vadd.f32 0.0, %v2068
    %v2070 = vpop.f32.mrf.mxu0
    %v2071 = vadd.f32 0.0, %v2070
    %2072 = vdwg.mxu0
    %2073 = vmatprep.subr.bf16.mxu0 %v1799
    %2074 = vmatpush1.bf16.msra.mxu0 %v1798
    %2075 = vmatprep.subr.bf16.mxu0 %v1783
    %2076 = vmatpush1.bf16.msra.mxu0 %v1782
    %2077 = vmatprep.subr.bf16.mxu0 %v1767
    %2078 = vmatpush1.bf16.msra.mxu0 %v1766
    %2079 = vmatprep.subr.bf16.mxu0 %v1751
    %2080 = vmatpush1.bf16.msra.mxu0 %v1750
    %2081 = vmatprep.subr.bf16.mxu0 %v1735
    %2082 = vmatpush1.bf16.msra.mxu0 %v1734
    %2083 = vmatprep.subr.bf16.mxu0 %v1719
    %2084 = vmatpush1.bf16.msra.mxu0 %v1718
    %2085 = vmatprep.subr.bf16.mxu0 %v1703
    %2086 = vmatpush1.bf16.msra.mxu0 %v1702
    %2087 = vmatprep.subr.bf16.mxu0 %v1687
    %2088 = vmatpush1.bf16.msra.mxu0 %v1686
    %2089 = vmatprep.subr.bf16.mxu0 %v1927
    %2090 = vmatpush2.bf16.msra.mxu0 %v1926
    %2091 = vmatprep.subr.bf16.mxu0 %v1911
    %2092 = vmatpush2.bf16.msra.mxu0 %v1910
    %2093 = vmatprep.subr.bf16.mxu0 %v1895
    %2094 = vmatpush2.bf16.msra.mxu0 %v1894
    %2095 = vmatprep.subr.bf16.mxu0 %v1879
    %2096 = vmatpush2.bf16.msra.mxu0 %v1878
    %2097 = vmatprep.subr.bf16.mxu0 %v1863
    %2098 = vmatpush2.bf16.msra.mxu0 %v1862
    %2099 = vmatprep.subr.bf16.mxu0 %v1847
    %2100 = vmatpush2.bf16.msra.mxu0 %v1846
    %2101 = vmatprep.subr.bf16.mxu0 %v1831
    %2102 = vmatpush2.bf16.msra.mxu0 %v1830
    %2103 = vmatprep.subr.bf16.mxu0 %v1815
    %2104 = vmatpush2.bf16.msra.mxu0 %v1814
    %2105 = vmatprep.mubr.bf16.mxu0 %v1171
    %2106 = vmatmul.mubr.bf16.gmra.mxu0 %v1170
    %v2107 = vpop.f32.mrf.mxu0
    %v2108 = vadd.f32 %v2065, %v2107
    %v2109 = vpop.f32.mrf.mxu0
    %v2110 = vadd.f32 %v2067, %v2109
    %v2111 = vpop.f32.mrf.mxu0
    %v2112 = vadd.f32 %v2069, %v2111
    %v2113 = vpop.f32.mrf.mxu0
    %v2114 = vadd.f32 %v2071, %v2113
    %2115 = vdwg.mxu0
    %2116 = vmatprep.subr.bf16.mxu0 %v1545
    %2117 = vmatpush1.bf16.msra.mxu0 %v1544
    %2118 = vmatprep.subr.bf16.mxu0 %v1529
    %2119 = vmatpush1.bf16.msra.mxu0 %v1528
    %2120 = vmatprep.subr.bf16.mxu0 %v1513
    %2121 = vmatpush1.bf16.msra.mxu0 %v1512
    %2122 = vmatprep.subr.bf16.mxu0 %v1497
    %2123 = vmatpush1.bf16.msra.mxu0 %v1496
    %2124 = vmatprep.subr.bf16.mxu0 %v1481
    %2125 = vmatpush1.bf16.msra.mxu0 %v1480
    %2126 = vmatprep.subr.bf16.mxu0 %v1465
    %2127 = vmatpush1.bf16.msra.mxu0 %v1464
    %2128 = vmatprep.subr.bf16.mxu0 %v1449
    %2129 = vmatpush1.bf16.msra.mxu0 %v1448
    %2130 = vmatprep.subr.bf16.mxu0 %v1433
    %2131 = vmatpush1.bf16.msra.mxu0 %v1432
    %2132 = vmatprep.subr.bf16.mxu0 %v1673
    %2133 = vmatpush2.bf16.msra.mxu0 %v1672
    %2134 = vmatprep.subr.bf16.mxu0 %v1657
    %2135 = vmatpush2.bf16.msra.mxu0 %v1656
    %2136 = vmatprep.subr.bf16.mxu0 %v1641
    %2137 = vmatpush2.bf16.msra.mxu0 %v1640
    %2138 = vmatprep.subr.bf16.mxu0 %v1625
    %2139 = vmatpush2.bf16.msra.mxu0 %v1624
    %2140 = vmatprep.subr.bf16.mxu0 %v1609
    %2141 = vmatpush2.bf16.msra.mxu0 %v1608
    %2142 = vmatprep.subr.bf16.mxu0 %v1593
    %2143 = vmatpush2.bf16.msra.mxu0 %v1592
    %2144 = vmatprep.subr.bf16.mxu0 %v1577
    %2145 = vmatpush2.bf16.msra.mxu0 %v1576
    %2146 = vmatprep.subr.bf16.mxu0 %v1561
    %2147 = vmatpush2.bf16.msra.mxu0 %v1560
    %2148 = vmatprep.mubr.bf16.mxu0 %v1169
    %2149 = vmatmul.mubr.bf16.gmra.mxu0 %v1168
    %v2150 = vpop.f32.mrf.mxu0
    %v2151 = vadd.f32 0.0, %v2150
    %v2152 = vpop.f32.mrf.mxu0
    %v2153 = vadd.f32 0.0, %v2152
    %v2154 = vpop.f32.mrf.mxu0
    %v2155 = vadd.f32 0.0, %v2154
    %v2156 = vpop.f32.mrf.mxu0
    %v2157 = vadd.f32 0.0, %v2156
    %2158 = vdwg.mxu0
    %2159 = vmatprep.subr.bf16.mxu0 %v1801
    %2160 = vmatpush1.bf16.msra.mxu0 %v1800
    %2161 = vmatprep.subr.bf16.mxu0 %v1785
    %2162 = vmatpush1.bf16.msra.mxu0 %v1784
    %2163 = vmatprep.subr.bf16.mxu0 %v1769
    %2164 = vmatpush1.bf16.msra.mxu0 %v1768
    %2165 = vmatprep.subr.bf16.mxu0 %v1753
    %2166 = vmatpush1.bf16.msra.mxu0 %v1752
    %2167 = vmatprep.subr.bf16.mxu0 %v1737
    %2168 = vmatpush1.bf16.msra.mxu0 %v1736
    %2169 = vmatprep.subr.bf16.mxu0 %v1721
    %2170 = vmatpush1.bf16.msra.mxu0 %v1720
    %2171 = vmatprep.subr.bf16.mxu0 %v1705
    %2172 = vmatpush1.bf16.msra.mxu0 %v1704
    %2173 = vmatprep.subr.bf16.mxu0 %v1689
    %2174 = vmatpush1.bf16.msra.mxu0 %v1688
    %2175 = vmatprep.subr.bf16.mxu0 %v1929
    %2176 = vmatpush2.bf16.msra.mxu0 %v1928
    %2177 = vmatprep.subr.bf16.mxu0 %v1913
    %2178 = vmatpush2.bf16.msra.mxu0 %v1912
    %2179 = vmatprep.subr.bf16.mxu0 %v1897
    %2180 = vmatpush2.bf16.msra.mxu0 %v1896
    %2181 = vmatprep.subr.bf16.mxu0 %v1881
    %2182 = vmatpush2.bf16.msra.mxu0 %v1880
    %2183 = vmatprep.subr.bf16.mxu0 %v1865
    %2184 = vmatpush2.bf16.msra.mxu0 %v1864
    %2185 = vmatprep.subr.bf16.mxu0 %v1849
    %2186 = vmatpush2.bf16.msra.mxu0 %v1848
    %2187 = vmatprep.subr.bf16.mxu0 %v1833
    %2188 = vmatpush2.bf16.msra.mxu0 %v1832
    %2189 = vmatprep.subr.bf16.mxu0 %v1817
    %2190 = vmatpush2.bf16.msra.mxu0 %v1816
    %2191 = vmatprep.mubr.bf16.mxu0 %v1171
    %2192 = vmatmul.mubr.bf16.gmra.mxu0 %v1170
    %v2193 = vpop.f32.mrf.mxu0
    %v2194 = vadd.f32 %v2151, %v2193
    %v2195 = vpop.f32.mrf.mxu0
    %v2196 = vadd.f32 %v2153, %v2195
    %v2197 = vpop.f32.mrf.mxu0
    %v2198 = vadd.f32 %v2155, %v2197
    %v2199 = vpop.f32.mrf.mxu0
    %v2200 = vadd.f32 %v2157, %v2199
    %2201 = vdwg.mxu0
    %2202 = vmatprep.subr.bf16.mxu0 %v1547
    %2203 = vmatpush1.bf16.msra.mxu0 %v1546
    %2204 = vmatprep.subr.bf16.mxu0 %v1531
    %2205 = vmatpush1.bf16.msra.mxu0 %v1530
    %2206 = vmatprep.subr.bf16.mxu0 %v1515
    %2207 = vmatpush1.bf16.msra.mxu0 %v1514
    %2208 = vmatprep.subr.bf16.mxu0 %v1499
    %2209 = vmatpush1.bf16.msra.mxu0 %v1498
    %2210 = vmatprep.subr.bf16.mxu0 %v1483
    %2211 = vmatpush1.bf16.msra.mxu0 %v1482
    %2212 = vmatprep.subr.bf16.mxu0 %v1467
    %2213 = vmatpush1.bf16.msra.mxu0 %v1466
    %2214 = vmatprep.subr.bf16.mxu0 %v1451
    %2215 = vmatpush1.bf16.msra.mxu0 %v1450
    %2216 = vmatprep.subr.bf16.mxu0 %v1435
    %2217 = vmatpush1.bf16.msra.mxu0 %v1434
    %2218 = vmatprep.subr.bf16.mxu0 %v1675
    %2219 = vmatpush2.bf16.msra.mxu0 %v1674
    %2220 = vmatprep.subr.bf16.mxu0 %v1659
    %2221 = vmatpush2.bf16.msra.mxu0 %v1658
    %2222 = vmatprep.subr.bf16.mxu0 %v1643
    %2223 = vmatpush2.bf16.msra.mxu0 %v1642
    %2224 = vmatprep.subr.bf16.mxu0 %v1627
    %2225 = vmatpush2.bf16.msra.mxu0 %v1626
    %2226 = vmatprep.subr.bf16.mxu0 %v1611
    %2227 = vmatpush2.bf16.msra.mxu0 %v1610
    %2228 = vmatprep.subr.bf16.mxu0 %v1595
    %2229 = vmatpush2.bf16.msra.mxu0 %v1594
    %2230 = vmatprep.subr.bf16.mxu0 %v1579
    %2231 = vmatpush2.bf16.msra.mxu0 %v1578
    %2232 = vmatprep.subr.bf16.mxu0 %v1563
    %2233 = vmatpush2.bf16.msra.mxu0 %v1562
    %2234 = vmatprep.mubr.bf16.mxu0 %v1169
    %2235 = vmatmul.mubr.bf16.gmra.mxu0 %v1168
    %v2236 = vpop.f32.mrf.mxu0
    %v2237 = vadd.f32 0.0, %v2236
    %v2238 = vpop.f32.mrf.mxu0
    %v2239 = vadd.f32 0.0, %v2238
    %v2240 = vpop.f32.mrf.mxu0
    %v2241 = vadd.f32 0.0, %v2240
    %v2242 = vpop.f32.mrf.mxu0
    %v2243 = vadd.f32 0.0, %v2242
    %2244 = vdwg.mxu0
    %2245 = vmatprep.subr.bf16.mxu0 %v1803
    %2246 = vmatpush1.bf16.msra.mxu0 %v1802
    %2247 = vmatprep.subr.bf16.mxu0 %v1787
    %2248 = vmatpush1.bf16.msra.mxu0 %v1786
    %2249 = vmatprep.subr.bf16.mxu0 %v1771
    %2250 = vmatpush1.bf16.msra.mxu0 %v1770
    %2251 = vmatprep.subr.bf16.mxu0 %v1755
    %2252 = vmatpush1.bf16.msra.mxu0 %v1754
    %2253 = vmatprep.subr.bf16.mxu0 %v1739
    %2254 = vmatpush1.bf16.msra.mxu0 %v1738
    %2255 = vmatprep.subr.bf16.mxu0 %v1723
    %2256 = vmatpush1.bf16.msra.mxu0 %v1722
    %2257 = vmatprep.subr.bf16.mxu0 %v1707
    %2258 = vmatpush1.bf16.msra.mxu0 %v1706
    %2259 = vmatprep.subr.bf16.mxu0 %v1691
    %2260 = vmatpush1.bf16.msra.mxu0 %v1690
    %2261 = vmatprep.subr.bf16.mxu0 %v1931
    %2262 = vmatpush2.bf16.msra.mxu0 %v1930
    %2263 = vmatprep.subr.bf16.mxu0 %v1915
    %2264 = vmatpush2.bf16.msra.mxu0 %v1914
    %2265 = vmatprep.subr.bf16.mxu0 %v1899
    %2266 = vmatpush2.bf16.msra.mxu0 %v1898
    %2267 = vmatprep.subr.bf16.mxu0 %v1883
    %2268 = vmatpush2.bf16.msra.mxu0 %v1882
    %2269 = vmatprep.subr.bf16.mxu0 %v1867
    %2270 = vmatpush2.bf16.msra.mxu0 %v1866
    %2271 = vmatprep.subr.bf16.mxu0 %v1851
    %2272 = vmatpush2.bf16.msra.mxu0 %v1850
    %2273 = vmatprep.subr.bf16.mxu0 %v1835
    %2274 = vmatpush2.bf16.msra.mxu0 %v1834
    %2275 = vmatprep.subr.bf16.mxu0 %v1819
    %2276 = vmatpush2.bf16.msra.mxu0 %v1818
    %2277 = vmatprep.mubr.bf16.mxu0 %v1171
    %2278 = vmatmul.mubr.bf16.gmra.mxu0 %v1170
    %v2279 = vpop.f32.mrf.mxu0
    %v2280 = vadd.f32 %v2237, %v2279
    %v2281 = vpop.f32.mrf.mxu0
    %v2282 = vadd.f32 %v2239, %v2281
    %v2283 = vpop.f32.mrf.mxu0
    %v2284 = vadd.f32 %v2241, %v2283
    %v2285 = vpop.f32.mrf.mxu0
    %v2286 = vadd.f32 %v2243, %v2285
    %2287 = vdwg.mxu0
    %2288 = vmatprep.subr.bf16.mxu0 %v1549
    %2289 = vmatpush1.bf16.msra.mxu0 %v1548
    %2290 = vmatprep.subr.bf16.mxu0 %v1533
    %2291 = vmatpush1.bf16.msra.mxu0 %v1532
    %2292 = vmatprep.subr.bf16.mxu0 %v1517
    %2293 = vmatpush1.bf16.msra.mxu0 %v1516
    %2294 = vmatprep.subr.bf16.mxu0 %v1501
    %2295 = vmatpush1.bf16.msra.mxu0 %v1500
    %2296 = vmatprep.subr.bf16.mxu0 %v1485
    %2297 = vmatpush1.bf16.msra.mxu0 %v1484
    %2298 = vmatprep.subr.bf16.mxu0 %v1469
    %2299 = vmatpush1.bf16.msra.mxu0 %v1468
    %2300 = vmatprep.subr.bf16.mxu0 %v1453
    %2301 = vmatpush1.bf16.msra.mxu0 %v1452
    %2302 = vmatprep.subr.bf16.mxu0 %v1437
    %2303 = vmatpush1.bf16.msra.mxu0 %v1436
    %2304 = vmatprep.subr.bf16.mxu0 %v1677
    %2305 = vmatpush2.bf16.msra.mxu0 %v1676
    %2306 = vmatprep.subr.bf16.mxu0 %v1661
    %2307 = vmatpush2.bf16.msra.mxu0 %v1660
    %2308 = vmatprep.subr.bf16.mxu0 %v1645
    %2309 = vmatpush2.bf16.msra.mxu0 %v1644
    %2310 = vmatprep.subr.bf16.mxu0 %v1629
    %2311 = vmatpush2.bf16.msra.mxu0 %v1628
    %2312 = vmatprep.subr.bf16.mxu0 %v1613
    %2313 = vmatpush2.bf16.msra.mxu0 %v1612
    %2314 = vmatprep.subr.bf16.mxu0 %v1597
    %2315 = vmatpush2.bf16.msra.mxu0 %v1596
    %2316 = vmatprep.subr.bf16.mxu0 %v1581
    %2317 = vmatpush2.bf16.msra.mxu0 %v1580
    %2318 = vmatprep.subr.bf16.mxu0 %v1565
    %2319 = vmatpush2.bf16.msra.mxu0 %v1564
    %2320 = vmatprep.mubr.bf16.mxu0 %v1169
    %2321 = vmatmul.mubr.bf16.gmra.mxu0 %v1168
    %v2322 = vpop.f32.mrf.mxu0
    %v2323 = vadd.f32 0.0, %v2322
    %v2324 = vpop.f32.mrf.mxu0
    %v2325 = vadd.f32 0.0, %v2324
    %v2326 = vpop.f32.mrf.mxu0
    %v2327 = vadd.f32 0.0, %v2326
    %v2328 = vpop.f32.mrf.mxu0
    %v2329 = vadd.f32 0.0, %v2328
    %2330 = vdwg.mxu0
    %2331 = vmatprep.subr.bf16.mxu0 %v1805
    %2332 = vmatpush1.bf16.msra.mxu0 %v1804
    %2333 = vmatprep.subr.bf16.mxu0 %v1789
    %2334 = vmatpush1.bf16.msra.mxu0 %v1788
    %2335 = vmatprep.subr.bf16.mxu0 %v1773
    %2336 = vmatpush1.bf16.msra.mxu0 %v1772
    %2337 = vmatprep.subr.bf16.mxu0 %v1757
    %2338 = vmatpush1.bf16.msra.mxu0 %v1756
    %2339 = vmatprep.subr.bf16.mxu0 %v1741
    %2340 = vmatpush1.bf16.msra.mxu0 %v1740
    %2341 = vmatprep.subr.bf16.mxu0 %v1725
    %2342 = vmatpush1.bf16.msra.mxu0 %v1724
    %2343 = vmatprep.subr.bf16.mxu0 %v1709
    %2344 = vmatpush1.bf16.msra.mxu0 %v1708
    %2345 = vmatprep.subr.bf16.mxu0 %v1693
    %2346 = vmatpush1.bf16.msra.mxu0 %v1692
    %2347 = vmatprep.subr.bf16.mxu0 %v1933
    %2348 = vmatpush2.bf16.msra.mxu0 %v1932
    %2349 = vmatprep.subr.bf16.mxu0 %v1917
    %2350 = vmatpush2.bf16.msra.mxu0 %v1916
    %2351 = vmatprep.subr.bf16.mxu0 %v1901
    %2352 = vmatpush2.bf16.msra.mxu0 %v1900
    %2353 = vmatprep.subr.bf16.mxu0 %v1885
    %2354 = vmatpush2.bf16.msra.mxu0 %v1884
    %2355 = vmatprep.subr.bf16.mxu0 %v1869
    %2356 = vmatpush2.bf16.msra.mxu0 %v1868
    %2357 = vmatprep.subr.bf16.mxu0 %v1853
    %2358 = vmatpush2.bf16.msra.mxu0 %v1852
    %2359 = vmatprep.subr.bf16.mxu0 %v1837
    %2360 = vmatpush2.bf16.msra.mxu0 %v1836
    %2361 = vmatprep.subr.bf16.mxu0 %v1821
    %2362 = vmatpush2.bf16.msra.mxu0 %v1820
    %2363 = vmatprep.mubr.bf16.mxu0 %v1171
    %2364 = vmatmul.mubr.bf16.gmra.mxu0 %v1170
    %v2365 = vpop.f32.mrf.mxu0
    %v2366 = vadd.f32 %v2323, %v2365
    %v2367 = vpop.f32.mrf.mxu0
    %v2368 = vadd.f32 %v2325, %v2367
    %v2369 = vpop.f32.mrf.mxu0
    %v2370 = vadd.f32 %v2327, %v2369
    %v2371 = vpop.f32.mrf.mxu0
    %v2372 = vadd.f32 %v2329, %v2371
    %2373 = vdwg.mxu0
    %2374 = vmatprep.subr.bf16.mxu0 %v1551
    %2375 = vmatpush1.bf16.msra.mxu0 %v1550
    %2376 = vmatprep.subr.bf16.mxu0 %v1535
    %2377 = vmatpush1.bf16.msra.mxu0 %v1534
    %2378 = vmatprep.subr.bf16.mxu0 %v1519
    %2379 = vmatpush1.bf16.msra.mxu0 %v1518
    %2380 = vmatprep.subr.bf16.mxu0 %v1503
    %2381 = vmatpush1.bf16.msra.mxu0 %v1502
    %2382 = vmatprep.subr.bf16.mxu0 %v1487
    %2383 = vmatpush1.bf16.msra.mxu0 %v1486
    %2384 = vmatprep.subr.bf16.mxu0 %v1471
    %2385 = vmatpush1.bf16.msra.mxu0 %v1470
    %2386 = vmatprep.subr.bf16.mxu0 %v1455
    %2387 = vmatpush1.bf16.msra.mxu0 %v1454
    %2388 = vmatprep.subr.bf16.mxu0 %v1439
    %2389 = vmatpush1.bf16.msra.mxu0 %v1438
    %2390 = vmatprep.subr.bf16.mxu0 %v1679
    %2391 = vmatpush2.bf16.msra.mxu0 %v1678
    %2392 = vmatprep.subr.bf16.mxu0 %v1663
    %2393 = vmatpush2.bf16.msra.mxu0 %v1662
    %2394 = vmatprep.subr.bf16.mxu0 %v1647
    %2395 = vmatpush2.bf16.msra.mxu0 %v1646
    %2396 = vmatprep.subr.bf16.mxu0 %v1631
    %2397 = vmatpush2.bf16.msra.mxu0 %v1630
    %2398 = vmatprep.subr.bf16.mxu0 %v1615
    %2399 = vmatpush2.bf16.msra.mxu0 %v1614
    %2400 = vmatprep.subr.bf16.mxu0 %v1599
    %2401 = vmatpush2.bf16.msra.mxu0 %v1598
    %2402 = vmatprep.subr.bf16.mxu0 %v1583
    %2403 = vmatpush2.bf16.msra.mxu0 %v1582
    %2404 = vmatprep.subr.bf16.mxu0 %v1567
    %2405 = vmatpush2.bf16.msra.mxu0 %v1566
    %2406 = vmatprep.mubr.bf16.mxu0 %v1169
    %2407 = vmatmul.mubr.bf16.gmra.mxu0 %v1168
    %v2408 = vpop.f32.mrf.mxu0
    %v2409 = vadd.f32 0.0, %v2408
    %v2410 = vpop.f32.mrf.mxu0
    %v2411 = vadd.f32 0.0, %v2410
    %v2412 = vpop.f32.mrf.mxu0
    %v2413 = vadd.f32 0.0, %v2412
    %v2414 = vpop.f32.mrf.mxu0
    %v2415 = vadd.f32 0.0, %v2414
    %2416 = vdwg.mxu0
    %2417 = vmatprep.subr.bf16.mxu0 %v1807
    %2418 = vmatpush1.bf16.msra.mxu0 %v1806
    %2419 = vmatprep.subr.bf16.mxu0 %v1791
    %2420 = vmatpush1.bf16.msra.mxu0 %v1790
    %2421 = vmatprep.subr.bf16.mxu0 %v1775
    %2422 = vmatpush1.bf16.msra.mxu0 %v1774
    %2423 = vmatprep.subr.bf16.mxu0 %v1759
    %2424 = vmatpush1.bf16.msra.mxu0 %v1758
    %2425 = vmatprep.subr.bf16.mxu0 %v1743
    %2426 = vmatpush1.bf16.msra.mxu0 %v1742
    %2427 = vmatprep.subr.bf16.mxu0 %v1727
    %2428 = vmatpush1.bf16.msra.mxu0 %v1726
    %2429 = vmatprep.subr.bf16.mxu0 %v1711
    %2430 = vmatpush1.bf16.msra.mxu0 %v1710
    %2431 = vmatprep.subr.bf16.mxu0 %v1695
    %2432 = vmatpush1.bf16.msra.mxu0 %v1694
    %2433 = vmatprep.subr.bf16.mxu0 %v1935
    %2434 = vmatpush2.bf16.msra.mxu0 %v1934
    %2435 = vmatprep.subr.bf16.mxu0 %v1919
    %2436 = vmatpush2.bf16.msra.mxu0 %v1918
    %2437 = vmatprep.subr.bf16.mxu0 %v1903
    %2438 = vmatpush2.bf16.msra.mxu0 %v1902
    %2439 = vmatprep.subr.bf16.mxu0 %v1887
    %2440 = vmatpush2.bf16.msra.mxu0 %v1886
    %2441 = vmatprep.subr.bf16.mxu0 %v1871
    %2442 = vmatpush2.bf16.msra.mxu0 %v1870
    %2443 = vmatprep.subr.bf16.mxu0 %v1855
    %2444 = vmatpush2.bf16.msra.mxu0 %v1854
    %2445 = vmatprep.subr.bf16.mxu0 %v1839
    %2446 = vmatpush2.bf16.msra.mxu0 %v1838
    %2447 = vmatprep.subr.bf16.mxu0 %v1823
    %2448 = vmatpush2.bf16.msra.mxu0 %v1822
    %2449 = vmatprep.mubr.bf16.mxu0 %v1171
    %2450 = vmatmul.mubr.bf16.gmra.mxu0 %v1170
    %v2451 = vpop.f32.mrf.mxu0
    %v2452 = vadd.f32 %v2409, %v2451
    %v2453 = vpop.f32.mrf.mxu0
    %v2454 = vadd.f32 %v2411, %v2453
    %v2455 = vpop.f32.mrf.mxu0
    %v2456 = vadd.f32 %v2413, %v2455
    %v2457 = vpop.f32.mrf.mxu0
    %v2458 = vadd.f32 %v2415, %v2457
    %2459 = vdwg.mxu0
    %2460 = vmatprep.subr.bf16.mxu0 %v1553
    %2461 = vmatpush1.bf16.msra.mxu0 %v1552
    %2462 = vmatprep.subr.bf16.mxu0 %v1537
    %2463 = vmatpush1.bf16.msra.mxu0 %v1536
    %2464 = vmatprep.subr.bf16.mxu0 %v1521
    %2465 = vmatpush1.bf16.msra.mxu0 %v1520
    %2466 = vmatprep.subr.bf16.mxu0 %v1505
    %2467 = vmatpush1.bf16.msra.mxu0 %v1504
    %2468 = vmatprep.subr.bf16.mxu0 %v1489
    %2469 = vmatpush1.bf16.msra.mxu0 %v1488
    %2470 = vmatprep.subr.bf16.mxu0 %v1473
    %2471 = vmatpush1.bf16.msra.mxu0 %v1472
    %2472 = vmatprep.subr.bf16.mxu0 %v1457
    %2473 = vmatpush1.bf16.msra.mxu0 %v1456
    %2474 = vmatprep.subr.bf16.mxu0 %v1441
    %2475 = vmatpush1.bf16.msra.mxu0 %v1440
    %2476 = vmatprep.subr.bf16.mxu0 %v1681
    %2477 = vmatpush2.bf16.msra.mxu0 %v1680
    %2478 = vmatprep.subr.bf16.mxu0 %v1665
    %2479 = vmatpush2.bf16.msra.mxu0 %v1664
    %2480 = vmatprep.subr.bf16.mxu0 %v1649
    %2481 = vmatpush2.bf16.msra.mxu0 %v1648
    %2482 = vmatprep.subr.bf16.mxu0 %v1633
    %2483 = vmatpush2.bf16.msra.mxu0 %v1632
    %2484 = vmatprep.subr.bf16.mxu0 %v1617
    %2485 = vmatpush2.bf16.msra.mxu0 %v1616
    %2486 = vmatprep.subr.bf16.mxu0 %v1601
    %2487 = vmatpush2.bf16.msra.mxu0 %v1600
    %2488 = vmatprep.subr.bf16.mxu0 %v1585
    %2489 = vmatpush2.bf16.msra.mxu0 %v1584
    %2490 = vmatprep.subr.bf16.mxu0 %v1569
    %2491 = vmatpush2.bf16.msra.mxu0 %v1568
    %2492 = vmatprep.mubr.bf16.mxu0 %v1169
    %2493 = vmatmul.mubr.bf16.gmra.mxu0 %v1168
    %v2494 = vpop.f32.mrf.mxu0
    %v2495 = vadd.f32 0.0, %v2494
    %v2496 = vpop.f32.mrf.mxu0
    %v2497 = vadd.f32 0.0, %v2496
    %v2498 = vpop.f32.mrf.mxu0
    %v2499 = vadd.f32 0.0, %v2498
    %v2500 = vpop.f32.mrf.mxu0
    %v2501 = vadd.f32 0.0, %v2500
    %2502 = vdwg.mxu0
    %2503 = vmatprep.subr.bf16.mxu0 %v1809
    %2504 = vmatpush1.bf16.msra.mxu0 %v1808
    %2505 = vmatprep.subr.bf16.mxu0 %v1793
    %2506 = vmatpush1.bf16.msra.mxu0 %v1792
    %2507 = vmatprep.subr.bf16.mxu0 %v1777
    %2508 = vmatpush1.bf16.msra.mxu0 %v1776
    %2509 = vmatprep.subr.bf16.mxu0 %v1761
    %2510 = vmatpush1.bf16.msra.mxu0 %v1760
    %2511 = vmatprep.subr.bf16.mxu0 %v1745
    %2512 = vmatpush1.bf16.msra.mxu0 %v1744
    %2513 = vmatprep.subr.bf16.mxu0 %v1729
    %2514 = vmatpush1.bf16.msra.mxu0 %v1728
    %2515 = vmatprep.subr.bf16.mxu0 %v1713
    %2516 = vmatpush1.bf16.msra.mxu0 %v1712
    %2517 = vmatprep.subr.bf16.mxu0 %v1697
    %2518 = vmatpush1.bf16.msra.mxu0 %v1696
    %2519 = vmatprep.subr.bf16.mxu0 %v1937
    %2520 = vmatpush2.bf16.msra.mxu0 %v1936
    %2521 = vmatprep.subr.bf16.mxu0 %v1921
    %2522 = vmatpush2.bf16.msra.mxu0 %v1920
    %2523 = vmatprep.subr.bf16.mxu0 %v1905
    %2524 = vmatpush2.bf16.msra.mxu0 %v1904
    %2525 = vmatprep.subr.bf16.mxu0 %v1889
    %2526 = vmatpush2.bf16.msra.mxu0 %v1888
    %2527 = vmatprep.subr.bf16.mxu0 %v1873
    %2528 = vmatpush2.bf16.msra.mxu0 %v1872
    %2529 = vmatprep.subr.bf16.mxu0 %v1857
    %2530 = vmatpush2.bf16.msra.mxu0 %v1856
    %2531 = vmatprep.subr.bf16.mxu0 %v1841
    %2532 = vmatpush2.bf16.msra.mxu0 %v1840
    %2533 = vmatprep.subr.bf16.mxu0 %v1825
    %2534 = vmatpush2.bf16.msra.mxu0 %v1824
    %2535 = vmatprep.mubr.bf16.mxu0 %v1171
    %2536 = vmatmul.mubr.bf16.gmra.mxu0 %v1170
    %v2537 = vpop.f32.mrf.mxu0
    %v2538 = vadd.f32 %v2495, %v2537
    %v2539 = vpop.f32.mrf.mxu0
    %v2540 = vadd.f32 %v2497, %v2539
    %v2541 = vpop.f32.mrf.mxu0
    %v2542 = vadd.f32 %v2499, %v2541
    %v2543 = vpop.f32.mrf.mxu0
    %v2544 = vadd.f32 %v2501, %v2543
    %2545 = vdwg.mxu0
    %2546 = vmatprep.subr.bf16.mxu0 %v1555
    %2547 = vmatpush1.bf16.msra.mxu0 %v1554
    %2548 = vmatprep.subr.bf16.mxu0 %v1539
    %2549 = vmatpush1.bf16.msra.mxu0 %v1538
    %2550 = vmatprep.subr.bf16.mxu0 %v1523
    %2551 = vmatpush1.bf16.msra.mxu0 %v1522
    %2552 = vmatprep.subr.bf16.mxu0 %v1507
    %2553 = vmatpush1.bf16.msra.mxu0 %v1506
    %2554 = vmatprep.subr.bf16.mxu0 %v1491
    %2555 = vmatpush1.bf16.msra.mxu0 %v1490
    %2556 = vmatprep.subr.bf16.mxu0 %v1475
    %2557 = vmatpush1.bf16.msra.mxu0 %v1474
    %2558 = vmatprep.subr.bf16.mxu0 %v1459
    %2559 = vmatpush1.bf16.msra.mxu0 %v1458
    %2560 = vmatprep.subr.bf16.mxu0 %v1443
    %2561 = vmatpush1.bf16.msra.mxu0 %v1442
    %2562 = vmatprep.subr.bf16.mxu0 %v1683
    %2563 = vmatpush2.bf16.msra.mxu0 %v1682
    %2564 = vmatprep.subr.bf16.mxu0 %v1667
    %2565 = vmatpush2.bf16.msra.mxu0 %v1666
    %2566 = vmatprep.subr.bf16.mxu0 %v1651
    %2567 = vmatpush2.bf16.msra.mxu0 %v1650
    %2568 = vmatprep.subr.bf16.mxu0 %v1635
    %2569 = vmatpush2.bf16.msra.mxu0 %v1634
    %2570 = vmatprep.subr.bf16.mxu0 %v1619
    %2571 = vmatpush2.bf16.msra.mxu0 %v1618
    %2572 = vmatprep.subr.bf16.mxu0 %v1603
    %2573 = vmatpush2.bf16.msra.mxu0 %v1602
    %2574 = vmatprep.subr.bf16.mxu0 %v1587
    %2575 = vmatpush2.bf16.msra.mxu0 %v1586
    %2576 = vmatprep.subr.bf16.mxu0 %v1571
    %2577 = vmatpush2.bf16.msra.mxu0 %v1570
    %2578 = vmatprep.mubr.bf16.mxu0 %v1169
    %2579 = vmatmul.mubr.bf16.gmra.mxu0 %v1168
    %v2580 = vpop.f32.mrf.mxu0
    %v2581 = vadd.f32 0.0, %v2580
    %v2582 = vpop.f32.mrf.mxu0
    %v2583 = vadd.f32 0.0, %v2582
    %v2584 = vpop.f32.mrf.mxu0
    %v2585 = vadd.f32 0.0, %v2584
    %v2586 = vpop.f32.mrf.mxu0
    %v2587 = vadd.f32 0.0, %v2586
    %2588 = vdwg.mxu0
    %2589 = vmatprep.subr.bf16.mxu0 %v1811
    %2590 = vmatpush1.bf16.msra.mxu0 %v1810
    %2591 = vmatprep.subr.bf16.mxu0 %v1795
    %2592 = vmatpush1.bf16.msra.mxu0 %v1794
    %2593 = vmatprep.subr.bf16.mxu0 %v1779
    %2594 = vmatpush1.bf16.msra.mxu0 %v1778
    %2595 = vmatprep.subr.bf16.mxu0 %v1763
    %2596 = vmatpush1.bf16.msra.mxu0 %v1762
    %2597 = vmatprep.subr.bf16.mxu0 %v1747
    %2598 = vmatpush1.bf16.msra.mxu0 %v1746
    %2599 = vmatprep.subr.bf16.mxu0 %v1731
    %2600 = vmatpush1.bf16.msra.mxu0 %v1730
    %2601 = vmatprep.subr.bf16.mxu0 %v1715
    %2602 = vmatpush1.bf16.msra.mxu0 %v1714
    %2603 = vmatprep.subr.bf16.mxu0 %v1699
    %2604 = vmatpush1.bf16.msra.mxu0 %v1698
    %2605 = vmatprep.subr.bf16.mxu0 %v1939
    %2606 = vmatpush2.bf16.msra.mxu0 %v1938
    %2607 = vmatprep.subr.bf16.mxu0 %v1923
    %2608 = vmatpush2.bf16.msra.mxu0 %v1922
    %2609 = vmatprep.subr.bf16.mxu0 %v1907
    %2610 = vmatpush2.bf16.msra.mxu0 %v1906
    %2611 = vmatprep.subr.bf16.mxu0 %v1891
    %2612 = vmatpush2.bf16.msra.mxu0 %v1890
    %2613 = vmatprep.subr.bf16.mxu0 %v1875
    %2614 = vmatpush2.bf16.msra.mxu0 %v1874
    %2615 = vmatprep.subr.bf16.mxu0 %v1859
    %2616 = vmatpush2.bf16.msra.mxu0 %v1858
    %2617 = vmatprep.subr.bf16.mxu0 %v1843
    %2618 = vmatpush2.bf16.msra.mxu0 %v1842
    %2619 = vmatprep.subr.bf16.mxu0 %v1827
    %2620 = vmatpush2.bf16.msra.mxu0 %v1826
    %2621 = vmatprep.mubr.bf16.mxu0 %v1171
    %2622 = vmatmul.mubr.bf16.gmra.mxu0 %v1170
    %v2623 = vpop.f32.mrf.mxu0
    %v2624 = vadd.f32 %v2581, %v2623
    %v2625 = vpop.f32.mrf.mxu0
    %v2626 = vadd.f32 %v2583, %v2625
    %v2627 = vpop.f32.mrf.mxu0
    %v2628 = vadd.f32 %v2585, %v2627
    %v2629 = vpop.f32.mrf.mxu0
    %v2630 = vadd.f32 %v2587, %v2629
    %2631 = vdwg.mxu0
    %v2634 = vlaneseq
    %v2635 = vshrl.u32 %v2634, 7
    %v2636 = vsub.s32 0, %v2635
    %v2637 = vrot.slane %v1942, %v2636
    %v2638 = vlaneseq
    %v2639 = vshrl.u32 %v2638, 7
    %v2640 = vsub.s32 1, %v2639
    %v2641 = vrot.slane %v1942, %v2640
    %v2642 = vlaneseq
    %v2643 = vshrl.u32 %v2642, 7
    %v2644 = vsub.s32 2, %v2643
    %v2645 = vrot.slane %v1942, %v2644
    %v2646 = vlaneseq
    %v2647 = vshrl.u32 %v2646, 7
    %v2648 = vsub.s32 3, %v2647
    %v2649 = vrot.slane %v1942, %v2648
    %v2650 = vlaneseq
    %v2651 = vshrl.u32 %v2650, 7
    %v2652 = vsub.s32 4, %v2651
    %v2653 = vrot.slane %v1942, %v2652
    %v2654 = vlaneseq
    %v2655 = vshrl.u32 %v2654, 7
    %v2656 = vsub.s32 5, %v2655
    %v2657 = vrot.slane %v1942, %v2656
    %v2658 = vlaneseq
    %v2659 = vshrl.u32 %v2658, 7
    %v2660 = vsub.s32 6, %v2659
    %v2661 = vrot.slane %v1942, %v2660
    %v2662 = vlaneseq
    %v2663 = vshrl.u32 %v2662, 7
    %v2664 = vsub.s32 7, %v2663
    %v2665 = vrot.slane %v1942, %v2664
    %v2666 = vlaneseq
    %v2667 = vshrl.u32 %v2666, 7
    %v2668 = vsub.s32 0, %v2667
    %v2669 = vrot.slane %v1943, %v2668
    %v2670 = vlaneseq
    %v2671 = vshrl.u32 %v2670, 7
    %v2672 = vsub.s32 1, %v2671
    %v2673 = vrot.slane %v1943, %v2672
    %v2674 = vlaneseq
    %v2675 = vshrl.u32 %v2674, 7
    %v2676 = vsub.s32 2, %v2675
    %v2677 = vrot.slane %v1943, %v2676
    %v2678 = vlaneseq
    %v2679 = vshrl.u32 %v2678, 7
    %v2680 = vsub.s32 3, %v2679
    %v2681 = vrot.slane %v1943, %v2680
    %v2682 = vlaneseq
    %v2683 = vshrl.u32 %v2682, 7
    %v2684 = vsub.s32 4, %v2683
    %v2685 = vrot.slane %v1943, %v2684
    %v2686 = vlaneseq
    %v2687 = vshrl.u32 %v2686, 7
    %v2688 = vsub.s32 5, %v2687
    %v2689 = vrot.slane %v1943, %v2688
    %v2690 = vlaneseq
    %v2691 = vshrl.u32 %v2690, 7
    %v2692 = vsub.s32 6, %v2691
    %v2693 = vrot.slane %v1943, %v2692
    %v2694 = vlaneseq
    %v2695 = vshrl.u32 %v2694, 7
    %v2696 = vsub.s32 7, %v2695
    %v2697 = vrot.slane %v1943, %v2696
    %v2714 = vmul.f32 %v2022, %v2637
    %v2715 = vmul.f32 %v2024, %v2641
    %v2716 = vmul.f32 %v2108, %v2645
    %v2717 = vmul.f32 %v2110, %v2649
    %v2718 = vmul.f32 %v2194, %v2653
    %v2719 = vmul.f32 %v2196, %v2657
    %v2720 = vmul.f32 %v2280, %v2661
    %v2721 = vmul.f32 %v2282, %v2665
    %v2722 = vmul.f32 %v2366, %v2669
    %v2723 = vmul.f32 %v2368, %v2673
    %v2724 = vmul.f32 %v2452, %v2677
    %v2725 = vmul.f32 %v2454, %v2681
    %v2726 = vmul.f32 %v2538, %v2685
    %v2727 = vmul.f32 %v2540, %v2689
    %v2728 = vmul.f32 %v2624, %v2693
    %v2729 = vmul.f32 %v2626, %v2697
    %v2730 = vmul.f32 %v2026, %v2637
    %v2731 = vmul.f32 %v2028, %v2641
    %v2732 = vmul.f32 %v2112, %v2645
    %v2733 = vmul.f32 %v2114, %v2649
    %v2734 = vmul.f32 %v2198, %v2653
    %v2735 = vmul.f32 %v2200, %v2657
    %v2736 = vmul.f32 %v2284, %v2661
    %v2737 = vmul.f32 %v2286, %v2665
    %v2738 = vmul.f32 %v2370, %v2669
    %v2739 = vmul.f32 %v2372, %v2673
    %v2740 = vmul.f32 %v2456, %v2677
    %v2741 = vmul.f32 %v2458, %v2681
    %v2742 = vmul.f32 %v2542, %v2685
    %v2743 = vmul.f32 %v2544, %v2689
    %v2744 = vmul.f32 %v2628, %v2693
    %v2745 = vmul.f32 %v2630, %v2697
    %v2748 = vlaneseq
    %v2749 = vshrl.u32 %v2748, 7
    %v2750 = vsub.s32 0, %v2749
    %v2751 = vrot.slane %v1940, %v2750
    %v2752 = vlaneseq
    %v2753 = vshrl.u32 %v2752, 7
    %v2754 = vsub.s32 1, %v2753
    %v2755 = vrot.slane %v1940, %v2754
    %v2756 = vlaneseq
    %v2757 = vshrl.u32 %v2756, 7
    %v2758 = vsub.s32 2, %v2757
    %v2759 = vrot.slane %v1940, %v2758
    %v2760 = vlaneseq
    %v2761 = vshrl.u32 %v2760, 7
    %v2762 = vsub.s32 3, %v2761
    %v2763 = vrot.slane %v1940, %v2762
    %v2764 = vlaneseq
    %v2765 = vshrl.u32 %v2764, 7
    %v2766 = vsub.s32 4, %v2765
    %v2767 = vrot.slane %v1940, %v2766
    %v2768 = vlaneseq
    %v2769 = vshrl.u32 %v2768, 7
    %v2770 = vsub.s32 5, %v2769
    %v2771 = vrot.slane %v1940, %v2770
    %v2772 = vlaneseq
    %v2773 = vshrl.u32 %v2772, 7
    %v2774 = vsub.s32 6, %v2773
    %v2775 = vrot.slane %v1940, %v2774
    %v2776 = vlaneseq
    %v2777 = vshrl.u32 %v2776, 7
    %v2778 = vsub.s32 7, %v2777
    %v2779 = vrot.slane %v1940, %v2778
    %v2780 = vlaneseq
    %v2781 = vshrl.u32 %v2780, 7
    %v2782 = vsub.s32 0, %v2781
    %v2783 = vrot.slane %v1941, %v2782
    %v2784 = vlaneseq
    %v2785 = vshrl.u32 %v2784, 7
    %v2786 = vsub.s32 1, %v2785
    %v2787 = vrot.slane %v1941, %v2786
    %v2788 = vlaneseq
    %v2789 = vshrl.u32 %v2788, 7
    %v2790 = vsub.s32 2, %v2789
    %v2791 = vrot.slane %v1941, %v2790
    %v2792 = vlaneseq
    %v2793 = vshrl.u32 %v2792, 7
    %v2794 = vsub.s32 3, %v2793
    %v2795 = vrot.slane %v1941, %v2794
    %v2796 = vlaneseq
    %v2797 = vshrl.u32 %v2796, 7
    %v2798 = vsub.s32 4, %v2797
    %v2799 = vrot.slane %v1941, %v2798
    %v2800 = vlaneseq
    %v2801 = vshrl.u32 %v2800, 7
    %v2802 = vsub.s32 5, %v2801
    %v2803 = vrot.slane %v1941, %v2802
    %v2804 = vlaneseq
    %v2805 = vshrl.u32 %v2804, 7
    %v2806 = vsub.s32 6, %v2805
    %v2807 = vrot.slane %v1941, %v2806
    %v2808 = vlaneseq
    %v2809 = vshrl.u32 %v2808, 7
    %v2810 = vsub.s32 7, %v2809
    %v2811 = vrot.slane %v1941, %v2810
    %v2828 = vadd.f32 %v2714, %v2751
    %v2829 = vadd.f32 %v2715, %v2755
    %v2830 = vadd.f32 %v2716, %v2759
    %v2831 = vadd.f32 %v2717, %v2763
    %v2832 = vadd.f32 %v2718, %v2767
    %v2833 = vadd.f32 %v2719, %v2771
    %v2834 = vadd.f32 %v2720, %v2775
    %v2835 = vadd.f32 %v2721, %v2779
    %v2836 = vadd.f32 %v2722, %v2783
    %v2837 = vadd.f32 %v2723, %v2787
    %v2838 = vadd.f32 %v2724, %v2791
    %v2839 = vadd.f32 %v2725, %v2795
    %v2840 = vadd.f32 %v2726, %v2799
    %v2841 = vadd.f32 %v2727, %v2803
    %v2842 = vadd.f32 %v2728, %v2807
    %v2843 = vadd.f32 %v2729, %v2811
    %v2844 = vadd.f32 %v2730, %v2751
    %v2845 = vadd.f32 %v2731, %v2755
    %v2846 = vadd.f32 %v2732, %v2759
    %v2847 = vadd.f32 %v2733, %v2763
    %v2848 = vadd.f32 %v2734, %v2767
    %v2849 = vadd.f32 %v2735, %v2771
    %v2850 = vadd.f32 %v2736, %v2775
    %v2851 = vadd.f32 %v2737, %v2779
    %v2852 = vadd.f32 %v2738, %v2783
    %v2853 = vadd.f32 %v2739, %v2787
    %v2854 = vadd.f32 %v2740, %v2791
    %v2855 = vadd.f32 %v2741, %v2795
    %v2856 = vadd.f32 %v2742, %v2799
    %v2857 = vadd.f32 %v2743, %v2803
    %v2858 = vadd.f32 %v2744, %v2807
    %v2859 = vadd.f32 %v2745, %v2811
    %v2860 = vmax.f32 %v2828, 0.0
    %v2861 = vmax.f32 %v2829, 0.0
    %v2862 = vmax.f32 %v2830, 0.0
    %v2863 = vmax.f32 %v2831, 0.0
    %v2864 = vmax.f32 %v2832, 0.0
    %v2865 = vmax.f32 %v2833, 0.0
    %v2866 = vmax.f32 %v2834, 0.0
    %v2867 = vmax.f32 %v2835, 0.0
    %v2868 = vmax.f32 %v2836, 0.0
    %v2869 = vmax.f32 %v2837, 0.0
    %v2870 = vmax.f32 %v2838, 0.0
    %v2871 = vmax.f32 %v2839, 0.0
    %v2872 = vmax.f32 %v2840, 0.0
    %v2873 = vmax.f32 %v2841, 0.0
    %v2874 = vmax.f32 %v2842, 0.0
    %v2875 = vmax.f32 %v2843, 0.0
    %v2876 = vmax.f32 %v2844, 0.0
    %v2877 = vmax.f32 %v2845, 0.0
    %v2878 = vmax.f32 %v2846, 0.0
    %v2879 = vmax.f32 %v2847, 0.0
    %v2880 = vmax.f32 %v2848, 0.0
    %v2881 = vmax.f32 %v2849, 0.0
    %v2882 = vmax.f32 %v2850, 0.0
    %v2883 = vmax.f32 %v2851, 0.0
    %v2884 = vmax.f32 %v2852, 0.0
    %v2885 = vmax.f32 %v2853, 0.0
    %v2886 = vmax.f32 %v2854, 0.0
    %v2887 = vmax.f32 %v2855, 0.0
    %v2888 = vmax.f32 %v2856, 0.0
    %v2889 = vmax.f32 %v2857, 0.0
    %v2890 = vmax.f32 %v2858, 0.0
    %v2891 = vmax.f32 %v2859, 0.0
    %s2892 = smul.u32 2, 256
    %s2893 = smul.u32 %s2892, 5
    %s2894 = sshll.u32 %s2893, 4
    %2895 = dma.done %s172, %s2894
    %v2896 = vpack.c.bf16 %v2876, %v2860
    %v2897 = vpack.c.bf16 %v2877, %v2861
    %v2898 = vpack.c.bf16 %v2878, %v2862
    %v2899 = vpack.c.bf16 %v2879, %v2863
    %v2900 = vpack.c.bf16 %v2880, %v2864
    %v2901 = vpack.c.bf16 %v2881, %v2865
    %v2902 = vpack.c.bf16 %v2882, %v2866
    %v2903 = vpack.c.bf16 %v2883, %v2867
    %v2904 = vpack.c.bf16 %v2884, %v2868
    %v2905 = vpack.c.bf16 %v2885, %v2869
    %v2906 = vpack.c.bf16 %v2886, %v2870
    %v2907 = vpack.c.bf16 %v2887, %v2871
    %v2908 = vpack.c.bf16 %v2888, %v2872
    %v2909 = vpack.c.bf16 %v2889, %v2873
    %v2910 = vpack.c.bf16 %v2890, %v2874
    %v2911 = vpack.c.bf16 %v2891, %v2875
    %v2912 = vld [vmem:[#allocation3] sm:$0xff]
    %v2913 = vld [vmem:[#allocation3 + $0x8] sm:$0xff]
    %v2914 = vld [vmem:[#allocation3 + $0x10] sm:$0xff]
    %v2915 = vld [vmem:[#allocation3 + $0x18] sm:$0xff]
    %v2916 = vld [vmem:[#allocation3 + $0x20] sm:$0xff]
    %v2917 = vld [vmem:[#allocation3 + $0x28] sm:$0xff]
    %v2918 = vld [vmem:[#allocation3 + $0x30] sm:$0xff]
    %v2919 = vld [vmem:[#allocation3 + $0x38] sm:$0xff]
    %v2920 = vld [vmem:[#allocation3 + $0x40] sm:$0xff]
    %v2921 = vld [vmem:[#allocation3 + $0x48] sm:$0xff]
    %v2922 = vld [vmem:[#allocation3 + $0x50] sm:$0xff]
    %v2923 = vld [vmem:[#allocation3 + $0x58] sm:$0xff]
    %v2924 = vld [vmem:[#allocation3 + $0x60] sm:$0xff]
    %v2925 = vld [vmem:[#allocation3 + $0x68] sm:$0xff]
    %v2926 = vld [vmem:[#allocation3 + $0x70] sm:$0xff]
    %v2927 = vld [vmem:[#allocation3 + $0x78] sm:$0xff]
    %v2928 = vld [vmem:[#allocation3 + $0x80] sm:$0xff]
    %v2929 = vld [vmem:[#allocation3 + $0x88] sm:$0xff]
    %v2930 = vld [vmem:[#allocation3 + $0x90] sm:$0xff]
    %v2931 = vld [vmem:[#allocation3 + $0x98] sm:$0xff]
    %v2932 = vld [vmem:[#allocation3 + $0xa0] sm:$0xff]
    %v2933 = vld [vmem:[#allocation3 + $0xa8] sm:$0xff]
    %v2934 = vld [vmem:[#allocation3 + $0xb0] sm:$0xff]
    %v2935 = vld [vmem:[#allocation3 + $0xb8] sm:$0xff]
    %v2936 = vld [vmem:[#allocation3 + $0xc0] sm:$0xff]
    %v2937 = vld [vmem:[#allocation3 + $0xc8] sm:$0xff]
    %v2938 = vld [vmem:[#allocation3 + $0xd0] sm:$0xff]
    %v2939 = vld [vmem:[#allocation3 + $0xd8] sm:$0xff]
    %v2940 = vld [vmem:[#allocation3 + $0xe0] sm:$0xff]
    %v2941 = vld [vmem:[#allocation3 + $0xe8] sm:$0xff]
    %v2942 = vld [vmem:[#allocation3 + $0xf0] sm:$0xff]
    %v2943 = vld [vmem:[#allocation3 + $0xf8] sm:$0xff]
    %v2944 = vld [vmem:[#allocation3 + $0x100] sm:$0xff]
    %v2945 = vld [vmem:[#allocation3 + $0x108] sm:$0xff]
    %v2946 = vld [vmem:[#allocation3 + $0x110] sm:$0xff]
    %v2947 = vld [vmem:[#allocation3 + $0x118] sm:$0xff]
    %v2948 = vld [vmem:[#allocation3 + $0x120] sm:$0xff]
    %v2949 = vld [vmem:[#allocation3 + $0x128] sm:$0xff]
    %v2950 = vld [vmem:[#allocation3 + $0x130] sm:$0xff]
    %v2951 = vld [vmem:[#allocation3 + $0x138] sm:$0xff]
    %v2952 = vld [vmem:[#allocation3 + $0x140] sm:$0xff]
    %v2953 = vld [vmem:[#allocation3 + $0x148] sm:$0xff]
    %v2954 = vld [vmem:[#allocation3 + $0x150] sm:$0xff]
    %v2955 = vld [vmem:[#allocation3 + $0x158] sm:$0xff]
    %v2956 = vld [vmem:[#allocation3 + $0x160] sm:$0xff]
    %v2957 = vld [vmem:[#allocation3 + $0x168] sm:$0xff]
    %v2958 = vld [vmem:[#allocation3 + $0x170] sm:$0xff]
    %v2959 = vld [vmem:[#allocation3 + $0x178] sm:$0xff]
    %v2960 = vld [vmem:[#allocation3 + $0x180] sm:$0xff]
    %v2961 = vld [vmem:[#allocation3 + $0x188] sm:$0xff]
    %v2962 = vld [vmem:[#allocation3 + $0x190] sm:$0xff]
    %v2963 = vld [vmem:[#allocation3 + $0x198] sm:$0xff]
    %v2964 = vld [vmem:[#allocation3 + $0x1a0] sm:$0xff]
    %v2965 = vld [vmem:[#allocation3 + $0x1a8] sm:$0xff]
    %v2966 = vld [vmem:[#allocation3 + $0x1b0] sm:$0xff]
    %v2967 = vld [vmem:[#allocation3 + $0x1b8] sm:$0xff]
    %v2968 = vld [vmem:[#allocation3 + $0x1c0] sm:$0xff]
    %v2969 = vld [vmem:[#allocation3 + $0x1c8] sm:$0xff]
    %v2970 = vld [vmem:[#allocation3 + $0x1d0] sm:$0xff]
    %v2971 = vld [vmem:[#allocation3 + $0x1d8] sm:$0xff]
    %v2972 = vld [vmem:[#allocation3 + $0x1e0] sm:$0xff]
    %v2973 = vld [vmem:[#allocation3 + $0x1e8] sm:$0xff]
    %v2974 = vld [vmem:[#allocation3 + $0x1f0] sm:$0xff]
    %v2975 = vld [vmem:[#allocation3 + $0x1f8] sm:$0xff]
    %v2976 = vld [vmem:[#allocation3 + $0x200] sm:$0xff]
    %v2977 = vld [vmem:[#allocation3 + $0x208] sm:$0xff]
    %v2978 = vld [vmem:[#allocation3 + $0x210] sm:$0xff]
    %v2979 = vld [vmem:[#allocation3 + $0x218] sm:$0xff]
    %v2980 = vld [vmem:[#allocation3 + $0x220] sm:$0xff]
    %v2981 = vld [vmem:[#allocation3 + $0x228] sm:$0xff]
    %v2982 = vld [vmem:[#allocation3 + $0x230] sm:$0xff]
    %v2983 = vld [vmem:[#allocation3 + $0x238] sm:$0xff]
    %v2984 = vld [vmem:[#allocation3 + $0x240] sm:$0xff]
    %v2985 = vld [vmem:[#allocation3 + $0x248] sm:$0xff]
    %v2986 = vld [vmem:[#allocation3 + $0x250] sm:$0xff]
    %v2987 = vld [vmem:[#allocation3 + $0x258] sm:$0xff]
    %v2988 = vld [vmem:[#allocation3 + $0x260] sm:$0xff]
    %v2989 = vld [vmem:[#allocation3 + $0x268] sm:$0xff]
    %v2990 = vld [vmem:[#allocation3 + $0x270] sm:$0xff]
    %v2991 = vld [vmem:[#allocation3 + $0x278] sm:$0xff]
    %v2992 = vld [vmem:[#allocation3 + $0x280] sm:$0xff]
    %v2993 = vld [vmem:[#allocation3 + $0x288] sm:$0xff]
    %v2994 = vld [vmem:[#allocation3 + $0x290] sm:$0xff]
    %v2995 = vld [vmem:[#allocation3 + $0x298] sm:$0xff]
    %v2996 = vld [vmem:[#allocation3 + $0x2a0] sm:$0xff]
    %v2997 = vld [vmem:[#allocation3 + $0x2a8] sm:$0xff]
    %v2998 = vld [vmem:[#allocation3 + $0x2b0] sm:$0xff]
    %v2999 = vld [vmem:[#allocation3 + $0x2b8] sm:$0xff]
    %v3000 = vld [vmem:[#allocation3 + $0x2c0] sm:$0xff]
    %v3001 = vld [vmem:[#allocation3 + $0x2c8] sm:$0xff]
    %v3002 = vld [vmem:[#allocation3 + $0x2d0] sm:$0xff]
    %v3003 = vld [vmem:[#allocation3 + $0x2d8] sm:$0xff]
    %v3004 = vld [vmem:[#allocation3 + $0x2e0] sm:$0xff]
    %v3005 = vld [vmem:[#allocation3 + $0x2e8] sm:$0xff]
    %v3006 = vld [vmem:[#allocation3 + $0x2f0] sm:$0xff]
    %v3007 = vld [vmem:[#allocation3 + $0x2f8] sm:$0xff]
    %v3008 = vld [vmem:[#allocation3 + $0x300] sm:$0xff]
    %v3009 = vld [vmem:[#allocation3 + $0x308] sm:$0xff]
    %v3010 = vld [vmem:[#allocation3 + $0x310] sm:$0xff]
    %v3011 = vld [vmem:[#allocation3 + $0x318] sm:$0xff]
    %v3012 = vld [vmem:[#allocation3 + $0x320] sm:$0xff]
    %v3013 = vld [vmem:[#allocation3 + $0x328] sm:$0xff]
    %v3014 = vld [vmem:[#allocation3 + $0x330] sm:$0xff]
    %v3015 = vld [vmem:[#allocation3 + $0x338] sm:$0xff]
    %v3016 = vld [vmem:[#allocation3 + $0x340] sm:$0xff]
    %v3017 = vld [vmem:[#allocation3 + $0x348] sm:$0xff]
    %v3018 = vld [vmem:[#allocation3 + $0x350] sm:$0xff]
    %v3019 = vld [vmem:[#allocation3 + $0x358] sm:$0xff]
    %v3020 = vld [vmem:[#allocation3 + $0x360] sm:$0xff]
    %v3021 = vld [vmem:[#allocation3 + $0x368] sm:$0xff]
    %v3022 = vld [vmem:[#allocation3 + $0x370] sm:$0xff]
    %v3023 = vld [vmem:[#allocation3 + $0x378] sm:$0xff]
    %v3024 = vld [vmem:[#allocation3 + $0x380] sm:$0xff]
    %v3025 = vld [vmem:[#allocation3 + $0x388] sm:$0xff]
    %v3026 = vld [vmem:[#allocation3 + $0x390] sm:$0xff]
    %v3027 = vld [vmem:[#allocation3 + $0x398] sm:$0xff]
    %v3028 = vld [vmem:[#allocation3 + $0x3a0] sm:$0xff]
    %v3029 = vld [vmem:[#allocation3 + $0x3a8] sm:$0xff]
    %v3030 = vld [vmem:[#allocation3 + $0x3b0] sm:$0xff]
    %v3031 = vld [vmem:[#allocation3 + $0x3b8] sm:$0xff]
    %v3032 = vld [vmem:[#allocation3 + $0x3c0] sm:$0xff]
    %v3033 = vld [vmem:[#allocation3 + $0x3c8] sm:$0xff]
    %v3034 = vld [vmem:[#allocation3 + $0x3d0] sm:$0xff]
    %v3035 = vld [vmem:[#allocation3 + $0x3d8] sm:$0xff]
    %v3036 = vld [vmem:[#allocation3 + $0x3e0] sm:$0xff]
    %v3037 = vld [vmem:[#allocation3 + $0x3e8] sm:$0xff]
    %v3038 = vld [vmem:[#allocation3 + $0x3f0] sm:$0xff]
    %v3039 = vld [vmem:[#allocation3 + $0x3f8] sm:$0xff]
    %v3040 = vld [vmem:[#allocation3 + $0x400] sm:$0xff]
    %v3041 = vld [vmem:[#allocation3 + $0x408] sm:$0xff]
    %v3042 = vld [vmem:[#allocation3 + $0x410] sm:$0xff]
    %v3043 = vld [vmem:[#allocation3 + $0x418] sm:$0xff]
    %v3044 = vld [vmem:[#allocation3 + $0x420] sm:$0xff]
    %v3045 = vld [vmem:[#allocation3 + $0x428] sm:$0xff]
    %v3046 = vld [vmem:[#allocation3 + $0x430] sm:$0xff]
    %v3047 = vld [vmem:[#allocation3 + $0x438] sm:$0xff]
    %v3048 = vld [vmem:[#allocation3 + $0x440] sm:$0xff]
    %v3049 = vld [vmem:[#allocation3 + $0x448] sm:$0xff]
    %v3050 = vld [vmem:[#allocation3 + $0x450] sm:$0xff]
    %v3051 = vld [vmem:[#allocation3 + $0x458] sm:$0xff]
    %v3052 = vld [vmem:[#allocation3 + $0x460] sm:$0xff]
    %v3053 = vld [vmem:[#allocation3 + $0x468] sm:$0xff]
    %v3054 = vld [vmem:[#allocation3 + $0x470] sm:$0xff]
    %v3055 = vld [vmem:[#allocation3 + $0x478] sm:$0xff]
    %v3056 = vld [vmem:[#allocation3 + $0x480] sm:$0xff]
    %v3057 = vld [vmem:[#allocation3 + $0x488] sm:$0xff]
    %v3058 = vld [vmem:[#allocation3 + $0x490] sm:$0xff]
    %v3059 = vld [vmem:[#allocation3 + $0x498] sm:$0xff]
    %v3060 = vld [vmem:[#allocation3 + $0x4a0] sm:$0xff]
    %v3061 = vld [vmem:[#allocation3 + $0x4a8] sm:$0xff]
    %v3062 = vld [vmem:[#allocation3 + $0x4b0] sm:$0xff]
    %v3063 = vld [vmem:[#allocation3 + $0x4b8] sm:$0xff]
    %v3064 = vld [vmem:[#allocation3 + $0x4c0] sm:$0xff]
    %v3065 = vld [vmem:[#allocation3 + $0x4c8] sm:$0xff]
    %v3066 = vld [vmem:[#allocation3 + $0x4d0] sm:$0xff]
    %v3067 = vld [vmem:[#allocation3 + $0x4d8] sm:$0xff]
    %v3068 = vld [vmem:[#allocation3 + $0x4e0] sm:$0xff]
    %v3069 = vld [vmem:[#allocation3 + $0x4e8] sm:$0xff]
    %v3070 = vld [vmem:[#allocation3 + $0x4f0] sm:$0xff]
    %v3071 = vld [vmem:[#allocation3 + $0x4f8] sm:$0xff]
    %v3072 = vld [vmem:[#allocation3 + $0x500] sm:$0xff]
    %v3073 = vld [vmem:[#allocation3 + $0x508] sm:$0xff]
    %v3074 = vld [vmem:[#allocation3 + $0x510] sm:$0xff]
    %v3075 = vld [vmem:[#allocation3 + $0x518] sm:$0xff]
    %v3076 = vld [vmem:[#allocation3 + $0x520] sm:$0xff]
    %v3077 = vld [vmem:[#allocation3 + $0x528] sm:$0xff]
    %v3078 = vld [vmem:[#allocation3 + $0x530] sm:$0xff]
    %v3079 = vld [vmem:[#allocation3 + $0x538] sm:$0xff]
    %v3080 = vld [vmem:[#allocation3 + $0x540] sm:$0xff]
    %v3081 = vld [vmem:[#allocation3 + $0x548] sm:$0xff]
    %v3082 = vld [vmem:[#allocation3 + $0x550] sm:$0xff]
    %v3083 = vld [vmem:[#allocation3 + $0x558] sm:$0xff]
    %v3084 = vld [vmem:[#allocation3 + $0x560] sm:$0xff]
    %v3085 = vld [vmem:[#allocation3 + $0x568] sm:$0xff]
    %v3086 = vld [vmem:[#allocation3 + $0x570] sm:$0xff]
    %v3087 = vld [vmem:[#allocation3 + $0x578] sm:$0xff]
    %v3088 = vld [vmem:[#allocation3 + $0x580] sm:$0xff]
    %v3089 = vld [vmem:[#allocation3 + $0x588] sm:$0xff]
    %v3090 = vld [vmem:[#allocation3 + $0x590] sm:$0xff]
    %v3091 = vld [vmem:[#allocation3 + $0x598] sm:$0xff]
    %v3092 = vld [vmem:[#allocation3 + $0x5a0] sm:$0xff]
    %v3093 = vld [vmem:[#allocation3 + $0x5a8] sm:$0xff]
    %v3094 = vld [vmem:[#allocation3 + $0x5b0] sm:$0xff]
    %v3095 = vld [vmem:[#allocation3 + $0x5b8] sm:$0xff]
    %v3096 = vld [vmem:[#allocation3 + $0x5c0] sm:$0xff]
    %v3097 = vld [vmem:[#allocation3 + $0x5c8] sm:$0xff]
    %v3098 = vld [vmem:[#allocation3 + $0x5d0] sm:$0xff]
    %v3099 = vld [vmem:[#allocation3 + $0x5d8] sm:$0xff]
    %v3100 = vld [vmem:[#allocation3 + $0x5e0] sm:$0xff]
    %v3101 = vld [vmem:[#allocation3 + $0x5e8] sm:$0xff]
    %v3102 = vld [vmem:[#allocation3 + $0x5f0] sm:$0xff]
    %v3103 = vld [vmem:[#allocation3 + $0x5f8] sm:$0xff]
    %v3104 = vld [vmem:[#allocation3 + $0x600] sm:$0xff]
    %v3105 = vld [vmem:[#allocation3 + $0x608] sm:$0xff]
    %v3106 = vld [vmem:[#allocation3 + $0x610] sm:$0xff]
    %v3107 = vld [vmem:[#allocation3 + $0x618] sm:$0xff]
    %v3108 = vld [vmem:[#allocation3 + $0x620] sm:$0xff]
    %v3109 = vld [vmem:[#allocation3 + $0x628] sm:$0xff]
    %v3110 = vld [vmem:[#allocation3 + $0x630] sm:$0xff]
    %v3111 = vld [vmem:[#allocation3 + $0x638] sm:$0xff]
    %v3112 = vld [vmem:[#allocation3 + $0x640] sm:$0xff]
    %v3113 = vld [vmem:[#allocation3 + $0x648] sm:$0xff]
    %v3114 = vld [vmem:[#allocation3 + $0x650] sm:$0xff]
    %v3115 = vld [vmem:[#allocation3 + $0x658] sm:$0xff]
    %v3116 = vld [vmem:[#allocation3 + $0x660] sm:$0xff]
    %v3117 = vld [vmem:[#allocation3 + $0x668] sm:$0xff]
    %v3118 = vld [vmem:[#allocation3 + $0x670] sm:$0xff]
    %v3119 = vld [vmem:[#allocation3 + $0x678] sm:$0xff]
    %v3120 = vld [vmem:[#allocation3 + $0x680] sm:$0xff]
    %v3121 = vld [vmem:[#allocation3 + $0x688] sm:$0xff]
    %v3122 = vld [vmem:[#allocation3 + $0x690] sm:$0xff]
    %v3123 = vld [vmem:[#allocation3 + $0x698] sm:$0xff]
    %v3124 = vld [vmem:[#allocation3 + $0x6a0] sm:$0xff]
    %v3125 = vld [vmem:[#allocation3 + $0x6a8] sm:$0xff]
    %v3126 = vld [vmem:[#allocation3 + $0x6b0] sm:$0xff]
    %v3127 = vld [vmem:[#allocation3 + $0x6b8] sm:$0xff]
    %v3128 = vld [vmem:[#allocation3 + $0x6c0] sm:$0xff]
    %v3129 = vld [vmem:[#allocation3 + $0x6c8] sm:$0xff]
    %v3130 = vld [vmem:[#allocation3 + $0x6d0] sm:$0xff]
    %v3131 = vld [vmem:[#allocation3 + $0x6d8] sm:$0xff]
    %v3132 = vld [vmem:[#allocation3 + $0x6e0] sm:$0xff]
    %v3133 = vld [vmem:[#allocation3 + $0x6e8] sm:$0xff]
    %v3134 = vld [vmem:[#allocation3 + $0x6f0] sm:$0xff]
    %v3135 = vld [vmem:[#allocation3 + $0x6f8] sm:$0xff]
    %v3136 = vld [vmem:[#allocation3 + $0x700] sm:$0xff]
    %v3137 = vld [vmem:[#allocation3 + $0x708] sm:$0xff]
    %v3138 = vld [vmem:[#allocation3 + $0x710] sm:$0xff]
    %v3139 = vld [vmem:[#allocation3 + $0x718] sm:$0xff]
    %v3140 = vld [vmem:[#allocation3 + $0x720] sm:$0xff]
    %v3141 = vld [vmem:[#allocation3 + $0x728] sm:$0xff]
    %v3142 = vld [vmem:[#allocation3 + $0x730] sm:$0xff]
    %v3143 = vld [vmem:[#allocation3 + $0x738] sm:$0xff]
    %v3144 = vld [vmem:[#allocation3 + $0x740] sm:$0xff]
    %v3145 = vld [vmem:[#allocation3 + $0x748] sm:$0xff]
    %v3146 = vld [vmem:[#allocation3 + $0x750] sm:$0xff]
    %v3147 = vld [vmem:[#allocation3 + $0x758] sm:$0xff]
    %v3148 = vld [vmem:[#allocation3 + $0x760] sm:$0xff]
    %v3149 = vld [vmem:[#allocation3 + $0x768] sm:$0xff]
    %v3150 = vld [vmem:[#allocation3 + $0x770] sm:$0xff]
    %v3151 = vld [vmem:[#allocation3 + $0x778] sm:$0xff]
    %v3152 = vld [vmem:[#allocation3 + $0x780] sm:$0xff]
    %v3153 = vld [vmem:[#allocation3 + $0x788] sm:$0xff]
    %v3154 = vld [vmem:[#allocation3 + $0x790] sm:$0xff]
    %v3155 = vld [vmem:[#allocation3 + $0x798] sm:$0xff]
    %v3156 = vld [vmem:[#allocation3 + $0x7a0] sm:$0xff]
    %v3157 = vld [vmem:[#allocation3 + $0x7a8] sm:$0xff]
    %v3158 = vld [vmem:[#allocation3 + $0x7b0] sm:$0xff]
    %v3159 = vld [vmem:[#allocation3 + $0x7b8] sm:$0xff]
    %v3160 = vld [vmem:[#allocation3 + $0x7c0] sm:$0xff]
    %v3161 = vld [vmem:[#allocation3 + $0x7c8] sm:$0xff]
    %v3162 = vld [vmem:[#allocation3 + $0x7d0] sm:$0xff]
    %v3163 = vld [vmem:[#allocation3 + $0x7d8] sm:$0xff]
    %v3164 = vld [vmem:[#allocation3 + $0x7e0] sm:$0xff]
    %v3165 = vld [vmem:[#allocation3 + $0x7e8] sm:$0xff]
    %v3166 = vld [vmem:[#allocation3 + $0x7f0] sm:$0xff]
    %v3167 = vld [vmem:[#allocation3 + $0x7f8] sm:$0xff]
    %v3168 = vld [vmem:[#allocation3 + $0x800] sm:$0xff]
    %v3169 = vld [vmem:[#allocation3 + $0x808] sm:$0xff]
    %v3170 = vld [vmem:[#allocation3 + $0x810] sm:$0xff]
    %v3171 = vld [vmem:[#allocation3 + $0x818] sm:$0xff]
    %v3172 = vld [vmem:[#allocation3 + $0x820] sm:$0xff]
    %v3173 = vld [vmem:[#allocation3 + $0x828] sm:$0xff]
    %v3174 = vld [vmem:[#allocation3 + $0x830] sm:$0xff]
    %v3175 = vld [vmem:[#allocation3 + $0x838] sm:$0xff]
    %v3176 = vld [vmem:[#allocation3 + $0x840] sm:$0xff]
    %v3177 = vld [vmem:[#allocation3 + $0x848] sm:$0xff]
    %v3178 = vld [vmem:[#allocation3 + $0x850] sm:$0xff]
    %v3179 = vld [vmem:[#allocation3 + $0x858] sm:$0xff]
    %v3180 = vld [vmem:[#allocation3 + $0x860] sm:$0xff]
    %v3181 = vld [vmem:[#allocation3 + $0x868] sm:$0xff]
    %v3182 = vld [vmem:[#allocation3 + $0x870] sm:$0xff]
    %v3183 = vld [vmem:[#allocation3 + $0x878] sm:$0xff]
    %v3184 = vld [vmem:[#allocation3 + $0x880] sm:$0xff]
    %v3185 = vld [vmem:[#allocation3 + $0x888] sm:$0xff]
    %v3186 = vld [vmem:[#allocation3 + $0x890] sm:$0xff]
    %v3187 = vld [vmem:[#allocation3 + $0x898] sm:$0xff]
    %v3188 = vld [vmem:[#allocation3 + $0x8a0] sm:$0xff]
    %v3189 = vld [vmem:[#allocation3 + $0x8a8] sm:$0xff]
    %v3190 = vld [vmem:[#allocation3 + $0x8b0] sm:$0xff]
    %v3191 = vld [vmem:[#allocation3 + $0x8b8] sm:$0xff]
    %v3192 = vld [vmem:[#allocation3 + $0x8c0] sm:$0xff]
    %v3193 = vld [vmem:[#allocation3 + $0x8c8] sm:$0xff]
    %v3194 = vld [vmem:[#allocation3 + $0x8d0] sm:$0xff]
    %v3195 = vld [vmem:[#allocation3 + $0x8d8] sm:$0xff]
    %v3196 = vld [vmem:[#allocation3 + $0x8e0] sm:$0xff]
    %v3197 = vld [vmem:[#allocation3 + $0x8e8] sm:$0xff]
    %v3198 = vld [vmem:[#allocation3 + $0x8f0] sm:$0xff]
    %v3199 = vld [vmem:[#allocation3 + $0x8f8] sm:$0xff]
    %v3200 = vld [vmem:[#allocation3 + $0x900] sm:$0xff]
    %v3201 = vld [vmem:[#allocation3 + $0x908] sm:$0xff]
    %v3202 = vld [vmem:[#allocation3 + $0x910] sm:$0xff]
    %v3203 = vld [vmem:[#allocation3 + $0x918] sm:$0xff]
    %v3204 = vld [vmem:[#allocation3 + $0x920] sm:$0xff]
    %v3205 = vld [vmem:[#allocation3 + $0x928] sm:$0xff]
    %v3206 = vld [vmem:[#allocation3 + $0x930] sm:$0xff]
    %v3207 = vld [vmem:[#allocation3 + $0x938] sm:$0xff]
    %v3208 = vld [vmem:[#allocation3 + $0x940] sm:$0xff]
    %v3209 = vld [vmem:[#allocation3 + $0x948] sm:$0xff]
    %v3210 = vld [vmem:[#allocation3 + $0x950] sm:$0xff]
    %v3211 = vld [vmem:[#allocation3 + $0x958] sm:$0xff]
    %v3212 = vld [vmem:[#allocation3 + $0x960] sm:$0xff]
    %v3213 = vld [vmem:[#allocation3 + $0x968] sm:$0xff]
    %v3214 = vld [vmem:[#allocation3 + $0x970] sm:$0xff]
    %v3215 = vld [vmem:[#allocation3 + $0x978] sm:$0xff]
    %v3216 = vld [vmem:[#allocation3 + $0x980] sm:$0xff]
    %v3217 = vld [vmem:[#allocation3 + $0x988] sm:$0xff]
    %v3218 = vld [vmem:[#allocation3 + $0x990] sm:$0xff]
    %v3219 = vld [vmem:[#allocation3 + $0x998] sm:$0xff]
    %v3220 = vld [vmem:[#allocation3 + $0x9a0] sm:$0xff]
    %v3221 = vld [vmem:[#allocation3 + $0x9a8] sm:$0xff]
    %v3222 = vld [vmem:[#allocation3 + $0x9b0] sm:$0xff]
    %v3223 = vld [vmem:[#allocation3 + $0x9b8] sm:$0xff]
    %v3224 = vld [vmem:[#allocation3 + $0x9c0] sm:$0xff]
    %v3225 = vld [vmem:[#allocation3 + $0x9c8] sm:$0xff]
    %v3226 = vld [vmem:[#allocation3 + $0x9d0] sm:$0xff]
    %v3227 = vld [vmem:[#allocation3 + $0x9d8] sm:$0xff]
    %v3228 = vld [vmem:[#allocation3 + $0x9e0] sm:$0xff]
    %v3229 = vld [vmem:[#allocation3 + $0x9e8] sm:$0xff]
    %v3230 = vld [vmem:[#allocation3 + $0x9f0] sm:$0xff]
    %v3231 = vld [vmem:[#allocation3 + $0x9f8] sm:$0xff]
    %v3232 = vunpack.c.l.s8.bf16 %v2912
    %v3233 = vunpack.c.l.s8.bf16 %v2913
    %v3234 = vunpack.c.l.s8.bf16 %v2914
    %v3235 = vunpack.c.l.s8.bf16 %v2915
    %v3236 = vunpack.c.l.s8.bf16 %v2916
    %v3237 = vunpack.c.h.s8.bf16 %v2912
    %v3238 = vunpack.c.h.s8.bf16 %v2913
    %v3239 = vunpack.c.h.s8.bf16 %v2914
    %v3240 = vunpack.c.h.s8.bf16 %v2915
    %v3241 = vunpack.c.h.s8.bf16 %v2916
    %v3242 = vunpack.c.l.s8.bf16 %v2917
    %v3243 = vunpack.c.l.s8.bf16 %v2918
    %v3244 = vunpack.c.l.s8.bf16 %v2919
    %v3245 = vunpack.c.l.s8.bf16 %v2920
    %v3246 = vunpack.c.l.s8.bf16 %v2921
    %v3247 = vunpack.c.h.s8.bf16 %v2917
    %v3248 = vunpack.c.h.s8.bf16 %v2918
    %v3249 = vunpack.c.h.s8.bf16 %v2919
    %v3250 = vunpack.c.h.s8.bf16 %v2920
    %v3251 = vunpack.c.h.s8.bf16 %v2921
    %v3252 = vunpack.c.l.s8.bf16 %v2922
    %v3253 = vunpack.c.l.s8.bf16 %v2923
    %v3254 = vunpack.c.l.s8.bf16 %v2924
    %v3255 = vunpack.c.l.s8.bf16 %v2925
    %v3256 = vunpack.c.l.s8.bf16 %v2926
    %v3257 = vunpack.c.h.s8.bf16 %v2922
    %v3258 = vunpack.c.h.s8.bf16 %v2923
    %v3259 = vunpack.c.h.s8.bf16 %v2924
    %v3260 = vunpack.c.h.s8.bf16 %v2925
    %v3261 = vunpack.c.h.s8.bf16 %v2926
    %v3262 = vunpack.c.l.s8.bf16 %v2927
    %v3263 = vunpack.c.l.s8.bf16 %v2928
    %v3264 = vunpack.c.l.s8.bf16 %v2929
    %v3265 = vunpack.c.l.s8.bf16 %v2930
    %v3266 = vunpack.c.l.s8.bf16 %v2931
    %v3267 = vunpack.c.h.s8.bf16 %v2927
    %v3268 = vunpack.c.h.s8.bf16 %v2928
    %v3269 = vunpack.c.h.s8.bf16 %v2929
    %v3270 = vunpack.c.h.s8.bf16 %v2930
    %v3271 = vunpack.c.h.s8.bf16 %v2931
    %v3272 = vunpack.c.l.s8.bf16 %v2932
    %v3273 = vunpack.c.l.s8.bf16 %v2933
    %v3274 = vunpack.c.l.s8.bf16 %v2934
    %v3275 = vunpack.c.l.s8.bf16 %v2935
    %v3276 = vunpack.c.l.s8.bf16 %v2936
    %v3277 = vunpack.c.h.s8.bf16 %v2932
    %v3278 = vunpack.c.h.s8.bf16 %v2933
    %v3279 = vunpack.c.h.s8.bf16 %v2934
    %v3280 = vunpack.c.h.s8.bf16 %v2935
    %v3281 = vunpack.c.h.s8.bf16 %v2936
    %v3282 = vunpack.c.l.s8.bf16 %v2937
    %v3283 = vunpack.c.l.s8.bf16 %v2938
    %v3284 = vunpack.c.l.s8.bf16 %v2939
    %v3285 = vunpack.c.l.s8.bf16 %v2940
    %v3286 = vunpack.c.l.s8.bf16 %v2941
    %v3287 = vunpack.c.h.s8.bf16 %v2937
    %v3288 = vunpack.c.h.s8.bf16 %v2938
    %v3289 = vunpack.c.h.s8.bf16 %v2939
    %v3290 = vunpack.c.h.s8.bf16 %v2940
    %v3291 = vunpack.c.h.s8.bf16 %v2941
    %v3292 = vunpack.c.l.s8.bf16 %v2942
    %v3293 = vunpack.c.l.s8.bf16 %v2943
    %v3294 = vunpack.c.l.s8.bf16 %v2944
    %v3295 = vunpack.c.l.s8.bf16 %v2945
    %v3296 = vunpack.c.l.s8.bf16 %v2946
    %v3297 = vunpack.c.h.s8.bf16 %v2942
    %v3298 = vunpack.c.h.s8.bf16 %v2943
    %v3299 = vunpack.c.h.s8.bf16 %v2944
    %v3300 = vunpack.c.h.s8.bf16 %v2945
    %v3301 = vunpack.c.h.s8.bf16 %v2946
    %v3302 = vunpack.c.l.s8.bf16 %v2947
    %v3303 = vunpack.c.l.s8.bf16 %v2948
    %v3304 = vunpack.c.l.s8.bf16 %v2949
    %v3305 = vunpack.c.l.s8.bf16 %v2950
    %v3306 = vunpack.c.l.s8.bf16 %v2951
    %v3307 = vunpack.c.h.s8.bf16 %v2947
    %v3308 = vunpack.c.h.s8.bf16 %v2948
    %v3309 = vunpack.c.h.s8.bf16 %v2949
    %v3310 = vunpack.c.h.s8.bf16 %v2950
    %v3311 = vunpack.c.h.s8.bf16 %v2951
    %v3312 = vunpack.c.l.s8.bf16 %v2952
    %v3313 = vunpack.c.l.s8.bf16 %v2953
    %v3314 = vunpack.c.l.s8.bf16 %v2954
    %v3315 = vunpack.c.l.s8.bf16 %v2955
    %v3316 = vunpack.c.l.s8.bf16 %v2956
    %v3317 = vunpack.c.h.s8.bf16 %v2952
    %v3318 = vunpack.c.h.s8.bf16 %v2953
    %v3319 = vunpack.c.h.s8.bf16 %v2954
    %v3320 = vunpack.c.h.s8.bf16 %v2955
    %v3321 = vunpack.c.h.s8.bf16 %v2956
    %v3322 = vunpack.c.l.s8.bf16 %v2957
    %v3323 = vunpack.c.l.s8.bf16 %v2958
    %v3324 = vunpack.c.l.s8.bf16 %v2959
    %v3325 = vunpack.c.l.s8.bf16 %v2960
    %v3326 = vunpack.c.l.s8.bf16 %v2961
    %v3327 = vunpack.c.h.s8.bf16 %v2957
    %v3328 = vunpack.c.h.s8.bf16 %v2958
    %v3329 = vunpack.c.h.s8.bf16 %v2959
    %v3330 = vunpack.c.h.s8.bf16 %v2960
    %v3331 = vunpack.c.h.s8.bf16 %v2961
    %v3332 = vunpack.c.l.s8.bf16 %v2962
    %v3333 = vunpack.c.l.s8.bf16 %v2963
    %v3334 = vunpack.c.l.s8.bf16 %v2964
    %v3335 = vunpack.c.l.s8.bf16 %v2965
    %v3336 = vunpack.c.l.s8.bf16 %v2966
    %v3337 = vunpack.c.h.s8.bf16 %v2962
    %v3338 = vunpack.c.h.s8.bf16 %v2963
    %v3339 = vunpack.c.h.s8.bf16 %v2964
    %v3340 = vunpack.c.h.s8.bf16 %v2965
    %v3341 = vunpack.c.h.s8.bf16 %v2966
    %v3342 = vunpack.c.l.s8.bf16 %v2967
    %v3343 = vunpack.c.l.s8.bf16 %v2968
    %v3344 = vunpack.c.l.s8.bf16 %v2969
    %v3345 = vunpack.c.l.s8.bf16 %v2970
    %v3346 = vunpack.c.l.s8.bf16 %v2971
    %v3347 = vunpack.c.h.s8.bf16 %v2967
    %v3348 = vunpack.c.h.s8.bf16 %v2968
    %v3349 = vunpack.c.h.s8.bf16 %v2969
    %v3350 = vunpack.c.h.s8.bf16 %v2970
    %v3351 = vunpack.c.h.s8.bf16 %v2971
    %v3352 = vunpack.c.l.s8.bf16 %v2972
    %v3353 = vunpack.c.l.s8.bf16 %v2973
    %v3354 = vunpack.c.l.s8.bf16 %v2974
    %v3355 = vunpack.c.l.s8.bf16 %v2975
    %v3356 = vunpack.c.l.s8.bf16 %v2976
    %v3357 = vunpack.c.h.s8.bf16 %v2972
    %v3358 = vunpack.c.h.s8.bf16 %v2973
    %v3359 = vunpack.c.h.s8.bf16 %v2974
    %v3360 = vunpack.c.h.s8.bf16 %v2975
    %v3361 = vunpack.c.h.s8.bf16 %v2976
    %v3362 = vunpack.c.l.s8.bf16 %v2977
    %v3363 = vunpack.c.l.s8.bf16 %v2978
    %v3364 = vunpack.c.l.s8.bf16 %v2979
    %v3365 = vunpack.c.l.s8.bf16 %v2980
    %v3366 = vunpack.c.l.s8.bf16 %v2981
    %v3367 = vunpack.c.h.s8.bf16 %v2977
    %v3368 = vunpack.c.h.s8.bf16 %v2978
    %v3369 = vunpack.c.h.s8.bf16 %v2979
    %v3370 = vunpack.c.h.s8.bf16 %v2980
    %v3371 = vunpack.c.h.s8.bf16 %v2981
    %v3372 = vunpack.c.l.s8.bf16 %v2982
    %v3373 = vunpack.c.l.s8.bf16 %v2983
    %v3374 = vunpack.c.l.s8.bf16 %v2984
    %v3375 = vunpack.c.l.s8.bf16 %v2985
    %v3376 = vunpack.c.l.s8.bf16 %v2986
    %v3377 = vunpack.c.h.s8.bf16 %v2982
    %v3378 = vunpack.c.h.s8.bf16 %v2983
    %v3379 = vunpack.c.h.s8.bf16 %v2984
    %v3380 = vunpack.c.h.s8.bf16 %v2985
    %v3381 = vunpack.c.h.s8.bf16 %v2986
    %v3382 = vunpack.c.l.s8.bf16 %v2987
    %v3383 = vunpack.c.l.s8.bf16 %v2988
    %v3384 = vunpack.c.l.s8.bf16 %v2989
    %v3385 = vunpack.c.l.s8.bf16 %v2990
    %v3386 = vunpack.c.l.s8.bf16 %v2991
    %v3387 = vunpack.c.h.s8.bf16 %v2987
    %v3388 = vunpack.c.h.s8.bf16 %v2988
    %v3389 = vunpack.c.h.s8.bf16 %v2989
    %v3390 = vunpack.c.h.s8.bf16 %v2990
    %v3391 = vunpack.c.h.s8.bf16 %v2991
    %v3392 = vunpack.c.l.s8.bf16 %v2992
    %v3393 = vunpack.c.l.s8.bf16 %v2993
    %v3394 = vunpack.c.l.s8.bf16 %v2994
    %v3395 = vunpack.c.l.s8.bf16 %v2995
    %v3396 = vunpack.c.l.s8.bf16 %v2996
    %v3397 = vunpack.c.h.s8.bf16 %v2992
    %v3398 = vunpack.c.h.s8.bf16 %v2993
    %v3399 = vunpack.c.h.s8.bf16 %v2994
    %v3400 = vunpack.c.h.s8.bf16 %v2995
    %v3401 = vunpack.c.h.s8.bf16 %v2996
    %v3402 = vunpack.c.l.s8.bf16 %v2997
    %v3403 = vunpack.c.l.s8.bf16 %v2998
    %v3404 = vunpack.c.l.s8.bf16 %v2999
    %v3405 = vunpack.c.l.s8.bf16 %v3000
    %v3406 = vunpack.c.l.s8.bf16 %v3001
    %v3407 = vunpack.c.h.s8.bf16 %v2997
    %v3408 = vunpack.c.h.s8.bf16 %v2998
    %v3409 = vunpack.c.h.s8.bf16 %v2999
    %v3410 = vunpack.c.h.s8.bf16 %v3000
    %v3411 = vunpack.c.h.s8.bf16 %v3001
    %v3412 = vunpack.c.l.s8.bf16 %v3002
    %v3413 = vunpack.c.l.s8.bf16 %v3003
    %v3414 = vunpack.c.l.s8.bf16 %v3004
    %v3415 = vunpack.c.l.s8.bf16 %v3005
    %v3416 = vunpack.c.l.s8.bf16 %v3006
    %v3417 = vunpack.c.h.s8.bf16 %v3002
    %v3418 = vunpack.c.h.s8.bf16 %v3003
    %v3419 = vunpack.c.h.s8.bf16 %v3004
    %v3420 = vunpack.c.h.s8.bf16 %v3005
    %v3421 = vunpack.c.h.s8.bf16 %v3006
    %v3422 = vunpack.c.l.s8.bf16 %v3007
    %v3423 = vunpack.c.l.s8.bf16 %v3008
    %v3424 = vunpack.c.l.s8.bf16 %v3009
    %v3425 = vunpack.c.l.s8.bf16 %v3010
    %v3426 = vunpack.c.l.s8.bf16 %v3011
    %v3427 = vunpack.c.h.s8.bf16 %v3007
    %v3428 = vunpack.c.h.s8.bf16 %v3008
    %v3429 = vunpack.c.h.s8.bf16 %v3009
    %v3430 = vunpack.c.h.s8.bf16 %v3010
    %v3431 = vunpack.c.h.s8.bf16 %v3011
    %v3432 = vunpack.c.l.s8.bf16 %v3012
    %v3433 = vunpack.c.l.s8.bf16 %v3013
    %v3434 = vunpack.c.l.s8.bf16 %v3014
    %v3435 = vunpack.c.l.s8.bf16 %v3015
    %v3436 = vunpack.c.l.s8.bf16 %v3016
    %v3437 = vunpack.c.h.s8.bf16 %v3012
    %v3438 = vunpack.c.h.s8.bf16 %v3013
    %v3439 = vunpack.c.h.s8.bf16 %v3014
    %v3440 = vunpack.c.h.s8.bf16 %v3015
    %v3441 = vunpack.c.h.s8.bf16 %v3016
    %v3442 = vunpack.c.l.s8.bf16 %v3017
    %v3443 = vunpack.c.l.s8.bf16 %v3018
    %v3444 = vunpack.c.l.s8.bf16 %v3019
    %v3445 = vunpack.c.l.s8.bf16 %v3020
    %v3446 = vunpack.c.l.s8.bf16 %v3021
    %v3447 = vunpack.c.h.s8.bf16 %v3017
    %v3448 = vunpack.c.h.s8.bf16 %v3018
    %v3449 = vunpack.c.h.s8.bf16 %v3019
    %v3450 = vunpack.c.h.s8.bf16 %v3020
    %v3451 = vunpack.c.h.s8.bf16 %v3021
    %v3452 = vunpack.c.l.s8.bf16 %v3022
    %v3453 = vunpack.c.l.s8.bf16 %v3023
    %v3454 = vunpack.c.l.s8.bf16 %v3024
    %v3455 = vunpack.c.l.s8.bf16 %v3025
    %v3456 = vunpack.c.l.s8.bf16 %v3026
    %v3457 = vunpack.c.h.s8.bf16 %v3022
    %v3458 = vunpack.c.h.s8.bf16 %v3023
    %v3459 = vunpack.c.h.s8.bf16 %v3024
    %v3460 = vunpack.c.h.s8.bf16 %v3025
    %v3461 = vunpack.c.h.s8.bf16 %v3026
    %v3462 = vunpack.c.l.s8.bf16 %v3027
    %v3463 = vunpack.c.l.s8.bf16 %v3028
    %v3464 = vunpack.c.l.s8.bf16 %v3029
    %v3465 = vunpack.c.l.s8.bf16 %v3030
    %v3466 = vunpack.c.l.s8.bf16 %v3031
    %v3467 = vunpack.c.h.s8.bf16 %v3027
    %v3468 = vunpack.c.h.s8.bf16 %v3028
    %v3469 = vunpack.c.h.s8.bf16 %v3029
    %v3470 = vunpack.c.h.s8.bf16 %v3030
    %v3471 = vunpack.c.h.s8.bf16 %v3031
    %v3472 = vunpack.c.l.s8.bf16 %v3032
    %v3473 = vunpack.c.l.s8.bf16 %v3033
    %v3474 = vunpack.c.l.s8.bf16 %v3034
    %v3475 = vunpack.c.l.s8.bf16 %v3035
    %v3476 = vunpack.c.l.s8.bf16 %v3036
    %v3477 = vunpack.c.h.s8.bf16 %v3032
    %v3478 = vunpack.c.h.s8.bf16 %v3033
    %v3479 = vunpack.c.h.s8.bf16 %v3034
    %v3480 = vunpack.c.h.s8.bf16 %v3035
    %v3481 = vunpack.c.h.s8.bf16 %v3036
    %v3482 = vunpack.c.l.s8.bf16 %v3037
    %v3483 = vunpack.c.l.s8.bf16 %v3038
    %v3484 = vunpack.c.l.s8.bf16 %v3039
    %v3485 = vunpack.c.l.s8.bf16 %v3040
    %v3486 = vunpack.c.l.s8.bf16 %v3041
    %v3487 = vunpack.c.h.s8.bf16 %v3037
    %v3488 = vunpack.c.h.s8.bf16 %v3038
    %v3489 = vunpack.c.h.s8.bf16 %v3039
    %v3490 = vunpack.c.h.s8.bf16 %v3040
    %v3491 = vunpack.c.h.s8.bf16 %v3041
    %v3492 = vunpack.c.l.s8.bf16 %v3042
    %v3493 = vunpack.c.l.s8.bf16 %v3043
    %v3494 = vunpack.c.l.s8.bf16 %v3044
    %v3495 = vunpack.c.l.s8.bf16 %v3045
    %v3496 = vunpack.c.l.s8.bf16 %v3046
    %v3497 = vunpack.c.h.s8.bf16 %v3042
    %v3498 = vunpack.c.h.s8.bf16 %v3043
    %v3499 = vunpack.c.h.s8.bf16 %v3044
    %v3500 = vunpack.c.h.s8.bf16 %v3045
    %v3501 = vunpack.c.h.s8.bf16 %v3046
    %v3502 = vunpack.c.l.s8.bf16 %v3047
    %v3503 = vunpack.c.l.s8.bf16 %v3048
    %v3504 = vunpack.c.l.s8.bf16 %v3049
    %v3505 = vunpack.c.l.s8.bf16 %v3050
    %v3506 = vunpack.c.l.s8.bf16 %v3051
    %v3507 = vunpack.c.h.s8.bf16 %v3047
    %v3508 = vunpack.c.h.s8.bf16 %v3048
    %v3509 = vunpack.c.h.s8.bf16 %v3049
    %v3510 = vunpack.c.h.s8.bf16 %v3050
    %v3511 = vunpack.c.h.s8.bf16 %v3051
    %v3512 = vunpack.c.l.s8.bf16 %v3052
    %v3513 = vunpack.c.l.s8.bf16 %v3053
    %v3514 = vunpack.c.l.s8.bf16 %v3054
    %v3515 = vunpack.c.l.s8.bf16 %v3055
    %v3516 = vunpack.c.l.s8.bf16 %v3056
    %v3517 = vunpack.c.h.s8.bf16 %v3052
    %v3518 = vunpack.c.h.s8.bf16 %v3053
    %v3519 = vunpack.c.h.s8.bf16 %v3054
    %v3520 = vunpack.c.h.s8.bf16 %v3055
    %v3521 = vunpack.c.h.s8.bf16 %v3056
    %v3522 = vunpack.c.l.s8.bf16 %v3057
    %v3523 = vunpack.c.l.s8.bf16 %v3058
    %v3524 = vunpack.c.l.s8.bf16 %v3059
    %v3525 = vunpack.c.l.s8.bf16 %v3060
    %v3526 = vunpack.c.l.s8.bf16 %v3061
    %v3527 = vunpack.c.h.s8.bf16 %v3057
    %v3528 = vunpack.c.h.s8.bf16 %v3058
    %v3529 = vunpack.c.h.s8.bf16 %v3059
    %v3530 = vunpack.c.h.s8.bf16 %v3060
    %v3531 = vunpack.c.h.s8.bf16 %v3061
    %v3532 = vunpack.c.l.s8.bf16 %v3062
    %v3533 = vunpack.c.l.s8.bf16 %v3063
    %v3534 = vunpack.c.l.s8.bf16 %v3064
    %v3535 = vunpack.c.l.s8.bf16 %v3065
    %v3536 = vunpack.c.l.s8.bf16 %v3066
    %v3537 = vunpack.c.h.s8.bf16 %v3062
    %v3538 = vunpack.c.h.s8.bf16 %v3063
    %v3539 = vunpack.c.h.s8.bf16 %v3064
    %v3540 = vunpack.c.h.s8.bf16 %v3065
    %v3541 = vunpack.c.h.s8.bf16 %v3066
    %v3542 = vunpack.c.l.s8.bf16 %v3067
    %v3543 = vunpack.c.l.s8.bf16 %v3068
    %v3544 = vunpack.c.l.s8.bf16 %v3069
    %v3545 = vunpack.c.l.s8.bf16 %v3070
    %v3546 = vunpack.c.l.s8.bf16 %v3071
    %v3547 = vunpack.c.h.s8.bf16 %v3067
    %v3548 = vunpack.c.h.s8.bf16 %v3068
    %v3549 = vunpack.c.h.s8.bf16 %v3069
    %v3550 = vunpack.c.h.s8.bf16 %v3070
    %v3551 = vunpack.c.h.s8.bf16 %v3071
    %v3552 = vunpack.c.l.s8.bf16 %v3072
    %v3553 = vunpack.c.l.s8.bf16 %v3073
    %v3554 = vunpack.c.l.s8.bf16 %v3074
    %v3555 = vunpack.c.l.s8.bf16 %v3075
    %v3556 = vunpack.c.l.s8.bf16 %v3076
    %v3557 = vunpack.c.h.s8.bf16 %v3072
    %v3558 = vunpack.c.h.s8.bf16 %v3073
    %v3559 = vunpack.c.h.s8.bf16 %v3074
    %v3560 = vunpack.c.h.s8.bf16 %v3075
    %v3561 = vunpack.c.h.s8.bf16 %v3076
    %v3562 = vunpack.c.l.s8.bf16 %v3077
    %v3563 = vunpack.c.l.s8.bf16 %v3078
    %v3564 = vunpack.c.l.s8.bf16 %v3079
    %v3565 = vunpack.c.l.s8.bf16 %v3080
    %v3566 = vunpack.c.l.s8.bf16 %v3081
    %v3567 = vunpack.c.h.s8.bf16 %v3077
    %v3568 = vunpack.c.h.s8.bf16 %v3078
    %v3569 = vunpack.c.h.s8.bf16 %v3079
    %v3570 = vunpack.c.h.s8.bf16 %v3080
    %v3571 = vunpack.c.h.s8.bf16 %v3081
    %v3572 = vunpack.c.l.s8.bf16 %v3082
    %v3573 = vunpack.c.l.s8.bf16 %v3083
    %v3574 = vunpack.c.l.s8.bf16 %v3084
    %v3575 = vunpack.c.l.s8.bf16 %v3085
    %v3576 = vunpack.c.l.s8.bf16 %v3086
    %v3577 = vunpack.c.h.s8.bf16 %v3082
    %v3578 = vunpack.c.h.s8.bf16 %v3083
    %v3579 = vunpack.c.h.s8.bf16 %v3084
    %v3580 = vunpack.c.h.s8.bf16 %v3085
    %v3581 = vunpack.c.h.s8.bf16 %v3086
    %v3582 = vunpack.c.l.s8.bf16 %v3087
    %v3583 = vunpack.c.l.s8.bf16 %v3088
    %v3584 = vunpack.c.l.s8.bf16 %v3089
    %v3585 = vunpack.c.l.s8.bf16 %v3090
    %v3586 = vunpack.c.l.s8.bf16 %v3091
    %v3587 = vunpack.c.h.s8.bf16 %v3087
    %v3588 = vunpack.c.h.s8.bf16 %v3088
    %v3589 = vunpack.c.h.s8.bf16 %v3089
    %v3590 = vunpack.c.h.s8.bf16 %v3090
    %v3591 = vunpack.c.h.s8.bf16 %v3091
    %v3592 = vunpack.c.l.s8.bf16 %v3092
    %v3593 = vunpack.c.l.s8.bf16 %v3093
    %v3594 = vunpack.c.l.s8.bf16 %v3094
    %v3595 = vunpack.c.l.s8.bf16 %v3095
    %v3596 = vunpack.c.l.s8.bf16 %v3096
    %v3597 = vunpack.c.h.s8.bf16 %v3092
    %v3598 = vunpack.c.h.s8.bf16 %v3093
    %v3599 = vunpack.c.h.s8.bf16 %v3094
    %v3600 = vunpack.c.h.s8.bf16 %v3095
    %v3601 = vunpack.c.h.s8.bf16 %v3096
    %v3602 = vunpack.c.l.s8.bf16 %v3097
    %v3603 = vunpack.c.l.s8.bf16 %v3098
    %v3604 = vunpack.c.l.s8.bf16 %v3099
    %v3605 = vunpack.c.l.s8.bf16 %v3100
    %v3606 = vunpack.c.l.s8.bf16 %v3101
    %v3607 = vunpack.c.h.s8.bf16 %v3097
    %v3608 = vunpack.c.h.s8.bf16 %v3098
    %v3609 = vunpack.c.h.s8.bf16 %v3099
    %v3610 = vunpack.c.h.s8.bf16 %v3100
    %v3611 = vunpack.c.h.s8.bf16 %v3101
    %v3612 = vunpack.c.l.s8.bf16 %v3102
    %v3613 = vunpack.c.l.s8.bf16 %v3103
    %v3614 = vunpack.c.l.s8.bf16 %v3104
    %v3615 = vunpack.c.l.s8.bf16 %v3105
    %v3616 = vunpack.c.l.s8.bf16 %v3106
    %v3617 = vunpack.c.h.s8.bf16 %v3102
    %v3618 = vunpack.c.h.s8.bf16 %v3103
    %v3619 = vunpack.c.h.s8.bf16 %v3104
    %v3620 = vunpack.c.h.s8.bf16 %v3105
    %v3621 = vunpack.c.h.s8.bf16 %v3106
    %v3622 = vunpack.c.l.s8.bf16 %v3107
    %v3623 = vunpack.c.l.s8.bf16 %v3108
    %v3624 = vunpack.c.l.s8.bf16 %v3109
    %v3625 = vunpack.c.l.s8.bf16 %v3110
    %v3626 = vunpack.c.l.s8.bf16 %v3111
    %v3627 = vunpack.c.h.s8.bf16 %v3107
    %v3628 = vunpack.c.h.s8.bf16 %v3108
    %v3629 = vunpack.c.h.s8.bf16 %v3109
    %v3630 = vunpack.c.h.s8.bf16 %v3110
    %v3631 = vunpack.c.h.s8.bf16 %v3111
    %v3632 = vunpack.c.l.s8.bf16 %v3112
    %v3633 = vunpack.c.l.s8.bf16 %v3113
    %v3634 = vunpack.c.l.s8.bf16 %v3114
    %v3635 = vunpack.c.l.s8.bf16 %v3115
    %v3636 = vunpack.c.l.s8.bf16 %v3116
    %v3637 = vunpack.c.h.s8.bf16 %v3112
    %v3638 = vunpack.c.h.s8.bf16 %v3113
    %v3639 = vunpack.c.h.s8.bf16 %v3114
    %v3640 = vunpack.c.h.s8.bf16 %v3115
    %v3641 = vunpack.c.h.s8.bf16 %v3116
    %v3642 = vunpack.c.l.s8.bf16 %v3117
    %v3643 = vunpack.c.l.s8.bf16 %v3118
    %v3644 = vunpack.c.l.s8.bf16 %v3119
    %v3645 = vunpack.c.l.s8.bf16 %v3120
    %v3646 = vunpack.c.l.s8.bf16 %v3121
    %v3647 = vunpack.c.h.s8.bf16 %v3117
    %v3648 = vunpack.c.h.s8.bf16 %v3118
    %v3649 = vunpack.c.h.s8.bf16 %v3119
    %v3650 = vunpack.c.h.s8.bf16 %v3120
    %v3651 = vunpack.c.h.s8.bf16 %v3121
    %v3652 = vunpack.c.l.s8.bf16 %v3122
    %v3653 = vunpack.c.l.s8.bf16 %v3123
    %v3654 = vunpack.c.l.s8.bf16 %v3124
    %v3655 = vunpack.c.l.s8.bf16 %v3125
    %v3656 = vunpack.c.l.s8.bf16 %v3126
    %v3657 = vunpack.c.h.s8.bf16 %v3122
    %v3658 = vunpack.c.h.s8.bf16 %v3123
    %v3659 = vunpack.c.h.s8.bf16 %v3124
    %v3660 = vunpack.c.h.s8.bf16 %v3125
    %v3661 = vunpack.c.h.s8.bf16 %v3126
    %v3662 = vunpack.c.l.s8.bf16 %v3127
    %v3663 = vunpack.c.l.s8.bf16 %v3128
    %v3664 = vunpack.c.l.s8.bf16 %v3129
    %v3665 = vunpack.c.l.s8.bf16 %v3130
    %v3666 = vunpack.c.l.s8.bf16 %v3131
    %v3667 = vunpack.c.h.s8.bf16 %v3127
    %v3668 = vunpack.c.h.s8.bf16 %v3128
    %v3669 = vunpack.c.h.s8.bf16 %v3129
    %v3670 = vunpack.c.h.s8.bf16 %v3130
    %v3671 = vunpack.c.h.s8.bf16 %v3131
    %v3672 = vunpack.c.l.s8.bf16 %v3132
    %v3673 = vunpack.c.l.s8.bf16 %v3133
    %v3674 = vunpack.c.l.s8.bf16 %v3134
    %v3675 = vunpack.c.l.s8.bf16 %v3135
    %v3676 = vunpack.c.l.s8.bf16 %v3136
    %v3677 = vunpack.c.h.s8.bf16 %v3132
    %v3678 = vunpack.c.h.s8.bf16 %v3133
    %v3679 = vunpack.c.h.s8.bf16 %v3134
    %v3680 = vunpack.c.h.s8.bf16 %v3135
    %v3681 = vunpack.c.h.s8.bf16 %v3136
    %v3682 = vunpack.c.l.s8.bf16 %v3137
    %v3683 = vunpack.c.l.s8.bf16 %v3138
    %v3684 = vunpack.c.l.s8.bf16 %v3139
    %v3685 = vunpack.c.l.s8.bf16 %v3140
    %v3686 = vunpack.c.l.s8.bf16 %v3141
    %v3687 = vunpack.c.h.s8.bf16 %v3137
    %v3688 = vunpack.c.h.s8.bf16 %v3138
    %v3689 = vunpack.c.h.s8.bf16 %v3139
    %v3690 = vunpack.c.h.s8.bf16 %v3140
    %v3691 = vunpack.c.h.s8.bf16 %v3141
    %v3692 = vunpack.c.l.s8.bf16 %v3142
    %v3693 = vunpack.c.l.s8.bf16 %v3143
    %v3694 = vunpack.c.l.s8.bf16 %v3144
    %v3695 = vunpack.c.l.s8.bf16 %v3145
    %v3696 = vunpack.c.l.s8.bf16 %v3146
    %v3697 = vunpack.c.h.s8.bf16 %v3142
    %v3698 = vunpack.c.h.s8.bf16 %v3143
    %v3699 = vunpack.c.h.s8.bf16 %v3144
    %v3700 = vunpack.c.h.s8.bf16 %v3145
    %v3701 = vunpack.c.h.s8.bf16 %v3146
    %v3702 = vunpack.c.l.s8.bf16 %v3147
    %v3703 = vunpack.c.l.s8.bf16 %v3148
    %v3704 = vunpack.c.l.s8.bf16 %v3149
    %v3705 = vunpack.c.l.s8.bf16 %v3150
    %v3706 = vunpack.c.l.s8.bf16 %v3151
    %v3707 = vunpack.c.h.s8.bf16 %v3147
    %v3708 = vunpack.c.h.s8.bf16 %v3148
    %v3709 = vunpack.c.h.s8.bf16 %v3149
    %v3710 = vunpack.c.h.s8.bf16 %v3150
    %v3711 = vunpack.c.h.s8.bf16 %v3151
    %v3712 = vunpack.c.l.s8.bf16 %v3152
    %v3713 = vunpack.c.l.s8.bf16 %v3153
    %v3714 = vunpack.c.l.s8.bf16 %v3154
    %v3715 = vunpack.c.l.s8.bf16 %v3155
    %v3716 = vunpack.c.l.s8.bf16 %v3156
    %v3717 = vunpack.c.h.s8.bf16 %v3152
    %v3718 = vunpack.c.h.s8.bf16 %v3153
    %v3719 = vunpack.c.h.s8.bf16 %v3154
    %v3720 = vunpack.c.h.s8.bf16 %v3155
    %v3721 = vunpack.c.h.s8.bf16 %v3156
    %v3722 = vunpack.c.l.s8.bf16 %v3157
    %v3723 = vunpack.c.l.s8.bf16 %v3158
    %v3724 = vunpack.c.l.s8.bf16 %v3159
    %v3725 = vunpack.c.l.s8.bf16 %v3160
    %v3726 = vunpack.c.l.s8.bf16 %v3161
    %v3727 = vunpack.c.h.s8.bf16 %v3157
    %v3728 = vunpack.c.h.s8.bf16 %v3158
    %v3729 = vunpack.c.h.s8.bf16 %v3159
    %v3730 = vunpack.c.h.s8.bf16 %v3160
    %v3731 = vunpack.c.h.s8.bf16 %v3161
    %v3732 = vunpack.c.l.s8.bf16 %v3162
    %v3733 = vunpack.c.l.s8.bf16 %v3163
    %v3734 = vunpack.c.l.s8.bf16 %v3164
    %v3735 = vunpack.c.l.s8.bf16 %v3165
    %v3736 = vunpack.c.l.s8.bf16 %v3166
    %v3737 = vunpack.c.h.s8.bf16 %v3162
    %v3738 = vunpack.c.h.s8.bf16 %v3163
    %v3739 = vunpack.c.h.s8.bf16 %v3164
    %v3740 = vunpack.c.h.s8.bf16 %v3165
    %v3741 = vunpack.c.h.s8.bf16 %v3166
    %v3742 = vunpack.c.l.s8.bf16 %v3167
    %v3743 = vunpack.c.l.s8.bf16 %v3168
    %v3744 = vunpack.c.l.s8.bf16 %v3169
    %v3745 = vunpack.c.l.s8.bf16 %v3170
    %v3746 = vunpack.c.l.s8.bf16 %v3171
    %v3747 = vunpack.c.h.s8.bf16 %v3167
    %v3748 = vunpack.c.h.s8.bf16 %v3168
    %v3749 = vunpack.c.h.s8.bf16 %v3169
    %v3750 = vunpack.c.h.s8.bf16 %v3170
    %v3751 = vunpack.c.h.s8.bf16 %v3171
    %v3752 = vunpack.c.l.s8.bf16 %v3172
    %v3753 = vunpack.c.l.s8.bf16 %v3173
    %v3754 = vunpack.c.l.s8.bf16 %v3174
    %v3755 = vunpack.c.l.s8.bf16 %v3175
    %v3756 = vunpack.c.l.s8.bf16 %v3176
    %v3757 = vunpack.c.h.s8.bf16 %v3172
    %v3758 = vunpack.c.h.s8.bf16 %v3173
    %v3759 = vunpack.c.h.s8.bf16 %v3174
    %v3760 = vunpack.c.h.s8.bf16 %v3175
    %v3761 = vunpack.c.h.s8.bf16 %v3176
    %v3762 = vunpack.c.l.s8.bf16 %v3177
    %v3763 = vunpack.c.l.s8.bf16 %v3178
    %v3764 = vunpack.c.l.s8.bf16 %v3179
    %v3765 = vunpack.c.l.s8.bf16 %v3180
    %v3766 = vunpack.c.l.s8.bf16 %v3181
    %v3767 = vunpack.c.h.s8.bf16 %v3177
    %v3768 = vunpack.c.h.s8.bf16 %v3178
    %v3769 = vunpack.c.h.s8.bf16 %v3179
    %v3770 = vunpack.c.h.s8.bf16 %v3180
    %v3771 = vunpack.c.h.s8.bf16 %v3181
    %v3772 = vunpack.c.l.s8.bf16 %v3182
    %v3773 = vunpack.c.l.s8.bf16 %v3183
    %v3774 = vunpack.c.l.s8.bf16 %v3184
    %v3775 = vunpack.c.l.s8.bf16 %v3185
    %v3776 = vunpack.c.l.s8.bf16 %v3186
    %v3777 = vunpack.c.h.s8.bf16 %v3182
    %v3778 = vunpack.c.h.s8.bf16 %v3183
    %v3779 = vunpack.c.h.s8.bf16 %v3184
    %v3780 = vunpack.c.h.s8.bf16 %v3185
    %v3781 = vunpack.c.h.s8.bf16 %v3186
    %v3782 = vunpack.c.l.s8.bf16 %v3187
    %v3783 = vunpack.c.l.s8.bf16 %v3188
    %v3784 = vunpack.c.l.s8.bf16 %v3189
    %v3785 = vunpack.c.l.s8.bf16 %v3190
    %v3786 = vunpack.c.l.s8.bf16 %v3191
    %v3787 = vunpack.c.h.s8.bf16 %v3187
    %v3788 = vunpack.c.h.s8.bf16 %v3188
    %v3789 = vunpack.c.h.s8.bf16 %v3189
    %v3790 = vunpack.c.h.s8.bf16 %v3190
    %v3791 = vunpack.c.h.s8.bf16 %v3191
    %v3792 = vunpack.c.l.s8.bf16 %v3192
    %v3793 = vunpack.c.l.s8.bf16 %v3193
    %v3794 = vunpack.c.l.s8.bf16 %v3194
    %v3795 = vunpack.c.l.s8.bf16 %v3195
    %v3796 = vunpack.c.l.s8.bf16 %v3196
    %v3797 = vunpack.c.h.s8.bf16 %v3192
    %v3798 = vunpack.c.h.s8.bf16 %v3193
    %v3799 = vunpack.c.h.s8.bf16 %v3194
    %v3800 = vunpack.c.h.s8.bf16 %v3195
    %v3801 = vunpack.c.h.s8.bf16 %v3196
    %v3802 = vunpack.c.l.s8.bf16 %v3197
    %v3803 = vunpack.c.l.s8.bf16 %v3198
    %v3804 = vunpack.c.l.s8.bf16 %v3199
    %v3805 = vunpack.c.l.s8.bf16 %v3200
    %v3806 = vunpack.c.l.s8.bf16 %v3201
    %v3807 = vunpack.c.h.s8.bf16 %v3197
    %v3808 = vunpack.c.h.s8.bf16 %v3198
    %v3809 = vunpack.c.h.s8.bf16 %v3199
    %v3810 = vunpack.c.h.s8.bf16 %v3200
    %v3811 = vunpack.c.h.s8.bf16 %v3201
    %v3812 = vunpack.c.l.s8.bf16 %v3202
    %v3813 = vunpack.c.l.s8.bf16 %v3203
    %v3814 = vunpack.c.l.s8.bf16 %v3204
    %v3815 = vunpack.c.l.s8.bf16 %v3205
    %v3816 = vunpack.c.l.s8.bf16 %v3206
    %v3817 = vunpack.c.h.s8.bf16 %v3202
    %v3818 = vunpack.c.h.s8.bf16 %v3203
    %v3819 = vunpack.c.h.s8.bf16 %v3204
    %v3820 = vunpack.c.h.s8.bf16 %v3205
    %v3821 = vunpack.c.h.s8.bf16 %v3206
    %v3822 = vunpack.c.l.s8.bf16 %v3207
    %v3823 = vunpack.c.l.s8.bf16 %v3208
    %v3824 = vunpack.c.l.s8.bf16 %v3209
    %v3825 = vunpack.c.l.s8.bf16 %v3210
    %v3826 = vunpack.c.l.s8.bf16 %v3211
    %v3827 = vunpack.c.h.s8.bf16 %v3207
    %v3828 = vunpack.c.h.s8.bf16 %v3208
    %v3829 = vunpack.c.h.s8.bf16 %v3209
    %v3830 = vunpack.c.h.s8.bf16 %v3210
    %v3831 = vunpack.c.h.s8.bf16 %v3211
    %v3832 = vunpack.c.l.s8.bf16 %v3212
    %v3833 = vunpack.c.l.s8.bf16 %v3213
    %v3834 = vunpack.c.l.s8.bf16 %v3214
    %v3835 = vunpack.c.l.s8.bf16 %v3215
    %v3836 = vunpack.c.l.s8.bf16 %v3216
    %v3837 = vunpack.c.h.s8.bf16 %v3212
    %v3838 = vunpack.c.h.s8.bf16 %v3213
    %v3839 = vunpack.c.h.s8.bf16 %v3214
    %v3840 = vunpack.c.h.s8.bf16 %v3215
    %v3841 = vunpack.c.h.s8.bf16 %v3216
    %v3842 = vunpack.c.l.s8.bf16 %v3217
    %v3843 = vunpack.c.l.s8.bf16 %v3218
    %v3844 = vunpack.c.l.s8.bf16 %v3219
    %v3845 = vunpack.c.l.s8.bf16 %v3220
    %v3846 = vunpack.c.l.s8.bf16 %v3221
    %v3847 = vunpack.c.h.s8.bf16 %v3217
    %v3848 = vunpack.c.h.s8.bf16 %v3218
    %v3849 = vunpack.c.h.s8.bf16 %v3219
    %v3850 = vunpack.c.h.s8.bf16 %v3220
    %v3851 = vunpack.c.h.s8.bf16 %v3221
    %v3852 = vunpack.c.l.s8.bf16 %v3222
    %v3853 = vunpack.c.l.s8.bf16 %v3223
    %v3854 = vunpack.c.l.s8.bf16 %v3224
    %v3855 = vunpack.c.l.s8.bf16 %v3225
    %v3856 = vunpack.c.l.s8.bf16 %v3226
    %v3857 = vunpack.c.h.s8.bf16 %v3222
    %v3858 = vunpack.c.h.s8.bf16 %v3223
    %v3859 = vunpack.c.h.s8.bf16 %v3224
    %v3860 = vunpack.c.h.s8.bf16 %v3225
    %v3861 = vunpack.c.h.s8.bf16 %v3226
    %v3862 = vunpack.c.l.s8.bf16 %v3227
    %v3863 = vunpack.c.l.s8.bf16 %v3228
    %v3864 = vunpack.c.l.s8.bf16 %v3229
    %v3865 = vunpack.c.l.s8.bf16 %v3230
    %v3866 = vunpack.c.l.s8.bf16 %v3231
    %v3867 = vunpack.c.h.s8.bf16 %v3227
    %v3868 = vunpack.c.h.s8.bf16 %v3228
    %v3869 = vunpack.c.h.s8.bf16 %v3229
    %v3870 = vunpack.c.h.s8.bf16 %v3230
    %v3871 = vunpack.c.h.s8.bf16 %v3231
    %v3872 = vld [vmem:[#allocation18] sm:$0x1f]
    %v3873 = vld [vmem:[#allocation17] sm:$0x1f]
    %3874 = vmatprep.subr.bf16.mxu0 %v3268
    %3875 = vmatpush1.bf16.msra.mxu0 %v3267
    %3876 = vmatprep.subr.bf16.mxu0 %v3263
    %3877 = vmatpush1.bf16.msra.mxu0 %v3262
    %3878 = vmatprep.subr.bf16.mxu0 %v3258
    %3879 = vmatpush1.bf16.msra.mxu0 %v3257
    %3880 = vmatprep.subr.bf16.mxu0 %v3253
    %3881 = vmatpush1.bf16.msra.mxu0 %v3252
    %3882 = vmatprep.subr.bf16.mxu0 %v3248
    %3883 = vmatpush1.bf16.msra.mxu0 %v3247
    %3884 = vmatprep.subr.bf16.mxu0 %v3243
    %3885 = vmatpush1.bf16.msra.mxu0 %v3242
    %3886 = vmatprep.subr.bf16.mxu0 %v3238
    %3887 = vmatpush1.bf16.msra.mxu0 %v3237
    %3888 = vmatprep.subr.bf16.mxu0 %v3233
    %3889 = vmatpush1.bf16.msra.mxu0 %v3232
    %3890 = vmatprep.subr.bf16.mxu0 %v3308
    %3891 = vmatpush2.bf16.msra.mxu0 %v3307
    %3892 = vmatprep.subr.bf16.mxu0 %v3303
    %3893 = vmatpush2.bf16.msra.mxu0 %v3302
    %3894 = vmatprep.subr.bf16.mxu0 %v3298
    %3895 = vmatpush2.bf16.msra.mxu0 %v3297
    %3896 = vmatprep.subr.bf16.mxu0 %v3293
    %3897 = vmatpush2.bf16.msra.mxu0 %v3292
    %3898 = vmatprep.subr.bf16.mxu0 %v3288
    %3899 = vmatpush2.bf16.msra.mxu0 %v3287
    %3900 = vmatprep.subr.bf16.mxu0 %v3283
    %3901 = vmatpush2.bf16.msra.mxu0 %v3282
    %3902 = vmatprep.subr.bf16.mxu0 %v3278
    %3903 = vmatpush2.bf16.msra.mxu0 %v3277
    %3904 = vmatprep.subr.bf16.mxu0 %v3273
    %3905 = vmatpush2.bf16.msra.mxu0 %v3272
    %3906 = vmatprep.mubr.bf16.mxu0 %v2897
    %3907 = vmatmul.mubr.bf16.gmra.mxu0 %v2896
    %v3908 = vpop.f32.mrf.mxu0
    %v3909 = vadd.f32 0.0, %v3908
    %v3910 = vpop.f32.mrf.mxu0
    %v3911 = vadd.f32 0.0, %v3910
    %v3912 = vpop.f32.mrf.mxu0
    %v3913 = vadd.f32 0.0, %v3912
    %v3914 = vpop.f32.mrf.mxu0
    %v3915 = vadd.f32 0.0, %v3914
    %3916 = vdwg.mxu0
    %3917 = vmatprep.subr.bf16.mxu0 %v3348
    %3918 = vmatpush1.bf16.msra.mxu0 %v3347
    %3919 = vmatprep.subr.bf16.mxu0 %v3343
    %3920 = vmatpush1.bf16.msra.mxu0 %v3342
    %3921 = vmatprep.subr.bf16.mxu0 %v3338
    %3922 = vmatpush1.bf16.msra.mxu0 %v3337
    %3923 = vmatprep.subr.bf16.mxu0 %v3333
    %3924 = vmatpush1.bf16.msra.mxu0 %v3332
    %3925 = vmatprep.subr.bf16.mxu0 %v3328
    %3926 = vmatpush1.bf16.msra.mxu0 %v3327
    %3927 = vmatprep.subr.bf16.mxu0 %v3323
    %3928 = vmatpush1.bf16.msra.mxu0 %v3322
    %3929 = vmatprep.subr.bf16.mxu0 %v3318
    %3930 = vmatpush1.bf16.msra.mxu0 %v3317
    %3931 = vmatprep.subr.bf16.mxu0 %v3313
    %3932 = vmatpush1.bf16.msra.mxu0 %v3312
    %3933 = vmatprep.subr.bf16.mxu0 %v3388
    %3934 = vmatpush2.bf16.msra.mxu0 %v3387
    %3935 = vmatprep.subr.bf16.mxu0 %v3383
    %3936 = vmatpush2.bf16.msra.mxu0 %v3382
    %3937 = vmatprep.subr.bf16.mxu0 %v3378
    %3938 = vmatpush2.bf16.msra.mxu0 %v3377
    %3939 = vmatprep.subr.bf16.mxu0 %v3373
    %3940 = vmatpush2.bf16.msra.mxu0 %v3372
    %3941 = vmatprep.subr.bf16.mxu0 %v3368
    %3942 = vmatpush2.bf16.msra.mxu0 %v3367
    %3943 = vmatprep.subr.bf16.mxu0 %v3363
    %3944 = vmatpush2.bf16.msra.mxu0 %v3362
    %3945 = vmatprep.subr.bf16.mxu0 %v3358
    %3946 = vmatpush2.bf16.msra.mxu0 %v3357
    %3947 = vmatprep.subr.bf16.mxu0 %v3353
    %3948 = vmatpush2.bf16.msra.mxu0 %v3352
    %3949 = vmatprep.mubr.bf16.mxu0 %v2899
    %3950 = vmatmul.mubr.bf16.gmra.mxu0 %v2898
    %v3951 = vpop.f32.mrf.mxu0
    %v3952 = vadd.f32 %v3909, %v3951
    %v3953 = vpop.f32.mrf.mxu0
    %v3954 = vadd.f32 %v3911, %v3953
    %v3955 = vpop.f32.mrf.mxu0
    %v3956 = vadd.f32 %v3913, %v3955
    %v3957 = vpop.f32.mrf.mxu0
    %v3958 = vadd.f32 %v3915, %v3957
    %3959 = vdwg.mxu0
    %3960 = vmatprep.subr.bf16.mxu0 %v3428
    %3961 = vmatpush1.bf16.msra.mxu0 %v3427
    %3962 = vmatprep.subr.bf16.mxu0 %v3423
    %3963 = vmatpush1.bf16.msra.mxu0 %v3422
    %3964 = vmatprep.subr.bf16.mxu0 %v3418
    %3965 = vmatpush1.bf16.msra.mxu0 %v3417
    %3966 = vmatprep.subr.bf16.mxu0 %v3413
    %3967 = vmatpush1.bf16.msra.mxu0 %v3412
    %3968 = vmatprep.subr.bf16.mxu0 %v3408
    %3969 = vmatpush1.bf16.msra.mxu0 %v3407
    %3970 = vmatprep.subr.bf16.mxu0 %v3403
    %3971 = vmatpush1.bf16.msra.mxu0 %v3402
    %3972 = vmatprep.subr.bf16.mxu0 %v3398
    %3973 = vmatpush1.bf16.msra.mxu0 %v3397
    %3974 = vmatprep.subr.bf16.mxu0 %v3393
    %3975 = vmatpush1.bf16.msra.mxu0 %v3392
    %3976 = vmatprep.subr.bf16.mxu0 %v3468
    %3977 = vmatpush2.bf16.msra.mxu0 %v3467
    %3978 = vmatprep.subr.bf16.mxu0 %v3463
    %3979 = vmatpush2.bf16.msra.mxu0 %v3462
    %3980 = vmatprep.subr.bf16.mxu0 %v3458
    %3981 = vmatpush2.bf16.msra.mxu0 %v3457
    %3982 = vmatprep.subr.bf16.mxu0 %v3453
    %3983 = vmatpush2.bf16.msra.mxu0 %v3452
    %3984 = vmatprep.subr.bf16.mxu0 %v3448
    %3985 = vmatpush2.bf16.msra.mxu0 %v3447
    %3986 = vmatprep.subr.bf16.mxu0 %v3443
    %3987 = vmatpush2.bf16.msra.mxu0 %v3442
    %3988 = vmatprep.subr.bf16.mxu0 %v3438
    %3989 = vmatpush2.bf16.msra.mxu0 %v3437
    %3990 = vmatprep.subr.bf16.mxu0 %v3433
    %3991 = vmatpush2.bf16.msra.mxu0 %v3432
    %3992 = vmatprep.mubr.bf16.mxu0 %v2901
    %3993 = vmatmul.mubr.bf16.gmra.mxu0 %v2900
    %v3994 = vpop.f32.mrf.mxu0
    %v3995 = vadd.f32 %v3952, %v3994
    %v3996 = vpop.f32.mrf.mxu0
    %v3997 = vadd.f32 %v3954, %v3996
    %v3998 = vpop.f32.mrf.mxu0
    %v3999 = vadd.f32 %v3956, %v3998
    %v4000 = vpop.f32.mrf.mxu0
    %v4001 = vadd.f32 %v3958, %v4000
    %4002 = vdwg.mxu0
    %4003 = vmatprep.subr.bf16.mxu0 %v3508
    %4004 = vmatpush1.bf16.msra.mxu0 %v3507
    %4005 = vmatprep.subr.bf16.mxu0 %v3503
    %4006 = vmatpush1.bf16.msra.mxu0 %v3502
    %4007 = vmatprep.subr.bf16.mxu0 %v3498
    %4008 = vmatpush1.bf16.msra.mxu0 %v3497
    %4009 = vmatprep.subr.bf16.mxu0 %v3493
    %4010 = vmatpush1.bf16.msra.mxu0 %v3492
    %4011 = vmatprep.subr.bf16.mxu0 %v3488
    %4012 = vmatpush1.bf16.msra.mxu0 %v3487
    %4013 = vmatprep.subr.bf16.mxu0 %v3483
    %4014 = vmatpush1.bf16.msra.mxu0 %v3482
    %4015 = vmatprep.subr.bf16.mxu0 %v3478
    %4016 = vmatpush1.bf16.msra.mxu0 %v3477
    %4017 = vmatprep.subr.bf16.mxu0 %v3473
    %4018 = vmatpush1.bf16.msra.mxu0 %v3472
    %4019 = vmatprep.subr.bf16.mxu0 %v3548
    %4020 = vmatpush2.bf16.msra.mxu0 %v3547
    %4021 = vmatprep.subr.bf16.mxu0 %v3543
    %4022 = vmatpush2.bf16.msra.mxu0 %v3542
    %4023 = vmatprep.subr.bf16.mxu0 %v3538
    %4024 = vmatpush2.bf16.msra.mxu0 %v3537
    %4025 = vmatprep.subr.bf16.mxu0 %v3533
    %4026 = vmatpush2.bf16.msra.mxu0 %v3532
    %4027 = vmatprep.subr.bf16.mxu0 %v3528
    %4028 = vmatpush2.bf16.msra.mxu0 %v3527
    %4029 = vmatprep.subr.bf16.mxu0 %v3523
    %4030 = vmatpush2.bf16.msra.mxu0 %v3522
    %4031 = vmatprep.subr.bf16.mxu0 %v3518
    %4032 = vmatpush2.bf16.msra.mxu0 %v3517
    %4033 = vmatprep.subr.bf16.mxu0 %v3513
    %4034 = vmatpush2.bf16.msra.mxu0 %v3512
    %4035 = vmatprep.mubr.bf16.mxu0 %v2903
    %4036 = vmatmul.mubr.bf16.gmra.mxu0 %v2902
    %v4037 = vpop.f32.mrf.mxu0
    %v4038 = vadd.f32 %v3995, %v4037
    %v4039 = vpop.f32.mrf.mxu0
    %v4040 = vadd.f32 %v3997, %v4039
    %v4041 = vpop.f32.mrf.mxu0
    %v4042 = vadd.f32 %v3999, %v4041
    %v4043 = vpop.f32.mrf.mxu0
    %v4044 = vadd.f32 %v4001, %v4043
    %4045 = vdwg.mxu0
    %4046 = vmatprep.subr.bf16.mxu0 %v3588
    %4047 = vmatpush1.bf16.msra.mxu0 %v3587
    %4048 = vmatprep.subr.bf16.mxu0 %v3583
    %4049 = vmatpush1.bf16.msra.mxu0 %v3582
    %4050 = vmatprep.subr.bf16.mxu0 %v3578
    %4051 = vmatpush1.bf16.msra.mxu0 %v3577
    %4052 = vmatprep.subr.bf16.mxu0 %v3573
    %4053 = vmatpush1.bf16.msra.mxu0 %v3572
    %4054 = vmatprep.subr.bf16.mxu0 %v3568
    %4055 = vmatpush1.bf16.msra.mxu0 %v3567
    %4056 = vmatprep.subr.bf16.mxu0 %v3563
    %4057 = vmatpush1.bf16.msra.mxu0 %v3562
    %4058 = vmatprep.subr.bf16.mxu0 %v3558
    %4059 = vmatpush1.bf16.msra.mxu0 %v3557
    %4060 = vmatprep.subr.bf16.mxu0 %v3553
    %4061 = vmatpush1.bf16.msra.mxu0 %v3552
    %4062 = vmatprep.subr.bf16.mxu0 %v3628
    %4063 = vmatpush2.bf16.msra.mxu0 %v3627
    %4064 = vmatprep.subr.bf16.mxu0 %v3623
    %4065 = vmatpush2.bf16.msra.mxu0 %v3622
    %4066 = vmatprep.subr.bf16.mxu0 %v3618
    %4067 = vmatpush2.bf16.msra.mxu0 %v3617
    %4068 = vmatprep.subr.bf16.mxu0 %v3613
    %4069 = vmatpush2.bf16.msra.mxu0 %v3612
    %4070 = vmatprep.subr.bf16.mxu0 %v3608
    %4071 = vmatpush2.bf16.msra.mxu0 %v3607
    %4072 = vmatprep.subr.bf16.mxu0 %v3603
    %4073 = vmatpush2.bf16.msra.mxu0 %v3602
    %4074 = vmatprep.subr.bf16.mxu0 %v3598
    %4075 = vmatpush2.bf16.msra.mxu0 %v3597
    %4076 = vmatprep.subr.bf16.mxu0 %v3593
    %4077 = vmatpush2.bf16.msra.mxu0 %v3592
    %4078 = vmatprep.mubr.bf16.mxu0 %v2905
    %4079 = vmatmul.mubr.bf16.gmra.mxu0 %v2904
    %v4080 = vpop.f32.mrf.mxu0
    %v4081 = vadd.f32 %v4038, %v4080
    %v4082 = vpop.f32.mrf.mxu0
    %v4083 = vadd.f32 %v4040, %v4082
    %v4084 = vpop.f32.mrf.mxu0
    %v4085 = vadd.f32 %v4042, %v4084
    %v4086 = vpop.f32.mrf.mxu0
    %v4087 = vadd.f32 %v4044, %v4086
    %4088 = vdwg.mxu0
    %4089 = vmatprep.subr.bf16.mxu0 %v3668
    %4090 = vmatpush1.bf16.msra.mxu0 %v3667
    %4091 = vmatprep.subr.bf16.mxu0 %v3663
    %4092 = vmatpush1.bf16.msra.mxu0 %v3662
    %4093 = vmatprep.subr.bf16.mxu0 %v3658
    %4094 = vmatpush1.bf16.msra.mxu0 %v3657
    %4095 = vmatprep.subr.bf16.mxu0 %v3653
    %4096 = vmatpush1.bf16.msra.mxu0 %v3652
    %4097 = vmatprep.subr.bf16.mxu0 %v3648
    %4098 = vmatpush1.bf16.msra.mxu0 %v3647
    %4099 = vmatprep.subr.bf16.mxu0 %v3643
    %4100 = vmatpush1.bf16.msra.mxu0 %v3642
    %4101 = vmatprep.subr.bf16.mxu0 %v3638
    %4102 = vmatpush1.bf16.msra.mxu0 %v3637
    %4103 = vmatprep.subr.bf16.mxu0 %v3633
    %4104 = vmatpush1.bf16.msra.mxu0 %v3632
    %4105 = vmatprep.subr.bf16.mxu0 %v3708
    %4106 = vmatpush2.bf16.msra.mxu0 %v3707
    %4107 = vmatprep.subr.bf16.mxu0 %v3703
    %4108 = vmatpush2.bf16.msra.mxu0 %v3702
    %4109 = vmatprep.subr.bf16.mxu0 %v3698
    %4110 = vmatpush2.bf16.msra.mxu0 %v3697
    %4111 = vmatprep.subr.bf16.mxu0 %v3693
    %4112 = vmatpush2.bf16.msra.mxu0 %v3692
    %4113 = vmatprep.subr.bf16.mxu0 %v3688
    %4114 = vmatpush2.bf16.msra.mxu0 %v3687
    %4115 = vmatprep.subr.bf16.mxu0 %v3683
    %4116 = vmatpush2.bf16.msra.mxu0 %v3682
    %4117 = vmatprep.subr.bf16.mxu0 %v3678
    %4118 = vmatpush2.bf16.msra.mxu0 %v3677
    %4119 = vmatprep.subr.bf16.mxu0 %v3673
    %4120 = vmatpush2.bf16.msra.mxu0 %v3672
    %4121 = vmatprep.mubr.bf16.mxu0 %v2907
    %4122 = vmatmul.mubr.bf16.gmra.mxu0 %v2906
    %v4123 = vpop.f32.mrf.mxu0
    %v4124 = vadd.f32 %v4081, %v4123
    %v4125 = vpop.f32.mrf.mxu0
    %v4126 = vadd.f32 %v4083, %v4125
    %v4127 = vpop.f32.mrf.mxu0
    %v4128 = vadd.f32 %v4085, %v4127
    %v4129 = vpop.f32.mrf.mxu0
    %v4130 = vadd.f32 %v4087, %v4129
    %4131 = vdwg.mxu0
    %4132 = vmatprep.subr.bf16.mxu0 %v3748
    %4133 = vmatpush1.bf16.msra.mxu0 %v3747
    %4134 = vmatprep.subr.bf16.mxu0 %v3743
    %4135 = vmatpush1.bf16.msra.mxu0 %v3742
    %4136 = vmatprep.subr.bf16.mxu0 %v3738
    %4137 = vmatpush1.bf16.msra.mxu0 %v3737
    %4138 = vmatprep.subr.bf16.mxu0 %v3733
    %4139 = vmatpush1.bf16.msra.mxu0 %v3732
    %4140 = vmatprep.subr.bf16.mxu0 %v3728
    %4141 = vmatpush1.bf16.msra.mxu0 %v3727
    %4142 = vmatprep.subr.bf16.mxu0 %v3723
    %4143 = vmatpush1.bf16.msra.mxu0 %v3722
    %4144 = vmatprep.subr.bf16.mxu0 %v3718
    %4145 = vmatpush1.bf16.msra.mxu0 %v3717
    %4146 = vmatprep.subr.bf16.mxu0 %v3713
    %4147 = vmatpush1.bf16.msra.mxu0 %v3712
    %4148 = vmatprep.subr.bf16.mxu0 %v3788
    %4149 = vmatpush2.bf16.msra.mxu0 %v3787
    %4150 = vmatprep.subr.bf16.mxu0 %v3783
    %4151 = vmatpush2.bf16.msra.mxu0 %v3782
    %4152 = vmatprep.subr.bf16.mxu0 %v3778
    %4153 = vmatpush2.bf16.msra.mxu0 %v3777
    %4154 = vmatprep.subr.bf16.mxu0 %v3773
    %4155 = vmatpush2.bf16.msra.mxu0 %v3772
    %4156 = vmatprep.subr.bf16.mxu0 %v3768
    %4157 = vmatpush2.bf16.msra.mxu0 %v3767
    %4158 = vmatprep.subr.bf16.mxu0 %v3763
    %4159 = vmatpush2.bf16.msra.mxu0 %v3762
    %4160 = vmatprep.subr.bf16.mxu0 %v3758
    %4161 = vmatpush2.bf16.msra.mxu0 %v3757
    %4162 = vmatprep.subr.bf16.mxu0 %v3753
    %4163 = vmatpush2.bf16.msra.mxu0 %v3752
    %4164 = vmatprep.mubr.bf16.mxu0 %v2909
    %4165 = vmatmul.mubr.bf16.gmra.mxu0 %v2908
    %v4166 = vpop.f32.mrf.mxu0
    %v4167 = vadd.f32 %v4124, %v4166
    %v4168 = vpop.f32.mrf.mxu0
    %v4169 = vadd.f32 %v4126, %v4168
    %v4170 = vpop.f32.mrf.mxu0
    %v4171 = vadd.f32 %v4128, %v4170
    %v4172 = vpop.f32.mrf.mxu0
    %v4173 = vadd.f32 %v4130, %v4172
    %4174 = vdwg.mxu0
    %4175 = vmatprep.subr.bf16.mxu0 %v3828
    %4176 = vmatpush1.bf16.msra.mxu0 %v3827
    %4177 = vmatprep.subr.bf16.mxu0 %v3823
    %4178 = vmatpush1.bf16.msra.mxu0 %v3822
    %4179 = vmatprep.subr.bf16.mxu0 %v3818
    %4180 = vmatpush1.bf16.msra.mxu0 %v3817
    %4181 = vmatprep.subr.bf16.mxu0 %v3813
    %4182 = vmatpush1.bf16.msra.mxu0 %v3812
    %4183 = vmatprep.subr.bf16.mxu0 %v3808
    %4184 = vmatpush1.bf16.msra.mxu0 %v3807
    %4185 = vmatprep.subr.bf16.mxu0 %v3803
    %4186 = vmatpush1.bf16.msra.mxu0 %v3802
    %4187 = vmatprep.subr.bf16.mxu0 %v3798
    %4188 = vmatpush1.bf16.msra.mxu0 %v3797
    %4189 = vmatprep.subr.bf16.mxu0 %v3793
    %4190 = vmatpush1.bf16.msra.mxu0 %v3792
    %4191 = vmatprep.subr.bf16.mxu0 %v3868
    %4192 = vmatpush2.bf16.msra.mxu0 %v3867
    %4193 = vmatprep.subr.bf16.mxu0 %v3863
    %4194 = vmatpush2.bf16.msra.mxu0 %v3862
    %4195 = vmatprep.subr.bf16.mxu0 %v3858
    %4196 = vmatpush2.bf16.msra.mxu0 %v3857
    %4197 = vmatprep.subr.bf16.mxu0 %v3853
    %4198 = vmatpush2.bf16.msra.mxu0 %v3852
    %4199 = vmatprep.subr.bf16.mxu0 %v3848
    %4200 = vmatpush2.bf16.msra.mxu0 %v3847
    %4201 = vmatprep.subr.bf16.mxu0 %v3843
    %4202 = vmatpush2.bf16.msra.mxu0 %v3842
    %4203 = vmatprep.subr.bf16.mxu0 %v3838
    %4204 = vmatpush2.bf16.msra.mxu0 %v3837
    %4205 = vmatprep.subr.bf16.mxu0 %v3833
    %4206 = vmatpush2.bf16.msra.mxu0 %v3832
    %4207 = vmatprep.mubr.bf16.mxu0 %v2911
    %4208 = vmatmul.mubr.bf16.gmra.mxu0 %v2910
    %v4209 = vpop.f32.mrf.mxu0
    %v4210 = vadd.f32 %v4167, %v4209
    %v4211 = vpop.f32.mrf.mxu0
    %v4212 = vadd.f32 %v4169, %v4211
    %v4213 = vpop.f32.mrf.mxu0
    %v4214 = vadd.f32 %v4171, %v4213
    %v4215 = vpop.f32.mrf.mxu0
    %v4216 = vadd.f32 %v4173, %v4215
    %4217 = vdwg.mxu0
    %4218 = vmatprep.subr.bf16.mxu0 %v3270
    %4219 = vmatpush1.bf16.msra.mxu0 %v3269
    %4220 = vmatprep.subr.bf16.mxu0 %v3265
    %4221 = vmatpush1.bf16.msra.mxu0 %v3264
    %4222 = vmatprep.subr.bf16.mxu0 %v3260
    %4223 = vmatpush1.bf16.msra.mxu0 %v3259
    %4224 = vmatprep.subr.bf16.mxu0 %v3255
    %4225 = vmatpush1.bf16.msra.mxu0 %v3254
    %4226 = vmatprep.subr.bf16.mxu0 %v3250
    %4227 = vmatpush1.bf16.msra.mxu0 %v3249
    %4228 = vmatprep.subr.bf16.mxu0 %v3245
    %4229 = vmatpush1.bf16.msra.mxu0 %v3244
    %4230 = vmatprep.subr.bf16.mxu0 %v3240
    %4231 = vmatpush1.bf16.msra.mxu0 %v3239
    %4232 = vmatprep.subr.bf16.mxu0 %v3235
    %4233 = vmatpush1.bf16.msra.mxu0 %v3234
    %4234 = vmatprep.subr.bf16.mxu0 %v3310
    %4235 = vmatpush2.bf16.msra.mxu0 %v3309
    %4236 = vmatprep.subr.bf16.mxu0 %v3305
    %4237 = vmatpush2.bf16.msra.mxu0 %v3304
    %4238 = vmatprep.subr.bf16.mxu0 %v3300
    %4239 = vmatpush2.bf16.msra.mxu0 %v3299
    %4240 = vmatprep.subr.bf16.mxu0 %v3295
    %4241 = vmatpush2.bf16.msra.mxu0 %v3294
    %4242 = vmatprep.subr.bf16.mxu0 %v3290
    %4243 = vmatpush2.bf16.msra.mxu0 %v3289
    %4244 = vmatprep.subr.bf16.mxu0 %v3285
    %4245 = vmatpush2.bf16.msra.mxu0 %v3284
    %4246 = vmatprep.subr.bf16.mxu0 %v3280
    %4247 = vmatpush2.bf16.msra.mxu0 %v3279
    %4248 = vmatprep.subr.bf16.mxu0 %v3275
    %4249 = vmatpush2.bf16.msra.mxu0 %v3274
    %4250 = vmatprep.mubr.bf16.mxu0 %v2897
    %4251 = vmatmul.mubr.bf16.gmra.mxu0 %v2896
    %v4252 = vpop.f32.mrf.mxu0
    %v4253 = vadd.f32 0.0, %v4252
    %v4254 = vpop.f32.mrf.mxu0
    %v4255 = vadd.f32 0.0, %v4254
    %v4256 = vpop.f32.mrf.mxu0
    %v4257 = vadd.f32 0.0, %v4256
    %v4258 = vpop.f32.mrf.mxu0
    %v4259 = vadd.f32 0.0, %v4258
    %4260 = vdwg.mxu0
    %4261 = vmatprep.subr.bf16.mxu0 %v3350
    %4262 = vmatpush1.bf16.msra.mxu0 %v3349
    %4263 = vmatprep.subr.bf16.mxu0 %v3345
    %4264 = vmatpush1.bf16.msra.mxu0 %v3344
    %4265 = vmatprep.subr.bf16.mxu0 %v3340
    %4266 = vmatpush1.bf16.msra.mxu0 %v3339
    %4267 = vmatprep.subr.bf16.mxu0 %v3335
    %4268 = vmatpush1.bf16.msra.mxu0 %v3334
    %4269 = vmatprep.subr.bf16.mxu0 %v3330
    %4270 = vmatpush1.bf16.msra.mxu0 %v3329
    %4271 = vmatprep.subr.bf16.mxu0 %v3325
    %4272 = vmatpush1.bf16.msra.mxu0 %v3324
    %4273 = vmatprep.subr.bf16.mxu0 %v3320
    %4274 = vmatpush1.bf16.msra.mxu0 %v3319
    %4275 = vmatprep.subr.bf16.mxu0 %v3315
    %4276 = vmatpush1.bf16.msra.mxu0 %v3314
    %4277 = vmatprep.subr.bf16.mxu0 %v3390
    %4278 = vmatpush2.bf16.msra.mxu0 %v3389
    %4279 = vmatprep.subr.bf16.mxu0 %v3385
    %4280 = vmatpush2.bf16.msra.mxu0 %v3384
    %4281 = vmatprep.subr.bf16.mxu0 %v3380
    %4282 = vmatpush2.bf16.msra.mxu0 %v3379
    %4283 = vmatprep.subr.bf16.mxu0 %v3375
    %4284 = vmatpush2.bf16.msra.mxu0 %v3374
    %4285 = vmatprep.subr.bf16.mxu0 %v3370
    %4286 = vmatpush2.bf16.msra.mxu0 %v3369
    %4287 = vmatprep.subr.bf16.mxu0 %v3365
    %4288 = vmatpush2.bf16.msra.mxu0 %v3364
    %4289 = vmatprep.subr.bf16.mxu0 %v3360
    %4290 = vmatpush2.bf16.msra.mxu0 %v3359
    %4291 = vmatprep.subr.bf16.mxu0 %v3355
    %4292 = vmatpush2.bf16.msra.mxu0 %v3354
    %4293 = vmatprep.mubr.bf16.mxu0 %v2899
    %4294 = vmatmul.mubr.bf16.gmra.mxu0 %v2898
    %v4295 = vpop.f32.mrf.mxu0
    %v4296 = vadd.f32 %v4253, %v4295
    %v4297 = vpop.f32.mrf.mxu0
    %v4298 = vadd.f32 %v4255, %v4297
    %v4299 = vpop.f32.mrf.mxu0
    %v4300 = vadd.f32 %v4257, %v4299
    %v4301 = vpop.f32.mrf.mxu0
    %v4302 = vadd.f32 %v4259, %v4301
    %4303 = vdwg.mxu0
    %4304 = vmatprep.subr.bf16.mxu0 %v3430
    %4305 = vmatpush1.bf16.msra.mxu0 %v3429
    %4306 = vmatprep.subr.bf16.mxu0 %v3425
    %4307 = vmatpush1.bf16.msra.mxu0 %v3424
    %4308 = vmatprep.subr.bf16.mxu0 %v3420
    %4309 = vmatpush1.bf16.msra.mxu0 %v3419
    %4310 = vmatprep.subr.bf16.mxu0 %v3415
    %4311 = vmatpush1.bf16.msra.mxu0 %v3414
    %4312 = vmatprep.subr.bf16.mxu0 %v3410
    %4313 = vmatpush1.bf16.msra.mxu0 %v3409
    %4314 = vmatprep.subr.bf16.mxu0 %v3405
    %4315 = vmatpush1.bf16.msra.mxu0 %v3404
    %4316 = vmatprep.subr.bf16.mxu0 %v3400
    %4317 = vmatpush1.bf16.msra.mxu0 %v3399
    %4318 = vmatprep.subr.bf16.mxu0 %v3395
    %4319 = vmatpush1.bf16.msra.mxu0 %v3394
    %4320 = vmatprep.subr.bf16.mxu0 %v3470
    %4321 = vmatpush2.bf16.msra.mxu0 %v3469
    %4322 = vmatprep.subr.bf16.mxu0 %v3465
    %4323 = vmatpush2.bf16.msra.mxu0 %v3464
    %4324 = vmatprep.subr.bf16.mxu0 %v3460
    %4325 = vmatpush2.bf16.msra.mxu0 %v3459
    %4326 = vmatprep.subr.bf16.mxu0 %v3455
    %4327 = vmatpush2.bf16.msra.mxu0 %v3454
    %4328 = vmatprep.subr.bf16.mxu0 %v3450
    %4329 = vmatpush2.bf16.msra.mxu0 %v3449
    %4330 = vmatprep.subr.bf16.mxu0 %v3445
    %4331 = vmatpush2.bf16.msra.mxu0 %v3444
    %4332 = vmatprep.subr.bf16.mxu0 %v3440
    %4333 = vmatpush2.bf16.msra.mxu0 %v3439
    %4334 = vmatprep.subr.bf16.mxu0 %v3435
    %4335 = vmatpush2.bf16.msra.mxu0 %v3434
    %4336 = vmatprep.mubr.bf16.mxu0 %v2901
    %4337 = vmatmul.mubr.bf16.gmra.mxu0 %v2900
    %v4338 = vpop.f32.mrf.mxu0
    %v4339 = vadd.f32 %v4296, %v4338
    %v4340 = vpop.f32.mrf.mxu0
    %v4341 = vadd.f32 %v4298, %v4340
    %v4342 = vpop.f32.mrf.mxu0
    %v4343 = vadd.f32 %v4300, %v4342
    %v4344 = vpop.f32.mrf.mxu0
    %v4345 = vadd.f32 %v4302, %v4344
    %4346 = vdwg.mxu0
    %4347 = vmatprep.subr.bf16.mxu0 %v3510
    %4348 = vmatpush1.bf16.msra.mxu0 %v3509
    %4349 = vmatprep.subr.bf16.mxu0 %v3505
    %4350 = vmatpush1.bf16.msra.mxu0 %v3504
    %4351 = vmatprep.subr.bf16.mxu0 %v3500
    %4352 = vmatpush1.bf16.msra.mxu0 %v3499
    %4353 = vmatprep.subr.bf16.mxu0 %v3495
    %4354 = vmatpush1.bf16.msra.mxu0 %v3494
    %4355 = vmatprep.subr.bf16.mxu0 %v3490
    %4356 = vmatpush1.bf16.msra.mxu0 %v3489
    %4357 = vmatprep.subr.bf16.mxu0 %v3485
    %4358 = vmatpush1.bf16.msra.mxu0 %v3484
    %4359 = vmatprep.subr.bf16.mxu0 %v3480
    %4360 = vmatpush1.bf16.msra.mxu0 %v3479
    %4361 = vmatprep.subr.bf16.mxu0 %v3475
    %4362 = vmatpush1.bf16.msra.mxu0 %v3474
    %4363 = vmatprep.subr.bf16.mxu0 %v3550
    %4364 = vmatpush2.bf16.msra.mxu0 %v3549
    %4365 = vmatprep.subr.bf16.mxu0 %v3545
    %4366 = vmatpush2.bf16.msra.mxu0 %v3544
    %4367 = vmatprep.subr.bf16.mxu0 %v3540
    %4368 = vmatpush2.bf16.msra.mxu0 %v3539
    %4369 = vmatprep.subr.bf16.mxu0 %v3535
    %4370 = vmatpush2.bf16.msra.mxu0 %v3534
    %4371 = vmatprep.subr.bf16.mxu0 %v3530
    %4372 = vmatpush2.bf16.msra.mxu0 %v3529
    %4373 = vmatprep.subr.bf16.mxu0 %v3525
    %4374 = vmatpush2.bf16.msra.mxu0 %v3524
    %4375 = vmatprep.subr.bf16.mxu0 %v3520
    %4376 = vmatpush2.bf16.msra.mxu0 %v3519
    %4377 = vmatprep.subr.bf16.mxu0 %v3515
    %4378 = vmatpush2.bf16.msra.mxu0 %v3514
    %4379 = vmatprep.mubr.bf16.mxu0 %v2903
    %4380 = vmatmul.mubr.bf16.gmra.mxu0 %v2902
    %v4381 = vpop.f32.mrf.mxu0
    %v4382 = vadd.f32 %v4339, %v4381
    %v4383 = vpop.f32.mrf.mxu0
    %v4384 = vadd.f32 %v4341, %v4383
    %v4385 = vpop.f32.mrf.mxu0
    %v4386 = vadd.f32 %v4343, %v4385
    %v4387 = vpop.f32.mrf.mxu0
    %v4388 = vadd.f32 %v4345, %v4387
    %4389 = vdwg.mxu0
    %4390 = vmatprep.subr.bf16.mxu0 %v3590
    %4391 = vmatpush1.bf16.msra.mxu0 %v3589
    %4392 = vmatprep.subr.bf16.mxu0 %v3585
    %4393 = vmatpush1.bf16.msra.mxu0 %v3584
    %4394 = vmatprep.subr.bf16.mxu0 %v3580
    %4395 = vmatpush1.bf16.msra.mxu0 %v3579
    %4396 = vmatprep.subr.bf16.mxu0 %v3575
    %4397 = vmatpush1.bf16.msra.mxu0 %v3574
    %4398 = vmatprep.subr.bf16.mxu0 %v3570
    %4399 = vmatpush1.bf16.msra.mxu0 %v3569
    %4400 = vmatprep.subr.bf16.mxu0 %v3565
    %4401 = vmatpush1.bf16.msra.mxu0 %v3564
    %4402 = vmatprep.subr.bf16.mxu0 %v3560
    %4403 = vmatpush1.bf16.msra.mxu0 %v3559
    %4404 = vmatprep.subr.bf16.mxu0 %v3555
    %4405 = vmatpush1.bf16.msra.mxu0 %v3554
    %4406 = vmatprep.subr.bf16.mxu0 %v3630
    %4407 = vmatpush2.bf16.msra.mxu0 %v3629
    %4408 = vmatprep.subr.bf16.mxu0 %v3625
    %4409 = vmatpush2.bf16.msra.mxu0 %v3624
    %4410 = vmatprep.subr.bf16.mxu0 %v3620
    %4411 = vmatpush2.bf16.msra.mxu0 %v3619
    %4412 = vmatprep.subr.bf16.mxu0 %v3615
    %4413 = vmatpush2.bf16.msra.mxu0 %v3614
    %4414 = vmatprep.subr.bf16.mxu0 %v3610
    %4415 = vmatpush2.bf16.msra.mxu0 %v3609
    %4416 = vmatprep.subr.bf16.mxu0 %v3605
    %4417 = vmatpush2.bf16.msra.mxu0 %v3604
    %4418 = vmatprep.subr.bf16.mxu0 %v3600
    %4419 = vmatpush2.bf16.msra.mxu0 %v3599
    %4420 = vmatprep.subr.bf16.mxu0 %v3595
    %4421 = vmatpush2.bf16.msra.mxu0 %v3594
    %4422 = vmatprep.mubr.bf16.mxu0 %v2905
    %4423 = vmatmul.mubr.bf16.gmra.mxu0 %v2904
    %v4424 = vpop.f32.mrf.mxu0
    %v4425 = vadd.f32 %v4382, %v4424
    %v4426 = vpop.f32.mrf.mxu0
    %v4427 = vadd.f32 %v4384, %v4426
    %v4428 = vpop.f32.mrf.mxu0
    %v4429 = vadd.f32 %v4386, %v4428
    %v4430 = vpop.f32.mrf.mxu0
    %v4431 = vadd.f32 %v4388, %v4430
    %4432 = vdwg.mxu0
    %4433 = vmatprep.subr.bf16.mxu0 %v3670
    %4434 = vmatpush1.bf16.msra.mxu0 %v3669
    %4435 = vmatprep.subr.bf16.mxu0 %v3665
    %4436 = vmatpush1.bf16.msra.mxu0 %v3664
    %4437 = vmatprep.subr.bf16.mxu0 %v3660
    %4438 = vmatpush1.bf16.msra.mxu0 %v3659
    %4439 = vmatprep.subr.bf16.mxu0 %v3655
    %4440 = vmatpush1.bf16.msra.mxu0 %v3654
    %4441 = vmatprep.subr.bf16.mxu0 %v3650
    %4442 = vmatpush1.bf16.msra.mxu0 %v3649
    %4443 = vmatprep.subr.bf16.mxu0 %v3645
    %4444 = vmatpush1.bf16.msra.mxu0 %v3644
    %4445 = vmatprep.subr.bf16.mxu0 %v3640
    %4446 = vmatpush1.bf16.msra.mxu0 %v3639
    %4447 = vmatprep.subr.bf16.mxu0 %v3635
    %4448 = vmatpush1.bf16.msra.mxu0 %v3634
    %4449 = vmatprep.subr.bf16.mxu0 %v3710
    %4450 = vmatpush2.bf16.msra.mxu0 %v3709
    %4451 = vmatprep.subr.bf16.mxu0 %v3705
    %4452 = vmatpush2.bf16.msra.mxu0 %v3704
    %4453 = vmatprep.subr.bf16.mxu0 %v3700
    %4454 = vmatpush2.bf16.msra.mxu0 %v3699
    %4455 = vmatprep.subr.bf16.mxu0 %v3695
    %4456 = vmatpush2.bf16.msra.mxu0 %v3694
    %4457 = vmatprep.subr.bf16.mxu0 %v3690
    %4458 = vmatpush2.bf16.msra.mxu0 %v3689
    %4459 = vmatprep.subr.bf16.mxu0 %v3685
    %4460 = vmatpush2.bf16.msra.mxu0 %v3684
    %4461 = vmatprep.subr.bf16.mxu0 %v3680
    %4462 = vmatpush2.bf16.msra.mxu0 %v3679
    %4463 = vmatprep.subr.bf16.mxu0 %v3675
    %4464 = vmatpush2.bf16.msra.mxu0 %v3674
    %4465 = vmatprep.mubr.bf16.mxu0 %v2907
    %4466 = vmatmul.mubr.bf16.gmra.mxu0 %v2906
    %v4467 = vpop.f32.mrf.mxu0
    %v4468 = vadd.f32 %v4425, %v4467
    %v4469 = vpop.f32.mrf.mxu0
    %v4470 = vadd.f32 %v4427, %v4469
    %v4471 = vpop.f32.mrf.mxu0
    %v4472 = vadd.f32 %v4429, %v4471
    %v4473 = vpop.f32.mrf.mxu0
    %v4474 = vadd.f32 %v4431, %v4473
    %4475 = vdwg.mxu0
    %4476 = vmatprep.subr.bf16.mxu0 %v3750
    %4477 = vmatpush1.bf16.msra.mxu0 %v3749
    %4478 = vmatprep.subr.bf16.mxu0 %v3745
    %4479 = vmatpush1.bf16.msra.mxu0 %v3744
    %4480 = vmatprep.subr.bf16.mxu0 %v3740
    %4481 = vmatpush1.bf16.msra.mxu0 %v3739
    %4482 = vmatprep.subr.bf16.mxu0 %v3735
    %4483 = vmatpush1.bf16.msra.mxu0 %v3734
    %4484 = vmatprep.subr.bf16.mxu0 %v3730
    %4485 = vmatpush1.bf16.msra.mxu0 %v3729
    %4486 = vmatprep.subr.bf16.mxu0 %v3725
    %4487 = vmatpush1.bf16.msra.mxu0 %v3724
    %4488 = vmatprep.subr.bf16.mxu0 %v3720
    %4489 = vmatpush1.bf16.msra.mxu0 %v3719
    %4490 = vmatprep.subr.bf16.mxu0 %v3715
    %4491 = vmatpush1.bf16.msra.mxu0 %v3714
    %4492 = vmatprep.subr.bf16.mxu0 %v3790
    %4493 = vmatpush2.bf16.msra.mxu0 %v3789
    %4494 = vmatprep.subr.bf16.mxu0 %v3785
    %4495 = vmatpush2.bf16.msra.mxu0 %v3784
    %4496 = vmatprep.subr.bf16.mxu0 %v3780
    %4497 = vmatpush2.bf16.msra.mxu0 %v3779
    %4498 = vmatprep.subr.bf16.mxu0 %v3775
    %4499 = vmatpush2.bf16.msra.mxu0 %v3774
    %4500 = vmatprep.subr.bf16.mxu0 %v3770
    %4501 = vmatpush2.bf16.msra.mxu0 %v3769
    %4502 = vmatprep.subr.bf16.mxu0 %v3765
    %4503 = vmatpush2.bf16.msra.mxu0 %v3764
    %4504 = vmatprep.subr.bf16.mxu0 %v3760
    %4505 = vmatpush2.bf16.msra.mxu0 %v3759
    %4506 = vmatprep.subr.bf16.mxu0 %v3755
    %4507 = vmatpush2.bf16.msra.mxu0 %v3754
    %4508 = vmatprep.mubr.bf16.mxu0 %v2909
    %4509 = vmatmul.mubr.bf16.gmra.mxu0 %v2908
    %v4510 = vpop.f32.mrf.mxu0
    %v4511 = vadd.f32 %v4468, %v4510
    %v4512 = vpop.f32.mrf.mxu0
    %v4513 = vadd.f32 %v4470, %v4512
    %v4514 = vpop.f32.mrf.mxu0
    %v4515 = vadd.f32 %v4472, %v4514
    %v4516 = vpop.f32.mrf.mxu0
    %v4517 = vadd.f32 %v4474, %v4516
    %4518 = vdwg.mxu0
    %4519 = vmatprep.subr.bf16.mxu0 %v3830
    %4520 = vmatpush1.bf16.msra.mxu0 %v3829
    %4521 = vmatprep.subr.bf16.mxu0 %v3825
    %4522 = vmatpush1.bf16.msra.mxu0 %v3824
    %4523 = vmatprep.subr.bf16.mxu0 %v3820
    %4524 = vmatpush1.bf16.msra.mxu0 %v3819
    %4525 = vmatprep.subr.bf16.mxu0 %v3815
    %4526 = vmatpush1.bf16.msra.mxu0 %v3814
    %4527 = vmatprep.subr.bf16.mxu0 %v3810
    %4528 = vmatpush1.bf16.msra.mxu0 %v3809
    %4529 = vmatprep.subr.bf16.mxu0 %v3805
    %4530 = vmatpush1.bf16.msra.mxu0 %v3804
    %4531 = vmatprep.subr.bf16.mxu0 %v3800
    %4532 = vmatpush1.bf16.msra.mxu0 %v3799
    %4533 = vmatprep.subr.bf16.mxu0 %v3795
    %4534 = vmatpush1.bf16.msra.mxu0 %v3794
    %4535 = vmatprep.subr.bf16.mxu0 %v3870
    %4536 = vmatpush2.bf16.msra.mxu0 %v3869
    %4537 = vmatprep.subr.bf16.mxu0 %v3865
    %4538 = vmatpush2.bf16.msra.mxu0 %v3864
    %4539 = vmatprep.subr.bf16.mxu0 %v3860
    %4540 = vmatpush2.bf16.msra.mxu0 %v3859
    %4541 = vmatprep.subr.bf16.mxu0 %v3855
    %4542 = vmatpush2.bf16.msra.mxu0 %v3854
    %4543 = vmatprep.subr.bf16.mxu0 %v3850
    %4544 = vmatpush2.bf16.msra.mxu0 %v3849
    %4545 = vmatprep.subr.bf16.mxu0 %v3845
    %4546 = vmatpush2.bf16.msra.mxu0 %v3844
    %4547 = vmatprep.subr.bf16.mxu0 %v3840
    %4548 = vmatpush2.bf16.msra.mxu0 %v3839
    %4549 = vmatprep.subr.bf16.mxu0 %v3835
    %4550 = vmatpush2.bf16.msra.mxu0 %v3834
    %4551 = vmatprep.mubr.bf16.mxu0 %v2911
    %4552 = vmatmul.mubr.bf16.gmra.mxu0 %v2910
    %v4553 = vpop.f32.mrf.mxu0
    %v4554 = vadd.f32 %v4511, %v4553
    %v4555 = vpop.f32.mrf.mxu0
    %v4556 = vadd.f32 %v4513, %v4555
    %v4557 = vpop.f32.mrf.mxu0
    %v4558 = vadd.f32 %v4515, %v4557
    %v4559 = vpop.f32.mrf.mxu0
    %v4560 = vadd.f32 %v4517, %v4559
    %4561 = vdwg.mxu0
    %4562 = vmatprep.subr.bf16.mxu0 0
    %4563 = vmatpush1.bf16.msra.mxu0 %v3271
    %4564 = vmatprep.subr.bf16.mxu0 0
    %4565 = vmatpush1.bf16.msra.mxu0 %v3266
    %4566 = vmatprep.subr.bf16.mxu0 0
    %4567 = vmatpush1.bf16.msra.mxu0 %v3261
    %4568 = vmatprep.subr.bf16.mxu0 0
    %4569 = vmatpush1.bf16.msra.mxu0 %v3256
    %4570 = vmatprep.subr.bf16.mxu0 0
    %4571 = vmatpush1.bf16.msra.mxu0 %v3251
    %4572 = vmatprep.subr.bf16.mxu0 0
    %4573 = vmatpush1.bf16.msra.mxu0 %v3246
    %4574 = vmatprep.subr.bf16.mxu0 0
    %4575 = vmatpush1.bf16.msra.mxu0 %v3241
    %4576 = vmatprep.subr.bf16.mxu0 0
    %4577 = vmatpush1.bf16.msra.mxu0 %v3236
    %4578 = vmatprep.subr.bf16.mxu0 0
    %4579 = vmatpush2.bf16.msra.mxu0 %v3311
    %4580 = vmatprep.subr.bf16.mxu0 0
    %4581 = vmatpush2.bf16.msra.mxu0 %v3306
    %4582 = vmatprep.subr.bf16.mxu0 0
    %4583 = vmatpush2.bf16.msra.mxu0 %v3301
    %4584 = vmatprep.subr.bf16.mxu0 0
    %4585 = vmatpush2.bf16.msra.mxu0 %v3296
    %4586 = vmatprep.subr.bf16.mxu0 0
    %4587 = vmatpush2.bf16.msra.mxu0 %v3291
    %4588 = vmatprep.subr.bf16.mxu0 0
    %4589 = vmatpush2.bf16.msra.mxu0 %v3286
    %4590 = vmatprep.subr.bf16.mxu0 0
    %4591 = vmatpush2.bf16.msra.mxu0 %v3281
    %4592 = vmatprep.subr.bf16.mxu0 0
    %4593 = vmatpush2.bf16.msra.mxu0 %v3276
    %4594 = vmatprep.mubr.bf16.mxu0 %v2897
    %4595 = vmatmul.mubr.bf16.gmra.mxu0 %v2896
    %v4596 = vpop.f32.mrf.mxu0
    %v4597 = vadd.f32 0.0, %v4596
    %v4598 = vpop.f32.mrf.mxu0
    %v4599 = vpop.f32.mrf.mxu0
    %v4600 = vadd.f32 0.0, %v4599
    %v4601 = vpop.f32.mrf.mxu0
    %4602 = vdwg.mxu0
    %4603 = vmatprep.subr.bf16.mxu0 0
    %4604 = vmatpush1.bf16.msra.mxu0 %v3351
    %4605 = vmatprep.subr.bf16.mxu0 0
    %4606 = vmatpush1.bf16.msra.mxu0 %v3346
    %4607 = vmatprep.subr.bf16.mxu0 0
    %4608 = vmatpush1.bf16.msra.mxu0 %v3341
    %4609 = vmatprep.subr.bf16.mxu0 0
    %4610 = vmatpush1.bf16.msra.mxu0 %v3336
    %4611 = vmatprep.subr.bf16.mxu0 0
    %4612 = vmatpush1.bf16.msra.mxu0 %v3331
    %4613 = vmatprep.subr.bf16.mxu0 0
    %4614 = vmatpush1.bf16.msra.mxu0 %v3326
    %4615 = vmatprep.subr.bf16.mxu0 0
    %4616 = vmatpush1.bf16.msra.mxu0 %v3321
    %4617 = vmatprep.subr.bf16.mxu0 0
    %4618 = vmatpush1.bf16.msra.mxu0 %v3316
    %4619 = vmatprep.subr.bf16.mxu0 0
    %4620 = vmatpush2.bf16.msra.mxu0 %v3391
    %4621 = vmatprep.subr.bf16.mxu0 0
    %4622 = vmatpush2.bf16.msra.mxu0 %v3386
    %4623 = vmatprep.subr.bf16.mxu0 0
    %4624 = vmatpush2.bf16.msra.mxu0 %v3381
    %4625 = vmatprep.subr.bf16.mxu0 0
    %4626 = vmatpush2.bf16.msra.mxu0 %v3376
    %4627 = vmatprep.subr.bf16.mxu0 0
    %4628 = vmatpush2.bf16.msra.mxu0 %v3371
    %4629 = vmatprep.subr.bf16.mxu0 0
    %4630 = vmatpush2.bf16.msra.mxu0 %v3366
    %4631 = vmatprep.subr.bf16.mxu0 0
    %4632 = vmatpush2.bf16.msra.mxu0 %v3361
    %4633 = vmatprep.subr.bf16.mxu0 0
    %4634 = vmatpush2.bf16.msra.mxu0 %v3356
    %4635 = vmatprep.mubr.bf16.mxu0 %v2899
    %4636 = vmatmul.mubr.bf16.gmra.mxu0 %v2898
    %v4637 = vpop.f32.mrf.mxu0
    %v4638 = vadd.f32 %v4597, %v4637
    %v4639 = vpop.f32.mrf.mxu0
    %v4640 = vpop.f32.mrf.mxu0
    %v4641 = vadd.f32 %v4600, %v4640
    %v4642 = vpop.f32.mrf.mxu0
    %4643 = vdwg.mxu0
    %4644 = vmatprep.subr.bf16.mxu0 0
    %4645 = vmatpush1.bf16.msra.mxu0 %v3431
    %4646 = vmatprep.subr.bf16.mxu0 0
    %4647 = vmatpush1.bf16.msra.mxu0 %v3426
    %4648 = vmatprep.subr.bf16.mxu0 0
    %4649 = vmatpush1.bf16.msra.mxu0 %v3421
    %4650 = vmatprep.subr.bf16.mxu0 0
    %4651 = vmatpush1.bf16.msra.mxu0 %v3416
    %4652 = vmatprep.subr.bf16.mxu0 0
    %4653 = vmatpush1.bf16.msra.mxu0 %v3411
    %4654 = vmatprep.subr.bf16.mxu0 0
    %4655 = vmatpush1.bf16.msra.mxu0 %v3406
    %4656 = vmatprep.subr.bf16.mxu0 0
    %4657 = vmatpush1.bf16.msra.mxu0 %v3401
    %4658 = vmatprep.subr.bf16.mxu0 0
    %4659 = vmatpush1.bf16.msra.mxu0 %v3396
    %4660 = vmatprep.subr.bf16.mxu0 0
    %4661 = vmatpush2.bf16.msra.mxu0 %v3471
    %4662 = vmatprep.subr.bf16.mxu0 0
    %4663 = vmatpush2.bf16.msra.mxu0 %v3466
    %4664 = vmatprep.subr.bf16.mxu0 0
    %4665 = vmatpush2.bf16.msra.mxu0 %v3461
    %4666 = vmatprep.subr.bf16.mxu0 0
    %4667 = vmatpush2.bf16.msra.mxu0 %v3456
    %4668 = vmatprep.subr.bf16.mxu0 0
    %4669 = vmatpush2.bf16.msra.mxu0 %v3451
    %4670 = vmatprep.subr.bf16.mxu0 0
    %4671 = vmatpush2.bf16.msra.mxu0 %v3446
    %4672 = vmatprep.subr.bf16.mxu0 0
    %4673 = vmatpush2.bf16.msra.mxu0 %v3441
    %4674 = vmatprep.subr.bf16.mxu0 0
    %4675 = vmatpush2.bf16.msra.mxu0 %v3436
    %4676 = vmatprep.mubr.bf16.mxu0 %v2901
    %4677 = vmatmul.mubr.bf16.gmra.mxu0 %v2900
    %v4678 = vpop.f32.mrf.mxu0
    %v4679 = vadd.f32 %v4638, %v4678
    %v4680 = vpop.f32.mrf.mxu0
    %v4681 = vpop.f32.mrf.mxu0
    %v4682 = vadd.f32 %v4641, %v4681
    %v4683 = vpop.f32.mrf.mxu0
    %4684 = vdwg.mxu0
    %4685 = vmatprep.subr.bf16.mxu0 0
    %4686 = vmatpush1.bf16.msra.mxu0 %v3511
    %4687 = vmatprep.subr.bf16.mxu0 0
    %4688 = vmatpush1.bf16.msra.mxu0 %v3506
    %4689 = vmatprep.subr.bf16.mxu0 0
    %4690 = vmatpush1.bf16.msra.mxu0 %v3501
    %4691 = vmatprep.subr.bf16.mxu0 0
    %4692 = vmatpush1.bf16.msra.mxu0 %v3496
    %4693 = vmatprep.subr.bf16.mxu0 0
    %4694 = vmatpush1.bf16.msra.mxu0 %v3491
    %4695 = vmatprep.subr.bf16.mxu0 0
    %4696 = vmatpush1.bf16.msra.mxu0 %v3486
    %4697 = vmatprep.subr.bf16.mxu0 0
    %4698 = vmatpush1.bf16.msra.mxu0 %v3481
    %4699 = vmatprep.subr.bf16.mxu0 0
    %4700 = vmatpush1.bf16.msra.mxu0 %v3476
    %4701 = vmatprep.subr.bf16.mxu0 0
    %4702 = vmatpush2.bf16.msra.mxu0 %v3551
    %4703 = vmatprep.subr.bf16.mxu0 0
    %4704 = vmatpush2.bf16.msra.mxu0 %v3546
    %4705 = vmatprep.subr.bf16.mxu0 0
    %4706 = vmatpush2.bf16.msra.mxu0 %v3541
    %4707 = vmatprep.subr.bf16.mxu0 0
    %4708 = vmatpush2.bf16.msra.mxu0 %v3536
    %4709 = vmatprep.subr.bf16.mxu0 0
    %4710 = vmatpush2.bf16.msra.mxu0 %v3531
    %4711 = vmatprep.subr.bf16.mxu0 0
    %4712 = vmatpush2.bf16.msra.mxu0 %v3526
    %4713 = vmatprep.subr.bf16.mxu0 0
    %4714 = vmatpush2.bf16.msra.mxu0 %v3521
    %4715 = vmatprep.subr.bf16.mxu0 0
    %4716 = vmatpush2.bf16.msra.mxu0 %v3516
    %4717 = vmatprep.mubr.bf16.mxu0 %v2903
    %4718 = vmatmul.mubr.bf16.gmra.mxu0 %v2902
    %v4719 = vpop.f32.mrf.mxu0
    %v4720 = vadd.f32 %v4679, %v4719
    %v4721 = vpop.f32.mrf.mxu0
    %v4722 = vpop.f32.mrf.mxu0
    %v4723 = vadd.f32 %v4682, %v4722
    %v4724 = vpop.f32.mrf.mxu0
    %4725 = vdwg.mxu0
    %4726 = vmatprep.subr.bf16.mxu0 0
    %4727 = vmatpush1.bf16.msra.mxu0 %v3591
    %4728 = vmatprep.subr.bf16.mxu0 0
    %4729 = vmatpush1.bf16.msra.mxu0 %v3586
    %4730 = vmatprep.subr.bf16.mxu0 0
    %4731 = vmatpush1.bf16.msra.mxu0 %v3581
    %4732 = vmatprep.subr.bf16.mxu0 0
    %4733 = vmatpush1.bf16.msra.mxu0 %v3576
    %4734 = vmatprep.subr.bf16.mxu0 0
    %4735 = vmatpush1.bf16.msra.mxu0 %v3571
    %4736 = vmatprep.subr.bf16.mxu0 0
    %4737 = vmatpush1.bf16.msra.mxu0 %v3566
    %4738 = vmatprep.subr.bf16.mxu0 0
    %4739 = vmatpush1.bf16.msra.mxu0 %v3561
    %4740 = vmatprep.subr.bf16.mxu0 0
    %4741 = vmatpush1.bf16.msra.mxu0 %v3556
    %4742 = vmatprep.subr.bf16.mxu0 0
    %4743 = vmatpush2.bf16.msra.mxu0 %v3631
    %4744 = vmatprep.subr.bf16.mxu0 0
    %4745 = vmatpush2.bf16.msra.mxu0 %v3626
    %4746 = vmatprep.subr.bf16.mxu0 0
    %4747 = vmatpush2.bf16.msra.mxu0 %v3621
    %4748 = vmatprep.subr.bf16.mxu0 0
    %4749 = vmatpush2.bf16.msra.mxu0 %v3616
    %4750 = vmatprep.subr.bf16.mxu0 0
    %4751 = vmatpush2.bf16.msra.mxu0 %v3611
    %4752 = vmatprep.subr.bf16.mxu0 0
    %4753 = vmatpush2.bf16.msra.mxu0 %v3606
    %4754 = vmatprep.subr.bf16.mxu0 0
    %4755 = vmatpush2.bf16.msra.mxu0 %v3601
    %4756 = vmatprep.subr.bf16.mxu0 0
    %4757 = vmatpush2.bf16.msra.mxu0 %v3596
    %4758 = vmatprep.mubr.bf16.mxu0 %v2905
    %4759 = vmatmul.mubr.bf16.gmra.mxu0 %v2904
    %v4760 = vpop.f32.mrf.mxu0
    %v4761 = vadd.f32 %v4720, %v4760
    %v4762 = vpop.f32.mrf.mxu0
    %v4763 = vpop.f32.mrf.mxu0
    %v4764 = vadd.f32 %v4723, %v4763
    %v4765 = vpop.f32.mrf.mxu0
    %4766 = vdwg.mxu0
    %4767 = vmatprep.subr.bf16.mxu0 0
    %4768 = vmatpush1.bf16.msra.mxu0 %v3671
    %4769 = vmatprep.subr.bf16.mxu0 0
    %4770 = vmatpush1.bf16.msra.mxu0 %v3666
    %4771 = vmatprep.subr.bf16.mxu0 0
    %4772 = vmatpush1.bf16.msra.mxu0 %v3661
    %4773 = vmatprep.subr.bf16.mxu0 0
    %4774 = vmatpush1.bf16.msra.mxu0 %v3656
    %4775 = vmatprep.subr.bf16.mxu0 0
    %4776 = vmatpush1.bf16.msra.mxu0 %v3651
    %4777 = vmatprep.subr.bf16.mxu0 0
    %4778 = vmatpush1.bf16.msra.mxu0 %v3646
    %4779 = vmatprep.subr.bf16.mxu0 0
    %4780 = vmatpush1.bf16.msra.mxu0 %v3641
    %4781 = vmatprep.subr.bf16.mxu0 0
    %4782 = vmatpush1.bf16.msra.mxu0 %v3636
    %4783 = vmatprep.subr.bf16.mxu0 0
    %4784 = vmatpush2.bf16.msra.mxu0 %v3711
    %4785 = vmatprep.subr.bf16.mxu0 0
    %4786 = vmatpush2.bf16.msra.mxu0 %v3706
    %4787 = vmatprep.subr.bf16.mxu0 0
    %4788 = vmatpush2.bf16.msra.mxu0 %v3701
    %4789 = vmatprep.subr.bf16.mxu0 0
    %4790 = vmatpush2.bf16.msra.mxu0 %v3696
    %4791 = vmatprep.subr.bf16.mxu0 0
    %4792 = vmatpush2.bf16.msra.mxu0 %v3691
    %4793 = vmatprep.subr.bf16.mxu0 0
    %4794 = vmatpush2.bf16.msra.mxu0 %v3686
    %4795 = vmatprep.subr.bf16.mxu0 0
    %4796 = vmatpush2.bf16.msra.mxu0 %v3681
    %4797 = vmatprep.subr.bf16.mxu0 0
    %4798 = vmatpush2.bf16.msra.mxu0 %v3676
    %4799 = vmatprep.mubr.bf16.mxu0 %v2907
    %4800 = vmatmul.mubr.bf16.gmra.mxu0 %v2906
    %v4801 = vpop.f32.mrf.mxu0
    %v4802 = vadd.f32 %v4761, %v4801
    %v4803 = vpop.f32.mrf.mxu0
    %v4804 = vpop.f32.mrf.mxu0
    %v4805 = vadd.f32 %v4764, %v4804
    %v4806 = vpop.f32.mrf.mxu0
    %4807 = vdwg.mxu0
    %4808 = vmatprep.subr.bf16.mxu0 0
    %4809 = vmatpush1.bf16.msra.mxu0 %v3751
    %4810 = vmatprep.subr.bf16.mxu0 0
    %4811 = vmatpush1.bf16.msra.mxu0 %v3746
    %4812 = vmatprep.subr.bf16.mxu0 0
    %4813 = vmatpush1.bf16.msra.mxu0 %v3741
    %4814 = vmatprep.subr.bf16.mxu0 0
    %4815 = vmatpush1.bf16.msra.mxu0 %v3736
    %4816 = vmatprep.subr.bf16.mxu0 0
    %4817 = vmatpush1.bf16.msra.mxu0 %v3731
    %4818 = vmatprep.subr.bf16.mxu0 0
    %4819 = vmatpush1.bf16.msra.mxu0 %v3726
    %4820 = vmatprep.subr.bf16.mxu0 0
    %4821 = vmatpush1.bf16.msra.mxu0 %v3721
    %4822 = vmatprep.subr.bf16.mxu0 0
    %4823 = vmatpush1.bf16.msra.mxu0 %v3716
    %4824 = vmatprep.subr.bf16.mxu0 0
    %4825 = vmatpush2.bf16.msra.mxu0 %v3791
    %4826 = vmatprep.subr.bf16.mxu0 0
    %4827 = vmatpush2.bf16.msra.mxu0 %v3786
    %4828 = vmatprep.subr.bf16.mxu0 0
    %4829 = vmatpush2.bf16.msra.mxu0 %v3781
    %4830 = vmatprep.subr.bf16.mxu0 0
    %4831 = vmatpush2.bf16.msra.mxu0 %v3776
    %4832 = vmatprep.subr.bf16.mxu0 0
    %4833 = vmatpush2.bf16.msra.mxu0 %v3771
    %4834 = vmatprep.subr.bf16.mxu0 0
    %4835 = vmatpush2.bf16.msra.mxu0 %v3766
    %4836 = vmatprep.subr.bf16.mxu0 0
    %4837 = vmatpush2.bf16.msra.mxu0 %v3761
    %4838 = vmatprep.subr.bf16.mxu0 0
    %4839 = vmatpush2.bf16.msra.mxu0 %v3756
    %4840 = vmatprep.mubr.bf16.mxu0 %v2909
    %4841 = vmatmul.mubr.bf16.gmra.mxu0 %v2908
    %v4842 = vpop.f32.mrf.mxu0
    %v4843 = vadd.f32 %v4802, %v4842
    %v4844 = vpop.f32.mrf.mxu0
    %v4845 = vpop.f32.mrf.mxu0
    %v4846 = vadd.f32 %v4805, %v4845
    %v4847 = vpop.f32.mrf.mxu0
    %4848 = vdwg.mxu0
    %4849 = vmatprep.subr.bf16.mxu0 0
    %4850 = vmatpush1.bf16.msra.mxu0 %v3831
    %4851 = vmatprep.subr.bf16.mxu0 0
    %4852 = vmatpush1.bf16.msra.mxu0 %v3826
    %4853 = vmatprep.subr.bf16.mxu0 0
    %4854 = vmatpush1.bf16.msra.mxu0 %v3821
    %4855 = vmatprep.subr.bf16.mxu0 0
    %4856 = vmatpush1.bf16.msra.mxu0 %v3816
    %4857 = vmatprep.subr.bf16.mxu0 0
    %4858 = vmatpush1.bf16.msra.mxu0 %v3811
    %4859 = vmatprep.subr.bf16.mxu0 0
    %4860 = vmatpush1.bf16.msra.mxu0 %v3806
    %4861 = vmatprep.subr.bf16.mxu0 0
    %4862 = vmatpush1.bf16.msra.mxu0 %v3801
    %4863 = vmatprep.subr.bf16.mxu0 0
    %4864 = vmatpush1.bf16.msra.mxu0 %v3796
    %4865 = vmatprep.subr.bf16.mxu0 0
    %4866 = vmatpush2.bf16.msra.mxu0 %v3871
    %4867 = vmatprep.subr.bf16.mxu0 0
    %4868 = vmatpush2.bf16.msra.mxu0 %v3866
    %4869 = vmatprep.subr.bf16.mxu0 0
    %4870 = vmatpush2.bf16.msra.mxu0 %v3861
    %4871 = vmatprep.subr.bf16.mxu0 0
    %4872 = vmatpush2.bf16.msra.mxu0 %v3856
    %4873 = vmatprep.subr.bf16.mxu0 0
    %4874 = vmatpush2.bf16.msra.mxu0 %v3851
    %4875 = vmatprep.subr.bf16.mxu0 0
    %4876 = vmatpush2.bf16.msra.mxu0 %v3846
    %4877 = vmatprep.subr.bf16.mxu0 0
    %4878 = vmatpush2.bf16.msra.mxu0 %v3841
    %4879 = vmatprep.subr.bf16.mxu0 0
    %4880 = vmatpush2.bf16.msra.mxu0 %v3836
    %4881 = vmatprep.mubr.bf16.mxu0 %v2911
    %4882 = vmatmul.mubr.bf16.gmra.mxu0 %v2910
    %v4883 = vpop.f32.mrf.mxu0
    %v4884 = vadd.f32 %v4843, %v4883
    %v4885 = vpop.f32.mrf.mxu0
    %v4886 = vpop.f32.mrf.mxu0
    %v4887 = vadd.f32 %v4846, %v4886
    %v4888 = vpop.f32.mrf.mxu0
    %4889 = vdwg.mxu0
    %v4891 = vlaneseq
    %v4892 = vshrl.u32 %v4891, 7
    %v4893 = vsub.s32 0, %v4892
    %v4894 = vrot.slane %v3873, %v4893
    %v4895 = vlaneseq
    %v4896 = vshrl.u32 %v4895, 7
    %v4897 = vsub.s32 1, %v4896
    %v4898 = vrot.slane %v3873, %v4897
    %v4899 = vlaneseq
    %v4900 = vshrl.u32 %v4899, 7
    %v4901 = vsub.s32 2, %v4900
    %v4902 = vrot.slane %v3873, %v4901
    %v4903 = vlaneseq
    %v4904 = vshrl.u32 %v4903, 7
    %v4905 = vsub.s32 3, %v4904
    %v4906 = vrot.slane %v3873, %v4905
    %v4907 = vlaneseq
    %v4908 = vshrl.u32 %v4907, 7
    %v4909 = vsub.s32 4, %v4908
    %v4910 = vrot.slane %v3873, %v4909
    %v4916 = vmul.f32 %v4210, %v4894
    %v4917 = vmul.f32 %v4212, %v4898
    %v4918 = vmul.f32 %v4554, %v4902
    %v4919 = vmul.f32 %v4556, %v4906
    %v4920 = vmul.f32 %v4884, %v4910
    %v4921 = vmul.f32 %v4214, %v4894
    %v4922 = vmul.f32 %v4216, %v4898
    %v4923 = vmul.f32 %v4558, %v4902
    %v4924 = vmul.f32 %v4560, %v4906
    %v4925 = vmul.f32 %v4887, %v4910
    %v4927 = vlaneseq
    %v4928 = vshrl.u32 %v4927, 7
    %v4929 = vsub.s32 0, %v4928
    %v4930 = vrot.slane %v3872, %v4929
    %v4931 = vlaneseq
    %v4932 = vshrl.u32 %v4931, 7
    %v4933 = vsub.s32 1, %v4932
    %v4934 = vrot.slane %v3872, %v4933
    %v4935 = vlaneseq
    %v4936 = vshrl.u32 %v4935, 7
    %v4937 = vsub.s32 2, %v4936
    %v4938 = vrot.slane %v3872, %v4937
    %v4939 = vlaneseq
    %v4940 = vshrl.u32 %v4939, 7
    %v4941 = vsub.s32 3, %v4940
    %v4942 = vrot.slane %v3872, %v4941
    %v4943 = vlaneseq
    %v4944 = vshrl.u32 %v4943, 7
    %v4945 = vsub.s32 4, %v4944
    %v4946 = vrot.slane %v3872, %v4945
    %v4952 = vadd.f32 %v4916, %v4930
    %v4953 = vadd.f32 %v4917, %v4934
    %v4954 = vadd.f32 %v4918, %v4938
    %v4955 = vadd.f32 %v4919, %v4942
    %v4956 = vadd.f32 %v4920, %v4946
    %v4957 = vadd.f32 %v4921, %v4930
    %v4958 = vadd.f32 %v4922, %v4934
    %v4959 = vadd.f32 %v4923, %v4938
    %v4960 = vadd.f32 %v4924, %v4942
    %v4961 = vadd.f32 %v4925, %v4946
    %v4962 = vmax.f32 %v4952, 0.0
    %v4963 = vmax.f32 %v4953, 0.0
    %v4964 = vmax.f32 %v4954, 0.0
    %v4965 = vmax.f32 %v4955, 0.0
    %v4966 = vmax.f32 %v4956, 0.0
    %v4967 = vmax.f32 %v4957, 0.0
    %v4968 = vmax.f32 %v4958, 0.0
    %v4969 = vmax.f32 %v4959, 0.0
    %v4970 = vmax.f32 %v4960, 0.0
    %v4971 = vmax.f32 %v4961, 0.0
    %s4972 = smul.u32 2, 80
    %s4973 = smul.u32 %s4972, 7
    %s4974 = sshll.u32 %s4973, 4
    %4975 = dma.done %s184, %s4974
    %v4976 = vpack.c.bf16 %v4967, %v4962
    %v4977 = vpack.c.bf16 %v4968, %v4963
    %v4978 = vpack.c.bf16 %v4969, %v4964
    %v4979 = vpack.c.bf16 %v4970, %v4965
    %v4980 = vpack.c.bf16 %v4971, %v4966
    %v4981 = vld [vmem:[#allocation4] sm:$0xff]
    %v4982 = vld [vmem:[#allocation4 + $0x8] sm:$0xff]
    %v4983 = vld [vmem:[#allocation4 + $0x10] sm:$0xff]
    %v4984 = vld [vmem:[#allocation4 + $0x18] sm:$0xff]
    %v4985 = vld [vmem:[#allocation4 + $0x20] sm:$0xff]
    %v4986 = vld [vmem:[#allocation4 + $0x28] sm:$0xff]
    %v4987 = vld [vmem:[#allocation4 + $0x30] sm:$0xff]
    %v4988 = vld [vmem:[#allocation4 + $0x38] sm:$0xff]
    %v4989 = vld [vmem:[#allocation4 + $0x40] sm:$0xff]
    %v4990 = vld [vmem:[#allocation4 + $0x48] sm:$0xff]
    %v4991 = vld [vmem:[#allocation4 + $0x50] sm:$0xff]
    %v4992 = vld [vmem:[#allocation4 + $0x58] sm:$0xff]
    %v4993 = vld [vmem:[#allocation4 + $0x60] sm:$0xff]
    %v4994 = vld [vmem:[#allocation4 + $0x68] sm:$0xff]
    %v4995 = vld [vmem:[#allocation4 + $0x70] sm:$0xff]
    %v4996 = vld [vmem:[#allocation4 + $0x78] sm:$0xff]
    %v4997 = vld [vmem:[#allocation4 + $0x80] sm:$0xff]
    %v4998 = vld [vmem:[#allocation4 + $0x88] sm:$0xff]
    %v4999 = vld [vmem:[#allocation4 + $0x90] sm:$0xff]
    %v5000 = vld [vmem:[#allocation4 + $0x98] sm:$0xff]
    %v5001 = vld [vmem:[#allocation4 + $0xa0] sm:$0xff]
    %v5002 = vld [vmem:[#allocation4 + $0xa8] sm:$0xff]
    %v5003 = vld [vmem:[#allocation4 + $0xb0] sm:$0xff]
    %v5004 = vld [vmem:[#allocation4 + $0xb8] sm:$0xff]
    %v5005 = vld [vmem:[#allocation4 + $0xc0] sm:$0xff]
    %v5006 = vld [vmem:[#allocation4 + $0xc8] sm:$0xff]
    %v5007 = vld [vmem:[#allocation4 + $0xd0] sm:$0xff]
    %v5008 = vld [vmem:[#allocation4 + $0xd8] sm:$0xff]
    %v5009 = vld [vmem:[#allocation4 + $0xe0] sm:$0xff]
    %v5010 = vld [vmem:[#allocation4 + $0xe8] sm:$0xff]
    %v5011 = vld [vmem:[#allocation4 + $0xf0] sm:$0xff]
    %v5012 = vld [vmem:[#allocation4 + $0xf8] sm:$0xff]
    %v5013 = vld [vmem:[#allocation4 + $0x100] sm:$0xff]
    %v5014 = vld [vmem:[#allocation4 + $0x108] sm:$0xff]
    %v5015 = vld [vmem:[#allocation4 + $0x110] sm:$0xff]
    %v5016 = vld [vmem:[#allocation4 + $0x118] sm:$0xff]
    %v5017 = vld [vmem:[#allocation4 + $0x120] sm:$0xff]
    %v5018 = vld [vmem:[#allocation4 + $0x128] sm:$0xff]
    %v5019 = vld [vmem:[#allocation4 + $0x130] sm:$0xff]
    %v5020 = vld [vmem:[#allocation4 + $0x138] sm:$0xff]
    %v5021 = vld [vmem:[#allocation4 + $0x140] sm:$0xff]
    %v5022 = vld [vmem:[#allocation4 + $0x148] sm:$0xff]
    %v5023 = vld [vmem:[#allocation4 + $0x150] sm:$0xff]
    %v5024 = vld [vmem:[#allocation4 + $0x158] sm:$0xff]
    %v5025 = vld [vmem:[#allocation4 + $0x160] sm:$0xff]
    %v5026 = vld [vmem:[#allocation4 + $0x168] sm:$0xff]
    %v5027 = vld [vmem:[#allocation4 + $0x170] sm:$0xff]
    %v5028 = vld [vmem:[#allocation4 + $0x178] sm:$0xff]
    %v5029 = vld [vmem:[#allocation4 + $0x180] sm:$0xff]
    %v5030 = vld [vmem:[#allocation4 + $0x188] sm:$0xff]
    %v5031 = vld [vmem:[#allocation4 + $0x190] sm:$0xff]
    %v5032 = vld [vmem:[#allocation4 + $0x198] sm:$0xff]
    %v5033 = vld [vmem:[#allocation4 + $0x1a0] sm:$0xff]
    %v5034 = vld [vmem:[#allocation4 + $0x1a8] sm:$0xff]
    %v5035 = vld [vmem:[#allocation4 + $0x1b0] sm:$0xff]
    %v5036 = vld [vmem:[#allocation4 + $0x1b8] sm:$0xff]
    %v5037 = vld [vmem:[#allocation4 + $0x1c0] sm:$0xff]
    %v5038 = vld [vmem:[#allocation4 + $0x1c8] sm:$0xff]
    %v5039 = vld [vmem:[#allocation4 + $0x1d0] sm:$0xff]
    %v5040 = vld [vmem:[#allocation4 + $0x1d8] sm:$0xff]
    %v5041 = vld [vmem:[#allocation4 + $0x1e0] sm:$0xff]
    %v5042 = vld [vmem:[#allocation4 + $0x1e8] sm:$0xff]
    %v5043 = vld [vmem:[#allocation4 + $0x1f0] sm:$0xff]
    %v5044 = vld [vmem:[#allocation4 + $0x1f8] sm:$0xff]
    %v5045 = vld [vmem:[#allocation4 + $0x200] sm:$0xff]
    %v5046 = vld [vmem:[#allocation4 + $0x208] sm:$0xff]
    %v5047 = vld [vmem:[#allocation4 + $0x210] sm:$0xff]
    %v5048 = vld [vmem:[#allocation4 + $0x218] sm:$0xff]
    %v5049 = vld [vmem:[#allocation4 + $0x220] sm:$0xff]
    %v5050 = vld [vmem:[#allocation4 + $0x228] sm:$0xff]
    %v5051 = vld [vmem:[#allocation4 + $0x230] sm:$0xff]
    %v5052 = vld [vmem:[#allocation4 + $0x238] sm:$0xff]
    %v5053 = vld [vmem:[#allocation4 + $0x240] sm:$0xff]
    %v5054 = vld [vmem:[#allocation4 + $0x248] sm:$0xff]
    %v5055 = vld [vmem:[#allocation4 + $0x250] sm:$0xff]
    %v5056 = vld [vmem:[#allocation4 + $0x258] sm:$0xff]
    %v5057 = vld [vmem:[#allocation4 + $0x260] sm:$0xff]
    %v5058 = vld [vmem:[#allocation4 + $0x268] sm:$0xff]
    %v5059 = vld [vmem:[#allocation4 + $0x270] sm:$0xff]
    %v5060 = vld [vmem:[#allocation4 + $0x278] sm:$0xff]
    %v5061 = vld [vmem:[#allocation4 + $0x280] sm:$0xff]
    %v5062 = vld [vmem:[#allocation4 + $0x288] sm:$0xff]
    %v5063 = vld [vmem:[#allocation4 + $0x290] sm:$0xff]
    %v5064 = vld [vmem:[#allocation4 + $0x298] sm:$0xff]
    %v5065 = vld [vmem:[#allocation4 + $0x2a0] sm:$0xff]
    %v5066 = vld [vmem:[#allocation4 + $0x2a8] sm:$0xff]
    %v5067 = vld [vmem:[#allocation4 + $0x2b0] sm:$0xff]
    %v5068 = vld [vmem:[#allocation4 + $0x2b8] sm:$0xff]
    %v5069 = vld [vmem:[#allocation4 + $0x2c0] sm:$0xff]
    %v5070 = vld [vmem:[#allocation4 + $0x2c8] sm:$0xff]
    %v5071 = vld [vmem:[#allocation4 + $0x2d0] sm:$0xff]
    %v5072 = vld [vmem:[#allocation4 + $0x2d8] sm:$0xff]
    %v5073 = vld [vmem:[#allocation4 + $0x2e0] sm:$0xff]
    %v5074 = vld [vmem:[#allocation4 + $0x2e8] sm:$0xff]
    %v5075 = vld [vmem:[#allocation4 + $0x2f0] sm:$0xff]
    %v5076 = vld [vmem:[#allocation4 + $0x2f8] sm:$0xff]
    %v5077 = vld [vmem:[#allocation4 + $0x300] sm:$0xff]
    %v5078 = vld [vmem:[#allocation4 + $0x308] sm:$0xff]
    %v5079 = vld [vmem:[#allocation4 + $0x310] sm:$0xff]
    %v5080 = vld [vmem:[#allocation4 + $0x318] sm:$0xff]
    %v5081 = vld [vmem:[#allocation4 + $0x320] sm:$0xff]
    %v5082 = vld [vmem:[#allocation4 + $0x328] sm:$0xff]
    %v5083 = vld [vmem:[#allocation4 + $0x330] sm:$0xff]
    %v5084 = vld [vmem:[#allocation4 + $0x338] sm:$0xff]
    %v5085 = vld [vmem:[#allocation4 + $0x340] sm:$0xff]
    %v5086 = vld [vmem:[#allocation4 + $0x348] sm:$0xff]
    %v5087 = vld [vmem:[#allocation4 + $0x350] sm:$0xff]
    %v5088 = vld [vmem:[#allocation4 + $0x358] sm:$0xff]
    %v5089 = vld [vmem:[#allocation4 + $0x360] sm:$0xff]
    %v5090 = vld [vmem:[#allocation4 + $0x368] sm:$0xff]
    %v5091 = vld [vmem:[#allocation4 + $0x370] sm:$0xff]
    %v5092 = vld [vmem:[#allocation4 + $0x378] sm:$0xff]
    %v5093 = vld [vmem:[#allocation4 + $0x380] sm:$0xff]
    %v5094 = vld [vmem:[#allocation4 + $0x388] sm:$0xff]
    %v5095 = vld [vmem:[#allocation4 + $0x390] sm:$0xff]
    %v5096 = vld [vmem:[#allocation4 + $0x398] sm:$0xff]
    %v5097 = vld [vmem:[#allocation4 + $0x3a0] sm:$0xff]
    %v5098 = vld [vmem:[#allocation4 + $0x3a8] sm:$0xff]
    %v5099 = vld [vmem:[#allocation4 + $0x3b0] sm:$0xff]
    %v5100 = vld [vmem:[#allocation4 + $0x3b8] sm:$0xff]
    %v5101 = vld [vmem:[#allocation4 + $0x3c0] sm:$0xff]
    %v5102 = vld [vmem:[#allocation4 + $0x3c8] sm:$0xff]
    %v5103 = vld [vmem:[#allocation4 + $0x3d0] sm:$0xff]
    %v5104 = vld [vmem:[#allocation4 + $0x3d8] sm:$0xff]
    %v5105 = vld [vmem:[#allocation4 + $0x3e0] sm:$0xff]
    %v5106 = vld [vmem:[#allocation4 + $0x3e8] sm:$0xff]
    %v5107 = vld [vmem:[#allocation4 + $0x3f0] sm:$0xff]
    %v5108 = vld [vmem:[#allocation4 + $0x3f8] sm:$0xff]
    %v5109 = vld [vmem:[#allocation4 + $0x400] sm:$0xff]
    %v5110 = vld [vmem:[#allocation4 + $0x408] sm:$0xff]
    %v5111 = vld [vmem:[#allocation4 + $0x410] sm:$0xff]
    %v5112 = vld [vmem:[#allocation4 + $0x418] sm:$0xff]
    %v5113 = vld [vmem:[#allocation4 + $0x420] sm:$0xff]
    %v5114 = vld [vmem:[#allocation4 + $0x428] sm:$0xff]
    %v5115 = vld [vmem:[#allocation4 + $0x430] sm:$0xff]
    %v5116 = vld [vmem:[#allocation4 + $0x438] sm:$0xff]
    %v5117 = vld [vmem:[#allocation4 + $0x440] sm:$0xff]
    %v5118 = vld [vmem:[#allocation4 + $0x448] sm:$0xff]
    %v5119 = vld [vmem:[#allocation4 + $0x450] sm:$0xff]
    %v5120 = vld [vmem:[#allocation4 + $0x458] sm:$0xff]
    %v5121 = vunpack.c.l.s8.bf16 %v4981
    %v5122 = vunpack.c.l.s8.bf16 %v4982
    %v5123 = vunpack.c.l.s8.bf16 %v4983
    %v5124 = vunpack.c.l.s8.bf16 %v4984
    %v5125 = vunpack.c.l.s8.bf16 %v4985
    %v5126 = vunpack.c.l.s8.bf16 %v4986
    %v5127 = vunpack.c.l.s8.bf16 %v4987
    %v5128 = vunpack.c.h.s8.bf16 %v4981
    %v5129 = vunpack.c.h.s8.bf16 %v4982
    %v5130 = vunpack.c.h.s8.bf16 %v4983
    %v5131 = vunpack.c.h.s8.bf16 %v4984
    %v5132 = vunpack.c.h.s8.bf16 %v4985
    %v5133 = vunpack.c.h.s8.bf16 %v4986
    %v5134 = vunpack.c.h.s8.bf16 %v4987
    %v5135 = vunpack.c.l.s8.bf16 %v4988
    %v5136 = vunpack.c.l.s8.bf16 %v4989
    %v5137 = vunpack.c.l.s8.bf16 %v4990
    %v5138 = vunpack.c.l.s8.bf16 %v4991
    %v5139 = vunpack.c.l.s8.bf16 %v4992
    %v5140 = vunpack.c.l.s8.bf16 %v4993
    %v5141 = vunpack.c.l.s8.bf16 %v4994
    %v5142 = vunpack.c.h.s8.bf16 %v4988
    %v5143 = vunpack.c.h.s8.bf16 %v4989
    %v5144 = vunpack.c.h.s8.bf16 %v4990
    %v5145 = vunpack.c.h.s8.bf16 %v4991
    %v5146 = vunpack.c.h.s8.bf16 %v4992
    %v5147 = vunpack.c.h.s8.bf16 %v4993
    %v5148 = vunpack.c.h.s8.bf16 %v4994
    %v5149 = vunpack.c.l.s8.bf16 %v4995
    %v5150 = vunpack.c.l.s8.bf16 %v4996
    %v5151 = vunpack.c.l.s8.bf16 %v4997
    %v5152 = vunpack.c.l.s8.bf16 %v4998
    %v5153 = vunpack.c.l.s8.bf16 %v4999
    %v5154 = vunpack.c.l.s8.bf16 %v5000
    %v5155 = vunpack.c.l.s8.bf16 %v5001
    %v5156 = vunpack.c.h.s8.bf16 %v4995
    %v5157 = vunpack.c.h.s8.bf16 %v4996
    %v5158 = vunpack.c.h.s8.bf16 %v4997
    %v5159 = vunpack.c.h.s8.bf16 %v4998
    %v5160 = vunpack.c.h.s8.bf16 %v4999
    %v5161 = vunpack.c.h.s8.bf16 %v5000
    %v5162 = vunpack.c.h.s8.bf16 %v5001
    %v5163 = vunpack.c.l.s8.bf16 %v5002
    %v5164 = vunpack.c.l.s8.bf16 %v5003
    %v5165 = vunpack.c.l.s8.bf16 %v5004
    %v5166 = vunpack.c.l.s8.bf16 %v5005
    %v5167 = vunpack.c.l.s8.bf16 %v5006
    %v5168 = vunpack.c.l.s8.bf16 %v5007
    %v5169 = vunpack.c.l.s8.bf16 %v5008
    %v5170 = vunpack.c.h.s8.bf16 %v5002
    %v5171 = vunpack.c.h.s8.bf16 %v5003
    %v5172 = vunpack.c.h.s8.bf16 %v5004
    %v5173 = vunpack.c.h.s8.bf16 %v5005
    %v5174 = vunpack.c.h.s8.bf16 %v5006
    %v5175 = vunpack.c.h.s8.bf16 %v5007
    %v5176 = vunpack.c.h.s8.bf16 %v5008
    %v5177 = vunpack.c.l.s8.bf16 %v5009
    %v5178 = vunpack.c.l.s8.bf16 %v5010
    %v5179 = vunpack.c.l.s8.bf16 %v5011
    %v5180 = vunpack.c.l.s8.bf16 %v5012
    %v5181 = vunpack.c.l.s8.bf16 %v5013
    %v5182 = vunpack.c.l.s8.bf16 %v5014
    %v5183 = vunpack.c.l.s8.bf16 %v5015
    %v5184 = vunpack.c.h.s8.bf16 %v5009
    %v5185 = vunpack.c.h.s8.bf16 %v5010
    %v5186 = vunpack.c.h.s8.bf16 %v5011
    %v5187 = vunpack.c.h.s8.bf16 %v5012
    %v5188 = vunpack.c.h.s8.bf16 %v5013
    %v5189 = vunpack.c.h.s8.bf16 %v5014
    %v5190 = vunpack.c.h.s8.bf16 %v5015
    %v5191 = vunpack.c.l.s8.bf16 %v5016
    %v5192 = vunpack.c.l.s8.bf16 %v5017
    %v5193 = vunpack.c.l.s8.bf16 %v5018
    %v5194 = vunpack.c.l.s8.bf16 %v5019
    %v5195 = vunpack.c.l.s8.bf16 %v5020
    %v5196 = vunpack.c.l.s8.bf16 %v5021
    %v5197 = vunpack.c.l.s8.bf16 %v5022
    %v5198 = vunpack.c.h.s8.bf16 %v5016
    %v5199 = vunpack.c.h.s8.bf16 %v5017
    %v5200 = vunpack.c.h.s8.bf16 %v5018
    %v5201 = vunpack.c.h.s8.bf16 %v5019
    %v5202 = vunpack.c.h.s8.bf16 %v5020
    %v5203 = vunpack.c.h.s8.bf16 %v5021
    %v5204 = vunpack.c.h.s8.bf16 %v5022
    %v5205 = vunpack.c.l.s8.bf16 %v5023
    %v5206 = vunpack.c.l.s8.bf16 %v5024
    %v5207 = vunpack.c.l.s8.bf16 %v5025
    %v5208 = vunpack.c.l.s8.bf16 %v5026
    %v5209 = vunpack.c.l.s8.bf16 %v5027
    %v5210 = vunpack.c.l.s8.bf16 %v5028
    %v5211 = vunpack.c.l.s8.bf16 %v5029
    %v5212 = vunpack.c.h.s8.bf16 %v5023
    %v5213 = vunpack.c.h.s8.bf16 %v5024
    %v5214 = vunpack.c.h.s8.bf16 %v5025
    %v5215 = vunpack.c.h.s8.bf16 %v5026
    %v5216 = vunpack.c.h.s8.bf16 %v5027
    %v5217 = vunpack.c.h.s8.bf16 %v5028
    %v5218 = vunpack.c.h.s8.bf16 %v5029
    %v5219 = vunpack.c.l.s8.bf16 %v5030
    %v5220 = vunpack.c.l.s8.bf16 %v5031
    %v5221 = vunpack.c.l.s8.bf16 %v5032
    %v5222 = vunpack.c.l.s8.bf16 %v5033
    %v5223 = vunpack.c.l.s8.bf16 %v5034
    %v5224 = vunpack.c.l.s8.bf16 %v5035
    %v5225 = vunpack.c.l.s8.bf16 %v5036
    %v5226 = vunpack.c.h.s8.bf16 %v5030
    %v5227 = vunpack.c.h.s8.bf16 %v5031
    %v5228 = vunpack.c.h.s8.bf16 %v5032
    %v5229 = vunpack.c.h.s8.bf16 %v5033
    %v5230 = vunpack.c.h.s8.bf16 %v5034
    %v5231 = vunpack.c.h.s8.bf16 %v5035
    %v5232 = vunpack.c.h.s8.bf16 %v5036
    %v5233 = vunpack.c.l.s8.bf16 %v5037
    %v5234 = vunpack.c.l.s8.bf16 %v5038
    %v5235 = vunpack.c.l.s8.bf16 %v5039
    %v5236 = vunpack.c.l.s8.bf16 %v5040
    %v5237 = vunpack.c.l.s8.bf16 %v5041
    %v5238 = vunpack.c.l.s8.bf16 %v5042
    %v5239 = vunpack.c.l.s8.bf16 %v5043
    %v5240 = vunpack.c.h.s8.bf16 %v5037
    %v5241 = vunpack.c.h.s8.bf16 %v5038
    %v5242 = vunpack.c.h.s8.bf16 %v5039
    %v5243 = vunpack.c.h.s8.bf16 %v5040
    %v5244 = vunpack.c.h.s8.bf16 %v5041
    %v5245 = vunpack.c.h.s8.bf16 %v5042
    %v5246 = vunpack.c.h.s8.bf16 %v5043
    %v5247 = vunpack.c.l.s8.bf16 %v5044
    %v5248 = vunpack.c.l.s8.bf16 %v5045
    %v5249 = vunpack.c.l.s8.bf16 %v5046
    %v5250 = vunpack.c.l.s8.bf16 %v5047
    %v5251 = vunpack.c.l.s8.bf16 %v5048
    %v5252 = vunpack.c.l.s8.bf16 %v5049
    %v5253 = vunpack.c.l.s8.bf16 %v5050
    %v5254 = vunpack.c.h.s8.bf16 %v5044
    %v5255 = vunpack.c.h.s8.bf16 %v5045
    %v5256 = vunpack.c.h.s8.bf16 %v5046
    %v5257 = vunpack.c.h.s8.bf16 %v5047
    %v5258 = vunpack.c.h.s8.bf16 %v5048
    %v5259 = vunpack.c.h.s8.bf16 %v5049
    %v5260 = vunpack.c.h.s8.bf16 %v5050
    %v5261 = vunpack.c.l.s8.bf16 %v5051
    %v5262 = vunpack.c.l.s8.bf16 %v5052
    %v5263 = vunpack.c.l.s8.bf16 %v5053
    %v5264 = vunpack.c.l.s8.bf16 %v5054
    %v5265 = vunpack.c.l.s8.bf16 %v5055
    %v5266 = vunpack.c.l.s8.bf16 %v5056
    %v5267 = vunpack.c.l.s8.bf16 %v5057
    %v5268 = vunpack.c.h.s8.bf16 %v5051
    %v5269 = vunpack.c.h.s8.bf16 %v5052
    %v5270 = vunpack.c.h.s8.bf16 %v5053
    %v5271 = vunpack.c.h.s8.bf16 %v5054
    %v5272 = vunpack.c.h.s8.bf16 %v5055
    %v5273 = vunpack.c.h.s8.bf16 %v5056
    %v5274 = vunpack.c.h.s8.bf16 %v5057
    %v5275 = vunpack.c.l.s8.bf16 %v5058
    %v5276 = vunpack.c.l.s8.bf16 %v5059
    %v5277 = vunpack.c.l.s8.bf16 %v5060
    %v5278 = vunpack.c.l.s8.bf16 %v5061
    %v5279 = vunpack.c.l.s8.bf16 %v5062
    %v5280 = vunpack.c.l.s8.bf16 %v5063
    %v5281 = vunpack.c.l.s8.bf16 %v5064
    %v5282 = vunpack.c.h.s8.bf16 %v5058
    %v5283 = vunpack.c.h.s8.bf16 %v5059
    %v5284 = vunpack.c.h.s8.bf16 %v5060
    %v5285 = vunpack.c.h.s8.bf16 %v5061
    %v5286 = vunpack.c.h.s8.bf16 %v5062
    %v5287 = vunpack.c.h.s8.bf16 %v5063
    %v5288 = vunpack.c.h.s8.bf16 %v5064
    %v5289 = vunpack.c.l.s8.bf16 %v5065
    %v5290 = vunpack.c.l.s8.bf16 %v5066
    %v5291 = vunpack.c.l.s8.bf16 %v5067
    %v5292 = vunpack.c.l.s8.bf16 %v5068
    %v5293 = vunpack.c.l.s8.bf16 %v5069
    %v5294 = vunpack.c.l.s8.bf16 %v5070
    %v5295 = vunpack.c.l.s8.bf16 %v5071
    %v5296 = vunpack.c.h.s8.bf16 %v5065
    %v5297 = vunpack.c.h.s8.bf16 %v5066
    %v5298 = vunpack.c.h.s8.bf16 %v5067
    %v5299 = vunpack.c.h.s8.bf16 %v5068
    %v5300 = vunpack.c.h.s8.bf16 %v5069
    %v5301 = vunpack.c.h.s8.bf16 %v5070
    %v5302 = vunpack.c.h.s8.bf16 %v5071
    %v5303 = vunpack.c.l.s8.bf16 %v5072
    %v5304 = vunpack.c.l.s8.bf16 %v5073
    %v5305 = vunpack.c.l.s8.bf16 %v5074
    %v5306 = vunpack.c.l.s8.bf16 %v5075
    %v5307 = vunpack.c.l.s8.bf16 %v5076
    %v5308 = vunpack.c.l.s8.bf16 %v5077
    %v5309 = vunpack.c.l.s8.bf16 %v5078
    %v5310 = vunpack.c.h.s8.bf16 %v5072
    %v5311 = vunpack.c.h.s8.bf16 %v5073
    %v5312 = vunpack.c.h.s8.bf16 %v5074
    %v5313 = vunpack.c.h.s8.bf16 %v5075
    %v5314 = vunpack.c.h.s8.bf16 %v5076
    %v5315 = vunpack.c.h.s8.bf16 %v5077
    %v5316 = vunpack.c.h.s8.bf16 %v5078
    %v5317 = vunpack.c.l.s8.bf16 %v5079
    %v5318 = vunpack.c.l.s8.bf16 %v5080
    %v5319 = vunpack.c.l.s8.bf16 %v5081
    %v5320 = vunpack.c.l.s8.bf16 %v5082
    %v5321 = vunpack.c.l.s8.bf16 %v5083
    %v5322 = vunpack.c.l.s8.bf16 %v5084
    %v5323 = vunpack.c.l.s8.bf16 %v5085
    %v5324 = vunpack.c.h.s8.bf16 %v5079
    %v5325 = vunpack.c.h.s8.bf16 %v5080
    %v5326 = vunpack.c.h.s8.bf16 %v5081
    %v5327 = vunpack.c.h.s8.bf16 %v5082
    %v5328 = vunpack.c.h.s8.bf16 %v5083
    %v5329 = vunpack.c.h.s8.bf16 %v5084
    %v5330 = vunpack.c.h.s8.bf16 %v5085
    %v5331 = vunpack.c.l.s8.bf16 %v5086
    %v5332 = vunpack.c.l.s8.bf16 %v5087
    %v5333 = vunpack.c.l.s8.bf16 %v5088
    %v5334 = vunpack.c.l.s8.bf16 %v5089
    %v5335 = vunpack.c.l.s8.bf16 %v5090
    %v5336 = vunpack.c.l.s8.bf16 %v5091
    %v5337 = vunpack.c.l.s8.bf16 %v5092
    %v5338 = vunpack.c.h.s8.bf16 %v5086
    %v5339 = vunpack.c.h.s8.bf16 %v5087
    %v5340 = vunpack.c.h.s8.bf16 %v5088
    %v5341 = vunpack.c.h.s8.bf16 %v5089
    %v5342 = vunpack.c.h.s8.bf16 %v5090
    %v5343 = vunpack.c.h.s8.bf16 %v5091
    %v5344 = vunpack.c.h.s8.bf16 %v5092
    %v5345 = vunpack.c.l.s8.bf16 %v5093
    %v5346 = vunpack.c.l.s8.bf16 %v5094
    %v5347 = vunpack.c.l.s8.bf16 %v5095
    %v5348 = vunpack.c.l.s8.bf16 %v5096
    %v5349 = vunpack.c.l.s8.bf16 %v5097
    %v5350 = vunpack.c.l.s8.bf16 %v5098
    %v5351 = vunpack.c.l.s8.bf16 %v5099
    %v5352 = vunpack.c.h.s8.bf16 %v5093
    %v5353 = vunpack.c.h.s8.bf16 %v5094
    %v5354 = vunpack.c.h.s8.bf16 %v5095
    %v5355 = vunpack.c.h.s8.bf16 %v5096
    %v5356 = vunpack.c.h.s8.bf16 %v5097
    %v5357 = vunpack.c.h.s8.bf16 %v5098
    %v5358 = vunpack.c.h.s8.bf16 %v5099
    %v5359 = vunpack.c.l.s8.bf16 %v5100
    %v5360 = vunpack.c.l.s8.bf16 %v5101
    %v5361 = vunpack.c.l.s8.bf16 %v5102
    %v5362 = vunpack.c.l.s8.bf16 %v5103
    %v5363 = vunpack.c.l.s8.bf16 %v5104
    %v5364 = vunpack.c.l.s8.bf16 %v5105
    %v5365 = vunpack.c.l.s8.bf16 %v5106
    %v5366 = vunpack.c.h.s8.bf16 %v5100
    %v5367 = vunpack.c.h.s8.bf16 %v5101
    %v5368 = vunpack.c.h.s8.bf16 %v5102
    %v5369 = vunpack.c.h.s8.bf16 %v5103
    %v5370 = vunpack.c.h.s8.bf16 %v5104
    %v5371 = vunpack.c.h.s8.bf16 %v5105
    %v5372 = vunpack.c.h.s8.bf16 %v5106
    %v5373 = vunpack.c.l.s8.bf16 %v5107
    %v5374 = vunpack.c.l.s8.bf16 %v5108
    %v5375 = vunpack.c.l.s8.bf16 %v5109
    %v5376 = vunpack.c.l.s8.bf16 %v5110
    %v5377 = vunpack.c.l.s8.bf16 %v5111
    %v5378 = vunpack.c.l.s8.bf16 %v5112
    %v5379 = vunpack.c.l.s8.bf16 %v5113
    %v5380 = vunpack.c.h.s8.bf16 %v5107
    %v5381 = vunpack.c.h.s8.bf16 %v5108
    %v5382 = vunpack.c.h.s8.bf16 %v5109
    %v5383 = vunpack.c.h.s8.bf16 %v5110
    %v5384 = vunpack.c.h.s8.bf16 %v5111
    %v5385 = vunpack.c.h.s8.bf16 %v5112
    %v5386 = vunpack.c.h.s8.bf16 %v5113
    %v5387 = vunpack.c.l.s8.bf16 %v5114
    %v5388 = vunpack.c.l.s8.bf16 %v5115
    %v5389 = vunpack.c.l.s8.bf16 %v5116
    %v5390 = vunpack.c.l.s8.bf16 %v5117
    %v5391 = vunpack.c.l.s8.bf16 %v5118
    %v5392 = vunpack.c.l.s8.bf16 %v5119
    %v5393 = vunpack.c.l.s8.bf16 %v5120
    %v5394 = vunpack.c.h.s8.bf16 %v5114
    %v5395 = vunpack.c.h.s8.bf16 %v5115
    %v5396 = vunpack.c.h.s8.bf16 %v5116
    %v5397 = vunpack.c.h.s8.bf16 %v5117
    %v5398 = vunpack.c.h.s8.bf16 %v5118
    %v5399 = vunpack.c.h.s8.bf16 %v5119
    %v5400 = vunpack.c.h.s8.bf16 %v5120
    %v5401 = vld [vmem:[#allocation21] sm:$0xff]
    %v5402 = vld [vmem:[#allocation20] sm:$0xff]
    %5403 = vmatprep.subr.bf16.mxu0 %v5171
    %5404 = vmatpush1.bf16.msra.mxu0 %v5170
    %5405 = vmatprep.subr.bf16.mxu0 %v5164
    %5406 = vmatpush1.bf16.msra.mxu0 %v5163
    %5407 = vmatprep.subr.bf16.mxu0 %v5157
    %5408 = vmatpush1.bf16.msra.mxu0 %v5156
    %5409 = vmatprep.subr.bf16.mxu0 %v5150
    %5410 = vmatpush1.bf16.msra.mxu0 %v5149
    %5411 = vmatprep.subr.bf16.mxu0 %v5143
    %5412 = vmatpush1.bf16.msra.mxu0 %v5142
    %5413 = vmatprep.subr.bf16.mxu0 %v5136
    %5414 = vmatpush1.bf16.msra.mxu0 %v5135
    %5415 = vmatprep.subr.bf16.mxu0 %v5129
    %5416 = vmatpush1.bf16.msra.mxu0 %v5128
    %5417 = vmatprep.subr.bf16.mxu0 %v5122
    %5418 = vmatpush1.bf16.msra.mxu0 %v5121
    %5419 = vmatprep.subr.bf16.mxu0 %v5227
    %5420 = vmatpush2.bf16.msra.mxu0 %v5226
    %5421 = vmatprep.subr.bf16.mxu0 %v5220
    %5422 = vmatpush2.bf16.msra.mxu0 %v5219
    %5423 = vmatprep.subr.bf16.mxu0 %v5213
    %5424 = vmatpush2.bf16.msra.mxu0 %v5212
    %5425 = vmatprep.subr.bf16.mxu0 %v5206
    %5426 = vmatpush2.bf16.msra.mxu0 %v5205
    %5427 = vmatprep.subr.bf16.mxu0 %v5199
    %5428 = vmatpush2.bf16.msra.mxu0 %v5198
    %5429 = vmatprep.subr.bf16.mxu0 %v5192
    %5430 = vmatpush2.bf16.msra.mxu0 %v5191
    %5431 = vmatprep.subr.bf16.mxu0 %v5185
    %5432 = vmatpush2.bf16.msra.mxu0 %v5184
    %5433 = vmatprep.subr.bf16.mxu0 %v5178
    %5434 = vmatpush2.bf16.msra.mxu0 %v5177
    %5435 = vmatprep.mubr.bf16.mxu0 %v4977
    %5436 = vmatmul.mubr.bf16.gmra.mxu0 %v4976
    %v5437 = vpop.f32.mrf.mxu0
    %v5438 = vadd.f32 0.0, %v5437
    %v5439 = vpop.f32.mrf.mxu0
    %v5440 = vadd.f32 0.0, %v5439
    %v5441 = vpop.f32.mrf.mxu0
    %v5442 = vadd.f32 0.0, %v5441
    %v5443 = vpop.f32.mrf.mxu0
    %v5444 = vadd.f32 0.0, %v5443
    %5445 = vdwg.mxu0
    %5446 = vmatprep.subr.bf16.mxu0 %v5283
    %5447 = vmatpush1.bf16.msra.mxu0 %v5282
    %5448 = vmatprep.subr.bf16.mxu0 %v5276
    %5449 = vmatpush1.bf16.msra.mxu0 %v5275
    %5450 = vmatprep.subr.bf16.mxu0 %v5269
    %5451 = vmatpush1.bf16.msra.mxu0 %v5268
    %5452 = vmatprep.subr.bf16.mxu0 %v5262
    %5453 = vmatpush1.bf16.msra.mxu0 %v5261
    %5454 = vmatprep.subr.bf16.mxu0 %v5255
    %5455 = vmatpush1.bf16.msra.mxu0 %v5254
    %5456 = vmatprep.subr.bf16.mxu0 %v5248
    %5457 = vmatpush1.bf16.msra.mxu0 %v5247
    %5458 = vmatprep.subr.bf16.mxu0 %v5241
    %5459 = vmatpush1.bf16.msra.mxu0 %v5240
    %5460 = vmatprep.subr.bf16.mxu0 %v5234
    %5461 = vmatpush1.bf16.msra.mxu0 %v5233
    %5462 = vmatprep.subr.bf16.mxu0 %v5339
    %5463 = vmatpush2.bf16.msra.mxu0 %v5338
    %5464 = vmatprep.subr.bf16.mxu0 %v5332
    %5465 = vmatpush2.bf16.msra.mxu0 %v5331
    %5466 = vmatprep.subr.bf16.mxu0 %v5325
    %5467 = vmatpush2.bf16.msra.mxu0 %v5324
    %5468 = vmatprep.subr.bf16.mxu0 %v5318
    %5469 = vmatpush2.bf16.msra.mxu0 %v5317
    %5470 = vmatprep.subr.bf16.mxu0 %v5311
    %5471 = vmatpush2.bf16.msra.mxu0 %v5310
    %5472 = vmatprep.subr.bf16.mxu0 %v5304
    %5473 = vmatpush2.bf16.msra.mxu0 %v5303
    %5474 = vmatprep.subr.bf16.mxu0 %v5297
    %5475 = vmatpush2.bf16.msra.mxu0 %v5296
    %5476 = vmatprep.subr.bf16.mxu0 %v5290
    %5477 = vmatpush2.bf16.msra.mxu0 %v5289
    %5478 = vmatprep.mubr.bf16.mxu0 %v4979
    %5479 = vmatmul.mubr.bf16.gmra.mxu0 %v4978
    %v5480 = vpop.f32.mrf.mxu0
    %v5481 = vadd.f32 %v5438, %v5480
    %v5482 = vpop.f32.mrf.mxu0
    %v5483 = vadd.f32 %v5440, %v5482
    %v5484 = vpop.f32.mrf.mxu0
    %v5485 = vadd.f32 %v5442, %v5484
    %v5486 = vpop.f32.mrf.mxu0
    %v5487 = vadd.f32 %v5444, %v5486
    %5488 = vdwg.mxu0
    %5489 = vmatprep.subr.bf16.mxu0 %v5395
    %5490 = vmatpush1.bf16.msra.mxu0 %v5394
    %5491 = vmatprep.subr.bf16.mxu0 %v5388
    %5492 = vmatpush1.bf16.msra.mxu0 %v5387
    %5493 = vmatprep.subr.bf16.mxu0 %v5381
    %5494 = vmatpush1.bf16.msra.mxu0 %v5380
    %5495 = vmatprep.subr.bf16.mxu0 %v5374
    %5496 = vmatpush1.bf16.msra.mxu0 %v5373
    %5497 = vmatprep.subr.bf16.mxu0 %v5367
    %5498 = vmatpush1.bf16.msra.mxu0 %v5366
    %5499 = vmatprep.subr.bf16.mxu0 %v5360
    %5500 = vmatpush1.bf16.msra.mxu0 %v5359
    %5501 = vmatprep.subr.bf16.mxu0 %v5353
    %5502 = vmatpush1.bf16.msra.mxu0 %v5352
    %5503 = vmatprep.subr.bf16.mxu0 %v5346
    %5504 = vmatpush1.bf16.msra.mxu0 %v5345
    %5505 = vmatprep.subr.bf16.mxu0 0
    %5506 = vmatpush2.bf16.msra.mxu0 0
    %5507 = vmatprep.subr.bf16.mxu0 0
    %5508 = vmatpush2.bf16.msra.mxu0 0
    %5509 = vmatprep.subr.bf16.mxu0 0
    %5510 = vmatpush2.bf16.msra.mxu0 0
    %5511 = vmatprep.subr.bf16.mxu0 0
    %5512 = vmatpush2.bf16.msra.mxu0 0
    %5513 = vmatprep.subr.bf16.mxu0 0
    %5514 = vmatpush2.bf16.msra.mxu0 0
    %5515 = vmatprep.subr.bf16.mxu0 0
    %5516 = vmatpush2.bf16.msra.mxu0 0
    %5517 = vmatprep.subr.bf16.mxu0 0
    %5518 = vmatpush2.bf16.msra.mxu0 0
    %5519 = vmatprep.subr.bf16.mxu0 0
    %5520 = vmatpush2.bf16.msra.mxu0 0
    %5521 = vmatprep.mubr.bf16.mxu0 0
    %5522 = vmatmul.mubr.bf16.gmra.mxu0 %v4980
    %v5523 = vpop.f32.mrf.mxu0
    %v5524 = vadd.f32 %v5481, %v5523
    %v5525 = vpop.f32.mrf.mxu0
    %v5526 = vadd.f32 %v5483, %v5525
    %v5527 = vpop.f32.mrf.mxu0
    %v5528 = vadd.f32 %v5485, %v5527
    %v5529 = vpop.f32.mrf.mxu0
    %v5530 = vadd.f32 %v5487, %v5529
    %5531 = vdwg.mxu0
    %5532 = vmatprep.subr.bf16.mxu0 %v5173
    %5533 = vmatpush1.bf16.msra.mxu0 %v5172
    %5534 = vmatprep.subr.bf16.mxu0 %v5166
    %5535 = vmatpush1.bf16.msra.mxu0 %v5165
    %5536 = vmatprep.subr.bf16.mxu0 %v5159
    %5537 = vmatpush1.bf16.msra.mxu0 %v5158
    %5538 = vmatprep.subr.bf16.mxu0 %v5152
    %5539 = vmatpush1.bf16.msra.mxu0 %v5151
    %5540 = vmatprep.subr.bf16.mxu0 %v5145
    %5541 = vmatpush1.bf16.msra.mxu0 %v5144
    %5542 = vmatprep.subr.bf16.mxu0 %v5138
    %5543 = vmatpush1.bf16.msra.mxu0 %v5137
    %5544 = vmatprep.subr.bf16.mxu0 %v5131
    %5545 = vmatpush1.bf16.msra.mxu0 %v5130
    %5546 = vmatprep.subr.bf16.mxu0 %v5124
    %5547 = vmatpush1.bf16.msra.mxu0 %v5123
    %5548 = vmatprep.subr.bf16.mxu0 %v5229
    %5549 = vmatpush2.bf16.msra.mxu0 %v5228
    %5550 = vmatprep.subr.bf16.mxu0 %v5222
    %5551 = vmatpush2.bf16.msra.mxu0 %v5221
    %5552 = vmatprep.subr.bf16.mxu0 %v5215
    %5553 = vmatpush2.bf16.msra.mxu0 %v5214
    %5554 = vmatprep.subr.bf16.mxu0 %v5208
    %5555 = vmatpush2.bf16.msra.mxu0 %v5207
    %5556 = vmatprep.subr.bf16.mxu0 %v5201
    %5557 = vmatpush2.bf16.msra.mxu0 %v5200
    %5558 = vmatprep.subr.bf16.mxu0 %v5194
    %5559 = vmatpush2.bf16.msra.mxu0 %v5193
    %5560 = vmatprep.subr.bf16.mxu0 %v5187
    %5561 = vmatpush2.bf16.msra.mxu0 %v5186
    %5562 = vmatprep.subr.bf16.mxu0 %v5180
    %5563 = vmatpush2.bf16.msra.mxu0 %v5179
    %5564 = vmatprep.mubr.bf16.mxu0 %v4977
    %5565 = vmatmul.mubr.bf16.gmra.mxu0 %v4976
    %v5566 = vpop.f32.mrf.mxu0
    %v5567 = vadd.f32 0.0, %v5566
    %v5568 = vpop.f32.mrf.mxu0
    %v5569 = vadd.f32 0.0, %v5568
    %v5570 = vpop.f32.mrf.mxu0
    %v5571 = vadd.f32 0.0, %v5570
    %v5572 = vpop.f32.mrf.mxu0
    %v5573 = vadd.f32 0.0, %v5572
    %5574 = vdwg.mxu0
    %5575 = vmatprep.subr.bf16.mxu0 %v5285
    %5576 = vmatpush1.bf16.msra.mxu0 %v5284
    %5577 = vmatprep.subr.bf16.mxu0 %v5278
    %5578 = vmatpush1.bf16.msra.mxu0 %v5277
    %5579 = vmatprep.subr.bf16.mxu0 %v5271
    %5580 = vmatpush1.bf16.msra.mxu0 %v5270
    %5581 = vmatprep.subr.bf16.mxu0 %v5264
    %5582 = vmatpush1.bf16.msra.mxu0 %v5263
    %5583 = vmatprep.subr.bf16.mxu0 %v5257
    %5584 = vmatpush1.bf16.msra.mxu0 %v5256
    %5585 = vmatprep.subr.bf16.mxu0 %v5250
    %5586 = vmatpush1.bf16.msra.mxu0 %v5249
    %5587 = vmatprep.subr.bf16.mxu0 %v5243
    %5588 = vmatpush1.bf16.msra.mxu0 %v5242
    %5589 = vmatprep.subr.bf16.mxu0 %v5236
    %5590 = vmatpush1.bf16.msra.mxu0 %v5235
    %5591 = vmatprep.subr.bf16.mxu0 %v5341
    %5592 = vmatpush2.bf16.msra.mxu0 %v5340
    %5593 = vmatprep.subr.bf16.mxu0 %v5334
    %5594 = vmatpush2.bf16.msra.mxu0 %v5333
    %5595 = vmatprep.subr.bf16.mxu0 %v5327
    %5596 = vmatpush2.bf16.msra.mxu0 %v5326
    %5597 = vmatprep.subr.bf16.mxu0 %v5320
    %5598 = vmatpush2.bf16.msra.mxu0 %v5319
    %5599 = vmatprep.subr.bf16.mxu0 %v5313
    %5600 = vmatpush2.bf16.msra.mxu0 %v5312
    %5601 = vmatprep.subr.bf16.mxu0 %v5306
    %5602 = vmatpush2.bf16.msra.mxu0 %v5305
    %5603 = vmatprep.subr.bf16.mxu0 %v5299
    %5604 = vmatpush2.bf16.msra.mxu0 %v5298
    %5605 = vmatprep.subr.bf16.mxu0 %v5292
    %5606 = vmatpush2.bf16.msra.mxu0 %v5291
    %5607 = vmatprep.mubr.bf16.mxu0 %v4979
    %5608 = vmatmul.mubr.bf16.gmra.mxu0 %v4978
    %v5609 = vpop.f32.mrf.mxu0
    %v5610 = vadd.f32 %v5567, %v5609
    %v5611 = vpop.f32.mrf.mxu0
    %v5612 = vadd.f32 %v5569, %v5611
    %v5613 = vpop.f32.mrf.mxu0
    %v5614 = vadd.f32 %v5571, %v5613
    %v5615 = vpop.f32.mrf.mxu0
    %v5616 = vadd.f32 %v5573, %v5615
    %5617 = vdwg.mxu0
    %5618 = vmatprep.subr.bf16.mxu0 %v5397
    %5619 = vmatpush1.bf16.msra.mxu0 %v5396
    %5620 = vmatprep.subr.bf16.mxu0 %v5390
    %5621 = vmatpush1.bf16.msra.mxu0 %v5389
    %5622 = vmatprep.subr.bf16.mxu0 %v5383
    %5623 = vmatpush1.bf16.msra.mxu0 %v5382
    %5624 = vmatprep.subr.bf16.mxu0 %v5376
    %5625 = vmatpush1.bf16.msra.mxu0 %v5375
    %5626 = vmatprep.subr.bf16.mxu0 %v5369
    %5627 = vmatpush1.bf16.msra.mxu0 %v5368
    %5628 = vmatprep.subr.bf16.mxu0 %v5362
    %5629 = vmatpush1.bf16.msra.mxu0 %v5361
    %5630 = vmatprep.subr.bf16.mxu0 %v5355
    %5631 = vmatpush1.bf16.msra.mxu0 %v5354
    %5632 = vmatprep.subr.bf16.mxu0 %v5348
    %5633 = vmatpush1.bf16.msra.mxu0 %v5347
    %5634 = vmatprep.subr.bf16.mxu0 0
    %5635 = vmatpush2.bf16.msra.mxu0 0
    %5636 = vmatprep.subr.bf16.mxu0 0
    %5637 = vmatpush2.bf16.msra.mxu0 0
    %5638 = vmatprep.subr.bf16.mxu0 0
    %5639 = vmatpush2.bf16.msra.mxu0 0
    %5640 = vmatprep.subr.bf16.mxu0 0
    %5641 = vmatpush2.bf16.msra.mxu0 0
    %5642 = vmatprep.subr.bf16.mxu0 0
    %5643 = vmatpush2.bf16.msra.mxu0 0
    %5644 = vmatprep.subr.bf16.mxu0 0
    %5645 = vmatpush2.bf16.msra.mxu0 0
    %5646 = vmatprep.subr.bf16.mxu0 0
    %5647 = vmatpush2.bf16.msra.mxu0 0
    %5648 = vmatprep.subr.bf16.mxu0 0
    %5649 = vmatpush2.bf16.msra.mxu0 0
    %5650 = vmatprep.mubr.bf16.mxu0 0
    %5651 = vmatmul.mubr.bf16.gmra.mxu0 %v4980
    %v5652 = vpop.f32.mrf.mxu0
    %v5653 = vadd.f32 %v5610, %v5652
    %v5654 = vpop.f32.mrf.mxu0
    %v5655 = vadd.f32 %v5612, %v5654
    %v5656 = vpop.f32.mrf.mxu0
    %v5657 = vadd.f32 %v5614, %v5656
    %v5658 = vpop.f32.mrf.mxu0
    %v5659 = vadd.f32 %v5616, %v5658
    %5660 = vdwg.mxu0
    %5661 = vmatprep.subr.bf16.mxu0 %v5175
    %5662 = vmatpush1.bf16.msra.mxu0 %v5174
    %5663 = vmatprep.subr.bf16.mxu0 %v5168
    %5664 = vmatpush1.bf16.msra.mxu0 %v5167
    %5665 = vmatprep.subr.bf16.mxu0 %v5161
    %5666 = vmatpush1.bf16.msra.mxu0 %v5160
    %5667 = vmatprep.subr.bf16.mxu0 %v5154
    %5668 = vmatpush1.bf16.msra.mxu0 %v5153
    %5669 = vmatprep.subr.bf16.mxu0 %v5147
    %5670 = vmatpush1.bf16.msra.mxu0 %v5146
    %5671 = vmatprep.subr.bf16.mxu0 %v5140
    %5672 = vmatpush1.bf16.msra.mxu0 %v5139
    %5673 = vmatprep.subr.bf16.mxu0 %v5133
    %5674 = vmatpush1.bf16.msra.mxu0 %v5132
    %5675 = vmatprep.subr.bf16.mxu0 %v5126
    %5676 = vmatpush1.bf16.msra.mxu0 %v5125
    %5677 = vmatprep.subr.bf16.mxu0 %v5231
    %5678 = vmatpush2.bf16.msra.mxu0 %v5230
    %5679 = vmatprep.subr.bf16.mxu0 %v5224
    %5680 = vmatpush2.bf16.msra.mxu0 %v5223
    %5681 = vmatprep.subr.bf16.mxu0 %v5217
    %5682 = vmatpush2.bf16.msra.mxu0 %v5216
    %5683 = vmatprep.subr.bf16.mxu0 %v5210
    %5684 = vmatpush2.bf16.msra.mxu0 %v5209
    %5685 = vmatprep.subr.bf16.mxu0 %v5203
    %5686 = vmatpush2.bf16.msra.mxu0 %v5202
    %5687 = vmatprep.subr.bf16.mxu0 %v5196
    %5688 = vmatpush2.bf16.msra.mxu0 %v5195
    %5689 = vmatprep.subr.bf16.mxu0 %v5189
    %5690 = vmatpush2.bf16.msra.mxu0 %v5188
    %5691 = vmatprep.subr.bf16.mxu0 %v5182
    %5692 = vmatpush2.bf16.msra.mxu0 %v5181
    %5693 = vmatprep.mubr.bf16.mxu0 %v4977
    %5694 = vmatmul.mubr.bf16.gmra.mxu0 %v4976
    %v5695 = vpop.f32.mrf.mxu0
    %v5696 = vadd.f32 0.0, %v5695
    %v5697 = vpop.f32.mrf.mxu0
    %v5698 = vadd.f32 0.0, %v5697
    %v5699 = vpop.f32.mrf.mxu0
    %v5700 = vadd.f32 0.0, %v5699
    %v5701 = vpop.f32.mrf.mxu0
    %v5702 = vadd.f32 0.0, %v5701
    %5703 = vdwg.mxu0
    %5704 = vmatprep.subr.bf16.mxu0 %v5287
    %5705 = vmatpush1.bf16.msra.mxu0 %v5286
    %5706 = vmatprep.subr.bf16.mxu0 %v5280
    %5707 = vmatpush1.bf16.msra.mxu0 %v5279
    %5708 = vmatprep.subr.bf16.mxu0 %v5273
    %5709 = vmatpush1.bf16.msra.mxu0 %v5272
    %5710 = vmatprep.subr.bf16.mxu0 %v5266
    %5711 = vmatpush1.bf16.msra.mxu0 %v5265
    %5712 = vmatprep.subr.bf16.mxu0 %v5259
    %5713 = vmatpush1.bf16.msra.mxu0 %v5258
    %5714 = vmatprep.subr.bf16.mxu0 %v5252
    %5715 = vmatpush1.bf16.msra.mxu0 %v5251
    %5716 = vmatprep.subr.bf16.mxu0 %v5245
    %5717 = vmatpush1.bf16.msra.mxu0 %v5244
    %5718 = vmatprep.subr.bf16.mxu0 %v5238
    %5719 = vmatpush1.bf16.msra.mxu0 %v5237
    %5720 = vmatprep.subr.bf16.mxu0 %v5343
    %5721 = vmatpush2.bf16.msra.mxu0 %v5342
    %5722 = vmatprep.subr.bf16.mxu0 %v5336
    %5723 = vmatpush2.bf16.msra.mxu0 %v5335
    %5724 = vmatprep.subr.bf16.mxu0 %v5329
    %5725 = vmatpush2.bf16.msra.mxu0 %v5328
    %5726 = vmatprep.subr.bf16.mxu0 %v5322
    %5727 = vmatpush2.bf16.msra.mxu0 %v5321
    %5728 = vmatprep.subr.bf16.mxu0 %v5315
    %5729 = vmatpush2.bf16.msra.mxu0 %v5314
    %5730 = vmatprep.subr.bf16.mxu0 %v5308
    %5731 = vmatpush2.bf16.msra.mxu0 %v5307
    %5732 = vmatprep.subr.bf16.mxu0 %v5301
    %5733 = vmatpush2.bf16.msra.mxu0 %v5300
    %5734 = vmatprep.subr.bf16.mxu0 %v5294
    %5735 = vmatpush2.bf16.msra.mxu0 %v5293
    %5736 = vmatprep.mubr.bf16.mxu0 %v4979
    %5737 = vmatmul.mubr.bf16.gmra.mxu0 %v4978
    %v5738 = vpop.f32.mrf.mxu0
    %v5739 = vadd.f32 %v5696, %v5738
    %v5740 = vpop.f32.mrf.mxu0
    %v5741 = vadd.f32 %v5698, %v5740
    %v5742 = vpop.f32.mrf.mxu0
    %v5743 = vadd.f32 %v5700, %v5742
    %v5744 = vpop.f32.mrf.mxu0
    %v5745 = vadd.f32 %v5702, %v5744
    %5746 = vdwg.mxu0
    %5747 = vmatprep.subr.bf16.mxu0 %v5399
    %5748 = vmatpush1.bf16.msra.mxu0 %v5398
    %5749 = vmatprep.subr.bf16.mxu0 %v5392
    %5750 = vmatpush1.bf16.msra.mxu0 %v5391
    %5751 = vmatprep.subr.bf16.mxu0 %v5385
    %5752 = vmatpush1.bf16.msra.mxu0 %v5384
    %5753 = vmatprep.subr.bf16.mxu0 %v5378
    %5754 = vmatpush1.bf16.msra.mxu0 %v5377
    %5755 = vmatprep.subr.bf16.mxu0 %v5371
    %5756 = vmatpush1.bf16.msra.mxu0 %v5370
    %5757 = vmatprep.subr.bf16.mxu0 %v5364
    %5758 = vmatpush1.bf16.msra.mxu0 %v5363
    %5759 = vmatprep.subr.bf16.mxu0 %v5357
    %5760 = vmatpush1.bf16.msra.mxu0 %v5356
    %5761 = vmatprep.subr.bf16.mxu0 %v5350
    %5762 = vmatpush1.bf16.msra.mxu0 %v5349
    %5763 = vmatprep.subr.bf16.mxu0 0
    %5764 = vmatpush2.bf16.msra.mxu0 0
    %5765 = vmatprep.subr.bf16.mxu0 0
    %5766 = vmatpush2.bf16.msra.mxu0 0
    %5767 = vmatprep.subr.bf16.mxu0 0
    %5768 = vmatpush2.bf16.msra.mxu0 0
    %5769 = vmatprep.subr.bf16.mxu0 0
    %5770 = vmatpush2.bf16.msra.mxu0 0
    %5771 = vmatprep.subr.bf16.mxu0 0
    %5772 = vmatpush2.bf16.msra.mxu0 0
    %5773 = vmatprep.subr.bf16.mxu0 0
    %5774 = vmatpush2.bf16.msra.mxu0 0
    %5775 = vmatprep.subr.bf16.mxu0 0
    %5776 = vmatpush2.bf16.msra.mxu0 0
    %5777 = vmatprep.subr.bf16.mxu0 0
    %5778 = vmatpush2.bf16.msra.mxu0 0
    %5779 = vmatprep.mubr.bf16.mxu0 0
    %5780 = vmatmul.mubr.bf16.gmra.mxu0 %v4980
    %v5781 = vpop.f32.mrf.mxu0
    %v5782 = vadd.f32 %v5739, %v5781
    %v5783 = vpop.f32.mrf.mxu0
    %v5784 = vadd.f32 %v5741, %v5783
    %v5785 = vpop.f32.mrf.mxu0
    %v5786 = vadd.f32 %v5743, %v5785
    %v5787 = vpop.f32.mrf.mxu0
    %v5788 = vadd.f32 %v5745, %v5787
    %5789 = vdwg.mxu0
    %5790 = vmatprep.subr.bf16.mxu0 0
    %5791 = vmatpush1.bf16.msra.mxu0 %v5176
    %5792 = vmatprep.subr.bf16.mxu0 0
    %5793 = vmatpush1.bf16.msra.mxu0 %v5169
    %5794 = vmatprep.subr.bf16.mxu0 0
    %5795 = vmatpush1.bf16.msra.mxu0 %v5162
    %5796 = vmatprep.subr.bf16.mxu0 0
    %5797 = vmatpush1.bf16.msra.mxu0 %v5155
    %5798 = vmatprep.subr.bf16.mxu0 0
    %5799 = vmatpush1.bf16.msra.mxu0 %v5148
    %5800 = vmatprep.subr.bf16.mxu0 0
    %5801 = vmatpush1.bf16.msra.mxu0 %v5141
    %5802 = vmatprep.subr.bf16.mxu0 0
    %5803 = vmatpush1.bf16.msra.mxu0 %v5134
    %5804 = vmatprep.subr.bf16.mxu0 0
    %5805 = vmatpush1.bf16.msra.mxu0 %v5127
    %5806 = vmatprep.subr.bf16.mxu0 0
    %5807 = vmatpush2.bf16.msra.mxu0 %v5232
    %5808 = vmatprep.subr.bf16.mxu0 0
    %5809 = vmatpush2.bf16.msra.mxu0 %v5225
    %5810 = vmatprep.subr.bf16.mxu0 0
    %5811 = vmatpush2.bf16.msra.mxu0 %v5218
    %5812 = vmatprep.subr.bf16.mxu0 0
    %5813 = vmatpush2.bf16.msra.mxu0 %v5211
    %5814 = vmatprep.subr.bf16.mxu0 0
    %5815 = vmatpush2.bf16.msra.mxu0 %v5204
    %5816 = vmatprep.subr.bf16.mxu0 0
    %5817 = vmatpush2.bf16.msra.mxu0 %v5197
    %5818 = vmatprep.subr.bf16.mxu0 0
    %5819 = vmatpush2.bf16.msra.mxu0 %v5190
    %5820 = vmatprep.subr.bf16.mxu0 0
    %5821 = vmatpush2.bf16.msra.mxu0 %v5183
    %5822 = vmatprep.mubr.bf16.mxu0 %v4977
    %5823 = vmatmul.mubr.bf16.gmra.mxu0 %v4976
    %v5824 = vpop.f32.mrf.mxu0
    %v5825 = vadd.f32 0.0, %v5824
    %v5826 = vpop.f32.mrf.mxu0
    %v5827 = vpop.f32.mrf.mxu0
    %v5828 = vadd.f32 0.0, %v5827
    %v5829 = vpop.f32.mrf.mxu0
    %5830 = vdwg.mxu0
    %5831 = vmatprep.subr.bf16.mxu0 0
    %5832 = vmatpush1.bf16.msra.mxu0 %v5288
    %5833 = vmatprep.subr.bf16.mxu0 0
    %5834 = vmatpush1.bf16.msra.mxu0 %v5281
    %5835 = vmatprep.subr.bf16.mxu0 0
    %5836 = vmatpush1.bf16.msra.mxu0 %v5274
    %5837 = vmatprep.subr.bf16.mxu0 0
    %5838 = vmatpush1.bf16.msra.mxu0 %v5267
    %5839 = vmatprep.subr.bf16.mxu0 0
    %5840 = vmatpush1.bf16.msra.mxu0 %v5260
    %5841 = vmatprep.subr.bf16.mxu0 0
    %5842 = vmatpush1.bf16.msra.mxu0 %v5253
    %5843 = vmatprep.subr.bf16.mxu0 0
    %5844 = vmatpush1.bf16.msra.mxu0 %v5246
    %5845 = vmatprep.subr.bf16.mxu0 0
    %5846 = vmatpush1.bf16.msra.mxu0 %v5239
    %5847 = vmatprep.subr.bf16.mxu0 0
    %5848 = vmatpush2.bf16.msra.mxu0 %v5344
    %5849 = vmatprep.subr.bf16.mxu0 0
    %5850 = vmatpush2.bf16.msra.mxu0 %v5337
    %5851 = vmatprep.subr.bf16.mxu0 0
    %5852 = vmatpush2.bf16.msra.mxu0 %v5330
    %5853 = vmatprep.subr.bf16.mxu0 0
    %5854 = vmatpush2.bf16.msra.mxu0 %v5323
    %5855 = vmatprep.subr.bf16.mxu0 0
    %5856 = vmatpush2.bf16.msra.mxu0 %v5316
    %5857 = vmatprep.subr.bf16.mxu0 0
    %5858 = vmatpush2.bf16.msra.mxu0 %v5309
    %5859 = vmatprep.subr.bf16.mxu0 0
    %5860 = vmatpush2.bf16.msra.mxu0 %v5302
    %5861 = vmatprep.subr.bf16.mxu0 0
    %5862 = vmatpush2.bf16.msra.mxu0 %v5295
    %5863 = vmatprep.mubr.bf16.mxu0 %v4979
    %5864 = vmatmul.mubr.bf16.gmra.mxu0 %v4978
    %v5865 = vpop.f32.mrf.mxu0
    %v5866 = vadd.f32 %v5825, %v5865
    %v5867 = vpop.f32.mrf.mxu0
    %v5868 = vpop.f32.mrf.mxu0
    %v5869 = vadd.f32 %v5828, %v5868
    %v5870 = vpop.f32.mrf.mxu0
    %5871 = vdwg.mxu0
    %5872 = vmatprep.subr.bf16.mxu0 0
    %5873 = vmatpush1.bf16.msra.mxu0 %v5400
    %5874 = vmatprep.subr.bf16.mxu0 0
    %5875 = vmatpush1.bf16.msra.mxu0 %v5393
    %5876 = vmatprep.subr.bf16.mxu0 0
    %5877 = vmatpush1.bf16.msra.mxu0 %v5386
    %5878 = vmatprep.subr.bf16.mxu0 0
    %5879 = vmatpush1.bf16.msra.mxu0 %v5379
    %5880 = vmatprep.subr.bf16.mxu0 0
    %5881 = vmatpush1.bf16.msra.mxu0 %v5372
    %5882 = vmatprep.subr.bf16.mxu0 0
    %5883 = vmatpush1.bf16.msra.mxu0 %v5365
    %5884 = vmatprep.subr.bf16.mxu0 0
    %5885 = vmatpush1.bf16.msra.mxu0 %v5358
    %5886 = vmatprep.subr.bf16.mxu0 0
    %5887 = vmatpush1.bf16.msra.mxu0 %v5351
    %5888 = vmatprep.subr.bf16.mxu0 0
    %5889 = vmatpush2.bf16.msra.mxu0 0
    %5890 = vmatprep.subr.bf16.mxu0 0
    %5891 = vmatpush2.bf16.msra.mxu0 0
    %5892 = vmatprep.subr.bf16.mxu0 0
    %5893 = vmatpush2.bf16.msra.mxu0 0
    %5894 = vmatprep.subr.bf16.mxu0 0
    %5895 = vmatpush2.bf16.msra.mxu0 0
    %5896 = vmatprep.subr.bf16.mxu0 0
    %5897 = vmatpush2.bf16.msra.mxu0 0
    %5898 = vmatprep.subr.bf16.mxu0 0
    %5899 = vmatpush2.bf16.msra.mxu0 0
    %5900 = vmatprep.subr.bf16.mxu0 0
    %5901 = vmatpush2.bf16.msra.mxu0 0
    %5902 = vmatprep.subr.bf16.mxu0 0
    %5903 = vmatpush2.bf16.msra.mxu0 0
    %5904 = vmatprep.mubr.bf16.mxu0 0
    %5905 = vmatmul.mubr.bf16.gmra.mxu0 %v4980
    %v5906 = vpop.f32.mrf.mxu0
    %v5907 = vadd.f32 %v5866, %v5906
    %v5908 = vpop.f32.mrf.mxu0
    %v5909 = vpop.f32.mrf.mxu0
    %v5910 = vadd.f32 %v5869, %v5909
    %v5911 = vpop.f32.mrf.mxu0
    %5912 = vdwg.mxu0
    %v5914 = vlaneseq
    %v5915 = vshrl.u32 %v5914, 7
    %v5916 = vsub.s32 0, %v5915
    %v5917 = vrot.slane %v5402, %v5916
    %v5918 = vlaneseq
    %v5919 = vshrl.u32 %v5918, 7
    %v5920 = vsub.s32 1, %v5919
    %v5921 = vrot.slane %v5402, %v5920
    %v5922 = vlaneseq
    %v5923 = vshrl.u32 %v5922, 7
    %v5924 = vsub.s32 2, %v5923
    %v5925 = vrot.slane %v5402, %v5924
    %v5926 = vlaneseq
    %v5927 = vshrl.u32 %v5926, 7
    %v5928 = vsub.s32 3, %v5927
    %v5929 = vrot.slane %v5402, %v5928
    %v5930 = vlaneseq
    %v5931 = vshrl.u32 %v5930, 7
    %v5932 = vsub.s32 4, %v5931
    %v5933 = vrot.slane %v5402, %v5932
    %v5934 = vlaneseq
    %v5935 = vshrl.u32 %v5934, 7
    %v5936 = vsub.s32 5, %v5935
    %v5937 = vrot.slane %v5402, %v5936
    %v5938 = vlaneseq
    %v5939 = vshrl.u32 %v5938, 7
    %v5940 = vsub.s32 6, %v5939
    %v5941 = vrot.slane %v5402, %v5940
    %v5949 = vmul.f32 %v5524, %v5917
    %v5950 = vmul.f32 %v5526, %v5921
    %v5951 = vmul.f32 %v5653, %v5925
    %v5952 = vmul.f32 %v5655, %v5929
    %v5953 = vmul.f32 %v5782, %v5933
    %v5954 = vmul.f32 %v5784, %v5937
    %v5955 = vmul.f32 %v5907, %v5941
    %v5956 = vmul.f32 %v5528, %v5917
    %v5957 = vmul.f32 %v5530, %v5921
    %v5958 = vmul.f32 %v5657, %v5925
    %v5959 = vmul.f32 %v5659, %v5929
    %v5960 = vmul.f32 %v5786, %v5933
    %v5961 = vmul.f32 %v5788, %v5937
    %v5962 = vmul.f32 %v5910, %v5941
    %v5964 = vlaneseq
    %v5965 = vshrl.u32 %v5964, 7
    %v5966 = vsub.s32 0, %v5965
    %v5967 = vrot.slane %v5401, %v5966
    %v5968 = vlaneseq
    %v5969 = vshrl.u32 %v5968, 7
    %v5970 = vsub.s32 1, %v5969
    %v5971 = vrot.slane %v5401, %v5970
    %v5972 = vlaneseq
    %v5973 = vshrl.u32 %v5972, 7
    %v5974 = vsub.s32 2, %v5973
    %v5975 = vrot.slane %v5401, %v5974
    %v5976 = vlaneseq
    %v5977 = vshrl.u32 %v5976, 7
    %v5978 = vsub.s32 3, %v5977
    %v5979 = vrot.slane %v5401, %v5978
    %v5980 = vlaneseq
    %v5981 = vshrl.u32 %v5980, 7
    %v5982 = vsub.s32 4, %v5981
    %v5983 = vrot.slane %v5401, %v5982
    %v5984 = vlaneseq
    %v5985 = vshrl.u32 %v5984, 7
    %v5986 = vsub.s32 5, %v5985
    %v5987 = vrot.slane %v5401, %v5986
    %v5988 = vlaneseq
    %v5989 = vshrl.u32 %v5988, 7
    %v5990 = vsub.s32 6, %v5989
    %v5991 = vrot.slane %v5401, %v5990
    %v5999 = vadd.f32 %v5949, %v5967
    %v6000 = vadd.f32 %v5950, %v5971
    %v6001 = vadd.f32 %v5951, %v5975
    %v6002 = vadd.f32 %v5952, %v5979
    %v6003 = vadd.f32 %v5953, %v5983
    %v6004 = vadd.f32 %v5954, %v5987
    %v6005 = vadd.f32 %v5955, %v5991
    %v6006 = vadd.f32 %v5956, %v5967
    %v6007 = vadd.f32 %v5957, %v5971
    %v6008 = vadd.f32 %v5958, %v5975
    %v6009 = vadd.f32 %v5959, %v5979
    %v6010 = vadd.f32 %v5960, %v5983
    %v6011 = vadd.f32 %v5961, %v5987
    %v6012 = vadd.f32 %v5962, %v5991
    %6013 = vst [vmem:[#allocation23] sm:$0xff] %v5999
    %6014 = vst [vmem:[#allocation23 + $0x8] sm:$0xff] %v6000
    %6015 = vst [vmem:[#allocation23 + $0x10] sm:$0xff] %v6001
    %6016 = vst [vmem:[#allocation23 + $0x18] sm:$0xff] %v6002
    %6017 = vst [vmem:[#allocation23 + $0x20] sm:$0xff] %v6003
    %6018 = vst [vmem:[#allocation23 + $0x28] sm:$0xff] %v6004
    %6019 = vst [vmem:[#allocation23 + $0x30] sm:$0xff] %v6005
    %6020 = vst [vmem:[#allocation23 + $0x38] sm:$0xff] %v6006
    %6021 = vst [vmem:[#allocation23 + $0x40] sm:$0xff] %v6007
    %6022 = vst [vmem:[#allocation23 + $0x48] sm:$0xff] %v6008
    %6023 = vst [vmem:[#allocation23 + $0x50] sm:$0xff] %v6009
    %6024 = vst [vmem:[#allocation23 + $0x58] sm:$0xff] %v6010
    %6025 = vst [vmem:[#allocation23 + $0x60] sm:$0xff] %v6011
    %6026 = vst [vmem:[#allocation23 + $0x68] sm:$0xff] %v6012
    // Predicated region
    $region98: #{tpu_custom_call.1} parent=1 // pred_check
      _
    $region99: #{tpu_custom_call.1} parent=1 // pred_check_branch
      %6028 = sbr.rel (0) target = $region101
    $region100: #{tpu_custom_call.1} parent=1 // pred_region
      %s6030 = ssub.s32 1792, 1792
      %6031 = vsyncadd [#allocation8], %s6030
      %s6032 = sshll.u32 [#allocation23], 4
      %s6033 = int_to_ptr.vmem [resolvable:$true] %s6032
      %6038 = dma.vmem_to_hbm [thread:$0]  %s6033, 1792, %s14, [#allocation8], 896, 896, 56
    $region101: #{tpu_custom_call.1} parent=1 // pred_fallthru
      _
    // Predicated region
    $region102: #{tpu_custom_call.1} parent=1 // pred_check
      _
    $region103: #{tpu_custom_call.1} parent=1 // pred_check_branch
      %6040 = sbr.rel (0) target = $region105
    $region104: #{tpu_custom_call.1} parent=1 // pred_region
      %6041 = dma.done [#allocation8], 1792
    $region105: #{tpu_custom_call.1} parent=1 // pred_fallthru
      _
    %6042 = vsyncpa [#allocation7], 1
    %6043 = vsyncpa [#allocation10], 1
    %6044 = vsyncpa [#allocation13], 1
    %6045 = vsyncpa [#allocation16], 1
    %6046 = vsyncpa [#allocation19], 1
    %6047 = vsyncpa [#allocation22], 1
    %6048 = vsyncpa [#allocation8], 1
  %6049 = vsyncmov [#allocation5]
  %s6050 = vpop.sfrf %6049
  %p6051 = scmp.eq.s32.totalorder %s6050, 0
  %p6052 = pneg %p6051
  %6054 = shalt.err (%p6052)
  %s6055 = scalar_lea.sflag [#allocation5], 1
  %6056 = vsyncmov %s6055
  %s6057 = vpop.sfrf %6056
  %p6058 = scmp.eq.s32.totalorder %s6057, 0
  %p6059 = pneg %p6058
  %6061 = shalt.err (%p6059)
  %s6062 = scalar_lea.sflag [#allocation5], 2
  %6063 = vsyncmov %s6062
  %s6064 = vpop.sfrf %6063
  %p6065 = scmp.eq.s32.totalorder %s6064, 0
  %p6066 = pneg %p6065
  %6068 = shalt.err (%p6066)

</llo_original>
